<compile_context>
chip_gen: v6e
topology: v6e:2x2x1
jax: 0.10.0
libtpu: 0.0.40
codegen_flags: <defaults>
</compile_context>

<pallas_src>
import jax
import jax.numpy as jnp
import numpy as np
from jax.experimental import pallas as pl
from jax.experimental.pallas import tpu as pltpu

# True-f32 matmuls everywhere so kernel and reference agree to ~1e-6.
jax.config.update("jax_default_matmul_precision", "float32")

# ---- scaled-down configuration (real model: C_IN=2048, C_MID=512, J=21) ----
B = 2           # batch
C_IN = 256      # backbone channels
H = W = 8       # spatial
HW = H * W
BHW = B * HW    # batch fused into lanes for the conv / sampling path
C_MID = 128     # conv output channels
J = 8           # joint_num
SHAPE_DIM = 16  # shape_param_dim
CAM_DIM = 3
ROOT_DIM = 6
POSE_DIM = 96   # (orig_joint_num - 1) * 6
FEAT_DIM = J * (C_MID + 3)

SC_DIM = SHAPE_DIM + CAM_DIM      # 19  -> fused shape|cam head width
SC_PAD = 128                      # padded to one full lane group
RP_DIM = ROOT_DIM + POSE_DIM      # 102 -> fused root|pose head width
RP_PAD = 128
OUT_PAD = SC_PAD + RP_PAD         # single fused (B, 256) output

# ------------------- static constant slab (shape-only data) -----------------
# row 0: pixel-x per fused lane, row 1: pixel-y per fused lane,
# rows 2..2+B-1: pooling rows (1/HW on own batch's lanes),
# rows 8..8+J*B-1: batch mask in JOINT-MAJOR row order (r = j*B + b).
_ROW_PX, _ROW_PY, _ROW_POOL, _ROW_MASK = 0, 1, 2, 8
_CONST_ROWS = _ROW_MASK + J * B
assert _ROW_POOL + B <= _ROW_MASK

_px1 = (np.arange(HW) % W).astype(np.float32)
_py1 = (np.arange(HW) // W).astype(np.float32)
_CONST = np.zeros((_CONST_ROWS, BHW), np.float32)
_CONST[_ROW_PX, :] = np.tile(_px1, B)
_CONST[_ROW_PY, :] = np.tile(_py1, B)
for _b in range(B):
    _CONST[_ROW_POOL + _b, _b * HW:(_b + 1) * HW] = 1.0 / HW
for _j in range(J):
    for _b in range(B):
        _CONST[_ROW_MASK + _j * B + _b, _b * HW:(_b + 1) * HW] = 1.0


def _vmem_specs(n):
    return [pl.BlockSpec(memory_space=pltpu.MemorySpace.VMEM) for _ in range(n)]


# --------------------------- single fused kernel ----------------------------
def fused_kernel(x_ref, const_ref, cxy_ref, cflat_ref,
                 w_sc_ref, w_conv_ref, shift_ref, w_rpf_ref, head_ref,
                 out_ref):
    x = x_ref[...]                                     # (C_IN, B*HW)

    px = const_ref[_ROW_PX:_ROW_PX + 1, :]             # (1, B*HW)
    py = const_ref[_ROW_PY:_ROW_PY + 1, :]             # (1, B*HW)
    pool = const_ref[_ROW_POOL:_ROW_POOL + B, :]       # (B, B*HW)
    bmask = const_ref[_ROW_MASK:_ROW_MASK + J * B, :]  # (J*B, B*HW), joint-major

    # ---- global average pool + fused shape|cam head, all batches at once ----
    pooled = jax.lax.dot_general(pool, x, (((1,), (1,)), ((), ())),
                                 preferred_element_type=jnp.float32)   # (B, C_IN)
    b_sc = head_ref[J * 3 + 1:J * 3 + 2, :]                            # (1, 128)
    out_sc = jnp.dot(pooled, w_sc_ref[...],
                     preferred_element_type=jnp.float32) + b_sc        # (B, 128)

    # ---- 1x1 conv (BN scale folded into weights) + shift + ReLU -------------
    # batch fused into lanes -> full 128-lane-dense (C_MID, B*HW) tile
    feat = jnp.dot(w_conv_ref[...], x,
                   preferred_element_type=jnp.float32)                 # (C_MID, B*HW)
    feat = jnp.maximum(feat + shift_ref[...], 0.0)

    # ---- bilinear grid_sample == one block-diagonal tent-weight matmul ------
    cx = cxy_ref[:, 0:1]                                # (J*B, 1), joint-major rows
    cy = cxy_ref[:, 1:2]
    wx = jnp.maximum(1.0 - jnp.abs(cx - px), 0.0)       # (J*B, B*HW)
    wy = jnp.maximum(1.0 - jnp.abs(cy - py), 0.0)
    wgt = wx * wy * bmask                               # zero off own batch's lanes
    sampled = jax.lax.dot_general(wgt, feat, (((1,), (1,)), ((), ())),
                                  preferred_element_type=jnp.float32)  # (J*B, C_MID)

    # ---- fused root|pose head: coord matmul + ONE K=J*C_MID feature matmul --
    w_rp_coord = head_ref[0:J * 3, :]                   # (J*3, 128)
    b_rp = head_ref[J * 3:J * 3 + 1, :]                 # (1, 128)
    acc = jnp.dot(cflat_ref[...], w_rp_coord,
                  preferred_element_type=jnp.float32) + b_rp           # (B, 128)
    # joint-major rows -> per-joint (B, C_MID) blocks, lane-concat to (B, J*C_MID)
    sampled_flat = jnp.concatenate(
        [sampled[j * B:(j + 1) * B, :] for j in range(J)], axis=1)     # (B, J*C_MID)
    out_rp = acc + jnp.dot(sampled_flat, w_rpf_ref[...],
                           preferred_element_type=jnp.float32)         # (B, 128)

    # single lane-dense store of both heads
    out_ref[...] = jnp.concatenate([out_sc, out_rp], axis=1)           # (B, 256)


# ------------------------- wrapper-side param prep --------------------------
def prepare_params(p):
    """Concatenate / pad / fold the weights for the fused kernel (done once)."""
    w_sc = jnp.pad(jnp.concatenate([p["w_shape"], p["w_cam"]], axis=1),
                   ((0, 0), (0, SC_PAD - SC_DIM)))                 # (C_IN, 128)
    b_sc = jnp.pad(jnp.concatenate([p["b_shape"], p["b_cam"]], axis=1),
                   ((0, 0), (0, SC_PAD - SC_DIM)))                 # (1, 128)

    w3 = jnp.concatenate(
        [p["w_root"].reshape(J, C_MID + 3, ROOT_DIM),
         p["w_pose"].reshape(J, C_MID + 3, POSE_DIM)], axis=2)     # (J, C_MID+3, 102)
    w3 = jnp.pad(w3, ((0, 0), (0, 0), (0, RP_PAD - RP_DIM)))       # (J, C_MID+3, 128)
    b_rp = jnp.pad(jnp.concatenate([p["b_root"], p["b_pose"]], axis=1),
                   ((0, 0), (0, RP_PAD - RP_DIM)))                 # (1, 128)

    w_rp_feat_flat = w3[:, :C_MID, :].reshape(J * C_MID, RP_PAD)   # (J*C_MID, 128)
    w_rp_coord = w3[:, C_MID:, :].reshape(J * 3, RP_PAD)           # (J*3, 128)
    # head slab: rows [0, J*3) coord weights, row J*3 = b_rp, row J*3+1 = b_sc
    head_slab = jnp.concatenate([w_rp_coord, b_rp, b_sc], axis=0)  # (J*3+2, 128)

    # 1x1 conv weight, channels-first, BN scale folded in row-wise.
    w_convT_scaled = p["w_conv"].T * p["bn_scale"].reshape(C_MID, 1)  # (C_MID, C_IN)

    return {
        "w_sc": w_sc,
        "w_convT_scaled": w_convT_scaled,
        "shift": p["bn_shift"].reshape(C_MID, 1),
        "w_rp_feat_flat": w_rp_feat_flat,
        "head_slab": head_slab,
    }


# ----------------------------- full forward ---------------------------------
def rotation_net_forward(prep, img_feat_nchw, joint_coord_img):
    """img_feat_nchw: (B, C_IN, H, W);  joint_coord_img: (B, J, 3)."""
    # (B, C_IN, H, W) -> (C_IN, B*HW): batch fused into the lane dimension.
    x = jnp.transpose(img_feat_nchw.reshape(B, C_IN, HW),
                      (1, 0, 2)).reshape(C_IN, BHW)
    # joint-major (j, b) row order to match the batch-mask / sampling layout
    coords_xy = jnp.transpose(joint_coord_img[..., :2],
                              (1, 0, 2)).reshape(J * B, 2)
    cflat = joint_coord_img.reshape(B, J * 3)
    const_slab = jnp.asarray(_CONST)

    out = pl.pallas_call(
        fused_kernel,
        out_shape=jax.ShapeDtypeStruct((B, OUT_PAD), jnp.float32),
        in_specs=_vmem_specs(9),
        out_specs=pl.BlockSpec(memory_space=pltpu.MemorySpace.VMEM),
    )(x, const_slab, coords_xy, cflat,
      prep["w_sc"], prep["w_convT_scaled"], prep["shift"],
      prep["w_rp_feat_flat"], prep["head_slab"])

    shape_param = out[:, :SHAPE_DIM]
    cam_param = out[:, SHAPE_DIM:SC_DIM]
    root_pose = out[:, SC_PAD:SC_PAD + ROOT_DIM]
    pose_param = out[:, SC_PAD + ROOT_DIM:SC_PAD + RP_DIM]
    return root_pose, pose_param, shape_param, cam_param


# ----------------------------- pure-JAX reference ---------------------------
def rotation_net_reference(params, img_feat_nchw, joint_coord_img):
    x = jnp.transpose(img_feat_nchw, (0, 2, 3, 1)).reshape(B, HW, C_IN)
    pooled = x.mean(axis=1)
    shape_param = pooled @ params["w_shape"] + params["b_shape"]
    cam_param = pooled @ params["w_cam"] + params["b_cam"]

    y = x.reshape(B * HW, C_IN) @ params["w_conv"]
    y = jnp.maximum(y * params["bn_scale"] + params["bn_shift"], 0.0)
    feat_mid = y.reshape(B, HW, C_MID)

    px = (jnp.arange(HW) % W).astype(jnp.float32)
    py = (jnp.arange(HW) // W).astype(jnp.float32)
    jx = joint_coord_img[:, :, 0:1]
    jy = joint_coord_img[:, :, 1:2]
    wx = jnp.maximum(1.0 - jnp.abs(jx - px[None, None, :]), 0.0)
    wy = jnp.maximum(1.0 - jnp.abs(jy - py[None, None, :]), 0.0)
    wgt = wx * wy                                            # (B, J, HW)
    sampled = jnp.einsum("bjp,bpc->bjc", wgt, feat_mid)
    feat = jnp.concatenate([sampled, joint_coord_img], axis=-1)
    feat_flat = feat.reshape(B, FEAT_DIM)

    root_pose = feat_flat @ params["w_root"] + params["b_root"]
    pose_param = feat_flat @ params["w_pose"] + params["b_pose"]
    return root_pose, pose_param, shape_param, cam_param


# ----------------------------- parameter init -------------------------------
def init_params(key):
    ks = jax.random.split(key, 12)
    s = 0.02
    # BatchNorm (eval-mode) folded into an affine scale/shift, including the
    # conv bias:  y = scale * (x@W) + shift'
    gamma = jax.random.uniform(ks[0], (C_MID,), minval=0.5, maxval=1.5)
    beta = s * jax.random.normal(ks[1], (C_MID,))
    run_mean = s * jax.random.normal(ks[2], (C_MID,))
    run_var = jax.random.uniform(ks[3], (C_MID,), minval=0.5, maxval=1.5)
    b_conv = s * jax.random.normal(ks[4], (C_MID,))
    bn_scale = gamma / jnp.sqrt(run_var + 1e-5)
    bn_shift = beta + bn_scale * (b_conv - run_mean)
    return {
        "w_shape": s * jax.random.normal(ks[5], (C_IN, SHAPE_DIM)),
        "b_shape": s * jax.random.normal(ks[6], (1, SHAPE_DIM)),
        "w_cam": s * jax.random.normal(ks[7], (C_IN, CAM_DIM)),
        "b_cam": s * jax.random.normal(ks[8], (1, CAM_DIM)),
        "w_conv": s * jax.random.normal(ks[9], (C_IN, C_MID)),
        "bn_scale": bn_scale.reshape(1, C_MID),
        "bn_shift": bn_shift.reshape(1, C_MID),
        "w_root": s * jax.random.normal(ks[10], (FEAT_DIM, ROOT_DIM)),
        "b_root": jnp.zeros((1, ROOT_DIM), jnp.float32),
        "w_pose": s * jax.random.normal(ks[11], (FEAT_DIM, POSE_DIM)),
        "b_pose": jnp.zeros((1, POSE_DIM), jnp.float32),
    }


if __name__ == "__main__":
    key = jax.random.PRNGKey(0)
    k_param, k_feat, k_joint = jax.random.split(key, 3)
    params = jax.tree_util.tree_map(
        lambda t: t.astype(jnp.float32), init_params(k_param))
    prep = prepare_params(params)   # done once, outside the forward pass

    img_feat = jax.random.normal(k_feat, (B, C_IN, H, W), jnp.float32)
    # joint coords: x in [0, W-1], y in [0, H-1], z arbitrary
    joint_coord = jnp.stack([
        jax.random.uniform(k_joint, (B, J), minval=0.0, maxval=W - 1.0),
        jax.random.uniform(jax.random.fold_in(k_joint, 1), (B, J),
                           minval=0.0, maxval=H - 1.0),
        jax.random.normal(jax.random.fold_in(k_joint, 2), (B, J)),
    ], axis=-1).astype(jnp.float32)

    outs = rotation_net_forward(prep, img_feat, joint_coord)
    outs = jax.block_until_ready(outs)

    refs = rotation_net_reference(params, img_feat, joint_coord)
    names = ("root_pose", "pose_param", "shape_param", "cam_param")
    for name, o, r in zip(names, outs, refs):
        np.testing.assert_allclose(np.asarray(o), np.asarray(r),
                                   rtol=1e-4, atol=1e-4, err_msg=name)

    print("KERNEL_OK")
</pallas_src>

<mosaic_0001>
module attributes {stable_mosaic.version = 11 : i64} {
  func.func @fused_kernel(%arg0: memref<256x128xf32, #tpu.memory_space<vmem>>, %arg1: memref<24x128xf32, #tpu.memory_space<vmem>>, %arg2: memref<16x2xf32, #tpu.memory_space<vmem>>, %arg3: memref<2x24xf32, #tpu.memory_space<vmem>>, %arg4: memref<256x128xf32, #tpu.memory_space<vmem>>, %arg5: memref<128x256xf32, #tpu.memory_space<vmem>>, %arg6: memref<128x1xf32, #tpu.memory_space<vmem>>, %arg7: memref<1024x128xf32, #tpu.memory_space<vmem>>, %arg8: memref<26x128xf32, #tpu.memory_space<vmem>>, %arg9: memref<2x256xf32, #tpu.memory_space<vmem>>) attributes {dimension_semantics = [], scalar_prefetch = 0 : i64, scratch_operands = 0 : i64, tpu.core_type = #tpu.core_type<tc>} {
    %c0 = arith.constant 0 : index
    %c0_0 = arith.constant 0 : index
    %0 = vector.load %arg0[%c0, %c0_0] : memref<256x128xf32, #tpu.memory_space<vmem>>, vector<256x128xf32>
    %c0_1 = arith.constant 0 : index
    %c0_2 = arith.constant 0 : index
    %1 = vector.load %arg1[%c0_1, %c0_2] : memref<24x128xf32, #tpu.memory_space<vmem>>, vector<1x128xf32>
    %c1 = arith.constant 1 : index
    %c0_3 = arith.constant 0 : index
    %2 = vector.load %arg1[%c1, %c0_3] : memref<24x128xf32, #tpu.memory_space<vmem>>, vector<1x128xf32>
    %c2 = arith.constant 2 : index
    %c0_4 = arith.constant 0 : index
    %3 = vector.load %arg1[%c2, %c0_4] : memref<24x128xf32, #tpu.memory_space<vmem>>, vector<2x128xf32>
    %c8 = arith.constant 8 : index
    %c0_5 = arith.constant 0 : index
    %4 = vector.load %arg1[%c8, %c0_5] : memref<24x128xf32, #tpu.memory_space<vmem>>, vector<16x128xf32>
    %cst = arith.constant dense<0.000000e+00> : vector<2x256xf32>
    %5 = tpu.matmul %3, %0, %cst {dimension_numbers = #tpu.dot_dimension_numbers<[1], [1], [0], [0], [0, 0, 1, 0], [], []>, precision = #tpu.contract_precision<fp32>} : vector<2x128xf32>, vector<256x128xf32>, vector<2x256xf32> -> vector<2x256xf32>
    %c25 = arith.constant 25 : index
    %c0_6 = arith.constant 0 : index
    %6 = vector.load %arg8[%c25, %c0_6] : memref<26x128xf32, #tpu.memory_space<vmem>>, vector<1x128xf32>
    %c0_7 = arith.constant 0 : index
    %c0_8 = arith.constant 0 : index
    %7 = vector.load %arg4[%c0_7, %c0_8] : memref<256x128xf32, #tpu.memory_space<vmem>>, vector<256x128xf32>
    %cst_9 = arith.constant dense<0.000000e+00> : vector<2x128xf32>
    %8 = tpu.matmul %5, %7, %cst_9 {dimension_numbers = #tpu.dot_dimension_numbers<[1], [0], [0], [1], [0, 0, 1, 1], [], []>, precision = #tpu.contract_precision<fp32>} : vector<2x256xf32>, vector<256x128xf32>, vector<2x128xf32> -> vector<2x128xf32>
    %9 = vector.broadcast %6 : vector<1x128xf32> to vector<2x128xf32>
    %10 = arith.addf %8, %9 : vector<2x128xf32>
    %c0_10 = arith.constant 0 : index
    %c0_11 = arith.constant 0 : index
    %11 = vector.load %arg5[%c0_10, %c0_11] : memref<128x256xf32, #tpu.memory_space<vmem>>, vector<128x256xf32>
    %cst_12 = arith.constant dense<0.000000e+00> : vector<128x128xf32>
    %12 = tpu.matmul %11, %0, %cst_12 {dimension_numbers = #tpu.dot_dimension_numbers<[1], [0], [0], [1], [0, 0, 1, 1], [], []>, precision = #tpu.contract_precision<fp32>} : vector<128x256xf32>, vector<256x128xf32>, vector<128x128xf32> -> vector<128x128xf32>
    %c0_13 = arith.constant 0 : index
    %c0_14 = arith.constant 0 : index
    %13 = vector.load %arg6[%c0_13, %c0_14] : memref<128x1xf32, #tpu.memory_space<vmem>>, vector<128x1xf32>
    %14 = vector.broadcast %13 : vector<128x1xf32> to vector<128x128xf32>
    %15 = arith.addf %12, %14 : vector<128x128xf32>
    %cst_15 = arith.constant 0.000000e+00 : f32
    %16 = vector.broadcast %cst_15 : f32 to vector<128x128xf32>
    %17 = arith.maximumf %15, %16 : vector<128x128xf32>
    %c0_16 = arith.constant 0 : index
    %c0_17 = arith.constant 0 : index
    %18 = vector.load %arg2[%c0_16, %c0_17] : memref<16x2xf32, #tpu.memory_space<vmem>>, vector<16x1xf32>
    %c0_18 = arith.constant 0 : index
    %c1_19 = arith.constant 1 : index
    %19 = vector.load %arg2[%c0_18, %c1_19] : memref<16x2xf32, #tpu.memory_space<vmem>>, vector<16x1xf32>
    %20 = vector.broadcast %18 : vector<16x1xf32> to vector<16x128xf32>
    %21 = vector.broadcast %1 : vector<1x128xf32> to vector<16x128xf32>
    %22 = arith.subf %20, %21 : vector<16x128xf32>
    %23 = math.absf %22 : vector<16x128xf32>
    %cst_20 = arith.constant 1.000000e+00 : f32
    %24 = vector.broadcast %cst_20 : f32 to vector<16x128xf32>
    %25 = arith.subf %24, %23 : vector<16x128xf32>
    %cst_21 = arith.constant 0.000000e+00 : f32
    %26 = vector.broadcast %cst_21 : f32 to vector<16x128xf32>
    %27 = arith.maximumf %25, %26 : vector<16x128xf32>
    %28 = vector.broadcast %19 : vector<16x1xf32> to vector<16x128xf32>
    %29 = vector.broadcast %2 : vector<1x128xf32> to vector<16x128xf32>
    %30 = arith.subf %28, %29 : vector<16x128xf32>
    %31 = math.absf %30 : vector<16x128xf32>
    %cst_22 = arith.constant 1.000000e+00 : f32
    %32 = vector.broadcast %cst_22 : f32 to vector<16x128xf32>
    %33 = arith.subf %32, %31 : vector<16x128xf32>
    %cst_23 = arith.constant 0.000000e+00 : f32
    %34 = vector.broadcast %cst_23 : f32 to vector<16x128xf32>
    %35 = arith.maximumf %33, %34 : vector<16x128xf32>
    %36 = arith.mulf %27, %35 : vector<16x128xf32>
    %37 = arith.mulf %36, %4 : vector<16x128xf32>
    %cst_24 = arith.constant dense<0.000000e+00> : vector<16x128xf32>
    %38 = tpu.matmul %37, %17, %cst_24 {dimension_numbers = #tpu.dot_dimension_numbers<[1], [1], [0], [0], [0, 0, 1, 0], [], []>, precision = #tpu.contract_precision<fp32>} : vector<16x128xf32>, vector<128x128xf32>, vector<16x128xf32> -> vector<16x128xf32>
    %c0_25 = arith.constant 0 : index
    %c0_26 = arith.constant 0 : index
    %39 = vector.load %arg8[%c0_25, %c0_26] : memref<26x128xf32, #tpu.memory_space<vmem>>, vector<24x128xf32>
    %c24 = arith.constant 24 : index
    %c0_27 = arith.constant 0 : index
    %40 = vector.load %arg8[%c24, %c0_27] : memref<26x128xf32, #tpu.memory_space<vmem>>, vector<1x128xf32>
    %c0_28 = arith.constant 0 : index
    %c0_29 = arith.constant 0 : index
    %41 = vector.load %arg3[%c0_28, %c0_29] : memref<2x24xf32, #tpu.memory_space<vmem>>, vector<2x24xf32>
    %cst_30 = arith.constant dense<0.000000e+00> : vector<2x128xf32>
    %42 = tpu.matmul %41, %39, %cst_30 {dimension_numbers = #tpu.dot_dimension_numbers<[1], [0], [0], [1], [0, 0, 1, 1], [], []>, precision = #tpu.contract_precision<fp32>} : vector<2x24xf32>, vector<24x128xf32>, vector<2x128xf32> -> vector<2x128xf32>
    %43 = vector.broadcast %40 : vector<1x128xf32> to vector<2x128xf32>
    %44 = arith.addf %42, %43 : vector<2x128xf32>
    %45 = vector.extract_strided_slice %38 {offsets = [0, 0], sizes = [2, 128], strides = [1, 1]} : vector<16x128xf32> to vector<2x128xf32>
    %46 = vector.extract_strided_slice %38 {offsets = [2, 0], sizes = [2, 128], strides = [1, 1]} : vector<16x128xf32> to vector<2x128xf32>
    %47 = vector.extract_strided_slice %38 {offsets = [4, 0], sizes = [2, 128], strides = [1, 1]} : vector<16x128xf32> to vector<2x128xf32>
    %48 = vector.extract_strided_slice %38 {offsets = [6, 0], sizes = [2, 128], strides = [1, 1]} : vector<16x128xf32> to vector<2x128xf32>
    %49 = vector.extract_strided_slice %38 {offsets = [8, 0], sizes = [2, 128], strides = [1, 1]} : vector<16x128xf32> to vector<2x128xf32>
    %50 = vector.extract_strided_slice %38 {offsets = [10, 0], sizes = [2, 128], strides = [1, 1]} : vector<16x128xf32> to vector<2x128xf32>
    %51 = vector.extract_strided_slice %38 {offsets = [12, 0], sizes = [2, 128], strides = [1, 1]} : vector<16x128xf32> to vector<2x128xf32>
    %52 = vector.extract_strided_slice %38 {offsets = [14, 0], sizes = [2, 128], strides = [1, 1]} : vector<16x128xf32> to vector<2x128xf32>
    %53 = tpu.concatenate %45, %46, %47, %48, %49, %50, %51, %52 in 1 : vector<2x128xf32>, vector<2x128xf32>, vector<2x128xf32>, vector<2x128xf32>, vector<2x128xf32>, vector<2x128xf32>, vector<2x128xf32>, vector<2x128xf32> -> vector<2x1024xf32>
    %c0_31 = arith.constant 0 : index
    %c0_32 = arith.constant 0 : index
    %54 = vector.load %arg7[%c0_31, %c0_32] : memref<1024x128xf32, #tpu.memory_space<vmem>>, vector<1024x128xf32>
    %cst_33 = arith.constant dense<0.000000e+00> : vector<2x128xf32>
    %55 = tpu.matmul %53, %54, %cst_33 {dimension_numbers = #tpu.dot_dimension_numbers<[1], [0], [0], [1], [0, 0, 1, 1], [], []>, precision = #tpu.contract_precision<fp32>} : vector<2x1024xf32>, vector<1024x128xf32>, vector<2x128xf32> -> vector<2x128xf32>
    %56 = arith.addf %44, %55 : vector<2x128xf32>
    %57 = tpu.concatenate %10, %56 in 1 : vector<2x128xf32>, vector<2x128xf32> -> vector<2x256xf32>
    %c0_34 = arith.constant 0 : index
    %c0_35 = arith.constant 0 : index
    %58 = vector.load %arg9[%c0_34, %c0_35] : memref<2x256xf32, #tpu.memory_space<vmem>>, vector<2x256xf32>
    tpu.vector_store %arg9[%c0_34, %c0_35], %57 {strides = array<i32>} : memref<2x256xf32, #tpu.memory_space<vmem>>, vector<2x256xf32>,
    return
  }
}

</mosaic_0001>

<llo_original>
// kernel: tpu_custom_call.1
$region0: #{tpu_custom_call.1}
  #allocation0 [shape = 'u32[]', space=smem, size = 0x4, offset = 0x4, fixed_abs, tag = 'smem constant byte address 0x4 - core index']
  #allocation1 [shape = 'u32[144,128]{1,0:T(1,128)}', space=vmem, size = 0x12000, scoped, tag = 'internal scratch']
  %s0 = inlined_call_operand.hbm [shape: f32[256,128], index: 0, kind: input, shape index: {}]
  %s1 = inlined_call_operand.vmem [shape: f32[24,128], index: 1, kind: input, shape index: {}]
  %s2 = inlined_call_operand.vmem [shape: f32[16,2], index: 2, kind: input, shape index: {}]
  %s3 = inlined_call_operand.vmem [shape: f32[2,24], index: 3, kind: input, shape index: {}]
  %s4 = inlined_call_operand.hbm [shape: f32[256,128], index: 4, kind: input, shape index: {}]
  %s5 = inlined_call_operand.hbm [shape: f32[128,256], index: 5, kind: input, shape index: {}]
  %s6 = inlined_call_operand.vmem [shape: f32[128,1], index: 6, kind: input, shape index: {}]
  %s7 = inlined_call_operand.hbm [shape: f32[1024,128], index: 7, kind: input, shape index: {}]
  %s8 = inlined_call_operand.vmem [shape: f32[26,128], index: 8, kind: input, shape index: {}]
  %s9 = inlined_call_operand.hbm [shape: f32[2,256], index: 9, kind: output, shape index: {}]
  %s10 = sld [smem:[#allocation0]]
  $region62: #{tpu_custom_call.1} parent=0
    _
  %s12 = ssub.s32 1, %s10
  %s13 = scalar_select 0, %s12, %s10
  $region1: #{tpu_custom_call.1} parent=0
    #allocation2 [shape = 'u8[131072]{0}', space=vmem, size = 0x20000, scoped, tag = 'input window, operand 0, single buffered']
    #allocation3 [shape = 's32[1]{0}', space=sflag, size = 0x4, scoped, tag = 'scoped memory for tpu_custom_call.1']
    #allocation4 [shape = 's32[1]{0}', space=sflag, size = 0x4, scoped, tag = 'scoped memory for tpu_custom_call.1']
    #allocation5 [shape = 'u8[131072]{0}', space=vmem, size = 0x20000, scoped, tag = 'input window, operand 4, single buffered']
    #allocation6 [shape = 's32[1]{0}', space=sflag, size = 0x4, scoped, tag = 'scoped memory for tpu_custom_call.1']
    #allocation7 [shape = 'u8[131072]{0}', space=vmem, size = 0x20000, scoped, tag = 'input window, operand 5, single buffered']
    #allocation8 [shape = 'u8[524288]{0}', space=vmem, size = 0x80000, scoped, tag = 'input window, operand 7, single buffered']
    #allocation9 [shape = 's32[1]{0}', space=sflag, size = 0x4, scoped, tag = 'scoped memory for tpu_custom_call.1']
    #allocation10 [shape = 'u8[2048]{0}', space=vmem, size = 0x800, scoped, tag = 'output window, operand 0, single buffered']
    %14 = vsyncpa [#allocation3], 0
    %15 = vsyncpa [#allocation6], 0
    %16 = vsyncpa [#allocation9], 0
    %17 = vsyncpa [#allocation4], 0
    // Predicated region
    $region2: #{tpu_custom_call.1} parent=1 // pred_check
      _
    $region3: #{tpu_custom_call.1} parent=1 // pred_check_branch
      %19 = sbr.rel (0) target = $region5
    $region4: #{tpu_custom_call.1} parent=1 // pred_region
      %s21 = ssub.s32 4096, 4096
      %22 = vsyncadd [#allocation3], %s21
      %s23 = sshll.u32 [#allocation2], 4
      %s24 = int_to_ptr.vmem [resolvable:$true] %s23
      %29 = dma.hbm_to_vmem [thread:$0]  %s0, 4096, %s24, [#allocation3], 128, 128, 8
    $region5: #{tpu_custom_call.1} parent=1 // pred_fallthru
      _
    // Predicated region
    $region6: #{tpu_custom_call.1} parent=1 // pred_check
      _
    $region7: #{tpu_custom_call.1} parent=1 // pred_check_branch
      %31 = sbr.rel (0) target = $region9
    $region8: #{tpu_custom_call.1} parent=1 // pred_region
      _
    $region9: #{tpu_custom_call.1} parent=1 // pred_fallthru
      _
    // Predicated region
    $region10: #{tpu_custom_call.1} parent=1 // pred_check
      _
    $region11: #{tpu_custom_call.1} parent=1 // pred_check_branch
      %33 = sbr.rel (0) target = $region13
    $region12: #{tpu_custom_call.1} parent=1 // pred_region
      _
    $region13: #{tpu_custom_call.1} parent=1 // pred_fallthru
      _
    // Predicated region
    $region14: #{tpu_custom_call.1} parent=1 // pred_check
      _
    $region15: #{tpu_custom_call.1} parent=1 // pred_check_branch
      %35 = sbr.rel (0) target = $region17
    $region16: #{tpu_custom_call.1} parent=1 // pred_region
      _
    $region17: #{tpu_custom_call.1} parent=1 // pred_fallthru
      _
    // Predicated region
    $region18: #{tpu_custom_call.1} parent=1 // pred_check
      _
    $region19: #{tpu_custom_call.1} parent=1 // pred_check_branch
      %37 = sbr.rel (0) target = $region21
    $region20: #{tpu_custom_call.1} parent=1 // pred_region
      %s39 = ssub.s32 4096, 4096
      %40 = vsyncadd [#allocation6], %s39
      %s41 = sshll.u32 [#allocation5], 4
      %s42 = int_to_ptr.vmem [resolvable:$true] %s41
      %47 = dma.hbm_to_vmem [thread:$0]  %s4, 4096, %s42, [#allocation6], 128, 128, 8
    $region21: #{tpu_custom_call.1} parent=1 // pred_fallthru
      _
    // Predicated region
    $region22: #{tpu_custom_call.1} parent=1 // pred_check
      _
    $region23: #{tpu_custom_call.1} parent=1 // pred_check_branch
      %49 = sbr.rel (0) target = $region25
    $region24: #{tpu_custom_call.1} parent=1 // pred_region
      %s51 = ssub.s32 4096, 4096
      %52 = vsyncadd [#allocation6], %s51
      %s53 = sshll.u32 [#allocation7], 4
      %s54 = int_to_ptr.vmem [resolvable:$true] %s53
      %59 = dma.hbm_to_vmem [thread:$0]  %s5, 4096, %s54, [#allocation6], 256, 256, 16
    $region25: #{tpu_custom_call.1} parent=1 // pred_fallthru
      _
    // Predicated region
    $region26: #{tpu_custom_call.1} parent=1 // pred_check
      _
    $region27: #{tpu_custom_call.1} parent=1 // pred_check_branch
      %61 = sbr.rel (0) target = $region29
    $region28: #{tpu_custom_call.1} parent=1 // pred_region
      _
    $region29: #{tpu_custom_call.1} parent=1 // pred_fallthru
      _
    // Predicated region
    $region30: #{tpu_custom_call.1} parent=1 // pred_check
      _
    $region31: #{tpu_custom_call.1} parent=1 // pred_check_branch
      %63 = sbr.rel (0) target = $region33
    $region32: #{tpu_custom_call.1} parent=1 // pred_region
      %s65 = ssub.s32 16384, 16384
      %66 = vsyncadd [#allocation9], %s65
      %s67 = sshll.u32 [#allocation8], 4
      %s68 = int_to_ptr.vmem [resolvable:$true] %s67
      %73 = dma.hbm_to_vmem [thread:$0]  %s7, 16384, %s68, [#allocation9], 128, 128, 8
    $region33: #{tpu_custom_call.1} parent=1 // pred_fallthru
      _
    // Predicated region
    $region34: #{tpu_custom_call.1} parent=1 // pred_check
      _
    $region35: #{tpu_custom_call.1} parent=1 // pred_check_branch
      %75 = sbr.rel (0) target = $region37
    $region36: #{tpu_custom_call.1} parent=1 // pred_region
      _
    $region37: #{tpu_custom_call.1} parent=1 // pred_fallthru
      _
    // Predicated region
    $region38: #{tpu_custom_call.1} parent=1 // pred_check
      _
    $region39: #{tpu_custom_call.1} parent=1 // pred_check_branch
      %77 = sbr.rel (0) target = $region41
    $region40: #{tpu_custom_call.1} parent=1 // pred_region
      %78 = dma.done [#allocation3], 4096
    $region41: #{tpu_custom_call.1} parent=1 // pred_fallthru
      _
    // Predicated region
    $region42: #{tpu_custom_call.1} parent=1 // pred_check
      _
    $region43: #{tpu_custom_call.1} parent=1 // pred_check_branch
      %80 = sbr.rel (0) target = $region45
    $region44: #{tpu_custom_call.1} parent=1 // pred_region
      %81 = dma.done [#allocation6], 4096
    $region45: #{tpu_custom_call.1} parent=1 // pred_fallthru
      _
    // Predicated region
    $region46: #{tpu_custom_call.1} parent=1 // pred_check
      _
    $region47: #{tpu_custom_call.1} parent=1 // pred_check_branch
      %83 = sbr.rel (0) target = $region49
    $region48: #{tpu_custom_call.1} parent=1 // pred_region
      %84 = dma.done [#allocation6], 4096
    $region49: #{tpu_custom_call.1} parent=1 // pred_fallthru
      _
    // Predicated region
    $region50: #{tpu_custom_call.1} parent=1 // pred_check
      _
    $region51: #{tpu_custom_call.1} parent=1 // pred_check_branch
      %86 = sbr.rel (0) target = $region53
    $region52: #{tpu_custom_call.1} parent=1 // pred_region
      %87 = dma.done [#allocation9], 16384
    $region53: #{tpu_custom_call.1} parent=1 // pred_fallthru
      _
    %v88 = vld [vmem:[#allocation2] sm:$0xff]
    %v89 = vld [vmem:[#allocation2 + $0x8] sm:$0xff]
    %v90 = vld [vmem:[#allocation2 + $0x10] sm:$0xff]
    %v91 = vld [vmem:[#allocation2 + $0x18] sm:$0xff]
    %v92 = vld [vmem:[#allocation2 + $0x20] sm:$0xff]
    %v93 = vld [vmem:[#allocation2 + $0x28] sm:$0xff]
    %v94 = vld [vmem:[#allocation2 + $0x30] sm:$0xff]
    %v95 = vld [vmem:[#allocation2 + $0x38] sm:$0xff]
    %v96 = vld [vmem:[#allocation2 + $0x40] sm:$0xff]
    %v97 = vld [vmem:[#allocation2 + $0x48] sm:$0xff]
    %v98 = vld [vmem:[#allocation2 + $0x50] sm:$0xff]
    %v99 = vld [vmem:[#allocation2 + $0x58] sm:$0xff]
    %v100 = vld [vmem:[#allocation2 + $0x60] sm:$0xff]
    %v101 = vld [vmem:[#allocation2 + $0x68] sm:$0xff]
    %v102 = vld [vmem:[#allocation2 + $0x70] sm:$0xff]
    %v103 = vld [vmem:[#allocation2 + $0x78] sm:$0xff]
    %v104 = vld [vmem:[#allocation2 + $0x80] sm:$0xff]
    %v105 = vld [vmem:[#allocation2 + $0x88] sm:$0xff]
    %v106 = vld [vmem:[#allocation2 + $0x90] sm:$0xff]
    %v107 = vld [vmem:[#allocation2 + $0x98] sm:$0xff]
    %v108 = vld [vmem:[#allocation2 + $0xa0] sm:$0xff]
    %v109 = vld [vmem:[#allocation2 + $0xa8] sm:$0xff]
    %v110 = vld [vmem:[#allocation2 + $0xb0] sm:$0xff]
    %v111 = vld [vmem:[#allocation2 + $0xb8] sm:$0xff]
    %v112 = vld [vmem:[#allocation2 + $0xc0] sm:$0xff]
    %v113 = vld [vmem:[#allocation2 + $0xc8] sm:$0xff]
    %v114 = vld [vmem:[#allocation2 + $0xd0] sm:$0xff]
    %v115 = vld [vmem:[#allocation2 + $0xd8] sm:$0xff]
    %v116 = vld [vmem:[#allocation2 + $0xe0] sm:$0xff]
    %v117 = vld [vmem:[#allocation2 + $0xe8] sm:$0xff]
    %v118 = vld [vmem:[#allocation2 + $0xf0] sm:$0xff]
    %v119 = vld [vmem:[#allocation2 + $0xf8] sm:$0xff]
    %v120 = vld [vmem:[%s1] sm:$0x1]
    %v121 = vld [vmem:[%s1 + $0x1] sm:$0x1]
    %v122 = vld [vmem:[%s1 + $0x2] sm:$0x3]
    %v123 = vld [vmem:[%s1 + $0x8] sm:$0xff]
    %v124 = vld [vmem:[%s1 + $0x10] sm:$0xff]
    %125 = vmatprep.subr.mxu0 0.0
    %v126 = vand.u32 %v103, 4294901760
    %127 = vmatpush1.xpose.msra.mxu0 %v126
    %128 = vmatprep.subr.mxu0 0.0
    %v129 = vand.u32 %v102, 4294901760
    %130 = vmatpush1.xpose.msra.mxu0 %v129
    %131 = vmatprep.subr.mxu0 0.0
    %v132 = vand.u32 %v101, 4294901760
    %133 = vmatpush1.xpose.msra.mxu0 %v132
    %134 = vmatprep.subr.mxu0 0.0
    %v135 = vand.u32 %v100, 4294901760
    %136 = vmatpush1.xpose.msra.mxu0 %v135
    %137 = vmatprep.subr.mxu0 0.0
    %v138 = vand.u32 %v99, 4294901760
    %139 = vmatpush1.xpose.msra.mxu0 %v138
    %140 = vmatprep.subr.mxu0 0.0
    %v141 = vand.u32 %v98, 4294901760
    %142 = vmatpush1.xpose.msra.mxu0 %v141
    %143 = vmatprep.subr.mxu0 0.0
    %v144 = vand.u32 %v97, 4294901760
    %145 = vmatpush1.xpose.msra.mxu0 %v144
    %146 = vmatprep.subr.mxu0 0.0
    %v147 = vand.u32 %v96, 4294901760
    %148 = vmatpush1.xpose.msra.mxu0 %v147
    %149 = vmatprep.subr.mxu0 0.0
    %v150 = vand.u32 %v95, 4294901760
    %151 = vmatpush1.xpose.msra.mxu0 %v150
    %152 = vmatprep.subr.mxu0 0.0
    %v153 = vand.u32 %v94, 4294901760
    %154 = vmatpush1.xpose.msra.mxu0 %v153
    %155 = vmatprep.subr.mxu0 0.0
    %v156 = vand.u32 %v93, 4294901760
    %157 = vmatpush1.xpose.msra.mxu0 %v156
    %158 = vmatprep.subr.mxu0 0.0
    %v159 = vand.u32 %v92, 4294901760
    %160 = vmatpush1.xpose.msra.mxu0 %v159
    %161 = vmatprep.subr.mxu0 0.0
    %v162 = vand.u32 %v91, 4294901760
    %163 = vmatpush1.xpose.msra.mxu0 %v162
    %164 = vmatprep.subr.mxu0 0.0
    %v165 = vand.u32 %v90, 4294901760
    %166 = vmatpush1.xpose.msra.mxu0 %v165
    %167 = vmatprep.subr.mxu0 0.0
    %v168 = vand.u32 %v89, 4294901760
    %169 = vmatpush1.xpose.msra.mxu0 %v168
    %170 = vmatprep.subr.mxu0 0.0
    %v171 = vand.u32 %v88, 4294901760
    %172 = vmatpush1.xpose.msra.mxu0 %v171
    %173 = vmatprep.subr.mxu0 0.0
    %v174 = vand.u32 %v119, 4294901760
    %175 = vmatpush2.xpose.msra.mxu0 %v174
    %176 = vmatprep.subr.mxu0 0.0
    %v177 = vand.u32 %v118, 4294901760
    %178 = vmatpush2.xpose.msra.mxu0 %v177
    %179 = vmatprep.subr.mxu0 0.0
    %v180 = vand.u32 %v117, 4294901760
    %181 = vmatpush2.xpose.msra.mxu0 %v180
    %182 = vmatprep.subr.mxu0 0.0
    %v183 = vand.u32 %v116, 4294901760
    %184 = vmatpush2.xpose.msra.mxu0 %v183
    %185 = vmatprep.subr.mxu0 0.0
    %v186 = vand.u32 %v115, 4294901760
    %187 = vmatpush2.xpose.msra.mxu0 %v186
    %188 = vmatprep.subr.mxu0 0.0
    %v189 = vand.u32 %v114, 4294901760
    %190 = vmatpush2.xpose.msra.mxu0 %v189
    %191 = vmatprep.subr.mxu0 0.0
    %v192 = vand.u32 %v113, 4294901760
    %193 = vmatpush2.xpose.msra.mxu0 %v192
    %194 = vmatprep.subr.mxu0 0.0
    %v195 = vand.u32 %v112, 4294901760
    %196 = vmatpush2.xpose.msra.mxu0 %v195
    %197 = vmatprep.subr.mxu0 0.0
    %v198 = vand.u32 %v111, 4294901760
    %199 = vmatpush2.xpose.msra.mxu0 %v198
    %200 = vmatprep.subr.mxu0 0.0
    %v201 = vand.u32 %v110, 4294901760
    %202 = vmatpush2.xpose.msra.mxu0 %v201
    %203 = vmatprep.subr.mxu0 0.0
    %v204 = vand.u32 %v109, 4294901760
    %205 = vmatpush2.xpose.msra.mxu0 %v204
    %206 = vmatprep.subr.mxu0 0.0
    %v207 = vand.u32 %v108, 4294901760
    %208 = vmatpush2.xpose.msra.mxu0 %v207
    %209 = vmatprep.subr.mxu0 0.0
    %v210 = vand.u32 %v107, 4294901760
    %211 = vmatpush2.xpose.msra.mxu0 %v210
    %212 = vmatprep.subr.mxu0 0.0
    %v213 = vand.u32 %v106, 4294901760
    %214 = vmatpush2.xpose.msra.mxu0 %v213
    %215 = vmatprep.subr.mxu0 0.0
    %v216 = vand.u32 %v105, 4294901760
    %217 = vmatpush2.xpose.msra.mxu0 %v216
    %218 = vmatprep.subr.mxu0 0.0
    %v219 = vand.u32 %v104, 4294901760
    %220 = vmatpush2.xpose.msra.mxu0 %v219
    %221 = vmatprep.mubr.f32.mxu0 0.0
    %v222 = vand.u32 %v122, 4294901760
    %v223 = vsub.f32 %v122, %v222
    %v224 = vand.u32 %v223, 4294901760
    %v225 = vsub.f32 %v223, %v224
    %v226 = vand.u32 %v225, 4294901760
    %227 = vmatmul.mubr.f32.gmra.mxu0 %v226
    %v228 = vpop.f32.mrf.mxu0
    %v229 = vadd.f32 0.0, %v228
    %v230 = vpop.f32.mrf.mxu0
    %v231 = vadd.f32 0.0, %v230
    %232 = vdwg.mxu0
    %233 = vmatprep.subr.mxu0 0.0
    %v234 = vand.u32 %v103, 4294901760
    %v235 = vsub.f32 %v103, %v234
    %v236 = vand.u32 %v235, 4294901760
    %v237 = vsub.f32 %v235, %v236
    %v238 = vand.u32 %v237, 4294901760
    %239 = vmatpush1.xpose.msra.mxu0 %v238
    %240 = vmatprep.subr.mxu0 0.0
    %v241 = vand.u32 %v102, 4294901760
    %v242 = vsub.f32 %v102, %v241
    %v243 = vand.u32 %v242, 4294901760
    %v244 = vsub.f32 %v242, %v243
    %v245 = vand.u32 %v244, 4294901760
    %246 = vmatpush1.xpose.msra.mxu0 %v245
    %247 = vmatprep.subr.mxu0 0.0
    %v248 = vand.u32 %v101, 4294901760
    %v249 = vsub.f32 %v101, %v248
    %v250 = vand.u32 %v249, 4294901760
    %v251 = vsub.f32 %v249, %v250
    %v252 = vand.u32 %v251, 4294901760
    %253 = vmatpush1.xpose.msra.mxu0 %v252
    %254 = vmatprep.subr.mxu0 0.0
    %v255 = vand.u32 %v100, 4294901760
    %v256 = vsub.f32 %v100, %v255
    %v257 = vand.u32 %v256, 4294901760
    %v258 = vsub.f32 %v256, %v257
    %v259 = vand.u32 %v258, 4294901760
    %260 = vmatpush1.xpose.msra.mxu0 %v259
    %261 = vmatprep.subr.mxu0 0.0
    %v262 = vand.u32 %v99, 4294901760
    %v263 = vsub.f32 %v99, %v262
    %v264 = vand.u32 %v263, 4294901760
    %v265 = vsub.f32 %v263, %v264
    %v266 = vand.u32 %v265, 4294901760
    %267 = vmatpush1.xpose.msra.mxu0 %v266
    %268 = vmatprep.subr.mxu0 0.0
    %v269 = vand.u32 %v98, 4294901760
    %v270 = vsub.f32 %v98, %v269
    %v271 = vand.u32 %v270, 4294901760
    %v272 = vsub.f32 %v270, %v271
    %v273 = vand.u32 %v272, 4294901760
    %274 = vmatpush1.xpose.msra.mxu0 %v273
    %275 = vmatprep.subr.mxu0 0.0
    %v276 = vand.u32 %v97, 4294901760
    %v277 = vsub.f32 %v97, %v276
    %v278 = vand.u32 %v277, 4294901760
    %v279 = vsub.f32 %v277, %v278
    %v280 = vand.u32 %v279, 4294901760
    %281 = vmatpush1.xpose.msra.mxu0 %v280
    %282 = vmatprep.subr.mxu0 0.0
    %v283 = vand.u32 %v96, 4294901760
    %v284 = vsub.f32 %v96, %v283
    %v285 = vand.u32 %v284, 4294901760
    %v286 = vsub.f32 %v284, %v285
    %v287 = vand.u32 %v286, 4294901760
    %288 = vmatpush1.xpose.msra.mxu0 %v287
    %289 = vmatprep.subr.mxu0 0.0
    %v290 = vand.u32 %v95, 4294901760
    %v291 = vsub.f32 %v95, %v290
    %v292 = vand.u32 %v291, 4294901760
    %v293 = vsub.f32 %v291, %v292
    %v294 = vand.u32 %v293, 4294901760
    %295 = vmatpush1.xpose.msra.mxu0 %v294
    %296 = vmatprep.subr.mxu0 0.0
    %v297 = vand.u32 %v94, 4294901760
    %v298 = vsub.f32 %v94, %v297
    %v299 = vand.u32 %v298, 4294901760
    %v300 = vsub.f32 %v298, %v299
    %v301 = vand.u32 %v300, 4294901760
    %302 = vmatpush1.xpose.msra.mxu0 %v301
    %303 = vmatprep.subr.mxu0 0.0
    %v304 = vand.u32 %v93, 4294901760
    %v305 = vsub.f32 %v93, %v304
    %v306 = vand.u32 %v305, 4294901760
    %v307 = vsub.f32 %v305, %v306
    %v308 = vand.u32 %v307, 4294901760
    %309 = vmatpush1.xpose.msra.mxu0 %v308
    %310 = vmatprep.subr.mxu0 0.0
    %v311 = vand.u32 %v92, 4294901760
    %v312 = vsub.f32 %v92, %v311
    %v313 = vand.u32 %v312, 4294901760
    %v314 = vsub.f32 %v312, %v313
    %v315 = vand.u32 %v314, 4294901760
    %316 = vmatpush1.xpose.msra.mxu0 %v315
    %317 = vmatprep.subr.mxu0 0.0
    %v318 = vand.u32 %v91, 4294901760
    %v319 = vsub.f32 %v91, %v318
    %v320 = vand.u32 %v319, 4294901760
    %v321 = vsub.f32 %v319, %v320
    %v322 = vand.u32 %v321, 4294901760
    %323 = vmatpush1.xpose.msra.mxu0 %v322
    %324 = vmatprep.subr.mxu0 0.0
    %v325 = vand.u32 %v90, 4294901760
    %v326 = vsub.f32 %v90, %v325
    %v327 = vand.u32 %v326, 4294901760
    %v328 = vsub.f32 %v326, %v327
    %v329 = vand.u32 %v328, 4294901760
    %330 = vmatpush1.xpose.msra.mxu0 %v329
    %331 = vmatprep.subr.mxu0 0.0
    %v332 = vand.u32 %v89, 4294901760
    %v333 = vsub.f32 %v89, %v332
    %v334 = vand.u32 %v333, 4294901760
    %v335 = vsub.f32 %v333, %v334
    %v336 = vand.u32 %v335, 4294901760
    %337 = vmatpush1.xpose.msra.mxu0 %v336
    %338 = vmatprep.subr.mxu0 0.0
    %v339 = vand.u32 %v88, 4294901760
    %v340 = vsub.f32 %v88, %v339
    %v341 = vand.u32 %v340, 4294901760
    %v342 = vsub.f32 %v340, %v341
    %v343 = vand.u32 %v342, 4294901760
    %344 = vmatpush1.xpose.msra.mxu0 %v343
    %345 = vmatprep.subr.mxu0 0.0
    %v346 = vand.u32 %v119, 4294901760
    %v347 = vsub.f32 %v119, %v346
    %v348 = vand.u32 %v347, 4294901760
    %v349 = vsub.f32 %v347, %v348
    %v350 = vand.u32 %v349, 4294901760
    %351 = vmatpush2.xpose.msra.mxu0 %v350
    %352 = vmatprep.subr.mxu0 0.0
    %v353 = vand.u32 %v118, 4294901760
    %v354 = vsub.f32 %v118, %v353
    %v355 = vand.u32 %v354, 4294901760
    %v356 = vsub.f32 %v354, %v355
    %v357 = vand.u32 %v356, 4294901760
    %358 = vmatpush2.xpose.msra.mxu0 %v357
    %359 = vmatprep.subr.mxu0 0.0
    %v360 = vand.u32 %v117, 4294901760
    %v361 = vsub.f32 %v117, %v360
    %v362 = vand.u32 %v361, 4294901760
    %v363 = vsub.f32 %v361, %v362
    %v364 = vand.u32 %v363, 4294901760
    %365 = vmatpush2.xpose.msra.mxu0 %v364
    %366 = vmatprep.subr.mxu0 0.0
    %v367 = vand.u32 %v116, 4294901760
    %v368 = vsub.f32 %v116, %v367
    %v369 = vand.u32 %v368, 4294901760
    %v370 = vsub.f32 %v368, %v369
    %v371 = vand.u32 %v370, 4294901760
    %372 = vmatpush2.xpose.msra.mxu0 %v371
    %373 = vmatprep.subr.mxu0 0.0
    %v374 = vand.u32 %v115, 4294901760
    %v375 = vsub.f32 %v115, %v374
    %v376 = vand.u32 %v375, 4294901760
    %v377 = vsub.f32 %v375, %v376
    %v378 = vand.u32 %v377, 4294901760
    %379 = vmatpush2.xpose.msra.mxu0 %v378
    %380 = vmatprep.subr.mxu0 0.0
    %v381 = vand.u32 %v114, 4294901760
    %v382 = vsub.f32 %v114, %v381
    %v383 = vand.u32 %v382, 4294901760
    %v384 = vsub.f32 %v382, %v383
    %v385 = vand.u32 %v384, 4294901760
    %386 = vmatpush2.xpose.msra.mxu0 %v385
    %387 = vmatprep.subr.mxu0 0.0
    %v388 = vand.u32 %v113, 4294901760
    %v389 = vsub.f32 %v113, %v388
    %v390 = vand.u32 %v389, 4294901760
    %v391 = vsub.f32 %v389, %v390
    %v392 = vand.u32 %v391, 4294901760
    %393 = vmatpush2.xpose.msra.mxu0 %v392
    %394 = vmatprep.subr.mxu0 0.0
    %v395 = vand.u32 %v112, 4294901760
    %v396 = vsub.f32 %v112, %v395
    %v397 = vand.u32 %v396, 4294901760
    %v398 = vsub.f32 %v396, %v397
    %v399 = vand.u32 %v398, 4294901760
    %400 = vmatpush2.xpose.msra.mxu0 %v399
    %401 = vmatprep.subr.mxu0 0.0
    %v402 = vand.u32 %v111, 4294901760
    %v403 = vsub.f32 %v111, %v402
    %v404 = vand.u32 %v403, 4294901760
    %v405 = vsub.f32 %v403, %v404
    %v406 = vand.u32 %v405, 4294901760
    %407 = vmatpush2.xpose.msra.mxu0 %v406
    %408 = vmatprep.subr.mxu0 0.0
    %v409 = vand.u32 %v110, 4294901760
    %v410 = vsub.f32 %v110, %v409
    %v411 = vand.u32 %v410, 4294901760
    %v412 = vsub.f32 %v410, %v411
    %v413 = vand.u32 %v412, 4294901760
    %414 = vmatpush2.xpose.msra.mxu0 %v413
    %415 = vmatprep.subr.mxu0 0.0
    %v416 = vand.u32 %v109, 4294901760
    %v417 = vsub.f32 %v109, %v416
    %v418 = vand.u32 %v417, 4294901760
    %v419 = vsub.f32 %v417, %v418
    %v420 = vand.u32 %v419, 4294901760
    %421 = vmatpush2.xpose.msra.mxu0 %v420
    %422 = vmatprep.subr.mxu0 0.0
    %v423 = vand.u32 %v108, 4294901760
    %v424 = vsub.f32 %v108, %v423
    %v425 = vand.u32 %v424, 4294901760
    %v426 = vsub.f32 %v424, %v425
    %v427 = vand.u32 %v426, 4294901760
    %428 = vmatpush2.xpose.msra.mxu0 %v427
    %429 = vmatprep.subr.mxu0 0.0
    %v430 = vand.u32 %v107, 4294901760
    %v431 = vsub.f32 %v107, %v430
    %v432 = vand.u32 %v431, 4294901760
    %v433 = vsub.f32 %v431, %v432
    %v434 = vand.u32 %v433, 4294901760
    %435 = vmatpush2.xpose.msra.mxu0 %v434
    %436 = vmatprep.subr.mxu0 0.0
    %v437 = vand.u32 %v106, 4294901760
    %v438 = vsub.f32 %v106, %v437
    %v439 = vand.u32 %v438, 4294901760
    %v440 = vsub.f32 %v438, %v439
    %v441 = vand.u32 %v440, 4294901760
    %442 = vmatpush2.xpose.msra.mxu0 %v441
    %443 = vmatprep.subr.mxu0 0.0
    %v444 = vand.u32 %v105, 4294901760
    %v445 = vsub.f32 %v105, %v444
    %v446 = vand.u32 %v445, 4294901760
    %v447 = vsub.f32 %v445, %v446
    %v448 = vand.u32 %v447, 4294901760
    %449 = vmatpush2.xpose.msra.mxu0 %v448
    %450 = vmatprep.subr.mxu0 0.0
    %v451 = vand.u32 %v104, 4294901760
    %v452 = vsub.f32 %v104, %v451
    %v453 = vand.u32 %v452, 4294901760
    %v454 = vsub.f32 %v452, %v453
    %v455 = vand.u32 %v454, 4294901760
    %456 = vmatpush2.xpose.msra.mxu0 %v455
    %457 = vmatprep.mubr.f32.mxu0 0.0
    %v458 = vand.u32 %v122, 4294901760
    %459 = vmatmul.mubr.f32.gmra.mxu0 %v458
    %v460 = vpop.f32.mrf.mxu0
    %v461 = vadd.f32 %v229, %v460
    %v462 = vpop.f32.mrf.mxu0
    %v463 = vadd.f32 %v231, %v462
    %464 = vdwg.mxu0
    %465 = vmatprep.subr.mxu0 0.0
    %v466 = vand.u32 %v103, 4294901760
    %v467 = vsub.f32 %v103, %v466
    %468 = vmatpush1.xpose.msra.mxu0 %v467
    %469 = vmatprep.subr.mxu0 0.0
    %v470 = vand.u32 %v102, 4294901760
    %v471 = vsub.f32 %v102, %v470
    %472 = vmatpush1.xpose.msra.mxu0 %v471
    %473 = vmatprep.subr.mxu0 0.0
    %v474 = vand.u32 %v101, 4294901760
    %v475 = vsub.f32 %v101, %v474
    %476 = vmatpush1.xpose.msra.mxu0 %v475
    %477 = vmatprep.subr.mxu0 0.0
    %v478 = vand.u32 %v100, 4294901760
    %v479 = vsub.f32 %v100, %v478
    %480 = vmatpush1.xpose.msra.mxu0 %v479
    %481 = vmatprep.subr.mxu0 0.0
    %v482 = vand.u32 %v99, 4294901760
    %v483 = vsub.f32 %v99, %v482
    %484 = vmatpush1.xpose.msra.mxu0 %v483
    %485 = vmatprep.subr.mxu0 0.0
    %v486 = vand.u32 %v98, 4294901760
    %v487 = vsub.f32 %v98, %v486
    %488 = vmatpush1.xpose.msra.mxu0 %v487
    %489 = vmatprep.subr.mxu0 0.0
    %v490 = vand.u32 %v97, 4294901760
    %v491 = vsub.f32 %v97, %v490
    %492 = vmatpush1.xpose.msra.mxu0 %v491
    %493 = vmatprep.subr.mxu0 0.0
    %v494 = vand.u32 %v96, 4294901760
    %v495 = vsub.f32 %v96, %v494
    %496 = vmatpush1.xpose.msra.mxu0 %v495
    %497 = vmatprep.subr.mxu0 0.0
    %v498 = vand.u32 %v95, 4294901760
    %v499 = vsub.f32 %v95, %v498
    %500 = vmatpush1.xpose.msra.mxu0 %v499
    %501 = vmatprep.subr.mxu0 0.0
    %v502 = vand.u32 %v94, 4294901760
    %v503 = vsub.f32 %v94, %v502
    %504 = vmatpush1.xpose.msra.mxu0 %v503
    %505 = vmatprep.subr.mxu0 0.0
    %v506 = vand.u32 %v93, 4294901760
    %v507 = vsub.f32 %v93, %v506
    %508 = vmatpush1.xpose.msra.mxu0 %v507
    %509 = vmatprep.subr.mxu0 0.0
    %v510 = vand.u32 %v92, 4294901760
    %v511 = vsub.f32 %v92, %v510
    %512 = vmatpush1.xpose.msra.mxu0 %v511
    %513 = vmatprep.subr.mxu0 0.0
    %v514 = vand.u32 %v91, 4294901760
    %v515 = vsub.f32 %v91, %v514
    %516 = vmatpush1.xpose.msra.mxu0 %v515
    %517 = vmatprep.subr.mxu0 0.0
    %v518 = vand.u32 %v90, 4294901760
    %v519 = vsub.f32 %v90, %v518
    %520 = vmatpush1.xpose.msra.mxu0 %v519
    %521 = vmatprep.subr.mxu0 0.0
    %v522 = vand.u32 %v89, 4294901760
    %v523 = vsub.f32 %v89, %v522
    %524 = vmatpush1.xpose.msra.mxu0 %v523
    %525 = vmatprep.subr.mxu0 0.0
    %v526 = vand.u32 %v88, 4294901760
    %v527 = vsub.f32 %v88, %v526
    %528 = vmatpush1.xpose.msra.mxu0 %v527
    %529 = vmatprep.subr.mxu0 0.0
    %v530 = vand.u32 %v119, 4294901760
    %v531 = vsub.f32 %v119, %v530
    %532 = vmatpush2.xpose.msra.mxu0 %v531
    %533 = vmatprep.subr.mxu0 0.0
    %v534 = vand.u32 %v118, 4294901760
    %v535 = vsub.f32 %v118, %v534
    %536 = vmatpush2.xpose.msra.mxu0 %v535
    %537 = vmatprep.subr.mxu0 0.0
    %v538 = vand.u32 %v117, 4294901760
    %v539 = vsub.f32 %v117, %v538
    %540 = vmatpush2.xpose.msra.mxu0 %v539
    %541 = vmatprep.subr.mxu0 0.0
    %v542 = vand.u32 %v116, 4294901760
    %v543 = vsub.f32 %v116, %v542
    %544 = vmatpush2.xpose.msra.mxu0 %v543
    %545 = vmatprep.subr.mxu0 0.0
    %v546 = vand.u32 %v115, 4294901760
    %v547 = vsub.f32 %v115, %v546
    %548 = vmatpush2.xpose.msra.mxu0 %v547
    %549 = vmatprep.subr.mxu0 0.0
    %v550 = vand.u32 %v114, 4294901760
    %v551 = vsub.f32 %v114, %v550
    %552 = vmatpush2.xpose.msra.mxu0 %v551
    %553 = vmatprep.subr.mxu0 0.0
    %v554 = vand.u32 %v113, 4294901760
    %v555 = vsub.f32 %v113, %v554
    %556 = vmatpush2.xpose.msra.mxu0 %v555
    %557 = vmatprep.subr.mxu0 0.0
    %v558 = vand.u32 %v112, 4294901760
    %v559 = vsub.f32 %v112, %v558
    %560 = vmatpush2.xpose.msra.mxu0 %v559
    %561 = vmatprep.subr.mxu0 0.0
    %v562 = vand.u32 %v111, 4294901760
    %v563 = vsub.f32 %v111, %v562
    %564 = vmatpush2.xpose.msra.mxu0 %v563
    %565 = vmatprep.subr.mxu0 0.0
    %v566 = vand.u32 %v110, 4294901760
    %v567 = vsub.f32 %v110, %v566
    %568 = vmatpush2.xpose.msra.mxu0 %v567
    %569 = vmatprep.subr.mxu0 0.0
    %v570 = vand.u32 %v109, 4294901760
    %v571 = vsub.f32 %v109, %v570
    %572 = vmatpush2.xpose.msra.mxu0 %v571
    %573 = vmatprep.subr.mxu0 0.0
    %v574 = vand.u32 %v108, 4294901760
    %v575 = vsub.f32 %v108, %v574
    %576 = vmatpush2.xpose.msra.mxu0 %v575
    %577 = vmatprep.subr.mxu0 0.0
    %v578 = vand.u32 %v107, 4294901760
    %v579 = vsub.f32 %v107, %v578
    %580 = vmatpush2.xpose.msra.mxu0 %v579
    %581 = vmatprep.subr.mxu0 0.0
    %v582 = vand.u32 %v106, 4294901760
    %v583 = vsub.f32 %v106, %v582
    %584 = vmatpush2.xpose.msra.mxu0 %v583
    %585 = vmatprep.subr.mxu0 0.0
    %v586 = vand.u32 %v105, 4294901760
    %v587 = vsub.f32 %v105, %v586
    %588 = vmatpush2.xpose.msra.mxu0 %v587
    %589 = vmatprep.subr.mxu0 0.0
    %v590 = vand.u32 %v104, 4294901760
    %v591 = vsub.f32 %v104, %v590
    %592 = vmatpush2.xpose.msra.mxu0 %v591
    %593 = vmatprep.mubr.f32.mxu0 0.0
    %v594 = vand.u32 %v122, 4294901760
    %v595 = vsub.f32 %v122, %v594
    %596 = vmatmul.mubr.f32.gmra.mxu0 %v595
    %v597 = vpop.f32.mrf.mxu0
    %v598 = vadd.f32 %v461, %v597
    %v599 = vpop.f32.mrf.mxu0
    %v600 = vadd.f32 %v463, %v599
    %601 = vdwg.mxu0
    %602 = vmatprep.subr.mxu0 0.0
    %v603 = vand.u32 %v103, 4294901760
    %604 = vmatpush1.xpose.msra.mxu0 %v603
    %605 = vmatprep.subr.mxu0 0.0
    %v606 = vand.u32 %v102, 4294901760
    %607 = vmatpush1.xpose.msra.mxu0 %v606
    %608 = vmatprep.subr.mxu0 0.0
    %v609 = vand.u32 %v101, 4294901760
    %610 = vmatpush1.xpose.msra.mxu0 %v609
    %611 = vmatprep.subr.mxu0 0.0
    %v612 = vand.u32 %v100, 4294901760
    %613 = vmatpush1.xpose.msra.mxu0 %v612
    %614 = vmatprep.subr.mxu0 0.0
    %v615 = vand.u32 %v99, 4294901760
    %616 = vmatpush1.xpose.msra.mxu0 %v615
    %617 = vmatprep.subr.mxu0 0.0
    %v618 = vand.u32 %v98, 4294901760
    %619 = vmatpush1.xpose.msra.mxu0 %v618
    %620 = vmatprep.subr.mxu0 0.0
    %v621 = vand.u32 %v97, 4294901760
    %622 = vmatpush1.xpose.msra.mxu0 %v621
    %623 = vmatprep.subr.mxu0 0.0
    %v624 = vand.u32 %v96, 4294901760
    %625 = vmatpush1.xpose.msra.mxu0 %v624
    %626 = vmatprep.subr.mxu0 0.0
    %v627 = vand.u32 %v95, 4294901760
    %628 = vmatpush1.xpose.msra.mxu0 %v627
    %629 = vmatprep.subr.mxu0 0.0
    %v630 = vand.u32 %v94, 4294901760
    %631 = vmatpush1.xpose.msra.mxu0 %v630
    %632 = vmatprep.subr.mxu0 0.0
    %v633 = vand.u32 %v93, 4294901760
    %634 = vmatpush1.xpose.msra.mxu0 %v633
    %635 = vmatprep.subr.mxu0 0.0
    %v636 = vand.u32 %v92, 4294901760
    %637 = vmatpush1.xpose.msra.mxu0 %v636
    %638 = vmatprep.subr.mxu0 0.0
    %v639 = vand.u32 %v91, 4294901760
    %640 = vmatpush1.xpose.msra.mxu0 %v639
    %641 = vmatprep.subr.mxu0 0.0
    %v642 = vand.u32 %v90, 4294901760
    %643 = vmatpush1.xpose.msra.mxu0 %v642
    %644 = vmatprep.subr.mxu0 0.0
    %v645 = vand.u32 %v89, 4294901760
    %646 = vmatpush1.xpose.msra.mxu0 %v645
    %647 = vmatprep.subr.mxu0 0.0
    %v648 = vand.u32 %v88, 4294901760
    %649 = vmatpush1.xpose.msra.mxu0 %v648
    %650 = vmatprep.subr.mxu0 0.0
    %v651 = vand.u32 %v119, 4294901760
    %652 = vmatpush2.xpose.msra.mxu0 %v651
    %653 = vmatprep.subr.mxu0 0.0
    %v654 = vand.u32 %v118, 4294901760
    %655 = vmatpush2.xpose.msra.mxu0 %v654
    %656 = vmatprep.subr.mxu0 0.0
    %v657 = vand.u32 %v117, 4294901760
    %658 = vmatpush2.xpose.msra.mxu0 %v657
    %659 = vmatprep.subr.mxu0 0.0
    %v660 = vand.u32 %v116, 4294901760
    %661 = vmatpush2.xpose.msra.mxu0 %v660
    %662 = vmatprep.subr.mxu0 0.0
    %v663 = vand.u32 %v115, 4294901760
    %664 = vmatpush2.xpose.msra.mxu0 %v663
    %665 = vmatprep.subr.mxu0 0.0
    %v666 = vand.u32 %v114, 4294901760
    %667 = vmatpush2.xpose.msra.mxu0 %v666
    %668 = vmatprep.subr.mxu0 0.0
    %v669 = vand.u32 %v113, 4294901760
    %670 = vmatpush2.xpose.msra.mxu0 %v669
    %671 = vmatprep.subr.mxu0 0.0
    %v672 = vand.u32 %v112, 4294901760
    %673 = vmatpush2.xpose.msra.mxu0 %v672
    %674 = vmatprep.subr.mxu0 0.0
    %v675 = vand.u32 %v111, 4294901760
    %676 = vmatpush2.xpose.msra.mxu0 %v675
    %677 = vmatprep.subr.mxu0 0.0
    %v678 = vand.u32 %v110, 4294901760
    %679 = vmatpush2.xpose.msra.mxu0 %v678
    %680 = vmatprep.subr.mxu0 0.0
    %v681 = vand.u32 %v109, 4294901760
    %682 = vmatpush2.xpose.msra.mxu0 %v681
    %683 = vmatprep.subr.mxu0 0.0
    %v684 = vand.u32 %v108, 4294901760
    %685 = vmatpush2.xpose.msra.mxu0 %v684
    %686 = vmatprep.subr.mxu0 0.0
    %v687 = vand.u32 %v107, 4294901760
    %688 = vmatpush2.xpose.msra.mxu0 %v687
    %689 = vmatprep.subr.mxu0 0.0
    %v690 = vand.u32 %v106, 4294901760
    %691 = vmatpush2.xpose.msra.mxu0 %v690
    %692 = vmatprep.subr.mxu0 0.0
    %v693 = vand.u32 %v105, 4294901760
    %694 = vmatpush2.xpose.msra.mxu0 %v693
    %695 = vmatprep.subr.mxu0 0.0
    %v696 = vand.u32 %v104, 4294901760
    %697 = vmatpush2.xpose.msra.mxu0 %v696
    %698 = vmatprep.mubr.f32.mxu0 0.0
    %v699 = vand.u32 %v122, 4294901760
    %v700 = vsub.f32 %v122, %v699
    %v701 = vand.u32 %v700, 4294901760
    %702 = vmatmul.mubr.f32.gmra.mxu0 %v701
    %v703 = vpop.f32.mrf.mxu0
    %v704 = vadd.f32 %v598, %v703
    %v705 = vpop.f32.mrf.mxu0
    %v706 = vadd.f32 %v600, %v705
    %707 = vdwg.mxu0
    %708 = vmatprep.subr.mxu0 0.0
    %v709 = vand.u32 %v103, 4294901760
    %v710 = vsub.f32 %v103, %v709
    %v711 = vand.u32 %v710, 4294901760
    %712 = vmatpush1.xpose.msra.mxu0 %v711
    %713 = vmatprep.subr.mxu0 0.0
    %v714 = vand.u32 %v102, 4294901760
    %v715 = vsub.f32 %v102, %v714
    %v716 = vand.u32 %v715, 4294901760
    %717 = vmatpush1.xpose.msra.mxu0 %v716
    %718 = vmatprep.subr.mxu0 0.0
    %v719 = vand.u32 %v101, 4294901760
    %v720 = vsub.f32 %v101, %v719
    %v721 = vand.u32 %v720, 4294901760
    %722 = vmatpush1.xpose.msra.mxu0 %v721
    %723 = vmatprep.subr.mxu0 0.0
    %v724 = vand.u32 %v100, 4294901760
    %v725 = vsub.f32 %v100, %v724
    %v726 = vand.u32 %v725, 4294901760
    %727 = vmatpush1.xpose.msra.mxu0 %v726
    %728 = vmatprep.subr.mxu0 0.0
    %v729 = vand.u32 %v99, 4294901760
    %v730 = vsub.f32 %v99, %v729
    %v731 = vand.u32 %v730, 4294901760
    %732 = vmatpush1.xpose.msra.mxu0 %v731
    %733 = vmatprep.subr.mxu0 0.0
    %v734 = vand.u32 %v98, 4294901760
    %v735 = vsub.f32 %v98, %v734
    %v736 = vand.u32 %v735, 4294901760
    %737 = vmatpush1.xpose.msra.mxu0 %v736
    %738 = vmatprep.subr.mxu0 0.0
    %v739 = vand.u32 %v97, 4294901760
    %v740 = vsub.f32 %v97, %v739
    %v741 = vand.u32 %v740, 4294901760
    %742 = vmatpush1.xpose.msra.mxu0 %v741
    %743 = vmatprep.subr.mxu0 0.0
    %v744 = vand.u32 %v96, 4294901760
    %v745 = vsub.f32 %v96, %v744
    %v746 = vand.u32 %v745, 4294901760
    %747 = vmatpush1.xpose.msra.mxu0 %v746
    %748 = vmatprep.subr.mxu0 0.0
    %v749 = vand.u32 %v95, 4294901760
    %v750 = vsub.f32 %v95, %v749
    %v751 = vand.u32 %v750, 4294901760
    %752 = vmatpush1.xpose.msra.mxu0 %v751
    %753 = vmatprep.subr.mxu0 0.0
    %v754 = vand.u32 %v94, 4294901760
    %v755 = vsub.f32 %v94, %v754
    %v756 = vand.u32 %v755, 4294901760
    %757 = vmatpush1.xpose.msra.mxu0 %v756
    %758 = vmatprep.subr.mxu0 0.0
    %v759 = vand.u32 %v93, 4294901760
    %v760 = vsub.f32 %v93, %v759
    %v761 = vand.u32 %v760, 4294901760
    %762 = vmatpush1.xpose.msra.mxu0 %v761
    %763 = vmatprep.subr.mxu0 0.0
    %v764 = vand.u32 %v92, 4294901760
    %v765 = vsub.f32 %v92, %v764
    %v766 = vand.u32 %v765, 4294901760
    %767 = vmatpush1.xpose.msra.mxu0 %v766
    %768 = vmatprep.subr.mxu0 0.0
    %v769 = vand.u32 %v91, 4294901760
    %v770 = vsub.f32 %v91, %v769
    %v771 = vand.u32 %v770, 4294901760
    %772 = vmatpush1.xpose.msra.mxu0 %v771
    %773 = vmatprep.subr.mxu0 0.0
    %v774 = vand.u32 %v90, 4294901760
    %v775 = vsub.f32 %v90, %v774
    %v776 = vand.u32 %v775, 4294901760
    %777 = vmatpush1.xpose.msra.mxu0 %v776
    %778 = vmatprep.subr.mxu0 0.0
    %v779 = vand.u32 %v89, 4294901760
    %v780 = vsub.f32 %v89, %v779
    %v781 = vand.u32 %v780, 4294901760
    %782 = vmatpush1.xpose.msra.mxu0 %v781
    %783 = vmatprep.subr.mxu0 0.0
    %v784 = vand.u32 %v88, 4294901760
    %v785 = vsub.f32 %v88, %v784
    %v786 = vand.u32 %v785, 4294901760
    %787 = vmatpush1.xpose.msra.mxu0 %v786
    %788 = vmatprep.subr.mxu0 0.0
    %v789 = vand.u32 %v119, 4294901760
    %v790 = vsub.f32 %v119, %v789
    %v791 = vand.u32 %v790, 4294901760
    %792 = vmatpush2.xpose.msra.mxu0 %v791
    %793 = vmatprep.subr.mxu0 0.0
    %v794 = vand.u32 %v118, 4294901760
    %v795 = vsub.f32 %v118, %v794
    %v796 = vand.u32 %v795, 4294901760
    %797 = vmatpush2.xpose.msra.mxu0 %v796
    %798 = vmatprep.subr.mxu0 0.0
    %v799 = vand.u32 %v117, 4294901760
    %v800 = vsub.f32 %v117, %v799
    %v801 = vand.u32 %v800, 4294901760
    %802 = vmatpush2.xpose.msra.mxu0 %v801
    %803 = vmatprep.subr.mxu0 0.0
    %v804 = vand.u32 %v116, 4294901760
    %v805 = vsub.f32 %v116, %v804
    %v806 = vand.u32 %v805, 4294901760
    %807 = vmatpush2.xpose.msra.mxu0 %v806
    %808 = vmatprep.subr.mxu0 0.0
    %v809 = vand.u32 %v115, 4294901760
    %v810 = vsub.f32 %v115, %v809
    %v811 = vand.u32 %v810, 4294901760
    %812 = vmatpush2.xpose.msra.mxu0 %v811
    %813 = vmatprep.subr.mxu0 0.0
    %v814 = vand.u32 %v114, 4294901760
    %v815 = vsub.f32 %v114, %v814
    %v816 = vand.u32 %v815, 4294901760
    %817 = vmatpush2.xpose.msra.mxu0 %v816
    %818 = vmatprep.subr.mxu0 0.0
    %v819 = vand.u32 %v113, 4294901760
    %v820 = vsub.f32 %v113, %v819
    %v821 = vand.u32 %v820, 4294901760
    %822 = vmatpush2.xpose.msra.mxu0 %v821
    %823 = vmatprep.subr.mxu0 0.0
    %v824 = vand.u32 %v112, 4294901760
    %v825 = vsub.f32 %v112, %v824
    %v826 = vand.u32 %v825, 4294901760
    %827 = vmatpush2.xpose.msra.mxu0 %v826
    %828 = vmatprep.subr.mxu0 0.0
    %v829 = vand.u32 %v111, 4294901760
    %v830 = vsub.f32 %v111, %v829
    %v831 = vand.u32 %v830, 4294901760
    %832 = vmatpush2.xpose.msra.mxu0 %v831
    %833 = vmatprep.subr.mxu0 0.0
    %v834 = vand.u32 %v110, 4294901760
    %v835 = vsub.f32 %v110, %v834
    %v836 = vand.u32 %v835, 4294901760
    %837 = vmatpush2.xpose.msra.mxu0 %v836
    %838 = vmatprep.subr.mxu0 0.0
    %v839 = vand.u32 %v109, 4294901760
    %v840 = vsub.f32 %v109, %v839
    %v841 = vand.u32 %v840, 4294901760
    %842 = vmatpush2.xpose.msra.mxu0 %v841
    %843 = vmatprep.subr.mxu0 0.0
    %v844 = vand.u32 %v108, 4294901760
    %v845 = vsub.f32 %v108, %v844
    %v846 = vand.u32 %v845, 4294901760
    %847 = vmatpush2.xpose.msra.mxu0 %v846
    %848 = vmatprep.subr.mxu0 0.0
    %v849 = vand.u32 %v107, 4294901760
    %v850 = vsub.f32 %v107, %v849
    %v851 = vand.u32 %v850, 4294901760
    %852 = vmatpush2.xpose.msra.mxu0 %v851
    %853 = vmatprep.subr.mxu0 0.0
    %v854 = vand.u32 %v106, 4294901760
    %v855 = vsub.f32 %v106, %v854
    %v856 = vand.u32 %v855, 4294901760
    %857 = vmatpush2.xpose.msra.mxu0 %v856
    %858 = vmatprep.subr.mxu0 0.0
    %v859 = vand.u32 %v105, 4294901760
    %v860 = vsub.f32 %v105, %v859
    %v861 = vand.u32 %v860, 4294901760
    %862 = vmatpush2.xpose.msra.mxu0 %v861
    %863 = vmatprep.subr.mxu0 0.0
    %v864 = vand.u32 %v104, 4294901760
    %v865 = vsub.f32 %v104, %v864
    %v866 = vand.u32 %v865, 4294901760
    %867 = vmatpush2.xpose.msra.mxu0 %v866
    %868 = vmatprep.mubr.f32.mxu0 0.0
    %v869 = vand.u32 %v122, 4294901760
    %870 = vmatmul.mubr.f32.gmra.mxu0 %v869
    %v871 = vpop.f32.mrf.mxu0
    %v872 = vadd.f32 %v704, %v871
    %v873 = vpop.f32.mrf.mxu0
    %v874 = vadd.f32 %v706, %v873
    %875 = vdwg.mxu0
    %876 = vmatprep.subr.mxu0 0.0
    %v877 = vand.u32 %v103, 4294901760
    %878 = vmatpush1.xpose.msra.mxu0 %v877
    %879 = vmatprep.subr.mxu0 0.0
    %v880 = vand.u32 %v102, 4294901760
    %881 = vmatpush1.xpose.msra.mxu0 %v880
    %882 = vmatprep.subr.mxu0 0.0
    %v883 = vand.u32 %v101, 4294901760
    %884 = vmatpush1.xpose.msra.mxu0 %v883
    %885 = vmatprep.subr.mxu0 0.0
    %v886 = vand.u32 %v100, 4294901760
    %887 = vmatpush1.xpose.msra.mxu0 %v886
    %888 = vmatprep.subr.mxu0 0.0
    %v889 = vand.u32 %v99, 4294901760
    %890 = vmatpush1.xpose.msra.mxu0 %v889
    %891 = vmatprep.subr.mxu0 0.0
    %v892 = vand.u32 %v98, 4294901760
    %893 = vmatpush1.xpose.msra.mxu0 %v892
    %894 = vmatprep.subr.mxu0 0.0
    %v895 = vand.u32 %v97, 4294901760
    %896 = vmatpush1.xpose.msra.mxu0 %v895
    %897 = vmatprep.subr.mxu0 0.0
    %v898 = vand.u32 %v96, 4294901760
    %899 = vmatpush1.xpose.msra.mxu0 %v898
    %900 = vmatprep.subr.mxu0 0.0
    %v901 = vand.u32 %v95, 4294901760
    %902 = vmatpush1.xpose.msra.mxu0 %v901
    %903 = vmatprep.subr.mxu0 0.0
    %v904 = vand.u32 %v94, 4294901760
    %905 = vmatpush1.xpose.msra.mxu0 %v904
    %906 = vmatprep.subr.mxu0 0.0
    %v907 = vand.u32 %v93, 4294901760
    %908 = vmatpush1.xpose.msra.mxu0 %v907
    %909 = vmatprep.subr.mxu0 0.0
    %v910 = vand.u32 %v92, 4294901760
    %911 = vmatpush1.xpose.msra.mxu0 %v910
    %912 = vmatprep.subr.mxu0 0.0
    %v913 = vand.u32 %v91, 4294901760
    %914 = vmatpush1.xpose.msra.mxu0 %v913
    %915 = vmatprep.subr.mxu0 0.0
    %v916 = vand.u32 %v90, 4294901760
    %917 = vmatpush1.xpose.msra.mxu0 %v916
    %918 = vmatprep.subr.mxu0 0.0
    %v919 = vand.u32 %v89, 4294901760
    %920 = vmatpush1.xpose.msra.mxu0 %v919
    %921 = vmatprep.subr.mxu0 0.0
    %v922 = vand.u32 %v88, 4294901760
    %923 = vmatpush1.xpose.msra.mxu0 %v922
    %924 = vmatprep.subr.mxu0 0.0
    %v925 = vand.u32 %v119, 4294901760
    %926 = vmatpush2.xpose.msra.mxu0 %v925
    %927 = vmatprep.subr.mxu0 0.0
    %v928 = vand.u32 %v118, 4294901760
    %929 = vmatpush2.xpose.msra.mxu0 %v928
    %930 = vmatprep.subr.mxu0 0.0
    %v931 = vand.u32 %v117, 4294901760
    %932 = vmatpush2.xpose.msra.mxu0 %v931
    %933 = vmatprep.subr.mxu0 0.0
    %v934 = vand.u32 %v116, 4294901760
    %935 = vmatpush2.xpose.msra.mxu0 %v934
    %936 = vmatprep.subr.mxu0 0.0
    %v937 = vand.u32 %v115, 4294901760
    %938 = vmatpush2.xpose.msra.mxu0 %v937
    %939 = vmatprep.subr.mxu0 0.0
    %v940 = vand.u32 %v114, 4294901760
    %941 = vmatpush2.xpose.msra.mxu0 %v940
    %942 = vmatprep.subr.mxu0 0.0
    %v943 = vand.u32 %v113, 4294901760
    %944 = vmatpush2.xpose.msra.mxu0 %v943
    %945 = vmatprep.subr.mxu0 0.0
    %v946 = vand.u32 %v112, 4294901760
    %947 = vmatpush2.xpose.msra.mxu0 %v946
    %948 = vmatprep.subr.mxu0 0.0
    %v949 = vand.u32 %v111, 4294901760
    %950 = vmatpush2.xpose.msra.mxu0 %v949
    %951 = vmatprep.subr.mxu0 0.0
    %v952 = vand.u32 %v110, 4294901760
    %953 = vmatpush2.xpose.msra.mxu0 %v952
    %954 = vmatprep.subr.mxu0 0.0
    %v955 = vand.u32 %v109, 4294901760
    %956 = vmatpush2.xpose.msra.mxu0 %v955
    %957 = vmatprep.subr.mxu0 0.0
    %v958 = vand.u32 %v108, 4294901760
    %959 = vmatpush2.xpose.msra.mxu0 %v958
    %960 = vmatprep.subr.mxu0 0.0
    %v961 = vand.u32 %v107, 4294901760
    %962 = vmatpush2.xpose.msra.mxu0 %v961
    %963 = vmatprep.subr.mxu0 0.0
    %v964 = vand.u32 %v106, 4294901760
    %965 = vmatpush2.xpose.msra.mxu0 %v964
    %966 = vmatprep.subr.mxu0 0.0
    %v967 = vand.u32 %v105, 4294901760
    %968 = vmatpush2.xpose.msra.mxu0 %v967
    %969 = vmatprep.subr.mxu0 0.0
    %v970 = vand.u32 %v104, 4294901760
    %971 = vmatpush2.xpose.msra.mxu0 %v970
    %972 = vmatprep.mubr.f32.mxu0 0.0
    %v973 = vand.u32 %v122, 4294901760
    %974 = vmatmul.mubr.f32.gmra.mxu0 %v973
    %v975 = vpop.f32.mrf.mxu0
    %v976 = vadd.f32 %v872, %v975
    %v977 = vpop.f32.mrf.mxu0
    %v978 = vadd.f32 %v874, %v977
    %979 = vdwg.mxu0
    %v980 = vld [vmem:[%s8 + $0x19] sm:$0x1]
    %v981 = vld [vmem:[#allocation5] sm:$0xff]
    %v982 = vld [vmem:[#allocation5 + $0x8] sm:$0xff]
    %v983 = vld [vmem:[#allocation5 + $0x10] sm:$0xff]
    %v984 = vld [vmem:[#allocation5 + $0x18] sm:$0xff]
    %v985 = vld [vmem:[#allocation5 + $0x20] sm:$0xff]
    %v986 = vld [vmem:[#allocation5 + $0x28] sm:$0xff]
    %v987 = vld [vmem:[#allocation5 + $0x30] sm:$0xff]
    %v988 = vld [vmem:[#allocation5 + $0x38] sm:$0xff]
    %v989 = vld [vmem:[#allocation5 + $0x40] sm:$0xff]
    %v990 = vld [vmem:[#allocation5 + $0x48] sm:$0xff]
    %v991 = vld [vmem:[#allocation5 + $0x50] sm:$0xff]
    %v992 = vld [vmem:[#allocation5 + $0x58] sm:$0xff]
    %v993 = vld [vmem:[#allocation5 + $0x60] sm:$0xff]
    %v994 = vld [vmem:[#allocation5 + $0x68] sm:$0xff]
    %v995 = vld [vmem:[#allocation5 + $0x70] sm:$0xff]
    %v996 = vld [vmem:[#allocation5 + $0x78] sm:$0xff]
    %v997 = vld [vmem:[#allocation5 + $0x80] sm:$0xff]
    %v998 = vld [vmem:[#allocation5 + $0x88] sm:$0xff]
    %v999 = vld [vmem:[#allocation5 + $0x90] sm:$0xff]
    %v1000 = vld [vmem:[#allocation5 + $0x98] sm:$0xff]
    %v1001 = vld [vmem:[#allocation5 + $0xa0] sm:$0xff]
    %v1002 = vld [vmem:[#allocation5 + $0xa8] sm:$0xff]
    %v1003 = vld [vmem:[#allocation5 + $0xb0] sm:$0xff]
    %v1004 = vld [vmem:[#allocation5 + $0xb8] sm:$0xff]
    %v1005 = vld [vmem:[#allocation5 + $0xc0] sm:$0xff]
    %v1006 = vld [vmem:[#allocation5 + $0xc8] sm:$0xff]
    %v1007 = vld [vmem:[#allocation5 + $0xd0] sm:$0xff]
    %v1008 = vld [vmem:[#allocation5 + $0xd8] sm:$0xff]
    %v1009 = vld [vmem:[#allocation5 + $0xe0] sm:$0xff]
    %v1010 = vld [vmem:[#allocation5 + $0xe8] sm:$0xff]
    %v1011 = vld [vmem:[#allocation5 + $0xf0] sm:$0xff]
    %v1012 = vld [vmem:[#allocation5 + $0xf8] sm:$0xff]
    %v1013 = vlaneseq
    %v1014 = vshrl.u32 %v1013, 7
    %v1015 = vsub.s32 0, %v1014
    %v1016 = vrot.slane %v980, %v1015
    %1017 = vmatprep.subr.mxu0 0.0
    %v1018 = vand.u32 %v996, 4294901760
    %1019 = vmatpush1.msra.mxu0 %v1018
    %1020 = vmatprep.subr.mxu0 0.0
    %v1021 = vand.u32 %v995, 4294901760
    %1022 = vmatpush1.msra.mxu0 %v1021
    %1023 = vmatprep.subr.mxu0 0.0
    %v1024 = vand.u32 %v994, 4294901760
    %1025 = vmatpush1.msra.mxu0 %v1024
    %1026 = vmatprep.subr.mxu0 0.0
    %v1027 = vand.u32 %v993, 4294901760
    %1028 = vmatpush1.msra.mxu0 %v1027
    %1029 = vmatprep.subr.mxu0 0.0
    %v1030 = vand.u32 %v992, 4294901760
    %1031 = vmatpush1.msra.mxu0 %v1030
    %1032 = vmatprep.subr.mxu0 0.0
    %v1033 = vand.u32 %v991, 4294901760
    %1034 = vmatpush1.msra.mxu0 %v1033
    %1035 = vmatprep.subr.mxu0 0.0
    %v1036 = vand.u32 %v990, 4294901760
    %1037 = vmatpush1.msra.mxu0 %v1036
    %1038 = vmatprep.subr.mxu0 0.0
    %v1039 = vand.u32 %v989, 4294901760
    %1040 = vmatpush1.msra.mxu0 %v1039
    %1041 = vmatprep.subr.mxu0 0.0
    %v1042 = vand.u32 %v988, 4294901760
    %1043 = vmatpush1.msra.mxu0 %v1042
    %1044 = vmatprep.subr.mxu0 0.0
    %v1045 = vand.u32 %v987, 4294901760
    %1046 = vmatpush1.msra.mxu0 %v1045
    %1047 = vmatprep.subr.mxu0 0.0
    %v1048 = vand.u32 %v986, 4294901760
    %1049 = vmatpush1.msra.mxu0 %v1048
    %1050 = vmatprep.subr.mxu0 0.0
    %v1051 = vand.u32 %v985, 4294901760
    %1052 = vmatpush1.msra.mxu0 %v1051
    %1053 = vmatprep.subr.mxu0 0.0
    %v1054 = vand.u32 %v984, 4294901760
    %1055 = vmatpush1.msra.mxu0 %v1054
    %1056 = vmatprep.subr.mxu0 0.0
    %v1057 = vand.u32 %v983, 4294901760
    %1058 = vmatpush1.msra.mxu0 %v1057
    %1059 = vmatprep.subr.mxu0 0.0
    %v1060 = vand.u32 %v982, 4294901760
    %1061 = vmatpush1.msra.mxu0 %v1060
    %1062 = vmatprep.subr.mxu0 0.0
    %v1063 = vand.u32 %v981, 4294901760
    %1064 = vmatpush1.msra.mxu0 %v1063
    %1065 = vmatprep.subr.mxu0 0.0
    %v1066 = vand.u32 %v1012, 4294901760
    %1067 = vmatpush2.msra.mxu0 %v1066
    %1068 = vmatprep.subr.mxu0 0.0
    %v1069 = vand.u32 %v1011, 4294901760
    %1070 = vmatpush2.msra.mxu0 %v1069
    %1071 = vmatprep.subr.mxu0 0.0
    %v1072 = vand.u32 %v1010, 4294901760
    %1073 = vmatpush2.msra.mxu0 %v1072
    %1074 = vmatprep.subr.mxu0 0.0
    %v1075 = vand.u32 %v1009, 4294901760
    %1076 = vmatpush2.msra.mxu0 %v1075
    %1077 = vmatprep.subr.mxu0 0.0
    %v1078 = vand.u32 %v1008, 4294901760
    %1079 = vmatpush2.msra.mxu0 %v1078
    %1080 = vmatprep.subr.mxu0 0.0
    %v1081 = vand.u32 %v1007, 4294901760
    %1082 = vmatpush2.msra.mxu0 %v1081
    %1083 = vmatprep.subr.mxu0 0.0
    %v1084 = vand.u32 %v1006, 4294901760
    %1085 = vmatpush2.msra.mxu0 %v1084
    %1086 = vmatprep.subr.mxu0 0.0
    %v1087 = vand.u32 %v1005, 4294901760
    %1088 = vmatpush2.msra.mxu0 %v1087
    %1089 = vmatprep.subr.mxu0 0.0
    %v1090 = vand.u32 %v1004, 4294901760
    %1091 = vmatpush2.msra.mxu0 %v1090
    %1092 = vmatprep.subr.mxu0 0.0
    %v1093 = vand.u32 %v1003, 4294901760
    %1094 = vmatpush2.msra.mxu0 %v1093
    %1095 = vmatprep.subr.mxu0 0.0
    %v1096 = vand.u32 %v1002, 4294901760
    %1097 = vmatpush2.msra.mxu0 %v1096
    %1098 = vmatprep.subr.mxu0 0.0
    %v1099 = vand.u32 %v1001, 4294901760
    %1100 = vmatpush2.msra.mxu0 %v1099
    %1101 = vmatprep.subr.mxu0 0.0
    %v1102 = vand.u32 %v1000, 4294901760
    %1103 = vmatpush2.msra.mxu0 %v1102
    %1104 = vmatprep.subr.mxu0 0.0
    %v1105 = vand.u32 %v999, 4294901760
    %1106 = vmatpush2.msra.mxu0 %v1105
    %1107 = vmatprep.subr.mxu0 0.0
    %v1108 = vand.u32 %v998, 4294901760
    %1109 = vmatpush2.msra.mxu0 %v1108
    %1110 = vmatprep.subr.mxu0 0.0
    %v1111 = vand.u32 %v997, 4294901760
    %1112 = vmatpush2.msra.mxu0 %v1111
    %v1113 = vand.u32 %v978, 4294901760
    %v1114 = vsub.f32 %v978, %v1113
    %v1115 = vand.u32 %v1114, 4294901760
    %v1116 = vsub.f32 %v1114, %v1115
    %v1117 = vand.u32 %v1116, 4294901760
    %1118 = vmatprep.mubr.f32.mxu0 %v1117
    %v1119 = vand.u32 %v976, 4294901760
    %v1120 = vsub.f32 %v976, %v1119
    %v1121 = vand.u32 %v1120, 4294901760
    %v1122 = vsub.f32 %v1120, %v1121
    %v1123 = vand.u32 %v1122, 4294901760
    %1124 = vmatmul.mubr.f32.gmra.mxu0 %v1123
    %v1125 = vpop.f32.mrf.mxu0
    %v1126 = vadd.f32 %v1016, %v1125
    %v1127 = vpop.f32.mrf.mxu0
    %1128 = vdwg.mxu0
    %1129 = vmatprep.subr.mxu0 0.0
    %v1130 = vand.u32 %v996, 4294901760
    %v1131 = vsub.f32 %v996, %v1130
    %v1132 = vand.u32 %v1131, 4294901760
    %v1133 = vsub.f32 %v1131, %v1132
    %v1134 = vand.u32 %v1133, 4294901760
    %1135 = vmatpush1.msra.mxu0 %v1134
    %1136 = vmatprep.subr.mxu0 0.0
    %v1137 = vand.u32 %v995, 4294901760
    %v1138 = vsub.f32 %v995, %v1137
    %v1139 = vand.u32 %v1138, 4294901760
    %v1140 = vsub.f32 %v1138, %v1139
    %v1141 = vand.u32 %v1140, 4294901760
    %1142 = vmatpush1.msra.mxu0 %v1141
    %1143 = vmatprep.subr.mxu0 0.0
    %v1144 = vand.u32 %v994, 4294901760
    %v1145 = vsub.f32 %v994, %v1144
    %v1146 = vand.u32 %v1145, 4294901760
    %v1147 = vsub.f32 %v1145, %v1146
    %v1148 = vand.u32 %v1147, 4294901760
    %1149 = vmatpush1.msra.mxu0 %v1148
    %1150 = vmatprep.subr.mxu0 0.0
    %v1151 = vand.u32 %v993, 4294901760
    %v1152 = vsub.f32 %v993, %v1151
    %v1153 = vand.u32 %v1152, 4294901760
    %v1154 = vsub.f32 %v1152, %v1153
    %v1155 = vand.u32 %v1154, 4294901760
    %1156 = vmatpush1.msra.mxu0 %v1155
    %1157 = vmatprep.subr.mxu0 0.0
    %v1158 = vand.u32 %v992, 4294901760
    %v1159 = vsub.f32 %v992, %v1158
    %v1160 = vand.u32 %v1159, 4294901760
    %v1161 = vsub.f32 %v1159, %v1160
    %v1162 = vand.u32 %v1161, 4294901760
    %1163 = vmatpush1.msra.mxu0 %v1162
    %1164 = vmatprep.subr.mxu0 0.0
    %v1165 = vand.u32 %v991, 4294901760
    %v1166 = vsub.f32 %v991, %v1165
    %v1167 = vand.u32 %v1166, 4294901760
    %v1168 = vsub.f32 %v1166, %v1167
    %v1169 = vand.u32 %v1168, 4294901760
    %1170 = vmatpush1.msra.mxu0 %v1169
    %1171 = vmatprep.subr.mxu0 0.0
    %v1172 = vand.u32 %v990, 4294901760
    %v1173 = vsub.f32 %v990, %v1172
    %v1174 = vand.u32 %v1173, 4294901760
    %v1175 = vsub.f32 %v1173, %v1174
    %v1176 = vand.u32 %v1175, 4294901760
    %1177 = vmatpush1.msra.mxu0 %v1176
    %1178 = vmatprep.subr.mxu0 0.0
    %v1179 = vand.u32 %v989, 4294901760
    %v1180 = vsub.f32 %v989, %v1179
    %v1181 = vand.u32 %v1180, 4294901760
    %v1182 = vsub.f32 %v1180, %v1181
    %v1183 = vand.u32 %v1182, 4294901760
    %1184 = vmatpush1.msra.mxu0 %v1183
    %1185 = vmatprep.subr.mxu0 0.0
    %v1186 = vand.u32 %v988, 4294901760
    %v1187 = vsub.f32 %v988, %v1186
    %v1188 = vand.u32 %v1187, 4294901760
    %v1189 = vsub.f32 %v1187, %v1188
    %v1190 = vand.u32 %v1189, 4294901760
    %1191 = vmatpush1.msra.mxu0 %v1190
    %1192 = vmatprep.subr.mxu0 0.0
    %v1193 = vand.u32 %v987, 4294901760
    %v1194 = vsub.f32 %v987, %v1193
    %v1195 = vand.u32 %v1194, 4294901760
    %v1196 = vsub.f32 %v1194, %v1195
    %v1197 = vand.u32 %v1196, 4294901760
    %1198 = vmatpush1.msra.mxu0 %v1197
    %1199 = vmatprep.subr.mxu0 0.0
    %v1200 = vand.u32 %v986, 4294901760
    %v1201 = vsub.f32 %v986, %v1200
    %v1202 = vand.u32 %v1201, 4294901760
    %v1203 = vsub.f32 %v1201, %v1202
    %v1204 = vand.u32 %v1203, 4294901760
    %1205 = vmatpush1.msra.mxu0 %v1204
    %1206 = vmatprep.subr.mxu0 0.0
    %v1207 = vand.u32 %v985, 4294901760
    %v1208 = vsub.f32 %v985, %v1207
    %v1209 = vand.u32 %v1208, 4294901760
    %v1210 = vsub.f32 %v1208, %v1209
    %v1211 = vand.u32 %v1210, 4294901760
    %1212 = vmatpush1.msra.mxu0 %v1211
    %1213 = vmatprep.subr.mxu0 0.0
    %v1214 = vand.u32 %v984, 4294901760
    %v1215 = vsub.f32 %v984, %v1214
    %v1216 = vand.u32 %v1215, 4294901760
    %v1217 = vsub.f32 %v1215, %v1216
    %v1218 = vand.u32 %v1217, 4294901760
    %1219 = vmatpush1.msra.mxu0 %v1218
    %1220 = vmatprep.subr.mxu0 0.0
    %v1221 = vand.u32 %v983, 4294901760
    %v1222 = vsub.f32 %v983, %v1221
    %v1223 = vand.u32 %v1222, 4294901760
    %v1224 = vsub.f32 %v1222, %v1223
    %v1225 = vand.u32 %v1224, 4294901760
    %1226 = vmatpush1.msra.mxu0 %v1225
    %1227 = vmatprep.subr.mxu0 0.0
    %v1228 = vand.u32 %v982, 4294901760
    %v1229 = vsub.f32 %v982, %v1228
    %v1230 = vand.u32 %v1229, 4294901760
    %v1231 = vsub.f32 %v1229, %v1230
    %v1232 = vand.u32 %v1231, 4294901760
    %1233 = vmatpush1.msra.mxu0 %v1232
    %1234 = vmatprep.subr.mxu0 0.0
    %v1235 = vand.u32 %v981, 4294901760
    %v1236 = vsub.f32 %v981, %v1235
    %v1237 = vand.u32 %v1236, 4294901760
    %v1238 = vsub.f32 %v1236, %v1237
    %v1239 = vand.u32 %v1238, 4294901760
    %1240 = vmatpush1.msra.mxu0 %v1239
    %1241 = vmatprep.subr.mxu0 0.0
    %v1242 = vand.u32 %v1012, 4294901760
    %v1243 = vsub.f32 %v1012, %v1242
    %v1244 = vand.u32 %v1243, 4294901760
    %v1245 = vsub.f32 %v1243, %v1244
    %v1246 = vand.u32 %v1245, 4294901760
    %1247 = vmatpush2.msra.mxu0 %v1246
    %1248 = vmatprep.subr.mxu0 0.0
    %v1249 = vand.u32 %v1011, 4294901760
    %v1250 = vsub.f32 %v1011, %v1249
    %v1251 = vand.u32 %v1250, 4294901760
    %v1252 = vsub.f32 %v1250, %v1251
    %v1253 = vand.u32 %v1252, 4294901760
    %1254 = vmatpush2.msra.mxu0 %v1253
    %1255 = vmatprep.subr.mxu0 0.0
    %v1256 = vand.u32 %v1010, 4294901760
    %v1257 = vsub.f32 %v1010, %v1256
    %v1258 = vand.u32 %v1257, 4294901760
    %v1259 = vsub.f32 %v1257, %v1258
    %v1260 = vand.u32 %v1259, 4294901760
    %1261 = vmatpush2.msra.mxu0 %v1260
    %1262 = vmatprep.subr.mxu0 0.0
    %v1263 = vand.u32 %v1009, 4294901760
    %v1264 = vsub.f32 %v1009, %v1263
    %v1265 = vand.u32 %v1264, 4294901760
    %v1266 = vsub.f32 %v1264, %v1265
    %v1267 = vand.u32 %v1266, 4294901760
    %1268 = vmatpush2.msra.mxu0 %v1267
    %1269 = vmatprep.subr.mxu0 0.0
    %v1270 = vand.u32 %v1008, 4294901760
    %v1271 = vsub.f32 %v1008, %v1270
    %v1272 = vand.u32 %v1271, 4294901760
    %v1273 = vsub.f32 %v1271, %v1272
    %v1274 = vand.u32 %v1273, 4294901760
    %1275 = vmatpush2.msra.mxu0 %v1274
    %1276 = vmatprep.subr.mxu0 0.0
    %v1277 = vand.u32 %v1007, 4294901760
    %v1278 = vsub.f32 %v1007, %v1277
    %v1279 = vand.u32 %v1278, 4294901760
    %v1280 = vsub.f32 %v1278, %v1279
    %v1281 = vand.u32 %v1280, 4294901760
    %1282 = vmatpush2.msra.mxu0 %v1281
    %1283 = vmatprep.subr.mxu0 0.0
    %v1284 = vand.u32 %v1006, 4294901760
    %v1285 = vsub.f32 %v1006, %v1284
    %v1286 = vand.u32 %v1285, 4294901760
    %v1287 = vsub.f32 %v1285, %v1286
    %v1288 = vand.u32 %v1287, 4294901760
    %1289 = vmatpush2.msra.mxu0 %v1288
    %1290 = vmatprep.subr.mxu0 0.0
    %v1291 = vand.u32 %v1005, 4294901760
    %v1292 = vsub.f32 %v1005, %v1291
    %v1293 = vand.u32 %v1292, 4294901760
    %v1294 = vsub.f32 %v1292, %v1293
    %v1295 = vand.u32 %v1294, 4294901760
    %1296 = vmatpush2.msra.mxu0 %v1295
    %1297 = vmatprep.subr.mxu0 0.0
    %v1298 = vand.u32 %v1004, 4294901760
    %v1299 = vsub.f32 %v1004, %v1298
    %v1300 = vand.u32 %v1299, 4294901760
    %v1301 = vsub.f32 %v1299, %v1300
    %v1302 = vand.u32 %v1301, 4294901760
    %1303 = vmatpush2.msra.mxu0 %v1302
    %1304 = vmatprep.subr.mxu0 0.0
    %v1305 = vand.u32 %v1003, 4294901760
    %v1306 = vsub.f32 %v1003, %v1305
    %v1307 = vand.u32 %v1306, 4294901760
    %v1308 = vsub.f32 %v1306, %v1307
    %v1309 = vand.u32 %v1308, 4294901760
    %1310 = vmatpush2.msra.mxu0 %v1309
    %1311 = vmatprep.subr.mxu0 0.0
    %v1312 = vand.u32 %v1002, 4294901760
    %v1313 = vsub.f32 %v1002, %v1312
    %v1314 = vand.u32 %v1313, 4294901760
    %v1315 = vsub.f32 %v1313, %v1314
    %v1316 = vand.u32 %v1315, 4294901760
    %1317 = vmatpush2.msra.mxu0 %v1316
    %1318 = vmatprep.subr.mxu0 0.0
    %v1319 = vand.u32 %v1001, 4294901760
    %v1320 = vsub.f32 %v1001, %v1319
    %v1321 = vand.u32 %v1320, 4294901760
    %v1322 = vsub.f32 %v1320, %v1321
    %v1323 = vand.u32 %v1322, 4294901760
    %1324 = vmatpush2.msra.mxu0 %v1323
    %1325 = vmatprep.subr.mxu0 0.0
    %v1326 = vand.u32 %v1000, 4294901760
    %v1327 = vsub.f32 %v1000, %v1326
    %v1328 = vand.u32 %v1327, 4294901760
    %v1329 = vsub.f32 %v1327, %v1328
    %v1330 = vand.u32 %v1329, 4294901760
    %1331 = vmatpush2.msra.mxu0 %v1330
    %1332 = vmatprep.subr.mxu0 0.0
    %v1333 = vand.u32 %v999, 4294901760
    %v1334 = vsub.f32 %v999, %v1333
    %v1335 = vand.u32 %v1334, 4294901760
    %v1336 = vsub.f32 %v1334, %v1335
    %v1337 = vand.u32 %v1336, 4294901760
    %1338 = vmatpush2.msra.mxu0 %v1337
    %1339 = vmatprep.subr.mxu0 0.0
    %v1340 = vand.u32 %v998, 4294901760
    %v1341 = vsub.f32 %v998, %v1340
    %v1342 = vand.u32 %v1341, 4294901760
    %v1343 = vsub.f32 %v1341, %v1342
    %v1344 = vand.u32 %v1343, 4294901760
    %1345 = vmatpush2.msra.mxu0 %v1344
    %1346 = vmatprep.subr.mxu0 0.0
    %v1347 = vand.u32 %v997, 4294901760
    %v1348 = vsub.f32 %v997, %v1347
    %v1349 = vand.u32 %v1348, 4294901760
    %v1350 = vsub.f32 %v1348, %v1349
    %v1351 = vand.u32 %v1350, 4294901760
    %1352 = vmatpush2.msra.mxu0 %v1351
    %v1353 = vand.u32 %v978, 4294901760
    %1354 = vmatprep.mubr.f32.mxu0 %v1353
    %v1355 = vand.u32 %v976, 4294901760
    %1356 = vmatmul.mubr.f32.gmra.mxu0 %v1355
    %v1357 = vpop.f32.mrf.mxu0
    %v1358 = vadd.f32 %v1126, %v1357
    %v1359 = vpop.f32.mrf.mxu0
    %1360 = vdwg.mxu0
    %1361 = vmatprep.subr.mxu0 0.0
    %v1362 = vand.u32 %v996, 4294901760
    %v1363 = vsub.f32 %v996, %v1362
    %1364 = vmatpush1.msra.mxu0 %v1363
    %1365 = vmatprep.subr.mxu0 0.0
    %v1366 = vand.u32 %v995, 4294901760
    %v1367 = vsub.f32 %v995, %v1366
    %1368 = vmatpush1.msra.mxu0 %v1367
    %1369 = vmatprep.subr.mxu0 0.0
    %v1370 = vand.u32 %v994, 4294901760
    %v1371 = vsub.f32 %v994, %v1370
    %1372 = vmatpush1.msra.mxu0 %v1371
    %1373 = vmatprep.subr.mxu0 0.0
    %v1374 = vand.u32 %v993, 4294901760
    %v1375 = vsub.f32 %v993, %v1374
    %1376 = vmatpush1.msra.mxu0 %v1375
    %1377 = vmatprep.subr.mxu0 0.0
    %v1378 = vand.u32 %v992, 4294901760
    %v1379 = vsub.f32 %v992, %v1378
    %1380 = vmatpush1.msra.mxu0 %v1379
    %1381 = vmatprep.subr.mxu0 0.0
    %v1382 = vand.u32 %v991, 4294901760
    %v1383 = vsub.f32 %v991, %v1382
    %1384 = vmatpush1.msra.mxu0 %v1383
    %1385 = vmatprep.subr.mxu0 0.0
    %v1386 = vand.u32 %v990, 4294901760
    %v1387 = vsub.f32 %v990, %v1386
    %1388 = vmatpush1.msra.mxu0 %v1387
    %1389 = vmatprep.subr.mxu0 0.0
    %v1390 = vand.u32 %v989, 4294901760
    %v1391 = vsub.f32 %v989, %v1390
    %1392 = vmatpush1.msra.mxu0 %v1391
    %1393 = vmatprep.subr.mxu0 0.0
    %v1394 = vand.u32 %v988, 4294901760
    %v1395 = vsub.f32 %v988, %v1394
    %1396 = vmatpush1.msra.mxu0 %v1395
    %1397 = vmatprep.subr.mxu0 0.0
    %v1398 = vand.u32 %v987, 4294901760
    %v1399 = vsub.f32 %v987, %v1398
    %1400 = vmatpush1.msra.mxu0 %v1399
    %1401 = vmatprep.subr.mxu0 0.0
    %v1402 = vand.u32 %v986, 4294901760
    %v1403 = vsub.f32 %v986, %v1402
    %1404 = vmatpush1.msra.mxu0 %v1403
    %1405 = vmatprep.subr.mxu0 0.0
    %v1406 = vand.u32 %v985, 4294901760
    %v1407 = vsub.f32 %v985, %v1406
    %1408 = vmatpush1.msra.mxu0 %v1407
    %1409 = vmatprep.subr.mxu0 0.0
    %v1410 = vand.u32 %v984, 4294901760
    %v1411 = vsub.f32 %v984, %v1410
    %1412 = vmatpush1.msra.mxu0 %v1411
    %1413 = vmatprep.subr.mxu0 0.0
    %v1414 = vand.u32 %v983, 4294901760
    %v1415 = vsub.f32 %v983, %v1414
    %1416 = vmatpush1.msra.mxu0 %v1415
    %1417 = vmatprep.subr.mxu0 0.0
    %v1418 = vand.u32 %v982, 4294901760
    %v1419 = vsub.f32 %v982, %v1418
    %1420 = vmatpush1.msra.mxu0 %v1419
    %1421 = vmatprep.subr.mxu0 0.0
    %v1422 = vand.u32 %v981, 4294901760
    %v1423 = vsub.f32 %v981, %v1422
    %1424 = vmatpush1.msra.mxu0 %v1423
    %1425 = vmatprep.subr.mxu0 0.0
    %v1426 = vand.u32 %v1012, 4294901760
    %v1427 = vsub.f32 %v1012, %v1426
    %1428 = vmatpush2.msra.mxu0 %v1427
    %1429 = vmatprep.subr.mxu0 0.0
    %v1430 = vand.u32 %v1011, 4294901760
    %v1431 = vsub.f32 %v1011, %v1430
    %1432 = vmatpush2.msra.mxu0 %v1431
    %1433 = vmatprep.subr.mxu0 0.0
    %v1434 = vand.u32 %v1010, 4294901760
    %v1435 = vsub.f32 %v1010, %v1434
    %1436 = vmatpush2.msra.mxu0 %v1435
    %1437 = vmatprep.subr.mxu0 0.0
    %v1438 = vand.u32 %v1009, 4294901760
    %v1439 = vsub.f32 %v1009, %v1438
    %1440 = vmatpush2.msra.mxu0 %v1439
    %1441 = vmatprep.subr.mxu0 0.0
    %v1442 = vand.u32 %v1008, 4294901760
    %v1443 = vsub.f32 %v1008, %v1442
    %1444 = vmatpush2.msra.mxu0 %v1443
    %1445 = vmatprep.subr.mxu0 0.0
    %v1446 = vand.u32 %v1007, 4294901760
    %v1447 = vsub.f32 %v1007, %v1446
    %1448 = vmatpush2.msra.mxu0 %v1447
    %1449 = vmatprep.subr.mxu0 0.0
    %v1450 = vand.u32 %v1006, 4294901760
    %v1451 = vsub.f32 %v1006, %v1450
    %1452 = vmatpush2.msra.mxu0 %v1451
    %1453 = vmatprep.subr.mxu0 0.0
    %v1454 = vand.u32 %v1005, 4294901760
    %v1455 = vsub.f32 %v1005, %v1454
    %1456 = vmatpush2.msra.mxu0 %v1455
    %1457 = vmatprep.subr.mxu0 0.0
    %v1458 = vand.u32 %v1004, 4294901760
    %v1459 = vsub.f32 %v1004, %v1458
    %1460 = vmatpush2.msra.mxu0 %v1459
    %1461 = vmatprep.subr.mxu0 0.0
    %v1462 = vand.u32 %v1003, 4294901760
    %v1463 = vsub.f32 %v1003, %v1462
    %1464 = vmatpush2.msra.mxu0 %v1463
    %1465 = vmatprep.subr.mxu0 0.0
    %v1466 = vand.u32 %v1002, 4294901760
    %v1467 = vsub.f32 %v1002, %v1466
    %1468 = vmatpush2.msra.mxu0 %v1467
    %1469 = vmatprep.subr.mxu0 0.0
    %v1470 = vand.u32 %v1001, 4294901760
    %v1471 = vsub.f32 %v1001, %v1470
    %1472 = vmatpush2.msra.mxu0 %v1471
    %1473 = vmatprep.subr.mxu0 0.0
    %v1474 = vand.u32 %v1000, 4294901760
    %v1475 = vsub.f32 %v1000, %v1474
    %1476 = vmatpush2.msra.mxu0 %v1475
    %1477 = vmatprep.subr.mxu0 0.0
    %v1478 = vand.u32 %v999, 4294901760
    %v1479 = vsub.f32 %v999, %v1478
    %1480 = vmatpush2.msra.mxu0 %v1479
    %1481 = vmatprep.subr.mxu0 0.0
    %v1482 = vand.u32 %v998, 4294901760
    %v1483 = vsub.f32 %v998, %v1482
    %1484 = vmatpush2.msra.mxu0 %v1483
    %1485 = vmatprep.subr.mxu0 0.0
    %v1486 = vand.u32 %v997, 4294901760
    %v1487 = vsub.f32 %v997, %v1486
    %1488 = vmatpush2.msra.mxu0 %v1487
    %v1489 = vand.u32 %v978, 4294901760
    %v1490 = vsub.f32 %v978, %v1489
    %1491 = vmatprep.mubr.f32.mxu0 %v1490
    %v1492 = vand.u32 %v976, 4294901760
    %v1493 = vsub.f32 %v976, %v1492
    %1494 = vmatmul.mubr.f32.gmra.mxu0 %v1493
    %v1495 = vpop.f32.mrf.mxu0
    %v1496 = vadd.f32 %v1358, %v1495
    %v1497 = vpop.f32.mrf.mxu0
    %1498 = vdwg.mxu0
    %1499 = vmatprep.subr.mxu0 0.0
    %v1500 = vand.u32 %v996, 4294901760
    %1501 = vmatpush1.msra.mxu0 %v1500
    %1502 = vmatprep.subr.mxu0 0.0
    %v1503 = vand.u32 %v995, 4294901760
    %1504 = vmatpush1.msra.mxu0 %v1503
    %1505 = vmatprep.subr.mxu0 0.0
    %v1506 = vand.u32 %v994, 4294901760
    %1507 = vmatpush1.msra.mxu0 %v1506
    %1508 = vmatprep.subr.mxu0 0.0
    %v1509 = vand.u32 %v993, 4294901760
    %1510 = vmatpush1.msra.mxu0 %v1509
    %1511 = vmatprep.subr.mxu0 0.0
    %v1512 = vand.u32 %v992, 4294901760
    %1513 = vmatpush1.msra.mxu0 %v1512
    %1514 = vmatprep.subr.mxu0 0.0
    %v1515 = vand.u32 %v991, 4294901760
    %1516 = vmatpush1.msra.mxu0 %v1515
    %1517 = vmatprep.subr.mxu0 0.0
    %v1518 = vand.u32 %v990, 4294901760
    %1519 = vmatpush1.msra.mxu0 %v1518
    %1520 = vmatprep.subr.mxu0 0.0
    %v1521 = vand.u32 %v989, 4294901760
    %1522 = vmatpush1.msra.mxu0 %v1521
    %1523 = vmatprep.subr.mxu0 0.0
    %v1524 = vand.u32 %v988, 4294901760
    %1525 = vmatpush1.msra.mxu0 %v1524
    %1526 = vmatprep.subr.mxu0 0.0
    %v1527 = vand.u32 %v987, 4294901760
    %1528 = vmatpush1.msra.mxu0 %v1527
    %1529 = vmatprep.subr.mxu0 0.0
    %v1530 = vand.u32 %v986, 4294901760
    %1531 = vmatpush1.msra.mxu0 %v1530
    %1532 = vmatprep.subr.mxu0 0.0
    %v1533 = vand.u32 %v985, 4294901760
    %1534 = vmatpush1.msra.mxu0 %v1533
    %1535 = vmatprep.subr.mxu0 0.0
    %v1536 = vand.u32 %v984, 4294901760
    %1537 = vmatpush1.msra.mxu0 %v1536
    %1538 = vmatprep.subr.mxu0 0.0
    %v1539 = vand.u32 %v983, 4294901760
    %1540 = vmatpush1.msra.mxu0 %v1539
    %1541 = vmatprep.subr.mxu0 0.0
    %v1542 = vand.u32 %v982, 4294901760
    %1543 = vmatpush1.msra.mxu0 %v1542
    %1544 = vmatprep.subr.mxu0 0.0
    %v1545 = vand.u32 %v981, 4294901760
    %1546 = vmatpush1.msra.mxu0 %v1545
    %1547 = vmatprep.subr.mxu0 0.0
    %v1548 = vand.u32 %v1012, 4294901760
    %1549 = vmatpush2.msra.mxu0 %v1548
    %1550 = vmatprep.subr.mxu0 0.0
    %v1551 = vand.u32 %v1011, 4294901760
    %1552 = vmatpush2.msra.mxu0 %v1551
    %1553 = vmatprep.subr.mxu0 0.0
    %v1554 = vand.u32 %v1010, 4294901760
    %1555 = vmatpush2.msra.mxu0 %v1554
    %1556 = vmatprep.subr.mxu0 0.0
    %v1557 = vand.u32 %v1009, 4294901760
    %1558 = vmatpush2.msra.mxu0 %v1557
    %1559 = vmatprep.subr.mxu0 0.0
    %v1560 = vand.u32 %v1008, 4294901760
    %1561 = vmatpush2.msra.mxu0 %v1560
    %1562 = vmatprep.subr.mxu0 0.0
    %v1563 = vand.u32 %v1007, 4294901760
    %1564 = vmatpush2.msra.mxu0 %v1563
    %1565 = vmatprep.subr.mxu0 0.0
    %v1566 = vand.u32 %v1006, 4294901760
    %1567 = vmatpush2.msra.mxu0 %v1566
    %1568 = vmatprep.subr.mxu0 0.0
    %v1569 = vand.u32 %v1005, 4294901760
    %1570 = vmatpush2.msra.mxu0 %v1569
    %1571 = vmatprep.subr.mxu0 0.0
    %v1572 = vand.u32 %v1004, 4294901760
    %1573 = vmatpush2.msra.mxu0 %v1572
    %1574 = vmatprep.subr.mxu0 0.0
    %v1575 = vand.u32 %v1003, 4294901760
    %1576 = vmatpush2.msra.mxu0 %v1575
    %1577 = vmatprep.subr.mxu0 0.0
    %v1578 = vand.u32 %v1002, 4294901760
    %1579 = vmatpush2.msra.mxu0 %v1578
    %1580 = vmatprep.subr.mxu0 0.0
    %v1581 = vand.u32 %v1001, 4294901760
    %1582 = vmatpush2.msra.mxu0 %v1581
    %1583 = vmatprep.subr.mxu0 0.0
    %v1584 = vand.u32 %v1000, 4294901760
    %1585 = vmatpush2.msra.mxu0 %v1584
    %1586 = vmatprep.subr.mxu0 0.0
    %v1587 = vand.u32 %v999, 4294901760
    %1588 = vmatpush2.msra.mxu0 %v1587
    %1589 = vmatprep.subr.mxu0 0.0
    %v1590 = vand.u32 %v998, 4294901760
    %1591 = vmatpush2.msra.mxu0 %v1590
    %1592 = vmatprep.subr.mxu0 0.0
    %v1593 = vand.u32 %v997, 4294901760
    %1594 = vmatpush2.msra.mxu0 %v1593
    %v1595 = vand.u32 %v978, 4294901760
    %v1596 = vsub.f32 %v978, %v1595
    %v1597 = vand.u32 %v1596, 4294901760
    %1598 = vmatprep.mubr.f32.mxu0 %v1597
    %v1599 = vand.u32 %v976, 4294901760
    %v1600 = vsub.f32 %v976, %v1599
    %v1601 = vand.u32 %v1600, 4294901760
    %1602 = vmatmul.mubr.f32.gmra.mxu0 %v1601
    %v1603 = vpop.f32.mrf.mxu0
    %v1604 = vadd.f32 %v1496, %v1603
    %v1605 = vpop.f32.mrf.mxu0
    %1606 = vdwg.mxu0
    %1607 = vmatprep.subr.mxu0 0.0
    %v1608 = vand.u32 %v996, 4294901760
    %v1609 = vsub.f32 %v996, %v1608
    %v1610 = vand.u32 %v1609, 4294901760
    %1611 = vmatpush1.msra.mxu0 %v1610
    %1612 = vmatprep.subr.mxu0 0.0
    %v1613 = vand.u32 %v995, 4294901760
    %v1614 = vsub.f32 %v995, %v1613
    %v1615 = vand.u32 %v1614, 4294901760
    %1616 = vmatpush1.msra.mxu0 %v1615
    %1617 = vmatprep.subr.mxu0 0.0
    %v1618 = vand.u32 %v994, 4294901760
    %v1619 = vsub.f32 %v994, %v1618
    %v1620 = vand.u32 %v1619, 4294901760
    %1621 = vmatpush1.msra.mxu0 %v1620
    %1622 = vmatprep.subr.mxu0 0.0
    %v1623 = vand.u32 %v993, 4294901760
    %v1624 = vsub.f32 %v993, %v1623
    %v1625 = vand.u32 %v1624, 4294901760
    %1626 = vmatpush1.msra.mxu0 %v1625
    %1627 = vmatprep.subr.mxu0 0.0
    %v1628 = vand.u32 %v992, 4294901760
    %v1629 = vsub.f32 %v992, %v1628
    %v1630 = vand.u32 %v1629, 4294901760
    %1631 = vmatpush1.msra.mxu0 %v1630
    %1632 = vmatprep.subr.mxu0 0.0
    %v1633 = vand.u32 %v991, 4294901760
    %v1634 = vsub.f32 %v991, %v1633
    %v1635 = vand.u32 %v1634, 4294901760
    %1636 = vmatpush1.msra.mxu0 %v1635
    %1637 = vmatprep.subr.mxu0 0.0
    %v1638 = vand.u32 %v990, 4294901760
    %v1639 = vsub.f32 %v990, %v1638
    %v1640 = vand.u32 %v1639, 4294901760
    %1641 = vmatpush1.msra.mxu0 %v1640
    %1642 = vmatprep.subr.mxu0 0.0
    %v1643 = vand.u32 %v989, 4294901760
    %v1644 = vsub.f32 %v989, %v1643
    %v1645 = vand.u32 %v1644, 4294901760
    %1646 = vmatpush1.msra.mxu0 %v1645
    %1647 = vmatprep.subr.mxu0 0.0
    %v1648 = vand.u32 %v988, 4294901760
    %v1649 = vsub.f32 %v988, %v1648
    %v1650 = vand.u32 %v1649, 4294901760
    %1651 = vmatpush1.msra.mxu0 %v1650
    %1652 = vmatprep.subr.mxu0 0.0
    %v1653 = vand.u32 %v987, 4294901760
    %v1654 = vsub.f32 %v987, %v1653
    %v1655 = vand.u32 %v1654, 4294901760
    %1656 = vmatpush1.msra.mxu0 %v1655
    %1657 = vmatprep.subr.mxu0 0.0
    %v1658 = vand.u32 %v986, 4294901760
    %v1659 = vsub.f32 %v986, %v1658
    %v1660 = vand.u32 %v1659, 4294901760
    %1661 = vmatpush1.msra.mxu0 %v1660
    %1662 = vmatprep.subr.mxu0 0.0
    %v1663 = vand.u32 %v985, 4294901760
    %v1664 = vsub.f32 %v985, %v1663
    %v1665 = vand.u32 %v1664, 4294901760
    %1666 = vmatpush1.msra.mxu0 %v1665
    %1667 = vmatprep.subr.mxu0 0.0
    %v1668 = vand.u32 %v984, 4294901760
    %v1669 = vsub.f32 %v984, %v1668
    %v1670 = vand.u32 %v1669, 4294901760
    %1671 = vmatpush1.msra.mxu0 %v1670
    %1672 = vmatprep.subr.mxu0 0.0
    %v1673 = vand.u32 %v983, 4294901760
    %v1674 = vsub.f32 %v983, %v1673
    %v1675 = vand.u32 %v1674, 4294901760
    %1676 = vmatpush1.msra.mxu0 %v1675
    %1677 = vmatprep.subr.mxu0 0.0
    %v1678 = vand.u32 %v982, 4294901760
    %v1679 = vsub.f32 %v982, %v1678
    %v1680 = vand.u32 %v1679, 4294901760
    %1681 = vmatpush1.msra.mxu0 %v1680
    %1682 = vmatprep.subr.mxu0 0.0
    %v1683 = vand.u32 %v981, 4294901760
    %v1684 = vsub.f32 %v981, %v1683
    %v1685 = vand.u32 %v1684, 4294901760
    %1686 = vmatpush1.msra.mxu0 %v1685
    %1687 = vmatprep.subr.mxu0 0.0
    %v1688 = vand.u32 %v1012, 4294901760
    %v1689 = vsub.f32 %v1012, %v1688
    %v1690 = vand.u32 %v1689, 4294901760
    %1691 = vmatpush2.msra.mxu0 %v1690
    %1692 = vmatprep.subr.mxu0 0.0
    %v1693 = vand.u32 %v1011, 4294901760
    %v1694 = vsub.f32 %v1011, %v1693
    %v1695 = vand.u32 %v1694, 4294901760
    %1696 = vmatpush2.msra.mxu0 %v1695
    %1697 = vmatprep.subr.mxu0 0.0
    %v1698 = vand.u32 %v1010, 4294901760
    %v1699 = vsub.f32 %v1010, %v1698
    %v1700 = vand.u32 %v1699, 4294901760
    %1701 = vmatpush2.msra.mxu0 %v1700
    %1702 = vmatprep.subr.mxu0 0.0
    %v1703 = vand.u32 %v1009, 4294901760
    %v1704 = vsub.f32 %v1009, %v1703
    %v1705 = vand.u32 %v1704, 4294901760
    %1706 = vmatpush2.msra.mxu0 %v1705
    %1707 = vmatprep.subr.mxu0 0.0
    %v1708 = vand.u32 %v1008, 4294901760
    %v1709 = vsub.f32 %v1008, %v1708
    %v1710 = vand.u32 %v1709, 4294901760
    %1711 = vmatpush2.msra.mxu0 %v1710
    %1712 = vmatprep.subr.mxu0 0.0
    %v1713 = vand.u32 %v1007, 4294901760
    %v1714 = vsub.f32 %v1007, %v1713
    %v1715 = vand.u32 %v1714, 4294901760
    %1716 = vmatpush2.msra.mxu0 %v1715
    %1717 = vmatprep.subr.mxu0 0.0
    %v1718 = vand.u32 %v1006, 4294901760
    %v1719 = vsub.f32 %v1006, %v1718
    %v1720 = vand.u32 %v1719, 4294901760
    %1721 = vmatpush2.msra.mxu0 %v1720
    %1722 = vmatprep.subr.mxu0 0.0
    %v1723 = vand.u32 %v1005, 4294901760
    %v1724 = vsub.f32 %v1005, %v1723
    %v1725 = vand.u32 %v1724, 4294901760
    %1726 = vmatpush2.msra.mxu0 %v1725
    %1727 = vmatprep.subr.mxu0 0.0
    %v1728 = vand.u32 %v1004, 4294901760
    %v1729 = vsub.f32 %v1004, %v1728
    %v1730 = vand.u32 %v1729, 4294901760
    %1731 = vmatpush2.msra.mxu0 %v1730
    %1732 = vmatprep.subr.mxu0 0.0
    %v1733 = vand.u32 %v1003, 4294901760
    %v1734 = vsub.f32 %v1003, %v1733
    %v1735 = vand.u32 %v1734, 4294901760
    %1736 = vmatpush2.msra.mxu0 %v1735
    %1737 = vmatprep.subr.mxu0 0.0
    %v1738 = vand.u32 %v1002, 4294901760
    %v1739 = vsub.f32 %v1002, %v1738
    %v1740 = vand.u32 %v1739, 4294901760
    %1741 = vmatpush2.msra.mxu0 %v1740
    %1742 = vmatprep.subr.mxu0 0.0
    %v1743 = vand.u32 %v1001, 4294901760
    %v1744 = vsub.f32 %v1001, %v1743
    %v1745 = vand.u32 %v1744, 4294901760
    %1746 = vmatpush2.msra.mxu0 %v1745
    %1747 = vmatprep.subr.mxu0 0.0
    %v1748 = vand.u32 %v1000, 4294901760
    %v1749 = vsub.f32 %v1000, %v1748
    %v1750 = vand.u32 %v1749, 4294901760
    %1751 = vmatpush2.msra.mxu0 %v1750
    %1752 = vmatprep.subr.mxu0 0.0
    %v1753 = vand.u32 %v999, 4294901760
    %v1754 = vsub.f32 %v999, %v1753
    %v1755 = vand.u32 %v1754, 4294901760
    %1756 = vmatpush2.msra.mxu0 %v1755
    %1757 = vmatprep.subr.mxu0 0.0
    %v1758 = vand.u32 %v998, 4294901760
    %v1759 = vsub.f32 %v998, %v1758
    %v1760 = vand.u32 %v1759, 4294901760
    %1761 = vmatpush2.msra.mxu0 %v1760
    %1762 = vmatprep.subr.mxu0 0.0
    %v1763 = vand.u32 %v997, 4294901760
    %v1764 = vsub.f32 %v997, %v1763
    %v1765 = vand.u32 %v1764, 4294901760
    %1766 = vmatpush2.msra.mxu0 %v1765
    %v1767 = vand.u32 %v978, 4294901760
    %1768 = vmatprep.mubr.f32.mxu0 %v1767
    %v1769 = vand.u32 %v976, 4294901760
    %1770 = vmatmul.mubr.f32.gmra.mxu0 %v1769
    %v1771 = vpop.f32.mrf.mxu0
    %v1772 = vadd.f32 %v1604, %v1771
    %v1773 = vpop.f32.mrf.mxu0
    %1774 = vdwg.mxu0
    %1775 = vmatprep.subr.mxu0 0.0
    %v1776 = vand.u32 %v996, 4294901760
    %1777 = vmatpush1.msra.mxu0 %v1776
    %1778 = vmatprep.subr.mxu0 0.0
    %v1779 = vand.u32 %v995, 4294901760
    %1780 = vmatpush1.msra.mxu0 %v1779
    %1781 = vmatprep.subr.mxu0 0.0
    %v1782 = vand.u32 %v994, 4294901760
    %1783 = vmatpush1.msra.mxu0 %v1782
    %1784 = vmatprep.subr.mxu0 0.0
    %v1785 = vand.u32 %v993, 4294901760
    %1786 = vmatpush1.msra.mxu0 %v1785
    %1787 = vmatprep.subr.mxu0 0.0
    %v1788 = vand.u32 %v992, 4294901760
    %1789 = vmatpush1.msra.mxu0 %v1788
    %1790 = vmatprep.subr.mxu0 0.0
    %v1791 = vand.u32 %v991, 4294901760
    %1792 = vmatpush1.msra.mxu0 %v1791
    %1793 = vmatprep.subr.mxu0 0.0
    %v1794 = vand.u32 %v990, 4294901760
    %1795 = vmatpush1.msra.mxu0 %v1794
    %1796 = vmatprep.subr.mxu0 0.0
    %v1797 = vand.u32 %v989, 4294901760
    %1798 = vmatpush1.msra.mxu0 %v1797
    %1799 = vmatprep.subr.mxu0 0.0
    %v1800 = vand.u32 %v988, 4294901760
    %1801 = vmatpush1.msra.mxu0 %v1800
    %1802 = vmatprep.subr.mxu0 0.0
    %v1803 = vand.u32 %v987, 4294901760
    %1804 = vmatpush1.msra.mxu0 %v1803
    %1805 = vmatprep.subr.mxu0 0.0
    %v1806 = vand.u32 %v986, 4294901760
    %1807 = vmatpush1.msra.mxu0 %v1806
    %1808 = vmatprep.subr.mxu0 0.0
    %v1809 = vand.u32 %v985, 4294901760
    %1810 = vmatpush1.msra.mxu0 %v1809
    %1811 = vmatprep.subr.mxu0 0.0
    %v1812 = vand.u32 %v984, 4294901760
    %1813 = vmatpush1.msra.mxu0 %v1812
    %1814 = vmatprep.subr.mxu0 0.0
    %v1815 = vand.u32 %v983, 4294901760
    %1816 = vmatpush1.msra.mxu0 %v1815
    %1817 = vmatprep.subr.mxu0 0.0
    %v1818 = vand.u32 %v982, 4294901760
    %1819 = vmatpush1.msra.mxu0 %v1818
    %1820 = vmatprep.subr.mxu0 0.0
    %v1821 = vand.u32 %v981, 4294901760
    %1822 = vmatpush1.msra.mxu0 %v1821
    %1823 = vmatprep.subr.mxu0 0.0
    %v1824 = vand.u32 %v1012, 4294901760
    %1825 = vmatpush2.msra.mxu0 %v1824
    %1826 = vmatprep.subr.mxu0 0.0
    %v1827 = vand.u32 %v1011, 4294901760
    %1828 = vmatpush2.msra.mxu0 %v1827
    %1829 = vmatprep.subr.mxu0 0.0
    %v1830 = vand.u32 %v1010, 4294901760
    %1831 = vmatpush2.msra.mxu0 %v1830
    %1832 = vmatprep.subr.mxu0 0.0
    %v1833 = vand.u32 %v1009, 4294901760
    %1834 = vmatpush2.msra.mxu0 %v1833
    %1835 = vmatprep.subr.mxu0 0.0
    %v1836 = vand.u32 %v1008, 4294901760
    %1837 = vmatpush2.msra.mxu0 %v1836
    %1838 = vmatprep.subr.mxu0 0.0
    %v1839 = vand.u32 %v1007, 4294901760
    %1840 = vmatpush2.msra.mxu0 %v1839
    %1841 = vmatprep.subr.mxu0 0.0
    %v1842 = vand.u32 %v1006, 4294901760
    %1843 = vmatpush2.msra.mxu0 %v1842
    %1844 = vmatprep.subr.mxu0 0.0
    %v1845 = vand.u32 %v1005, 4294901760
    %1846 = vmatpush2.msra.mxu0 %v1845
    %1847 = vmatprep.subr.mxu0 0.0
    %v1848 = vand.u32 %v1004, 4294901760
    %1849 = vmatpush2.msra.mxu0 %v1848
    %1850 = vmatprep.subr.mxu0 0.0
    %v1851 = vand.u32 %v1003, 4294901760
    %1852 = vmatpush2.msra.mxu0 %v1851
    %1853 = vmatprep.subr.mxu0 0.0
    %v1854 = vand.u32 %v1002, 4294901760
    %1855 = vmatpush2.msra.mxu0 %v1854
    %1856 = vmatprep.subr.mxu0 0.0
    %v1857 = vand.u32 %v1001, 4294901760
    %1858 = vmatpush2.msra.mxu0 %v1857
    %1859 = vmatprep.subr.mxu0 0.0
    %v1860 = vand.u32 %v1000, 4294901760
    %1861 = vmatpush2.msra.mxu0 %v1860
    %1862 = vmatprep.subr.mxu0 0.0
    %v1863 = vand.u32 %v999, 4294901760
    %1864 = vmatpush2.msra.mxu0 %v1863
    %1865 = vmatprep.subr.mxu0 0.0
    %v1866 = vand.u32 %v998, 4294901760
    %1867 = vmatpush2.msra.mxu0 %v1866
    %1868 = vmatprep.subr.mxu0 0.0
    %v1869 = vand.u32 %v997, 4294901760
    %1870 = vmatpush2.msra.mxu0 %v1869
    %v1871 = vand.u32 %v978, 4294901760
    %1872 = vmatprep.mubr.f32.mxu0 %v1871
    %v1873 = vand.u32 %v976, 4294901760
    %1874 = vmatmul.mubr.f32.gmra.mxu0 %v1873
    %v1875 = vpop.f32.mrf.mxu0
    %v1876 = vadd.f32 %v1772, %v1875
    %v1877 = vpop.f32.mrf.mxu0
    %1878 = vdwg.mxu0
    %v1879 = vld [vmem:[#allocation7] sm:$0xff]
    %v1880 = vld [vmem:[#allocation7 + $0x8] sm:$0xff]
    %v1881 = vld [vmem:[#allocation7 + $0x10] sm:$0xff]
    %v1882 = vld [vmem:[#allocation7 + $0x18] sm:$0xff]
    %v1883 = vld [vmem:[#allocation7 + $0x20] sm:$0xff]
    %v1884 = vld [vmem:[#allocation7 + $0x28] sm:$0xff]
    %v1885 = vld [vmem:[#allocation7 + $0x30] sm:$0xff]
    %v1886 = vld [vmem:[#allocation7 + $0x38] sm:$0xff]
    %v1887 = vld [vmem:[#allocation7 + $0x40] sm:$0xff]
    %v1888 = vld [vmem:[#allocation7 + $0x48] sm:$0xff]
    %v1889 = vld [vmem:[#allocation7 + $0x50] sm:$0xff]
    %v1890 = vld [vmem:[#allocation7 + $0x58] sm:$0xff]
    %v1891 = vld [vmem:[#allocation7 + $0x60] sm:$0xff]
    %v1892 = vld [vmem:[#allocation7 + $0x68] sm:$0xff]
    %v1893 = vld [vmem:[#allocation7 + $0x70] sm:$0xff]
    %v1894 = vld [vmem:[#allocation7 + $0x78] sm:$0xff]
    %v1895 = vld [vmem:[#allocation7 + $0x80] sm:$0xff]
    %v1896 = vld [vmem:[#allocation7 + $0x88] sm:$0xff]
    %v1897 = vld [vmem:[#allocation7 + $0x90] sm:$0xff]
    %v1898 = vld [vmem:[#allocation7 + $0x98] sm:$0xff]
    %v1899 = vld [vmem:[#allocation7 + $0xa0] sm:$0xff]
    %v1900 = vld [vmem:[#allocation7 + $0xa8] sm:$0xff]
    %v1901 = vld [vmem:[#allocation7 + $0xb0] sm:$0xff]
    %v1902 = vld [vmem:[#allocation7 + $0xb8] sm:$0xff]
    %v1903 = vld [vmem:[#allocation7 + $0xc0] sm:$0xff]
    %v1904 = vld [vmem:[#allocation7 + $0xc8] sm:$0xff]
    %v1905 = vld [vmem:[#allocation7 + $0xd0] sm:$0xff]
    %v1906 = vld [vmem:[#allocation7 + $0xd8] sm:$0xff]
    %v1907 = vld [vmem:[#allocation7 + $0xe0] sm:$0xff]
    %v1908 = vld [vmem:[#allocation7 + $0xe8] sm:$0xff]
    %v1909 = vld [vmem:[#allocation7 + $0xf0] sm:$0xff]
    %v1910 = vld [vmem:[#allocation7 + $0xf8] sm:$0xff]
    %v1911 = vld [vmem:[%s6] sm:$0xff]
    %v1912 = vld [vmem:[%s6 + $0x8] sm:$0xff]
    %v1913 = vld [vmem:[%s6 + $0x10] sm:$0xff]
    %v1914 = vld [vmem:[%s6 + $0x18] sm:$0xff]
    %v1915 = vld [vmem:[%s6 + $0x20] sm:$0xff]
    %v1916 = vld [vmem:[%s6 + $0x28] sm:$0xff]
    %v1917 = vld [vmem:[%s6 + $0x30] sm:$0xff]
    %v1918 = vld [vmem:[%s6 + $0x38] sm:$0xff]
    %v1919 = vld [vmem:[%s6 + $0x40] sm:$0xff]
    %v1920 = vld [vmem:[%s6 + $0x48] sm:$0xff]
    %v1921 = vld [vmem:[%s6 + $0x50] sm:$0xff]
    %v1922 = vld [vmem:[%s6 + $0x58] sm:$0xff]
    %v1923 = vld [vmem:[%s6 + $0x60] sm:$0xff]
    %v1924 = vld [vmem:[%s6 + $0x68] sm:$0xff]
    %v1925 = vld [vmem:[%s6 + $0x70] sm:$0xff]
    %v1926 = vld [vmem:[%s6 + $0x78] sm:$0xff]
    %1928 = vset.pattern.permute.xlu0 0
    %1929 = vperm.xlu0 %1928, %v1911
    %v1930 = vpop.permute.xlu0 %1929
    %1933 = vset.pattern.permute.xlu0 0
    %1934 = vperm.xlu0 %1933, %v1912
    %v1935 = vpop.permute.xlu0 %1934
    %1938 = vset.pattern.permute.xlu0 0
    %1939 = vperm.xlu0 %1938, %v1913
    %v1940 = vpop.permute.xlu0 %1939
    %1943 = vset.pattern.permute.xlu0 0
    %1944 = vperm.xlu0 %1943, %v1914
    %v1945 = vpop.permute.xlu0 %1944
    %1948 = vset.pattern.permute.xlu0 0
    %1949 = vperm.xlu0 %1948, %v1915
    %v1950 = vpop.permute.xlu0 %1949
    %1953 = vset.pattern.permute.xlu0 0
    %1954 = vperm.xlu0 %1953, %v1916
    %v1955 = vpop.permute.xlu0 %1954
    %1958 = vset.pattern.permute.xlu0 0
    %1959 = vperm.xlu0 %1958, %v1917
    %v1960 = vpop.permute.xlu0 %1959
    %1963 = vset.pattern.permute.xlu0 0
    %1964 = vperm.xlu0 %1963, %v1918
    %v1965 = vpop.permute.xlu0 %1964
    %1968 = vset.pattern.permute.xlu0 0
    %1969 = vperm.xlu0 %1968, %v1919
    %v1970 = vpop.permute.xlu0 %1969
    %1973 = vset.pattern.permute.xlu0 0
    %1974 = vperm.xlu0 %1973, %v1920
    %v1975 = vpop.permute.xlu0 %1974
    %1978 = vset.pattern.permute.xlu0 0
    %1979 = vperm.xlu0 %1978, %v1921
    %v1980 = vpop.permute.xlu0 %1979
    %1983 = vset.pattern.permute.xlu0 0
    %1984 = vperm.xlu0 %1983, %v1922
    %v1985 = vpop.permute.xlu0 %1984
    %1988 = vset.pattern.permute.xlu0 0
    %1989 = vperm.xlu0 %1988, %v1923
    %v1990 = vpop.permute.xlu0 %1989
    %1993 = vset.pattern.permute.xlu0 0
    %1994 = vperm.xlu0 %1993, %v1924
    %v1995 = vpop.permute.xlu0 %1994
    %1998 = vset.pattern.permute.xlu0 0
    %1999 = vperm.xlu0 %1998, %v1925
    %v2000 = vpop.permute.xlu0 %1999
    %2003 = vset.pattern.permute.xlu0 0
    %2004 = vperm.xlu0 %2003, %v1926
    %v2005 = vpop.permute.xlu0 %2004
    %2007 = vmatprep.subr.mxu0 0.0
    %v2008 = vand.u32 %v103, 4294901760
    %2009 = vmatpush1.msra.mxu0 %v2008
    %2010 = vmatprep.subr.mxu0 0.0
    %v2011 = vand.u32 %v102, 4294901760
    %2012 = vmatpush1.msra.mxu0 %v2011
    %2013 = vmatprep.subr.mxu0 0.0
    %v2014 = vand.u32 %v101, 4294901760
    %2015 = vmatpush1.msra.mxu0 %v2014
    %2016 = vmatprep.subr.mxu0 0.0
    %v2017 = vand.u32 %v100, 4294901760
    %2018 = vmatpush1.msra.mxu0 %v2017
    %2019 = vmatprep.subr.mxu0 0.0
    %v2020 = vand.u32 %v99, 4294901760
    %2021 = vmatpush1.msra.mxu0 %v2020
    %2022 = vmatprep.subr.mxu0 0.0
    %v2023 = vand.u32 %v98, 4294901760
    %2024 = vmatpush1.msra.mxu0 %v2023
    %2025 = vmatprep.subr.mxu0 0.0
    %v2026 = vand.u32 %v97, 4294901760
    %2027 = vmatpush1.msra.mxu0 %v2026
    %2028 = vmatprep.subr.mxu0 0.0
    %v2029 = vand.u32 %v96, 4294901760
    %2030 = vmatpush1.msra.mxu0 %v2029
    %2031 = vmatprep.subr.mxu0 0.0
    %v2032 = vand.u32 %v95, 4294901760
    %2033 = vmatpush1.msra.mxu0 %v2032
    %2034 = vmatprep.subr.mxu0 0.0
    %v2035 = vand.u32 %v94, 4294901760
    %2036 = vmatpush1.msra.mxu0 %v2035
    %2037 = vmatprep.subr.mxu0 0.0
    %v2038 = vand.u32 %v93, 4294901760
    %2039 = vmatpush1.msra.mxu0 %v2038
    %2040 = vmatprep.subr.mxu0 0.0
    %v2041 = vand.u32 %v92, 4294901760
    %2042 = vmatpush1.msra.mxu0 %v2041
    %2043 = vmatprep.subr.mxu0 0.0
    %v2044 = vand.u32 %v91, 4294901760
    %2045 = vmatpush1.msra.mxu0 %v2044
    %2046 = vmatprep.subr.mxu0 0.0
    %v2047 = vand.u32 %v90, 4294901760
    %2048 = vmatpush1.msra.mxu0 %v2047
    %2049 = vmatprep.subr.mxu0 0.0
    %v2050 = vand.u32 %v89, 4294901760
    %2051 = vmatpush1.msra.mxu0 %v2050
    %2052 = vmatprep.subr.mxu0 0.0
    %v2053 = vand.u32 %v88, 4294901760
    %2054 = vmatpush1.msra.mxu0 %v2053
    %2055 = vmatprep.subr.mxu0 0.0
    %v2056 = vand.u32 %v119, 4294901760
    %2057 = vmatpush2.msra.mxu0 %v2056
    %2058 = vmatprep.subr.mxu0 0.0
    %v2059 = vand.u32 %v118, 4294901760
    %2060 = vmatpush2.msra.mxu0 %v2059
    %2061 = vmatprep.subr.mxu0 0.0
    %v2062 = vand.u32 %v117, 4294901760
    %2063 = vmatpush2.msra.mxu0 %v2062
    %2064 = vmatprep.subr.mxu0 0.0
    %v2065 = vand.u32 %v116, 4294901760
    %2066 = vmatpush2.msra.mxu0 %v2065
    %2067 = vmatprep.subr.mxu0 0.0
    %v2068 = vand.u32 %v115, 4294901760
    %2069 = vmatpush2.msra.mxu0 %v2068
    %2070 = vmatprep.subr.mxu0 0.0
    %v2071 = vand.u32 %v114, 4294901760
    %2072 = vmatpush2.msra.mxu0 %v2071
    %2073 = vmatprep.subr.mxu0 0.0
    %v2074 = vand.u32 %v113, 4294901760
    %2075 = vmatpush2.msra.mxu0 %v2074
    %2076 = vmatprep.subr.mxu0 0.0
    %v2077 = vand.u32 %v112, 4294901760
    %2078 = vmatpush2.msra.mxu0 %v2077
    %2079 = vmatprep.subr.mxu0 0.0
    %v2080 = vand.u32 %v111, 4294901760
    %2081 = vmatpush2.msra.mxu0 %v2080
    %2082 = vmatprep.subr.mxu0 0.0
    %v2083 = vand.u32 %v110, 4294901760
    %2084 = vmatpush2.msra.mxu0 %v2083
    %2085 = vmatprep.subr.mxu0 0.0
    %v2086 = vand.u32 %v109, 4294901760
    %2087 = vmatpush2.msra.mxu0 %v2086
    %2088 = vmatprep.subr.mxu0 0.0
    %v2089 = vand.u32 %v108, 4294901760
    %2090 = vmatpush2.msra.mxu0 %v2089
    %2091 = vmatprep.subr.mxu0 0.0
    %v2092 = vand.u32 %v107, 4294901760
    %2093 = vmatpush2.msra.mxu0 %v2092
    %2094 = vmatprep.subr.mxu0 0.0
    %v2095 = vand.u32 %v106, 4294901760
    %2096 = vmatpush2.msra.mxu0 %v2095
    %2097 = vmatprep.subr.mxu0 0.0
    %v2098 = vand.u32 %v105, 4294901760
    %2099 = vmatpush2.msra.mxu0 %v2098
    %2100 = vmatprep.subr.mxu0 0.0
    %v2101 = vand.u32 %v104, 4294901760
    %2102 = vmatpush2.msra.mxu0 %v2101
    %v2103 = vand.u32 %v1880, 4294901760
    %v2104 = vsub.f32 %v1880, %v2103
    %v2105 = vand.u32 %v2104, 4294901760
    %v2106 = vsub.f32 %v2104, %v2105
    %v2107 = vand.u32 %v2106, 4294901760
    %2108 = vmatprep.mubr.f32.mxu0 %v2107
    %v2109 = vand.u32 %v1879, 4294901760
    %v2110 = vsub.f32 %v1879, %v2109
    %v2111 = vand.u32 %v2110, 4294901760
    %v2112 = vsub.f32 %v2110, %v2111
    %v2113 = vand.u32 %v2112, 4294901760
    %2114 = vmatmul.mubr.f32.gmra.mxu0 %v2113
    %v2115 = vpop.f32.mrf.mxu0
    %v2116 = vadd.f32 %v1930, %v2115
    %v2117 = vpop.f32.mrf.mxu0
    %v2118 = vand.u32 %v1882, 4294901760
    %v2119 = vsub.f32 %v1882, %v2118
    %v2120 = vand.u32 %v2119, 4294901760
    %v2121 = vsub.f32 %v2119, %v2120
    %v2122 = vand.u32 %v2121, 4294901760
    %2123 = vmatprep.mubr.f32.mxu0 %v2122
    %v2124 = vand.u32 %v1881, 4294901760
    %v2125 = vsub.f32 %v1881, %v2124
    %v2126 = vand.u32 %v2125, 4294901760
    %v2127 = vsub.f32 %v2125, %v2126
    %v2128 = vand.u32 %v2127, 4294901760
    %2129 = vmatmul.mubr.f32.gmra.mxu0 %v2128
    %v2130 = vpop.f32.mrf.mxu0
    %v2131 = vadd.f32 %v1935, %v2130
    %v2132 = vpop.f32.mrf.mxu0
    %v2133 = vand.u32 %v1884, 4294901760
    %v2134 = vsub.f32 %v1884, %v2133
    %v2135 = vand.u32 %v2134, 4294901760
    %v2136 = vsub.f32 %v2134, %v2135
    %v2137 = vand.u32 %v2136, 4294901760
    %2138 = vmatprep.mubr.f32.mxu0 %v2137
    %v2139 = vand.u32 %v1883, 4294901760
    %v2140 = vsub.f32 %v1883, %v2139
    %v2141 = vand.u32 %v2140, 4294901760
    %v2142 = vsub.f32 %v2140, %v2141
    %v2143 = vand.u32 %v2142, 4294901760
    %2144 = vmatmul.mubr.f32.gmra.mxu0 %v2143
    %v2145 = vpop.f32.mrf.mxu0
    %v2146 = vadd.f32 %v1940, %v2145
    %v2147 = vpop.f32.mrf.mxu0
    %v2148 = vand.u32 %v1886, 4294901760
    %v2149 = vsub.f32 %v1886, %v2148
    %v2150 = vand.u32 %v2149, 4294901760
    %v2151 = vsub.f32 %v2149, %v2150
    %v2152 = vand.u32 %v2151, 4294901760
    %2153 = vmatprep.mubr.f32.mxu0 %v2152
    %v2154 = vand.u32 %v1885, 4294901760
    %v2155 = vsub.f32 %v1885, %v2154
    %v2156 = vand.u32 %v2155, 4294901760
    %v2157 = vsub.f32 %v2155, %v2156
    %v2158 = vand.u32 %v2157, 4294901760
    %2159 = vmatmul.mubr.f32.gmra.mxu0 %v2158
    %v2160 = vpop.f32.mrf.mxu0
    %v2161 = vadd.f32 %v1945, %v2160
    %v2162 = vpop.f32.mrf.mxu0
    %v2163 = vand.u32 %v1888, 4294901760
    %v2164 = vsub.f32 %v1888, %v2163
    %v2165 = vand.u32 %v2164, 4294901760
    %v2166 = vsub.f32 %v2164, %v2165
    %v2167 = vand.u32 %v2166, 4294901760
    %2168 = vmatprep.mubr.f32.mxu0 %v2167
    %v2169 = vand.u32 %v1887, 4294901760
    %v2170 = vsub.f32 %v1887, %v2169
    %v2171 = vand.u32 %v2170, 4294901760
    %v2172 = vsub.f32 %v2170, %v2171
    %v2173 = vand.u32 %v2172, 4294901760
    %2174 = vmatmul.mubr.f32.gmra.mxu0 %v2173
    %v2175 = vpop.f32.mrf.mxu0
    %v2176 = vadd.f32 %v1950, %v2175
    %v2177 = vpop.f32.mrf.mxu0
    %v2178 = vand.u32 %v1890, 4294901760
    %v2179 = vsub.f32 %v1890, %v2178
    %v2180 = vand.u32 %v2179, 4294901760
    %v2181 = vsub.f32 %v2179, %v2180
    %v2182 = vand.u32 %v2181, 4294901760
    %2183 = vmatprep.mubr.f32.mxu0 %v2182
    %v2184 = vand.u32 %v1889, 4294901760
    %v2185 = vsub.f32 %v1889, %v2184
    %v2186 = vand.u32 %v2185, 4294901760
    %v2187 = vsub.f32 %v2185, %v2186
    %v2188 = vand.u32 %v2187, 4294901760
    %2189 = vmatmul.mubr.f32.gmra.mxu0 %v2188
    %v2190 = vpop.f32.mrf.mxu0
    %v2191 = vadd.f32 %v1955, %v2190
    %v2192 = vpop.f32.mrf.mxu0
    %v2193 = vand.u32 %v1892, 4294901760
    %v2194 = vsub.f32 %v1892, %v2193
    %v2195 = vand.u32 %v2194, 4294901760
    %v2196 = vsub.f32 %v2194, %v2195
    %v2197 = vand.u32 %v2196, 4294901760
    %2198 = vmatprep.mubr.f32.mxu0 %v2197
    %v2199 = vand.u32 %v1891, 4294901760
    %v2200 = vsub.f32 %v1891, %v2199
    %v2201 = vand.u32 %v2200, 4294901760
    %v2202 = vsub.f32 %v2200, %v2201
    %v2203 = vand.u32 %v2202, 4294901760
    %2204 = vmatmul.mubr.f32.gmra.mxu0 %v2203
    %v2205 = vpop.f32.mrf.mxu0
    %v2206 = vadd.f32 %v1960, %v2205
    %v2207 = vpop.f32.mrf.mxu0
    %v2208 = vand.u32 %v1894, 4294901760
    %v2209 = vsub.f32 %v1894, %v2208
    %v2210 = vand.u32 %v2209, 4294901760
    %v2211 = vsub.f32 %v2209, %v2210
    %v2212 = vand.u32 %v2211, 4294901760
    %2213 = vmatprep.mubr.f32.mxu0 %v2212
    %v2214 = vand.u32 %v1893, 4294901760
    %v2215 = vsub.f32 %v1893, %v2214
    %v2216 = vand.u32 %v2215, 4294901760
    %v2217 = vsub.f32 %v2215, %v2216
    %v2218 = vand.u32 %v2217, 4294901760
    %2219 = vmatmul.mubr.f32.gmra.mxu0 %v2218
    %v2220 = vpop.f32.mrf.mxu0
    %v2221 = vadd.f32 %v1965, %v2220
    %v2222 = vpop.f32.mrf.mxu0
    %v2223 = vand.u32 %v1896, 4294901760
    %v2224 = vsub.f32 %v1896, %v2223
    %v2225 = vand.u32 %v2224, 4294901760
    %v2226 = vsub.f32 %v2224, %v2225
    %v2227 = vand.u32 %v2226, 4294901760
    %2228 = vmatprep.mubr.f32.mxu0 %v2227
    %v2229 = vand.u32 %v1895, 4294901760
    %v2230 = vsub.f32 %v1895, %v2229
    %v2231 = vand.u32 %v2230, 4294901760
    %v2232 = vsub.f32 %v2230, %v2231
    %v2233 = vand.u32 %v2232, 4294901760
    %2234 = vmatmul.mubr.f32.gmra.mxu0 %v2233
    %v2235 = vpop.f32.mrf.mxu0
    %v2236 = vadd.f32 %v1970, %v2235
    %v2237 = vpop.f32.mrf.mxu0
    %v2238 = vand.u32 %v1898, 4294901760
    %v2239 = vsub.f32 %v1898, %v2238
    %v2240 = vand.u32 %v2239, 4294901760
    %v2241 = vsub.f32 %v2239, %v2240
    %v2242 = vand.u32 %v2241, 4294901760
    %2243 = vmatprep.mubr.f32.mxu0 %v2242
    %v2244 = vand.u32 %v1897, 4294901760
    %v2245 = vsub.f32 %v1897, %v2244
    %v2246 = vand.u32 %v2245, 4294901760
    %v2247 = vsub.f32 %v2245, %v2246
    %v2248 = vand.u32 %v2247, 4294901760
    %2249 = vmatmul.mubr.f32.gmra.mxu0 %v2248
    %v2250 = vpop.f32.mrf.mxu0
    %v2251 = vadd.f32 %v1975, %v2250
    %v2252 = vpop.f32.mrf.mxu0
    %v2253 = vand.u32 %v1900, 4294901760
    %v2254 = vsub.f32 %v1900, %v2253
    %v2255 = vand.u32 %v2254, 4294901760
    %v2256 = vsub.f32 %v2254, %v2255
    %v2257 = vand.u32 %v2256, 4294901760
    %2258 = vmatprep.mubr.f32.mxu0 %v2257
    %v2259 = vand.u32 %v1899, 4294901760
    %v2260 = vsub.f32 %v1899, %v2259
    %v2261 = vand.u32 %v2260, 4294901760
    %v2262 = vsub.f32 %v2260, %v2261
    %v2263 = vand.u32 %v2262, 4294901760
    %2264 = vmatmul.mubr.f32.gmra.mxu0 %v2263
    %v2265 = vpop.f32.mrf.mxu0
    %v2266 = vadd.f32 %v1980, %v2265
    %v2267 = vpop.f32.mrf.mxu0
    %v2268 = vand.u32 %v1902, 4294901760
    %v2269 = vsub.f32 %v1902, %v2268
    %v2270 = vand.u32 %v2269, 4294901760
    %v2271 = vsub.f32 %v2269, %v2270
    %v2272 = vand.u32 %v2271, 4294901760
    %2273 = vmatprep.mubr.f32.mxu0 %v2272
    %v2274 = vand.u32 %v1901, 4294901760
    %v2275 = vsub.f32 %v1901, %v2274
    %v2276 = vand.u32 %v2275, 4294901760
    %v2277 = vsub.f32 %v2275, %v2276
    %v2278 = vand.u32 %v2277, 4294901760
    %2279 = vmatmul.mubr.f32.gmra.mxu0 %v2278
    %v2280 = vpop.f32.mrf.mxu0
    %v2281 = vadd.f32 %v1985, %v2280
    %v2282 = vpop.f32.mrf.mxu0
    %v2283 = vand.u32 %v1904, 4294901760
    %v2284 = vsub.f32 %v1904, %v2283
    %v2285 = vand.u32 %v2284, 4294901760
    %v2286 = vsub.f32 %v2284, %v2285
    %v2287 = vand.u32 %v2286, 4294901760
    %2288 = vmatprep.mubr.f32.mxu0 %v2287
    %v2289 = vand.u32 %v1903, 4294901760
    %v2290 = vsub.f32 %v1903, %v2289
    %v2291 = vand.u32 %v2290, 4294901760
    %v2292 = vsub.f32 %v2290, %v2291
    %v2293 = vand.u32 %v2292, 4294901760
    %2294 = vmatmul.mubr.f32.gmra.mxu0 %v2293
    %v2295 = vpop.f32.mrf.mxu0
    %v2296 = vadd.f32 %v1990, %v2295
    %v2297 = vpop.f32.mrf.mxu0
    %v2298 = vand.u32 %v1906, 4294901760
    %v2299 = vsub.f32 %v1906, %v2298
    %v2300 = vand.u32 %v2299, 4294901760
    %v2301 = vsub.f32 %v2299, %v2300
    %v2302 = vand.u32 %v2301, 4294901760
    %2303 = vmatprep.mubr.f32.mxu0 %v2302
    %v2304 = vand.u32 %v1905, 4294901760
    %v2305 = vsub.f32 %v1905, %v2304
    %v2306 = vand.u32 %v2305, 4294901760
    %v2307 = vsub.f32 %v2305, %v2306
    %v2308 = vand.u32 %v2307, 4294901760
    %2309 = vmatmul.mubr.f32.gmra.mxu0 %v2308
    %v2310 = vpop.f32.mrf.mxu0
    %v2311 = vadd.f32 %v1995, %v2310
    %v2312 = vpop.f32.mrf.mxu0
    %v2313 = vand.u32 %v1908, 4294901760
    %v2314 = vsub.f32 %v1908, %v2313
    %v2315 = vand.u32 %v2314, 4294901760
    %v2316 = vsub.f32 %v2314, %v2315
    %v2317 = vand.u32 %v2316, 4294901760
    %2318 = vmatprep.mubr.f32.mxu0 %v2317
    %v2319 = vand.u32 %v1907, 4294901760
    %v2320 = vsub.f32 %v1907, %v2319
    %v2321 = vand.u32 %v2320, 4294901760
    %v2322 = vsub.f32 %v2320, %v2321
    %v2323 = vand.u32 %v2322, 4294901760
    %2324 = vmatmul.mubr.f32.gmra.mxu0 %v2323
    %v2325 = vpop.f32.mrf.mxu0
    %v2326 = vadd.f32 %v2000, %v2325
    %v2327 = vpop.f32.mrf.mxu0
    %v2328 = vand.u32 %v1910, 4294901760
    %v2329 = vsub.f32 %v1910, %v2328
    %v2330 = vand.u32 %v2329, 4294901760
    %v2331 = vsub.f32 %v2329, %v2330
    %v2332 = vand.u32 %v2331, 4294901760
    %2333 = vmatprep.mubr.f32.mxu0 %v2332
    %v2334 = vand.u32 %v1909, 4294901760
    %v2335 = vsub.f32 %v1909, %v2334
    %v2336 = vand.u32 %v2335, 4294901760
    %v2337 = vsub.f32 %v2335, %v2336
    %v2338 = vand.u32 %v2337, 4294901760
    %2339 = vmatmul.mubr.f32.gmra.mxu0 %v2338
    %v2340 = vpop.f32.mrf.mxu0
    %v2341 = vadd.f32 %v2005, %v2340
    %v2342 = vpop.f32.mrf.mxu0
    %2343 = vdwg.mxu0
    %2344 = vmatprep.subr.mxu0 0.0
    %v2345 = vand.u32 %v103, 4294901760
    %v2346 = vsub.f32 %v103, %v2345
    %v2347 = vand.u32 %v2346, 4294901760
    %v2348 = vsub.f32 %v2346, %v2347
    %v2349 = vand.u32 %v2348, 4294901760
    %2350 = vmatpush1.msra.mxu0 %v2349
    %2351 = vmatprep.subr.mxu0 0.0
    %v2352 = vand.u32 %v102, 4294901760
    %v2353 = vsub.f32 %v102, %v2352
    %v2354 = vand.u32 %v2353, 4294901760
    %v2355 = vsub.f32 %v2353, %v2354
    %v2356 = vand.u32 %v2355, 4294901760
    %2357 = vmatpush1.msra.mxu0 %v2356
    %2358 = vmatprep.subr.mxu0 0.0
    %v2359 = vand.u32 %v101, 4294901760
    %v2360 = vsub.f32 %v101, %v2359
    %v2361 = vand.u32 %v2360, 4294901760
    %v2362 = vsub.f32 %v2360, %v2361
    %v2363 = vand.u32 %v2362, 4294901760
    %2364 = vmatpush1.msra.mxu0 %v2363
    %2365 = vmatprep.subr.mxu0 0.0
    %v2366 = vand.u32 %v100, 4294901760
    %v2367 = vsub.f32 %v100, %v2366
    %v2368 = vand.u32 %v2367, 4294901760
    %v2369 = vsub.f32 %v2367, %v2368
    %v2370 = vand.u32 %v2369, 4294901760
    %2371 = vmatpush1.msra.mxu0 %v2370
    %2372 = vmatprep.subr.mxu0 0.0
    %v2373 = vand.u32 %v99, 4294901760
    %v2374 = vsub.f32 %v99, %v2373
    %v2375 = vand.u32 %v2374, 4294901760
    %v2376 = vsub.f32 %v2374, %v2375
    %v2377 = vand.u32 %v2376, 4294901760
    %2378 = vmatpush1.msra.mxu0 %v2377
    %2379 = vmatprep.subr.mxu0 0.0
    %v2380 = vand.u32 %v98, 4294901760
    %v2381 = vsub.f32 %v98, %v2380
    %v2382 = vand.u32 %v2381, 4294901760
    %v2383 = vsub.f32 %v2381, %v2382
    %v2384 = vand.u32 %v2383, 4294901760
    %2385 = vmatpush1.msra.mxu0 %v2384
    %2386 = vmatprep.subr.mxu0 0.0
    %v2387 = vand.u32 %v97, 4294901760
    %v2388 = vsub.f32 %v97, %v2387
    %v2389 = vand.u32 %v2388, 4294901760
    %v2390 = vsub.f32 %v2388, %v2389
    %v2391 = vand.u32 %v2390, 4294901760
    %2392 = vmatpush1.msra.mxu0 %v2391
    %2393 = vmatprep.subr.mxu0 0.0
    %v2394 = vand.u32 %v96, 4294901760
    %v2395 = vsub.f32 %v96, %v2394
    %v2396 = vand.u32 %v2395, 4294901760
    %v2397 = vsub.f32 %v2395, %v2396
    %v2398 = vand.u32 %v2397, 4294901760
    %2399 = vmatpush1.msra.mxu0 %v2398
    %2400 = vmatprep.subr.mxu0 0.0
    %v2401 = vand.u32 %v95, 4294901760
    %v2402 = vsub.f32 %v95, %v2401
    %v2403 = vand.u32 %v2402, 4294901760
    %v2404 = vsub.f32 %v2402, %v2403
    %v2405 = vand.u32 %v2404, 4294901760
    %2406 = vmatpush1.msra.mxu0 %v2405
    %2407 = vmatprep.subr.mxu0 0.0
    %v2408 = vand.u32 %v94, 4294901760
    %v2409 = vsub.f32 %v94, %v2408
    %v2410 = vand.u32 %v2409, 4294901760
    %v2411 = vsub.f32 %v2409, %v2410
    %v2412 = vand.u32 %v2411, 4294901760
    %2413 = vmatpush1.msra.mxu0 %v2412
    %2414 = vmatprep.subr.mxu0 0.0
    %v2415 = vand.u32 %v93, 4294901760
    %v2416 = vsub.f32 %v93, %v2415
    %v2417 = vand.u32 %v2416, 4294901760
    %v2418 = vsub.f32 %v2416, %v2417
    %v2419 = vand.u32 %v2418, 4294901760
    %2420 = vmatpush1.msra.mxu0 %v2419
    %2421 = vmatprep.subr.mxu0 0.0
    %v2422 = vand.u32 %v92, 4294901760
    %v2423 = vsub.f32 %v92, %v2422
    %v2424 = vand.u32 %v2423, 4294901760
    %v2425 = vsub.f32 %v2423, %v2424
    %v2426 = vand.u32 %v2425, 4294901760
    %2427 = vmatpush1.msra.mxu0 %v2426
    %2428 = vmatprep.subr.mxu0 0.0
    %v2429 = vand.u32 %v91, 4294901760
    %v2430 = vsub.f32 %v91, %v2429
    %v2431 = vand.u32 %v2430, 4294901760
    %v2432 = vsub.f32 %v2430, %v2431
    %v2433 = vand.u32 %v2432, 4294901760
    %2434 = vmatpush1.msra.mxu0 %v2433
    %2435 = vmatprep.subr.mxu0 0.0
    %v2436 = vand.u32 %v90, 4294901760
    %v2437 = vsub.f32 %v90, %v2436
    %v2438 = vand.u32 %v2437, 4294901760
    %v2439 = vsub.f32 %v2437, %v2438
    %v2440 = vand.u32 %v2439, 4294901760
    %2441 = vmatpush1.msra.mxu0 %v2440
    %2442 = vmatprep.subr.mxu0 0.0
    %v2443 = vand.u32 %v89, 4294901760
    %v2444 = vsub.f32 %v89, %v2443
    %v2445 = vand.u32 %v2444, 4294901760
    %v2446 = vsub.f32 %v2444, %v2445
    %v2447 = vand.u32 %v2446, 4294901760
    %2448 = vmatpush1.msra.mxu0 %v2447
    %2449 = vmatprep.subr.mxu0 0.0
    %v2450 = vand.u32 %v88, 4294901760
    %v2451 = vsub.f32 %v88, %v2450
    %v2452 = vand.u32 %v2451, 4294901760
    %v2453 = vsub.f32 %v2451, %v2452
    %v2454 = vand.u32 %v2453, 4294901760
    %2455 = vmatpush1.msra.mxu0 %v2454
    %2456 = vmatprep.subr.mxu0 0.0
    %v2457 = vand.u32 %v119, 4294901760
    %v2458 = vsub.f32 %v119, %v2457
    %v2459 = vand.u32 %v2458, 4294901760
    %v2460 = vsub.f32 %v2458, %v2459
    %v2461 = vand.u32 %v2460, 4294901760
    %2462 = vmatpush2.msra.mxu0 %v2461
    %2463 = vmatprep.subr.mxu0 0.0
    %v2464 = vand.u32 %v118, 4294901760
    %v2465 = vsub.f32 %v118, %v2464
    %v2466 = vand.u32 %v2465, 4294901760
    %v2467 = vsub.f32 %v2465, %v2466
    %v2468 = vand.u32 %v2467, 4294901760
    %2469 = vmatpush2.msra.mxu0 %v2468
    %2470 = vmatprep.subr.mxu0 0.0
    %v2471 = vand.u32 %v117, 4294901760
    %v2472 = vsub.f32 %v117, %v2471
    %v2473 = vand.u32 %v2472, 4294901760
    %v2474 = vsub.f32 %v2472, %v2473
    %v2475 = vand.u32 %v2474, 4294901760
    %2476 = vmatpush2.msra.mxu0 %v2475
    %2477 = vmatprep.subr.mxu0 0.0
    %v2478 = vand.u32 %v116, 4294901760
    %v2479 = vsub.f32 %v116, %v2478
    %v2480 = vand.u32 %v2479, 4294901760
    %v2481 = vsub.f32 %v2479, %v2480
    %v2482 = vand.u32 %v2481, 4294901760
    %2483 = vmatpush2.msra.mxu0 %v2482
    %2484 = vmatprep.subr.mxu0 0.0
    %v2485 = vand.u32 %v115, 4294901760
    %v2486 = vsub.f32 %v115, %v2485
    %v2487 = vand.u32 %v2486, 4294901760
    %v2488 = vsub.f32 %v2486, %v2487
    %v2489 = vand.u32 %v2488, 4294901760
    %2490 = vmatpush2.msra.mxu0 %v2489
    %2491 = vmatprep.subr.mxu0 0.0
    %v2492 = vand.u32 %v114, 4294901760
    %v2493 = vsub.f32 %v114, %v2492
    %v2494 = vand.u32 %v2493, 4294901760
    %v2495 = vsub.f32 %v2493, %v2494
    %v2496 = vand.u32 %v2495, 4294901760
    %2497 = vmatpush2.msra.mxu0 %v2496
    %2498 = vmatprep.subr.mxu0 0.0
    %v2499 = vand.u32 %v113, 4294901760
    %v2500 = vsub.f32 %v113, %v2499
    %v2501 = vand.u32 %v2500, 4294901760
    %v2502 = vsub.f32 %v2500, %v2501
    %v2503 = vand.u32 %v2502, 4294901760
    %2504 = vmatpush2.msra.mxu0 %v2503
    %2505 = vmatprep.subr.mxu0 0.0
    %v2506 = vand.u32 %v112, 4294901760
    %v2507 = vsub.f32 %v112, %v2506
    %v2508 = vand.u32 %v2507, 4294901760
    %v2509 = vsub.f32 %v2507, %v2508
    %v2510 = vand.u32 %v2509, 4294901760
    %2511 = vmatpush2.msra.mxu0 %v2510
    %2512 = vmatprep.subr.mxu0 0.0
    %v2513 = vand.u32 %v111, 4294901760
    %v2514 = vsub.f32 %v111, %v2513
    %v2515 = vand.u32 %v2514, 4294901760
    %v2516 = vsub.f32 %v2514, %v2515
    %v2517 = vand.u32 %v2516, 4294901760
    %2518 = vmatpush2.msra.mxu0 %v2517
    %2519 = vmatprep.subr.mxu0 0.0
    %v2520 = vand.u32 %v110, 4294901760
    %v2521 = vsub.f32 %v110, %v2520
    %v2522 = vand.u32 %v2521, 4294901760
    %v2523 = vsub.f32 %v2521, %v2522
    %v2524 = vand.u32 %v2523, 4294901760
    %2525 = vmatpush2.msra.mxu0 %v2524
    %2526 = vmatprep.subr.mxu0 0.0
    %v2527 = vand.u32 %v109, 4294901760
    %v2528 = vsub.f32 %v109, %v2527
    %v2529 = vand.u32 %v2528, 4294901760
    %v2530 = vsub.f32 %v2528, %v2529
    %v2531 = vand.u32 %v2530, 4294901760
    %2532 = vmatpush2.msra.mxu0 %v2531
    %2533 = vmatprep.subr.mxu0 0.0
    %v2534 = vand.u32 %v108, 4294901760
    %v2535 = vsub.f32 %v108, %v2534
    %v2536 = vand.u32 %v2535, 4294901760
    %v2537 = vsub.f32 %v2535, %v2536
    %v2538 = vand.u32 %v2537, 4294901760
    %2539 = vmatpush2.msra.mxu0 %v2538
    %2540 = vmatprep.subr.mxu0 0.0
    %v2541 = vand.u32 %v107, 4294901760
    %v2542 = vsub.f32 %v107, %v2541
    %v2543 = vand.u32 %v2542, 4294901760
    %v2544 = vsub.f32 %v2542, %v2543
    %v2545 = vand.u32 %v2544, 4294901760
    %2546 = vmatpush2.msra.mxu0 %v2545
    %2547 = vmatprep.subr.mxu0 0.0
    %v2548 = vand.u32 %v106, 4294901760
    %v2549 = vsub.f32 %v106, %v2548
    %v2550 = vand.u32 %v2549, 4294901760
    %v2551 = vsub.f32 %v2549, %v2550
    %v2552 = vand.u32 %v2551, 4294901760
    %2553 = vmatpush2.msra.mxu0 %v2552
    %2554 = vmatprep.subr.mxu0 0.0
    %v2555 = vand.u32 %v105, 4294901760
    %v2556 = vsub.f32 %v105, %v2555
    %v2557 = vand.u32 %v2556, 4294901760
    %v2558 = vsub.f32 %v2556, %v2557
    %v2559 = vand.u32 %v2558, 4294901760
    %2560 = vmatpush2.msra.mxu0 %v2559
    %2561 = vmatprep.subr.mxu0 0.0
    %v2562 = vand.u32 %v104, 4294901760
    %v2563 = vsub.f32 %v104, %v2562
    %v2564 = vand.u32 %v2563, 4294901760
    %v2565 = vsub.f32 %v2563, %v2564
    %v2566 = vand.u32 %v2565, 4294901760
    %2567 = vmatpush2.msra.mxu0 %v2566
    %v2568 = vand.u32 %v1880, 4294901760
    %2569 = vmatprep.mubr.f32.mxu0 %v2568
    %v2570 = vand.u32 %v1879, 4294901760
    %2571 = vmatmul.mubr.f32.gmra.mxu0 %v2570
    %v2572 = vpop.f32.mrf.mxu0
    %v2573 = vadd.f32 %v2116, %v2572
    %v2574 = vpop.f32.mrf.mxu0
    %v2575 = vand.u32 %v1882, 4294901760
    %2576 = vmatprep.mubr.f32.mxu0 %v2575
    %v2577 = vand.u32 %v1881, 4294901760
    %2578 = vmatmul.mubr.f32.gmra.mxu0 %v2577
    %v2579 = vpop.f32.mrf.mxu0
    %v2580 = vadd.f32 %v2131, %v2579
    %v2581 = vpop.f32.mrf.mxu0
    %v2582 = vand.u32 %v1884, 4294901760
    %2583 = vmatprep.mubr.f32.mxu0 %v2582
    %v2584 = vand.u32 %v1883, 4294901760
    %2585 = vmatmul.mubr.f32.gmra.mxu0 %v2584
    %v2586 = vpop.f32.mrf.mxu0
    %v2587 = vadd.f32 %v2146, %v2586
    %v2588 = vpop.f32.mrf.mxu0
    %v2589 = vand.u32 %v1886, 4294901760
    %2590 = vmatprep.mubr.f32.mxu0 %v2589
    %v2591 = vand.u32 %v1885, 4294901760
    %2592 = vmatmul.mubr.f32.gmra.mxu0 %v2591
    %v2593 = vpop.f32.mrf.mxu0
    %v2594 = vadd.f32 %v2161, %v2593
    %v2595 = vpop.f32.mrf.mxu0
    %v2596 = vand.u32 %v1888, 4294901760
    %2597 = vmatprep.mubr.f32.mxu0 %v2596
    %v2598 = vand.u32 %v1887, 4294901760
    %2599 = vmatmul.mubr.f32.gmra.mxu0 %v2598
    %v2600 = vpop.f32.mrf.mxu0
    %v2601 = vadd.f32 %v2176, %v2600
    %v2602 = vpop.f32.mrf.mxu0
    %v2603 = vand.u32 %v1890, 4294901760
    %2604 = vmatprep.mubr.f32.mxu0 %v2603
    %v2605 = vand.u32 %v1889, 4294901760
    %2606 = vmatmul.mubr.f32.gmra.mxu0 %v2605
    %v2607 = vpop.f32.mrf.mxu0
    %v2608 = vadd.f32 %v2191, %v2607
    %v2609 = vpop.f32.mrf.mxu0
    %v2610 = vand.u32 %v1892, 4294901760
    %2611 = vmatprep.mubr.f32.mxu0 %v2610
    %v2612 = vand.u32 %v1891, 4294901760
    %2613 = vmatmul.mubr.f32.gmra.mxu0 %v2612
    %v2614 = vpop.f32.mrf.mxu0
    %v2615 = vadd.f32 %v2206, %v2614
    %v2616 = vpop.f32.mrf.mxu0
    %v2617 = vand.u32 %v1894, 4294901760
    %2618 = vmatprep.mubr.f32.mxu0 %v2617
    %v2619 = vand.u32 %v1893, 4294901760
    %2620 = vmatmul.mubr.f32.gmra.mxu0 %v2619
    %v2621 = vpop.f32.mrf.mxu0
    %v2622 = vadd.f32 %v2221, %v2621
    %v2623 = vpop.f32.mrf.mxu0
    %v2624 = vand.u32 %v1896, 4294901760
    %2625 = vmatprep.mubr.f32.mxu0 %v2624
    %v2626 = vand.u32 %v1895, 4294901760
    %2627 = vmatmul.mubr.f32.gmra.mxu0 %v2626
    %v2628 = vpop.f32.mrf.mxu0
    %v2629 = vadd.f32 %v2236, %v2628
    %v2630 = vpop.f32.mrf.mxu0
    %v2631 = vand.u32 %v1898, 4294901760
    %2632 = vmatprep.mubr.f32.mxu0 %v2631
    %v2633 = vand.u32 %v1897, 4294901760
    %2634 = vmatmul.mubr.f32.gmra.mxu0 %v2633
    %v2635 = vpop.f32.mrf.mxu0
    %v2636 = vadd.f32 %v2251, %v2635
    %v2637 = vpop.f32.mrf.mxu0
    %v2638 = vand.u32 %v1900, 4294901760
    %2639 = vmatprep.mubr.f32.mxu0 %v2638
    %v2640 = vand.u32 %v1899, 4294901760
    %2641 = vmatmul.mubr.f32.gmra.mxu0 %v2640
    %v2642 = vpop.f32.mrf.mxu0
    %v2643 = vadd.f32 %v2266, %v2642
    %v2644 = vpop.f32.mrf.mxu0
    %v2645 = vand.u32 %v1902, 4294901760
    %2646 = vmatprep.mubr.f32.mxu0 %v2645
    %v2647 = vand.u32 %v1901, 4294901760
    %2648 = vmatmul.mubr.f32.gmra.mxu0 %v2647
    %v2649 = vpop.f32.mrf.mxu0
    %v2650 = vadd.f32 %v2281, %v2649
    %v2651 = vpop.f32.mrf.mxu0
    %v2652 = vand.u32 %v1904, 4294901760
    %2653 = vmatprep.mubr.f32.mxu0 %v2652
    %v2654 = vand.u32 %v1903, 4294901760
    %2655 = vmatmul.mubr.f32.gmra.mxu0 %v2654
    %v2656 = vpop.f32.mrf.mxu0
    %v2657 = vadd.f32 %v2296, %v2656
    %v2658 = vpop.f32.mrf.mxu0
    %v2659 = vand.u32 %v1906, 4294901760
    %2660 = vmatprep.mubr.f32.mxu0 %v2659
    %v2661 = vand.u32 %v1905, 4294901760
    %2662 = vmatmul.mubr.f32.gmra.mxu0 %v2661
    %v2663 = vpop.f32.mrf.mxu0
    %v2664 = vadd.f32 %v2311, %v2663
    %v2665 = vpop.f32.mrf.mxu0
    %v2666 = vand.u32 %v1908, 4294901760
    %2667 = vmatprep.mubr.f32.mxu0 %v2666
    %v2668 = vand.u32 %v1907, 4294901760
    %2669 = vmatmul.mubr.f32.gmra.mxu0 %v2668
    %v2670 = vpop.f32.mrf.mxu0
    %v2671 = vadd.f32 %v2326, %v2670
    %v2672 = vpop.f32.mrf.mxu0
    %v2673 = vand.u32 %v1910, 4294901760
    %2674 = vmatprep.mubr.f32.mxu0 %v2673
    %v2675 = vand.u32 %v1909, 4294901760
    %2676 = vmatmul.mubr.f32.gmra.mxu0 %v2675
    %v2677 = vpop.f32.mrf.mxu0
    %v2678 = vadd.f32 %v2341, %v2677
    %v2679 = vpop.f32.mrf.mxu0
    %2680 = vdwg.mxu0
    %2681 = vmatprep.subr.mxu0 0.0
    %v2682 = vand.u32 %v103, 4294901760
    %v2683 = vsub.f32 %v103, %v2682
    %2684 = vmatpush1.msra.mxu0 %v2683
    %2685 = vmatprep.subr.mxu0 0.0
    %v2686 = vand.u32 %v102, 4294901760
    %v2687 = vsub.f32 %v102, %v2686
    %2688 = vmatpush1.msra.mxu0 %v2687
    %2689 = vmatprep.subr.mxu0 0.0
    %v2690 = vand.u32 %v101, 4294901760
    %v2691 = vsub.f32 %v101, %v2690
    %2692 = vmatpush1.msra.mxu0 %v2691
    %2693 = vmatprep.subr.mxu0 0.0
    %v2694 = vand.u32 %v100, 4294901760
    %v2695 = vsub.f32 %v100, %v2694
    %2696 = vmatpush1.msra.mxu0 %v2695
    %2697 = vmatprep.subr.mxu0 0.0
    %v2698 = vand.u32 %v99, 4294901760
    %v2699 = vsub.f32 %v99, %v2698
    %2700 = vmatpush1.msra.mxu0 %v2699
    %2701 = vmatprep.subr.mxu0 0.0
    %v2702 = vand.u32 %v98, 4294901760
    %v2703 = vsub.f32 %v98, %v2702
    %2704 = vmatpush1.msra.mxu0 %v2703
    %2705 = vmatprep.subr.mxu0 0.0
    %v2706 = vand.u32 %v97, 4294901760
    %v2707 = vsub.f32 %v97, %v2706
    %2708 = vmatpush1.msra.mxu0 %v2707
    %2709 = vmatprep.subr.mxu0 0.0
    %v2710 = vand.u32 %v96, 4294901760
    %v2711 = vsub.f32 %v96, %v2710
    %2712 = vmatpush1.msra.mxu0 %v2711
    %2713 = vmatprep.subr.mxu0 0.0
    %v2714 = vand.u32 %v95, 4294901760
    %v2715 = vsub.f32 %v95, %v2714
    %2716 = vmatpush1.msra.mxu0 %v2715
    %2717 = vmatprep.subr.mxu0 0.0
    %v2718 = vand.u32 %v94, 4294901760
    %v2719 = vsub.f32 %v94, %v2718
    %2720 = vmatpush1.msra.mxu0 %v2719
    %2721 = vmatprep.subr.mxu0 0.0
    %v2722 = vand.u32 %v93, 4294901760
    %v2723 = vsub.f32 %v93, %v2722
    %2724 = vmatpush1.msra.mxu0 %v2723
    %2725 = vmatprep.subr.mxu0 0.0
    %v2726 = vand.u32 %v92, 4294901760
    %v2727 = vsub.f32 %v92, %v2726
    %2728 = vmatpush1.msra.mxu0 %v2727
    %2729 = vmatprep.subr.mxu0 0.0
    %v2730 = vand.u32 %v91, 4294901760
    %v2731 = vsub.f32 %v91, %v2730
    %2732 = vmatpush1.msra.mxu0 %v2731
    %2733 = vmatprep.subr.mxu0 0.0
    %v2734 = vand.u32 %v90, 4294901760
    %v2735 = vsub.f32 %v90, %v2734
    %2736 = vmatpush1.msra.mxu0 %v2735
    %2737 = vmatprep.subr.mxu0 0.0
    %v2738 = vand.u32 %v89, 4294901760
    %v2739 = vsub.f32 %v89, %v2738
    %2740 = vmatpush1.msra.mxu0 %v2739
    %2741 = vmatprep.subr.mxu0 0.0
    %v2742 = vand.u32 %v88, 4294901760
    %v2743 = vsub.f32 %v88, %v2742
    %2744 = vmatpush1.msra.mxu0 %v2743
    %2745 = vmatprep.subr.mxu0 0.0
    %v2746 = vand.u32 %v119, 4294901760
    %v2747 = vsub.f32 %v119, %v2746
    %2748 = vmatpush2.msra.mxu0 %v2747
    %2749 = vmatprep.subr.mxu0 0.0
    %v2750 = vand.u32 %v118, 4294901760
    %v2751 = vsub.f32 %v118, %v2750
    %2752 = vmatpush2.msra.mxu0 %v2751
    %2753 = vmatprep.subr.mxu0 0.0
    %v2754 = vand.u32 %v117, 4294901760
    %v2755 = vsub.f32 %v117, %v2754
    %2756 = vmatpush2.msra.mxu0 %v2755
    %2757 = vmatprep.subr.mxu0 0.0
    %v2758 = vand.u32 %v116, 4294901760
    %v2759 = vsub.f32 %v116, %v2758
    %2760 = vmatpush2.msra.mxu0 %v2759
    %2761 = vmatprep.subr.mxu0 0.0
    %v2762 = vand.u32 %v115, 4294901760
    %v2763 = vsub.f32 %v115, %v2762
    %2764 = vmatpush2.msra.mxu0 %v2763
    %2765 = vmatprep.subr.mxu0 0.0
    %v2766 = vand.u32 %v114, 4294901760
    %v2767 = vsub.f32 %v114, %v2766
    %2768 = vmatpush2.msra.mxu0 %v2767
    %2769 = vmatprep.subr.mxu0 0.0
    %v2770 = vand.u32 %v113, 4294901760
    %v2771 = vsub.f32 %v113, %v2770
    %2772 = vmatpush2.msra.mxu0 %v2771
    %2773 = vmatprep.subr.mxu0 0.0
    %v2774 = vand.u32 %v112, 4294901760
    %v2775 = vsub.f32 %v112, %v2774
    %2776 = vmatpush2.msra.mxu0 %v2775
    %2777 = vmatprep.subr.mxu0 0.0
    %v2778 = vand.u32 %v111, 4294901760
    %v2779 = vsub.f32 %v111, %v2778
    %2780 = vmatpush2.msra.mxu0 %v2779
    %2781 = vmatprep.subr.mxu0 0.0
    %v2782 = vand.u32 %v110, 4294901760
    %v2783 = vsub.f32 %v110, %v2782
    %2784 = vmatpush2.msra.mxu0 %v2783
    %2785 = vmatprep.subr.mxu0 0.0
    %v2786 = vand.u32 %v109, 4294901760
    %v2787 = vsub.f32 %v109, %v2786
    %2788 = vmatpush2.msra.mxu0 %v2787
    %2789 = vmatprep.subr.mxu0 0.0
    %v2790 = vand.u32 %v108, 4294901760
    %v2791 = vsub.f32 %v108, %v2790
    %2792 = vmatpush2.msra.mxu0 %v2791
    %2793 = vmatprep.subr.mxu0 0.0
    %v2794 = vand.u32 %v107, 4294901760
    %v2795 = vsub.f32 %v107, %v2794
    %2796 = vmatpush2.msra.mxu0 %v2795
    %2797 = vmatprep.subr.mxu0 0.0
    %v2798 = vand.u32 %v106, 4294901760
    %v2799 = vsub.f32 %v106, %v2798
    %2800 = vmatpush2.msra.mxu0 %v2799
    %2801 = vmatprep.subr.mxu0 0.0
    %v2802 = vand.u32 %v105, 4294901760
    %v2803 = vsub.f32 %v105, %v2802
    %2804 = vmatpush2.msra.mxu0 %v2803
    %2805 = vmatprep.subr.mxu0 0.0
    %v2806 = vand.u32 %v104, 4294901760
    %v2807 = vsub.f32 %v104, %v2806
    %2808 = vmatpush2.msra.mxu0 %v2807
    %v2809 = vand.u32 %v1880, 4294901760
    %v2810 = vsub.f32 %v1880, %v2809
    %2811 = vmatprep.mubr.f32.mxu0 %v2810
    %v2812 = vand.u32 %v1879, 4294901760
    %v2813 = vsub.f32 %v1879, %v2812
    %2814 = vmatmul.mubr.f32.gmra.mxu0 %v2813
    %v2815 = vpop.f32.mrf.mxu0
    %v2816 = vadd.f32 %v2573, %v2815
    %v2817 = vpop.f32.mrf.mxu0
    %v2818 = vand.u32 %v1882, 4294901760
    %v2819 = vsub.f32 %v1882, %v2818
    %2820 = vmatprep.mubr.f32.mxu0 %v2819
    %v2821 = vand.u32 %v1881, 4294901760
    %v2822 = vsub.f32 %v1881, %v2821
    %2823 = vmatmul.mubr.f32.gmra.mxu0 %v2822
    %v2824 = vpop.f32.mrf.mxu0
    %v2825 = vadd.f32 %v2580, %v2824
    %v2826 = vpop.f32.mrf.mxu0
    %v2827 = vand.u32 %v1884, 4294901760
    %v2828 = vsub.f32 %v1884, %v2827
    %2829 = vmatprep.mubr.f32.mxu0 %v2828
    %v2830 = vand.u32 %v1883, 4294901760
    %v2831 = vsub.f32 %v1883, %v2830
    %2832 = vmatmul.mubr.f32.gmra.mxu0 %v2831
    %v2833 = vpop.f32.mrf.mxu0
    %v2834 = vadd.f32 %v2587, %v2833
    %v2835 = vpop.f32.mrf.mxu0
    %v2836 = vand.u32 %v1886, 4294901760
    %v2837 = vsub.f32 %v1886, %v2836
    %2838 = vmatprep.mubr.f32.mxu0 %v2837
    %v2839 = vand.u32 %v1885, 4294901760
    %v2840 = vsub.f32 %v1885, %v2839
    %2841 = vmatmul.mubr.f32.gmra.mxu0 %v2840
    %v2842 = vpop.f32.mrf.mxu0
    %v2843 = vadd.f32 %v2594, %v2842
    %v2844 = vpop.f32.mrf.mxu0
    %v2845 = vand.u32 %v1888, 4294901760
    %v2846 = vsub.f32 %v1888, %v2845
    %2847 = vmatprep.mubr.f32.mxu0 %v2846
    %v2848 = vand.u32 %v1887, 4294901760
    %v2849 = vsub.f32 %v1887, %v2848
    %2850 = vmatmul.mubr.f32.gmra.mxu0 %v2849
    %v2851 = vpop.f32.mrf.mxu0
    %v2852 = vadd.f32 %v2601, %v2851
    %v2853 = vpop.f32.mrf.mxu0
    %v2854 = vand.u32 %v1890, 4294901760
    %v2855 = vsub.f32 %v1890, %v2854
    %2856 = vmatprep.mubr.f32.mxu0 %v2855
    %v2857 = vand.u32 %v1889, 4294901760
    %v2858 = vsub.f32 %v1889, %v2857
    %2859 = vmatmul.mubr.f32.gmra.mxu0 %v2858
    %v2860 = vpop.f32.mrf.mxu0
    %v2861 = vadd.f32 %v2608, %v2860
    %v2862 = vpop.f32.mrf.mxu0
    %v2863 = vand.u32 %v1892, 4294901760
    %v2864 = vsub.f32 %v1892, %v2863
    %2865 = vmatprep.mubr.f32.mxu0 %v2864
    %v2866 = vand.u32 %v1891, 4294901760
    %v2867 = vsub.f32 %v1891, %v2866
    %2868 = vmatmul.mubr.f32.gmra.mxu0 %v2867
    %v2869 = vpop.f32.mrf.mxu0
    %v2870 = vadd.f32 %v2615, %v2869
    %v2871 = vpop.f32.mrf.mxu0
    %v2872 = vand.u32 %v1894, 4294901760
    %v2873 = vsub.f32 %v1894, %v2872
    %2874 = vmatprep.mubr.f32.mxu0 %v2873
    %v2875 = vand.u32 %v1893, 4294901760
    %v2876 = vsub.f32 %v1893, %v2875
    %2877 = vmatmul.mubr.f32.gmra.mxu0 %v2876
    %v2878 = vpop.f32.mrf.mxu0
    %v2879 = vadd.f32 %v2622, %v2878
    %v2880 = vpop.f32.mrf.mxu0
    %v2881 = vand.u32 %v1896, 4294901760
    %v2882 = vsub.f32 %v1896, %v2881
    %2883 = vmatprep.mubr.f32.mxu0 %v2882
    %v2884 = vand.u32 %v1895, 4294901760
    %v2885 = vsub.f32 %v1895, %v2884
    %2886 = vmatmul.mubr.f32.gmra.mxu0 %v2885
    %v2887 = vpop.f32.mrf.mxu0
    %v2888 = vadd.f32 %v2629, %v2887
    %v2889 = vpop.f32.mrf.mxu0
    %v2890 = vand.u32 %v1898, 4294901760
    %v2891 = vsub.f32 %v1898, %v2890
    %2892 = vmatprep.mubr.f32.mxu0 %v2891
    %v2893 = vand.u32 %v1897, 4294901760
    %v2894 = vsub.f32 %v1897, %v2893
    %2895 = vmatmul.mubr.f32.gmra.mxu0 %v2894
    %v2896 = vpop.f32.mrf.mxu0
    %v2897 = vadd.f32 %v2636, %v2896
    %v2898 = vpop.f32.mrf.mxu0
    %v2899 = vand.u32 %v1900, 4294901760
    %v2900 = vsub.f32 %v1900, %v2899
    %2901 = vmatprep.mubr.f32.mxu0 %v2900
    %v2902 = vand.u32 %v1899, 4294901760
    %v2903 = vsub.f32 %v1899, %v2902
    %2904 = vmatmul.mubr.f32.gmra.mxu0 %v2903
    %v2905 = vpop.f32.mrf.mxu0
    %v2906 = vadd.f32 %v2643, %v2905
    %v2907 = vpop.f32.mrf.mxu0
    %v2908 = vand.u32 %v1902, 4294901760
    %v2909 = vsub.f32 %v1902, %v2908
    %2910 = vmatprep.mubr.f32.mxu0 %v2909
    %v2911 = vand.u32 %v1901, 4294901760
    %v2912 = vsub.f32 %v1901, %v2911
    %2913 = vmatmul.mubr.f32.gmra.mxu0 %v2912
    %v2914 = vpop.f32.mrf.mxu0
    %v2915 = vadd.f32 %v2650, %v2914
    %v2916 = vpop.f32.mrf.mxu0
    %v2917 = vand.u32 %v1904, 4294901760
    %v2918 = vsub.f32 %v1904, %v2917
    %2919 = vmatprep.mubr.f32.mxu0 %v2918
    %v2920 = vand.u32 %v1903, 4294901760
    %v2921 = vsub.f32 %v1903, %v2920
    %2922 = vmatmul.mubr.f32.gmra.mxu0 %v2921
    %v2923 = vpop.f32.mrf.mxu0
    %v2924 = vadd.f32 %v2657, %v2923
    %v2925 = vpop.f32.mrf.mxu0
    %v2926 = vand.u32 %v1906, 4294901760
    %v2927 = vsub.f32 %v1906, %v2926
    %2928 = vmatprep.mubr.f32.mxu0 %v2927
    %v2929 = vand.u32 %v1905, 4294901760
    %v2930 = vsub.f32 %v1905, %v2929
    %2931 = vmatmul.mubr.f32.gmra.mxu0 %v2930
    %v2932 = vpop.f32.mrf.mxu0
    %v2933 = vadd.f32 %v2664, %v2932
    %v2934 = vpop.f32.mrf.mxu0
    %v2935 = vand.u32 %v1908, 4294901760
    %v2936 = vsub.f32 %v1908, %v2935
    %2937 = vmatprep.mubr.f32.mxu0 %v2936
    %v2938 = vand.u32 %v1907, 4294901760
    %v2939 = vsub.f32 %v1907, %v2938
    %2940 = vmatmul.mubr.f32.gmra.mxu0 %v2939
    %v2941 = vpop.f32.mrf.mxu0
    %v2942 = vadd.f32 %v2671, %v2941
    %v2943 = vpop.f32.mrf.mxu0
    %v2944 = vand.u32 %v1910, 4294901760
    %v2945 = vsub.f32 %v1910, %v2944
    %2946 = vmatprep.mubr.f32.mxu0 %v2945
    %v2947 = vand.u32 %v1909, 4294901760
    %v2948 = vsub.f32 %v1909, %v2947
    %2949 = vmatmul.mubr.f32.gmra.mxu0 %v2948
    %v2950 = vpop.f32.mrf.mxu0
    %v2951 = vadd.f32 %v2678, %v2950
    %v2952 = vpop.f32.mrf.mxu0
    %2953 = vdwg.mxu0
    %2954 = vmatprep.subr.mxu0 0.0
    %v2955 = vand.u32 %v103, 4294901760
    %2956 = vmatpush1.msra.mxu0 %v2955
    %2957 = vmatprep.subr.mxu0 0.0
    %v2958 = vand.u32 %v102, 4294901760
    %2959 = vmatpush1.msra.mxu0 %v2958
    %2960 = vmatprep.subr.mxu0 0.0
    %v2961 = vand.u32 %v101, 4294901760
    %2962 = vmatpush1.msra.mxu0 %v2961
    %2963 = vmatprep.subr.mxu0 0.0
    %v2964 = vand.u32 %v100, 4294901760
    %2965 = vmatpush1.msra.mxu0 %v2964
    %2966 = vmatprep.subr.mxu0 0.0
    %v2967 = vand.u32 %v99, 4294901760
    %2968 = vmatpush1.msra.mxu0 %v2967
    %2969 = vmatprep.subr.mxu0 0.0
    %v2970 = vand.u32 %v98, 4294901760
    %2971 = vmatpush1.msra.mxu0 %v2970
    %2972 = vmatprep.subr.mxu0 0.0
    %v2973 = vand.u32 %v97, 4294901760
    %2974 = vmatpush1.msra.mxu0 %v2973
    %2975 = vmatprep.subr.mxu0 0.0
    %v2976 = vand.u32 %v96, 4294901760
    %2977 = vmatpush1.msra.mxu0 %v2976
    %2978 = vmatprep.subr.mxu0 0.0
    %v2979 = vand.u32 %v95, 4294901760
    %2980 = vmatpush1.msra.mxu0 %v2979
    %2981 = vmatprep.subr.mxu0 0.0
    %v2982 = vand.u32 %v94, 4294901760
    %2983 = vmatpush1.msra.mxu0 %v2982
    %2984 = vmatprep.subr.mxu0 0.0
    %v2985 = vand.u32 %v93, 4294901760
    %2986 = vmatpush1.msra.mxu0 %v2985
    %2987 = vmatprep.subr.mxu0 0.0
    %v2988 = vand.u32 %v92, 4294901760
    %2989 = vmatpush1.msra.mxu0 %v2988
    %2990 = vmatprep.subr.mxu0 0.0
    %v2991 = vand.u32 %v91, 4294901760
    %2992 = vmatpush1.msra.mxu0 %v2991
    %2993 = vmatprep.subr.mxu0 0.0
    %v2994 = vand.u32 %v90, 4294901760
    %2995 = vmatpush1.msra.mxu0 %v2994
    %2996 = vmatprep.subr.mxu0 0.0
    %v2997 = vand.u32 %v89, 4294901760
    %2998 = vmatpush1.msra.mxu0 %v2997
    %2999 = vmatprep.subr.mxu0 0.0
    %v3000 = vand.u32 %v88, 4294901760
    %3001 = vmatpush1.msra.mxu0 %v3000
    %3002 = vmatprep.subr.mxu0 0.0
    %v3003 = vand.u32 %v119, 4294901760
    %3004 = vmatpush2.msra.mxu0 %v3003
    %3005 = vmatprep.subr.mxu0 0.0
    %v3006 = vand.u32 %v118, 4294901760
    %3007 = vmatpush2.msra.mxu0 %v3006
    %3008 = vmatprep.subr.mxu0 0.0
    %v3009 = vand.u32 %v117, 4294901760
    %3010 = vmatpush2.msra.mxu0 %v3009
    %3011 = vmatprep.subr.mxu0 0.0
    %v3012 = vand.u32 %v116, 4294901760
    %3013 = vmatpush2.msra.mxu0 %v3012
    %3014 = vmatprep.subr.mxu0 0.0
    %v3015 = vand.u32 %v115, 4294901760
    %3016 = vmatpush2.msra.mxu0 %v3015
    %3017 = vmatprep.subr.mxu0 0.0
    %v3018 = vand.u32 %v114, 4294901760
    %3019 = vmatpush2.msra.mxu0 %v3018
    %3020 = vmatprep.subr.mxu0 0.0
    %v3021 = vand.u32 %v113, 4294901760
    %3022 = vmatpush2.msra.mxu0 %v3021
    %3023 = vmatprep.subr.mxu0 0.0
    %v3024 = vand.u32 %v112, 4294901760
    %3025 = vmatpush2.msra.mxu0 %v3024
    %3026 = vmatprep.subr.mxu0 0.0
    %v3027 = vand.u32 %v111, 4294901760
    %3028 = vmatpush2.msra.mxu0 %v3027
    %3029 = vmatprep.subr.mxu0 0.0
    %v3030 = vand.u32 %v110, 4294901760
    %3031 = vmatpush2.msra.mxu0 %v3030
    %3032 = vmatprep.subr.mxu0 0.0
    %v3033 = vand.u32 %v109, 4294901760
    %3034 = vmatpush2.msra.mxu0 %v3033
    %3035 = vmatprep.subr.mxu0 0.0
    %v3036 = vand.u32 %v108, 4294901760
    %3037 = vmatpush2.msra.mxu0 %v3036
    %3038 = vmatprep.subr.mxu0 0.0
    %v3039 = vand.u32 %v107, 4294901760
    %3040 = vmatpush2.msra.mxu0 %v3039
    %3041 = vmatprep.subr.mxu0 0.0
    %v3042 = vand.u32 %v106, 4294901760
    %3043 = vmatpush2.msra.mxu0 %v3042
    %3044 = vmatprep.subr.mxu0 0.0
    %v3045 = vand.u32 %v105, 4294901760
    %3046 = vmatpush2.msra.mxu0 %v3045
    %3047 = vmatprep.subr.mxu0 0.0
    %v3048 = vand.u32 %v104, 4294901760
    %3049 = vmatpush2.msra.mxu0 %v3048
    %v3050 = vand.u32 %v1880, 4294901760
    %v3051 = vsub.f32 %v1880, %v3050
    %v3052 = vand.u32 %v3051, 4294901760
    %3053 = vmatprep.mubr.f32.mxu0 %v3052
    %v3054 = vand.u32 %v1879, 4294901760
    %v3055 = vsub.f32 %v1879, %v3054
    %v3056 = vand.u32 %v3055, 4294901760
    %3057 = vmatmul.mubr.f32.gmra.mxu0 %v3056
    %v3058 = vpop.f32.mrf.mxu0
    %v3059 = vadd.f32 %v2816, %v3058
    %v3060 = vpop.f32.mrf.mxu0
    %v3061 = vand.u32 %v1882, 4294901760
    %v3062 = vsub.f32 %v1882, %v3061
    %v3063 = vand.u32 %v3062, 4294901760
    %3064 = vmatprep.mubr.f32.mxu0 %v3063
    %v3065 = vand.u32 %v1881, 4294901760
    %v3066 = vsub.f32 %v1881, %v3065
    %v3067 = vand.u32 %v3066, 4294901760
    %3068 = vmatmul.mubr.f32.gmra.mxu0 %v3067
    %v3069 = vpop.f32.mrf.mxu0
    %v3070 = vadd.f32 %v2825, %v3069
    %v3071 = vpop.f32.mrf.mxu0
    %v3072 = vand.u32 %v1884, 4294901760
    %v3073 = vsub.f32 %v1884, %v3072
    %v3074 = vand.u32 %v3073, 4294901760
    %3075 = vmatprep.mubr.f32.mxu0 %v3074
    %v3076 = vand.u32 %v1883, 4294901760
    %v3077 = vsub.f32 %v1883, %v3076
    %v3078 = vand.u32 %v3077, 4294901760
    %3079 = vmatmul.mubr.f32.gmra.mxu0 %v3078
    %v3080 = vpop.f32.mrf.mxu0
    %v3081 = vadd.f32 %v2834, %v3080
    %v3082 = vpop.f32.mrf.mxu0
    %v3083 = vand.u32 %v1886, 4294901760
    %v3084 = vsub.f32 %v1886, %v3083
    %v3085 = vand.u32 %v3084, 4294901760
    %3086 = vmatprep.mubr.f32.mxu0 %v3085
    %v3087 = vand.u32 %v1885, 4294901760
    %v3088 = vsub.f32 %v1885, %v3087
    %v3089 = vand.u32 %v3088, 4294901760
    %3090 = vmatmul.mubr.f32.gmra.mxu0 %v3089
    %v3091 = vpop.f32.mrf.mxu0
    %v3092 = vadd.f32 %v2843, %v3091
    %v3093 = vpop.f32.mrf.mxu0
    %v3094 = vand.u32 %v1888, 4294901760
    %v3095 = vsub.f32 %v1888, %v3094
    %v3096 = vand.u32 %v3095, 4294901760
    %3097 = vmatprep.mubr.f32.mxu0 %v3096
    %v3098 = vand.u32 %v1887, 4294901760
    %v3099 = vsub.f32 %v1887, %v3098
    %v3100 = vand.u32 %v3099, 4294901760
    %3101 = vmatmul.mubr.f32.gmra.mxu0 %v3100
    %v3102 = vpop.f32.mrf.mxu0
    %v3103 = vadd.f32 %v2852, %v3102
    %v3104 = vpop.f32.mrf.mxu0
    %v3105 = vand.u32 %v1890, 4294901760
    %v3106 = vsub.f32 %v1890, %v3105
    %v3107 = vand.u32 %v3106, 4294901760
    %3108 = vmatprep.mubr.f32.mxu0 %v3107
    %v3109 = vand.u32 %v1889, 4294901760
    %v3110 = vsub.f32 %v1889, %v3109
    %v3111 = vand.u32 %v3110, 4294901760
    %3112 = vmatmul.mubr.f32.gmra.mxu0 %v3111
    %v3113 = vpop.f32.mrf.mxu0
    %v3114 = vadd.f32 %v2861, %v3113
    %v3115 = vpop.f32.mrf.mxu0
    %v3116 = vand.u32 %v1892, 4294901760
    %v3117 = vsub.f32 %v1892, %v3116
    %v3118 = vand.u32 %v3117, 4294901760
    %3119 = vmatprep.mubr.f32.mxu0 %v3118
    %v3120 = vand.u32 %v1891, 4294901760
    %v3121 = vsub.f32 %v1891, %v3120
    %v3122 = vand.u32 %v3121, 4294901760
    %3123 = vmatmul.mubr.f32.gmra.mxu0 %v3122
    %v3124 = vpop.f32.mrf.mxu0
    %v3125 = vadd.f32 %v2870, %v3124
    %v3126 = vpop.f32.mrf.mxu0
    %v3127 = vand.u32 %v1894, 4294901760
    %v3128 = vsub.f32 %v1894, %v3127
    %v3129 = vand.u32 %v3128, 4294901760
    %3130 = vmatprep.mubr.f32.mxu0 %v3129
    %v3131 = vand.u32 %v1893, 4294901760
    %v3132 = vsub.f32 %v1893, %v3131
    %v3133 = vand.u32 %v3132, 4294901760
    %3134 = vmatmul.mubr.f32.gmra.mxu0 %v3133
    %v3135 = vpop.f32.mrf.mxu0
    %v3136 = vadd.f32 %v2879, %v3135
    %v3137 = vpop.f32.mrf.mxu0
    %v3138 = vand.u32 %v1896, 4294901760
    %v3139 = vsub.f32 %v1896, %v3138
    %v3140 = vand.u32 %v3139, 4294901760
    %3141 = vmatprep.mubr.f32.mxu0 %v3140
    %v3142 = vand.u32 %v1895, 4294901760
    %v3143 = vsub.f32 %v1895, %v3142
    %v3144 = vand.u32 %v3143, 4294901760
    %3145 = vmatmul.mubr.f32.gmra.mxu0 %v3144
    %v3146 = vpop.f32.mrf.mxu0
    %v3147 = vadd.f32 %v2888, %v3146
    %v3148 = vpop.f32.mrf.mxu0
    %v3149 = vand.u32 %v1898, 4294901760
    %v3150 = vsub.f32 %v1898, %v3149
    %v3151 = vand.u32 %v3150, 4294901760
    %3152 = vmatprep.mubr.f32.mxu0 %v3151
    %v3153 = vand.u32 %v1897, 4294901760
    %v3154 = vsub.f32 %v1897, %v3153
    %v3155 = vand.u32 %v3154, 4294901760
    %3156 = vmatmul.mubr.f32.gmra.mxu0 %v3155
    %v3157 = vpop.f32.mrf.mxu0
    %v3158 = vadd.f32 %v2897, %v3157
    %v3159 = vpop.f32.mrf.mxu0
    %v3160 = vand.u32 %v1900, 4294901760
    %v3161 = vsub.f32 %v1900, %v3160
    %v3162 = vand.u32 %v3161, 4294901760
    %3163 = vmatprep.mubr.f32.mxu0 %v3162
    %v3164 = vand.u32 %v1899, 4294901760
    %v3165 = vsub.f32 %v1899, %v3164
    %v3166 = vand.u32 %v3165, 4294901760
    %3167 = vmatmul.mubr.f32.gmra.mxu0 %v3166
    %v3168 = vpop.f32.mrf.mxu0
    %v3169 = vadd.f32 %v2906, %v3168
    %v3170 = vpop.f32.mrf.mxu0
    %v3171 = vand.u32 %v1902, 4294901760
    %v3172 = vsub.f32 %v1902, %v3171
    %v3173 = vand.u32 %v3172, 4294901760
    %3174 = vmatprep.mubr.f32.mxu0 %v3173
    %v3175 = vand.u32 %v1901, 4294901760
    %v3176 = vsub.f32 %v1901, %v3175
    %v3177 = vand.u32 %v3176, 4294901760
    %3178 = vmatmul.mubr.f32.gmra.mxu0 %v3177
    %v3179 = vpop.f32.mrf.mxu0
    %v3180 = vadd.f32 %v2915, %v3179
    %v3181 = vpop.f32.mrf.mxu0
    %v3182 = vand.u32 %v1904, 4294901760
    %v3183 = vsub.f32 %v1904, %v3182
    %v3184 = vand.u32 %v3183, 4294901760
    %3185 = vmatprep.mubr.f32.mxu0 %v3184
    %v3186 = vand.u32 %v1903, 4294901760
    %v3187 = vsub.f32 %v1903, %v3186
    %v3188 = vand.u32 %v3187, 4294901760
    %3189 = vmatmul.mubr.f32.gmra.mxu0 %v3188
    %v3190 = vpop.f32.mrf.mxu0
    %v3191 = vadd.f32 %v2924, %v3190
    %v3192 = vpop.f32.mrf.mxu0
    %v3193 = vand.u32 %v1906, 4294901760
    %v3194 = vsub.f32 %v1906, %v3193
    %v3195 = vand.u32 %v3194, 4294901760
    %3196 = vmatprep.mubr.f32.mxu0 %v3195
    %v3197 = vand.u32 %v1905, 4294901760
    %v3198 = vsub.f32 %v1905, %v3197
    %v3199 = vand.u32 %v3198, 4294901760
    %3200 = vmatmul.mubr.f32.gmra.mxu0 %v3199
    %v3201 = vpop.f32.mrf.mxu0
    %v3202 = vadd.f32 %v2933, %v3201
    %v3203 = vpop.f32.mrf.mxu0
    %v3204 = vand.u32 %v1908, 4294901760
    %v3205 = vsub.f32 %v1908, %v3204
    %v3206 = vand.u32 %v3205, 4294901760
    %3207 = vmatprep.mubr.f32.mxu0 %v3206
    %v3208 = vand.u32 %v1907, 4294901760
    %v3209 = vsub.f32 %v1907, %v3208
    %v3210 = vand.u32 %v3209, 4294901760
    %3211 = vmatmul.mubr.f32.gmra.mxu0 %v3210
    %v3212 = vpop.f32.mrf.mxu0
    %v3213 = vadd.f32 %v2942, %v3212
    %v3214 = vpop.f32.mrf.mxu0
    %v3215 = vand.u32 %v1910, 4294901760
    %v3216 = vsub.f32 %v1910, %v3215
    %v3217 = vand.u32 %v3216, 4294901760
    %3218 = vmatprep.mubr.f32.mxu0 %v3217
    %v3219 = vand.u32 %v1909, 4294901760
    %v3220 = vsub.f32 %v1909, %v3219
    %v3221 = vand.u32 %v3220, 4294901760
    %3222 = vmatmul.mubr.f32.gmra.mxu0 %v3221
    %v3223 = vpop.f32.mrf.mxu0
    %v3224 = vadd.f32 %v2951, %v3223
    %v3225 = vpop.f32.mrf.mxu0
    %3226 = vdwg.mxu0
    %3227 = vmatprep.subr.mxu0 0.0
    %v3228 = vand.u32 %v103, 4294901760
    %v3229 = vsub.f32 %v103, %v3228
    %v3230 = vand.u32 %v3229, 4294901760
    %3231 = vmatpush1.msra.mxu0 %v3230
    %3232 = vmatprep.subr.mxu0 0.0
    %v3233 = vand.u32 %v102, 4294901760
    %v3234 = vsub.f32 %v102, %v3233
    %v3235 = vand.u32 %v3234, 4294901760
    %3236 = vmatpush1.msra.mxu0 %v3235
    %3237 = vmatprep.subr.mxu0 0.0
    %v3238 = vand.u32 %v101, 4294901760
    %v3239 = vsub.f32 %v101, %v3238
    %v3240 = vand.u32 %v3239, 4294901760
    %3241 = vmatpush1.msra.mxu0 %v3240
    %3242 = vmatprep.subr.mxu0 0.0
    %v3243 = vand.u32 %v100, 4294901760
    %v3244 = vsub.f32 %v100, %v3243
    %v3245 = vand.u32 %v3244, 4294901760
    %3246 = vmatpush1.msra.mxu0 %v3245
    %3247 = vmatprep.subr.mxu0 0.0
    %v3248 = vand.u32 %v99, 4294901760
    %v3249 = vsub.f32 %v99, %v3248
    %v3250 = vand.u32 %v3249, 4294901760
    %3251 = vmatpush1.msra.mxu0 %v3250
    %3252 = vmatprep.subr.mxu0 0.0
    %v3253 = vand.u32 %v98, 4294901760
    %v3254 = vsub.f32 %v98, %v3253
    %v3255 = vand.u32 %v3254, 4294901760
    %3256 = vmatpush1.msra.mxu0 %v3255
    %3257 = vmatprep.subr.mxu0 0.0
    %v3258 = vand.u32 %v97, 4294901760
    %v3259 = vsub.f32 %v97, %v3258
    %v3260 = vand.u32 %v3259, 4294901760
    %3261 = vmatpush1.msra.mxu0 %v3260
    %3262 = vmatprep.subr.mxu0 0.0
    %v3263 = vand.u32 %v96, 4294901760
    %v3264 = vsub.f32 %v96, %v3263
    %v3265 = vand.u32 %v3264, 4294901760
    %3266 = vmatpush1.msra.mxu0 %v3265
    %3267 = vmatprep.subr.mxu0 0.0
    %v3268 = vand.u32 %v95, 4294901760
    %v3269 = vsub.f32 %v95, %v3268
    %v3270 = vand.u32 %v3269, 4294901760
    %3271 = vmatpush1.msra.mxu0 %v3270
    %3272 = vmatprep.subr.mxu0 0.0
    %v3273 = vand.u32 %v94, 4294901760
    %v3274 = vsub.f32 %v94, %v3273
    %v3275 = vand.u32 %v3274, 4294901760
    %3276 = vmatpush1.msra.mxu0 %v3275
    %3277 = vmatprep.subr.mxu0 0.0
    %v3278 = vand.u32 %v93, 4294901760
    %v3279 = vsub.f32 %v93, %v3278
    %v3280 = vand.u32 %v3279, 4294901760
    %3281 = vmatpush1.msra.mxu0 %v3280
    %3282 = vmatprep.subr.mxu0 0.0
    %v3283 = vand.u32 %v92, 4294901760
    %v3284 = vsub.f32 %v92, %v3283
    %v3285 = vand.u32 %v3284, 4294901760
    %3286 = vmatpush1.msra.mxu0 %v3285
    %3287 = vmatprep.subr.mxu0 0.0
    %v3288 = vand.u32 %v91, 4294901760
    %v3289 = vsub.f32 %v91, %v3288
    %v3290 = vand.u32 %v3289, 4294901760
    %3291 = vmatpush1.msra.mxu0 %v3290
    %3292 = vmatprep.subr.mxu0 0.0
    %v3293 = vand.u32 %v90, 4294901760
    %v3294 = vsub.f32 %v90, %v3293
    %v3295 = vand.u32 %v3294, 4294901760
    %3296 = vmatpush1.msra.mxu0 %v3295
    %3297 = vmatprep.subr.mxu0 0.0
    %v3298 = vand.u32 %v89, 4294901760
    %v3299 = vsub.f32 %v89, %v3298
    %v3300 = vand.u32 %v3299, 4294901760
    %3301 = vmatpush1.msra.mxu0 %v3300
    %3302 = vmatprep.subr.mxu0 0.0
    %v3303 = vand.u32 %v88, 4294901760
    %v3304 = vsub.f32 %v88, %v3303
    %v3305 = vand.u32 %v3304, 4294901760
    %3306 = vmatpush1.msra.mxu0 %v3305
    %3307 = vmatprep.subr.mxu0 0.0
    %v3308 = vand.u32 %v119, 4294901760
    %v3309 = vsub.f32 %v119, %v3308
    %v3310 = vand.u32 %v3309, 4294901760
    %3311 = vmatpush2.msra.mxu0 %v3310
    %3312 = vmatprep.subr.mxu0 0.0
    %v3313 = vand.u32 %v118, 4294901760
    %v3314 = vsub.f32 %v118, %v3313
    %v3315 = vand.u32 %v3314, 4294901760
    %3316 = vmatpush2.msra.mxu0 %v3315
    %3317 = vmatprep.subr.mxu0 0.0
    %v3318 = vand.u32 %v117, 4294901760
    %v3319 = vsub.f32 %v117, %v3318
    %v3320 = vand.u32 %v3319, 4294901760
    %3321 = vmatpush2.msra.mxu0 %v3320
    %3322 = vmatprep.subr.mxu0 0.0
    %v3323 = vand.u32 %v116, 4294901760
    %v3324 = vsub.f32 %v116, %v3323
    %v3325 = vand.u32 %v3324, 4294901760
    %3326 = vmatpush2.msra.mxu0 %v3325
    %3327 = vmatprep.subr.mxu0 0.0
    %v3328 = vand.u32 %v115, 4294901760
    %v3329 = vsub.f32 %v115, %v3328
    %v3330 = vand.u32 %v3329, 4294901760
    %3331 = vmatpush2.msra.mxu0 %v3330
    %3332 = vmatprep.subr.mxu0 0.0
    %v3333 = vand.u32 %v114, 4294901760
    %v3334 = vsub.f32 %v114, %v3333
    %v3335 = vand.u32 %v3334, 4294901760
    %3336 = vmatpush2.msra.mxu0 %v3335
    %3337 = vmatprep.subr.mxu0 0.0
    %v3338 = vand.u32 %v113, 4294901760
    %v3339 = vsub.f32 %v113, %v3338
    %v3340 = vand.u32 %v3339, 4294901760
    %3341 = vmatpush2.msra.mxu0 %v3340
    %3342 = vmatprep.subr.mxu0 0.0
    %v3343 = vand.u32 %v112, 4294901760
    %v3344 = vsub.f32 %v112, %v3343
    %v3345 = vand.u32 %v3344, 4294901760
    %3346 = vmatpush2.msra.mxu0 %v3345
    %3347 = vmatprep.subr.mxu0 0.0
    %v3348 = vand.u32 %v111, 4294901760
    %v3349 = vsub.f32 %v111, %v3348
    %v3350 = vand.u32 %v3349, 4294901760
    %3351 = vmatpush2.msra.mxu0 %v3350
    %3352 = vmatprep.subr.mxu0 0.0
    %v3353 = vand.u32 %v110, 4294901760
    %v3354 = vsub.f32 %v110, %v3353
    %v3355 = vand.u32 %v3354, 4294901760
    %3356 = vmatpush2.msra.mxu0 %v3355
    %3357 = vmatprep.subr.mxu0 0.0
    %v3358 = vand.u32 %v109, 4294901760
    %v3359 = vsub.f32 %v109, %v3358
    %v3360 = vand.u32 %v3359, 4294901760
    %3361 = vmatpush2.msra.mxu0 %v3360
    %3362 = vmatprep.subr.mxu0 0.0
    %v3363 = vand.u32 %v108, 4294901760
    %v3364 = vsub.f32 %v108, %v3363
    %v3365 = vand.u32 %v3364, 4294901760
    %3366 = vmatpush2.msra.mxu0 %v3365
    %3367 = vmatprep.subr.mxu0 0.0
    %v3368 = vand.u32 %v107, 4294901760
    %v3369 = vsub.f32 %v107, %v3368
    %v3370 = vand.u32 %v3369, 4294901760
    %3371 = vmatpush2.msra.mxu0 %v3370
    %3372 = vmatprep.subr.mxu0 0.0
    %v3373 = vand.u32 %v106, 4294901760
    %v3374 = vsub.f32 %v106, %v3373
    %v3375 = vand.u32 %v3374, 4294901760
    %3376 = vmatpush2.msra.mxu0 %v3375
    %3377 = vmatprep.subr.mxu0 0.0
    %v3378 = vand.u32 %v105, 4294901760
    %v3379 = vsub.f32 %v105, %v3378
    %v3380 = vand.u32 %v3379, 4294901760
    %3381 = vmatpush2.msra.mxu0 %v3380
    %3382 = vmatprep.subr.mxu0 0.0
    %v3383 = vand.u32 %v104, 4294901760
    %v3384 = vsub.f32 %v104, %v3383
    %v3385 = vand.u32 %v3384, 4294901760
    %3386 = vmatpush2.msra.mxu0 %v3385
    %v3387 = vand.u32 %v1880, 4294901760
    %3388 = vmatprep.mubr.f32.mxu0 %v3387
    %v3389 = vand.u32 %v1879, 4294901760
    %3390 = vmatmul.mubr.f32.gmra.mxu0 %v3389
    %v3391 = vpop.f32.mrf.mxu0
    %v3392 = vadd.f32 %v3059, %v3391
    %v3393 = vpop.f32.mrf.mxu0
    %v3394 = vand.u32 %v1882, 4294901760
    %3395 = vmatprep.mubr.f32.mxu0 %v3394
    %v3396 = vand.u32 %v1881, 4294901760
    %3397 = vmatmul.mubr.f32.gmra.mxu0 %v3396
    %v3398 = vpop.f32.mrf.mxu0
    %v3399 = vadd.f32 %v3070, %v3398
    %v3400 = vpop.f32.mrf.mxu0
    %v3401 = vand.u32 %v1884, 4294901760
    %3402 = vmatprep.mubr.f32.mxu0 %v3401
    %v3403 = vand.u32 %v1883, 4294901760
    %3404 = vmatmul.mubr.f32.gmra.mxu0 %v3403
    %v3405 = vpop.f32.mrf.mxu0
    %v3406 = vadd.f32 %v3081, %v3405
    %v3407 = vpop.f32.mrf.mxu0
    %v3408 = vand.u32 %v1886, 4294901760
    %3409 = vmatprep.mubr.f32.mxu0 %v3408
    %v3410 = vand.u32 %v1885, 4294901760
    %3411 = vmatmul.mubr.f32.gmra.mxu0 %v3410
    %v3412 = vpop.f32.mrf.mxu0
    %v3413 = vadd.f32 %v3092, %v3412
    %v3414 = vpop.f32.mrf.mxu0
    %v3415 = vand.u32 %v1888, 4294901760
    %3416 = vmatprep.mubr.f32.mxu0 %v3415
    %v3417 = vand.u32 %v1887, 4294901760
    %3418 = vmatmul.mubr.f32.gmra.mxu0 %v3417
    %v3419 = vpop.f32.mrf.mxu0
    %v3420 = vadd.f32 %v3103, %v3419
    %v3421 = vpop.f32.mrf.mxu0
    %v3422 = vand.u32 %v1890, 4294901760
    %3423 = vmatprep.mubr.f32.mxu0 %v3422
    %v3424 = vand.u32 %v1889, 4294901760
    %3425 = vmatmul.mubr.f32.gmra.mxu0 %v3424
    %v3426 = vpop.f32.mrf.mxu0
    %v3427 = vadd.f32 %v3114, %v3426
    %v3428 = vpop.f32.mrf.mxu0
    %v3429 = vand.u32 %v1892, 4294901760
    %3430 = vmatprep.mubr.f32.mxu0 %v3429
    %v3431 = vand.u32 %v1891, 4294901760
    %3432 = vmatmul.mubr.f32.gmra.mxu0 %v3431
    %v3433 = vpop.f32.mrf.mxu0
    %v3434 = vadd.f32 %v3125, %v3433
    %v3435 = vpop.f32.mrf.mxu0
    %v3436 = vand.u32 %v1894, 4294901760
    %3437 = vmatprep.mubr.f32.mxu0 %v3436
    %v3438 = vand.u32 %v1893, 4294901760
    %3439 = vmatmul.mubr.f32.gmra.mxu0 %v3438
    %v3440 = vpop.f32.mrf.mxu0
    %v3441 = vadd.f32 %v3136, %v3440
    %v3442 = vpop.f32.mrf.mxu0
    %v3443 = vand.u32 %v1896, 4294901760
    %3444 = vmatprep.mubr.f32.mxu0 %v3443
    %v3445 = vand.u32 %v1895, 4294901760
    %3446 = vmatmul.mubr.f32.gmra.mxu0 %v3445
    %v3447 = vpop.f32.mrf.mxu0
    %v3448 = vadd.f32 %v3147, %v3447
    %v3449 = vpop.f32.mrf.mxu0
    %v3450 = vand.u32 %v1898, 4294901760
    %3451 = vmatprep.mubr.f32.mxu0 %v3450
    %v3452 = vand.u32 %v1897, 4294901760
    %3453 = vmatmul.mubr.f32.gmra.mxu0 %v3452
    %v3454 = vpop.f32.mrf.mxu0
    %v3455 = vadd.f32 %v3158, %v3454
    %v3456 = vpop.f32.mrf.mxu0
    %v3457 = vand.u32 %v1900, 4294901760
    %3458 = vmatprep.mubr.f32.mxu0 %v3457
    %v3459 = vand.u32 %v1899, 4294901760
    %3460 = vmatmul.mubr.f32.gmra.mxu0 %v3459
    %v3461 = vpop.f32.mrf.mxu0
    %v3462 = vadd.f32 %v3169, %v3461
    %v3463 = vpop.f32.mrf.mxu0
    %v3464 = vand.u32 %v1902, 4294901760
    %3465 = vmatprep.mubr.f32.mxu0 %v3464
    %v3466 = vand.u32 %v1901, 4294901760
    %3467 = vmatmul.mubr.f32.gmra.mxu0 %v3466
    %v3468 = vpop.f32.mrf.mxu0
    %v3469 = vadd.f32 %v3180, %v3468
    %v3470 = vpop.f32.mrf.mxu0
    %v3471 = vand.u32 %v1904, 4294901760
    %3472 = vmatprep.mubr.f32.mxu0 %v3471
    %v3473 = vand.u32 %v1903, 4294901760
    %3474 = vmatmul.mubr.f32.gmra.mxu0 %v3473
    %v3475 = vpop.f32.mrf.mxu0
    %v3476 = vadd.f32 %v3191, %v3475
    %v3477 = vpop.f32.mrf.mxu0
    %v3478 = vand.u32 %v1906, 4294901760
    %3479 = vmatprep.mubr.f32.mxu0 %v3478
    %v3480 = vand.u32 %v1905, 4294901760
    %3481 = vmatmul.mubr.f32.gmra.mxu0 %v3480
    %v3482 = vpop.f32.mrf.mxu0
    %v3483 = vadd.f32 %v3202, %v3482
    %v3484 = vpop.f32.mrf.mxu0
    %v3485 = vand.u32 %v1908, 4294901760
    %3486 = vmatprep.mubr.f32.mxu0 %v3485
    %v3487 = vand.u32 %v1907, 4294901760
    %3488 = vmatmul.mubr.f32.gmra.mxu0 %v3487
    %v3489 = vpop.f32.mrf.mxu0
    %v3490 = vadd.f32 %v3213, %v3489
    %v3491 = vpop.f32.mrf.mxu0
    %v3492 = vand.u32 %v1910, 4294901760
    %3493 = vmatprep.mubr.f32.mxu0 %v3492
    %v3494 = vand.u32 %v1909, 4294901760
    %3495 = vmatmul.mubr.f32.gmra.mxu0 %v3494
    %v3496 = vpop.f32.mrf.mxu0
    %v3497 = vadd.f32 %v3224, %v3496
    %v3498 = vpop.f32.mrf.mxu0
    %3499 = vdwg.mxu0
    %3500 = vmatprep.subr.mxu0 0.0
    %v3501 = vand.u32 %v103, 4294901760
    %3502 = vmatpush1.msra.mxu0 %v3501
    %3503 = vmatprep.subr.mxu0 0.0
    %v3504 = vand.u32 %v102, 4294901760
    %3505 = vmatpush1.msra.mxu0 %v3504
    %3506 = vmatprep.subr.mxu0 0.0
    %v3507 = vand.u32 %v101, 4294901760
    %3508 = vmatpush1.msra.mxu0 %v3507
    %3509 = vmatprep.subr.mxu0 0.0
    %v3510 = vand.u32 %v100, 4294901760
    %3511 = vmatpush1.msra.mxu0 %v3510
    %3512 = vmatprep.subr.mxu0 0.0
    %v3513 = vand.u32 %v99, 4294901760
    %3514 = vmatpush1.msra.mxu0 %v3513
    %3515 = vmatprep.subr.mxu0 0.0
    %v3516 = vand.u32 %v98, 4294901760
    %3517 = vmatpush1.msra.mxu0 %v3516
    %3518 = vmatprep.subr.mxu0 0.0
    %v3519 = vand.u32 %v97, 4294901760
    %3520 = vmatpush1.msra.mxu0 %v3519
    %3521 = vmatprep.subr.mxu0 0.0
    %v3522 = vand.u32 %v96, 4294901760
    %3523 = vmatpush1.msra.mxu0 %v3522
    %3524 = vmatprep.subr.mxu0 0.0
    %v3525 = vand.u32 %v95, 4294901760
    %3526 = vmatpush1.msra.mxu0 %v3525
    %3527 = vmatprep.subr.mxu0 0.0
    %v3528 = vand.u32 %v94, 4294901760
    %3529 = vmatpush1.msra.mxu0 %v3528
    %3530 = vmatprep.subr.mxu0 0.0
    %v3531 = vand.u32 %v93, 4294901760
    %3532 = vmatpush1.msra.mxu0 %v3531
    %3533 = vmatprep.subr.mxu0 0.0
    %v3534 = vand.u32 %v92, 4294901760
    %3535 = vmatpush1.msra.mxu0 %v3534
    %3536 = vmatprep.subr.mxu0 0.0
    %v3537 = vand.u32 %v91, 4294901760
    %3538 = vmatpush1.msra.mxu0 %v3537
    %3539 = vmatprep.subr.mxu0 0.0
    %v3540 = vand.u32 %v90, 4294901760
    %3541 = vmatpush1.msra.mxu0 %v3540
    %3542 = vmatprep.subr.mxu0 0.0
    %v3543 = vand.u32 %v89, 4294901760
    %3544 = vmatpush1.msra.mxu0 %v3543
    %3545 = vmatprep.subr.mxu0 0.0
    %v3546 = vand.u32 %v88, 4294901760
    %3547 = vmatpush1.msra.mxu0 %v3546
    %3548 = vmatprep.subr.mxu0 0.0
    %v3549 = vand.u32 %v119, 4294901760
    %3550 = vmatpush2.msra.mxu0 %v3549
    %3551 = vmatprep.subr.mxu0 0.0
    %v3552 = vand.u32 %v118, 4294901760
    %3553 = vmatpush2.msra.mxu0 %v3552
    %3554 = vmatprep.subr.mxu0 0.0
    %v3555 = vand.u32 %v117, 4294901760
    %3556 = vmatpush2.msra.mxu0 %v3555
    %3557 = vmatprep.subr.mxu0 0.0
    %v3558 = vand.u32 %v116, 4294901760
    %3559 = vmatpush2.msra.mxu0 %v3558
    %3560 = vmatprep.subr.mxu0 0.0
    %v3561 = vand.u32 %v115, 4294901760
    %3562 = vmatpush2.msra.mxu0 %v3561
    %3563 = vmatprep.subr.mxu0 0.0
    %v3564 = vand.u32 %v114, 4294901760
    %3565 = vmatpush2.msra.mxu0 %v3564
    %3566 = vmatprep.subr.mxu0 0.0
    %v3567 = vand.u32 %v113, 4294901760
    %3568 = vmatpush2.msra.mxu0 %v3567
    %3569 = vmatprep.subr.mxu0 0.0
    %v3570 = vand.u32 %v112, 4294901760
    %3571 = vmatpush2.msra.mxu0 %v3570
    %3572 = vmatprep.subr.mxu0 0.0
    %v3573 = vand.u32 %v111, 4294901760
    %3574 = vmatpush2.msra.mxu0 %v3573
    %3575 = vmatprep.subr.mxu0 0.0
    %v3576 = vand.u32 %v110, 4294901760
    %3577 = vmatpush2.msra.mxu0 %v3576
    %3578 = vmatprep.subr.mxu0 0.0
    %v3579 = vand.u32 %v109, 4294901760
    %3580 = vmatpush2.msra.mxu0 %v3579
    %3581 = vmatprep.subr.mxu0 0.0
    %v3582 = vand.u32 %v108, 4294901760
    %3583 = vmatpush2.msra.mxu0 %v3582
    %3584 = vmatprep.subr.mxu0 0.0
    %v3585 = vand.u32 %v107, 4294901760
    %3586 = vmatpush2.msra.mxu0 %v3585
    %3587 = vmatprep.subr.mxu0 0.0
    %v3588 = vand.u32 %v106, 4294901760
    %3589 = vmatpush2.msra.mxu0 %v3588
    %3590 = vmatprep.subr.mxu0 0.0
    %v3591 = vand.u32 %v105, 4294901760
    %3592 = vmatpush2.msra.mxu0 %v3591
    %3593 = vmatprep.subr.mxu0 0.0
    %v3594 = vand.u32 %v104, 4294901760
    %3595 = vmatpush2.msra.mxu0 %v3594
    %v3596 = vand.u32 %v1880, 4294901760
    %3597 = vmatprep.mubr.f32.mxu0 %v3596
    %v3598 = vand.u32 %v1879, 4294901760
    %3599 = vmatmul.mubr.f32.gmra.mxu0 %v3598
    %v3600 = vpop.f32.mrf.mxu0
    %v3601 = vadd.f32 %v3392, %v3600
    %v3602 = vpop.f32.mrf.mxu0
    %v3603 = vand.u32 %v1882, 4294901760
    %3604 = vmatprep.mubr.f32.mxu0 %v3603
    %v3605 = vand.u32 %v1881, 4294901760
    %3606 = vmatmul.mubr.f32.gmra.mxu0 %v3605
    %v3607 = vpop.f32.mrf.mxu0
    %v3608 = vadd.f32 %v3399, %v3607
    %v3609 = vpop.f32.mrf.mxu0
    %v3610 = vand.u32 %v1884, 4294901760
    %3611 = vmatprep.mubr.f32.mxu0 %v3610
    %v3612 = vand.u32 %v1883, 4294901760
    %3613 = vmatmul.mubr.f32.gmra.mxu0 %v3612
    %v3614 = vpop.f32.mrf.mxu0
    %v3615 = vadd.f32 %v3406, %v3614
    %v3616 = vpop.f32.mrf.mxu0
    %v3617 = vand.u32 %v1886, 4294901760
    %3618 = vmatprep.mubr.f32.mxu0 %v3617
    %v3619 = vand.u32 %v1885, 4294901760
    %3620 = vmatmul.mubr.f32.gmra.mxu0 %v3619
    %v3621 = vpop.f32.mrf.mxu0
    %v3622 = vadd.f32 %v3413, %v3621
    %v3623 = vpop.f32.mrf.mxu0
    %v3624 = vand.u32 %v1888, 4294901760
    %3625 = vmatprep.mubr.f32.mxu0 %v3624
    %v3626 = vand.u32 %v1887, 4294901760
    %3627 = vmatmul.mubr.f32.gmra.mxu0 %v3626
    %v3628 = vpop.f32.mrf.mxu0
    %v3629 = vadd.f32 %v3420, %v3628
    %v3630 = vpop.f32.mrf.mxu0
    %v3631 = vand.u32 %v1890, 4294901760
    %3632 = vmatprep.mubr.f32.mxu0 %v3631
    %v3633 = vand.u32 %v1889, 4294901760
    %3634 = vmatmul.mubr.f32.gmra.mxu0 %v3633
    %v3635 = vpop.f32.mrf.mxu0
    %v3636 = vadd.f32 %v3427, %v3635
    %v3637 = vpop.f32.mrf.mxu0
    %v3638 = vand.u32 %v1892, 4294901760
    %3639 = vmatprep.mubr.f32.mxu0 %v3638
    %v3640 = vand.u32 %v1891, 4294901760
    %3641 = vmatmul.mubr.f32.gmra.mxu0 %v3640
    %v3642 = vpop.f32.mrf.mxu0
    %v3643 = vadd.f32 %v3434, %v3642
    %v3644 = vpop.f32.mrf.mxu0
    %v3645 = vand.u32 %v1894, 4294901760
    %3646 = vmatprep.mubr.f32.mxu0 %v3645
    %v3647 = vand.u32 %v1893, 4294901760
    %3648 = vmatmul.mubr.f32.gmra.mxu0 %v3647
    %v3649 = vpop.f32.mrf.mxu0
    %v3650 = vadd.f32 %v3441, %v3649
    %v3651 = vpop.f32.mrf.mxu0
    %v3652 = vand.u32 %v1896, 4294901760
    %3653 = vmatprep.mubr.f32.mxu0 %v3652
    %v3654 = vand.u32 %v1895, 4294901760
    %3655 = vmatmul.mubr.f32.gmra.mxu0 %v3654
    %v3656 = vpop.f32.mrf.mxu0
    %v3657 = vadd.f32 %v3448, %v3656
    %v3658 = vpop.f32.mrf.mxu0
    %v3659 = vand.u32 %v1898, 4294901760
    %3660 = vmatprep.mubr.f32.mxu0 %v3659
    %v3661 = vand.u32 %v1897, 4294901760
    %3662 = vmatmul.mubr.f32.gmra.mxu0 %v3661
    %v3663 = vpop.f32.mrf.mxu0
    %v3664 = vadd.f32 %v3455, %v3663
    %v3665 = vpop.f32.mrf.mxu0
    %v3666 = vand.u32 %v1900, 4294901760
    %3667 = vmatprep.mubr.f32.mxu0 %v3666
    %v3668 = vand.u32 %v1899, 4294901760
    %3669 = vmatmul.mubr.f32.gmra.mxu0 %v3668
    %v3670 = vpop.f32.mrf.mxu0
    %v3671 = vadd.f32 %v3462, %v3670
    %v3672 = vpop.f32.mrf.mxu0
    %v3673 = vand.u32 %v1902, 4294901760
    %3674 = vmatprep.mubr.f32.mxu0 %v3673
    %v3675 = vand.u32 %v1901, 4294901760
    %3676 = vmatmul.mubr.f32.gmra.mxu0 %v3675
    %v3677 = vpop.f32.mrf.mxu0
    %v3678 = vadd.f32 %v3469, %v3677
    %v3679 = vpop.f32.mrf.mxu0
    %v3680 = vand.u32 %v1904, 4294901760
    %3681 = vmatprep.mubr.f32.mxu0 %v3680
    %v3682 = vand.u32 %v1903, 4294901760
    %3683 = vmatmul.mubr.f32.gmra.mxu0 %v3682
    %v3684 = vpop.f32.mrf.mxu0
    %v3685 = vadd.f32 %v3476, %v3684
    %v3686 = vpop.f32.mrf.mxu0
    %v3687 = vand.u32 %v1906, 4294901760
    %3688 = vmatprep.mubr.f32.mxu0 %v3687
    %v3689 = vand.u32 %v1905, 4294901760
    %3690 = vmatmul.mubr.f32.gmra.mxu0 %v3689
    %v3691 = vpop.f32.mrf.mxu0
    %v3692 = vadd.f32 %v3483, %v3691
    %v3693 = vpop.f32.mrf.mxu0
    %v3694 = vand.u32 %v1908, 4294901760
    %3695 = vmatprep.mubr.f32.mxu0 %v3694
    %v3696 = vand.u32 %v1907, 4294901760
    %3697 = vmatmul.mubr.f32.gmra.mxu0 %v3696
    %v3698 = vpop.f32.mrf.mxu0
    %v3699 = vadd.f32 %v3490, %v3698
    %v3700 = vpop.f32.mrf.mxu0
    %v3701 = vand.u32 %v1910, 4294901760
    %3702 = vmatprep.mubr.f32.mxu0 %v3701
    %v3703 = vand.u32 %v1909, 4294901760
    %3704 = vmatmul.mubr.f32.gmra.mxu0 %v3703
    %v3705 = vpop.f32.mrf.mxu0
    %v3706 = vadd.f32 %v3497, %v3705
    %v3707 = vpop.f32.mrf.mxu0
    %3708 = vdwg.mxu0
    %v3709 = vmax.f32 %v3601, 0.0
    %v3710 = vmax.f32 %v3608, 0.0
    %v3711 = vmax.f32 %v3615, 0.0
    %v3712 = vmax.f32 %v3622, 0.0
    %v3713 = vmax.f32 %v3629, 0.0
    %v3714 = vmax.f32 %v3636, 0.0
    %v3715 = vmax.f32 %v3643, 0.0
    %v3716 = vmax.f32 %v3650, 0.0
    %v3717 = vmax.f32 %v3657, 0.0
    %v3718 = vmax.f32 %v3664, 0.0
    %v3719 = vmax.f32 %v3671, 0.0
    %v3720 = vmax.f32 %v3678, 0.0
    %v3721 = vmax.f32 %v3685, 0.0
    %v3722 = vmax.f32 %v3692, 0.0
    %v3723 = vmax.f32 %v3699, 0.0
    %v3724 = vmax.f32 %v3706, 0.0
    %v3725 = vld [vmem:[%s2] sm:$0xff]
    %v3726 = vld [vmem:[%s2 + $0x8] sm:$0xff]
    %3728 = vset.pattern.permute.xlu0 0
    %3729 = vperm.xlu0 %3728, %v3725
    %v3730 = vpop.permute.xlu0 %3729
    %3733 = vset.pattern.permute.xlu0 0
    %3734 = vperm.xlu0 %3733, %v3726
    %v3735 = vpop.permute.xlu0 %3734
    %v3737 = vlaneseq
    %v3738 = vshrl.u32 %v3737, 7
    %v3739 = vsub.s32 0, %v3738
    %v3740 = vrot.slane %v120, %v3739
    %v3741 = vsub.f32 %v3730, %v3740
    %v3742 = vsub.f32 %v3735, %v3740
    %v3743 = vand.u32 2147483647, %v3741
    %v3744 = vand.u32 2147483647, %v3742
    %v3745 = vsub.f32 1.0, %v3743
    %v3746 = vsub.f32 1.0, %v3744
    %v3747 = vmax.f32 %v3745, 0.0
    %v3748 = vmax.f32 %v3746, 0.0
    %3749 = vset.pattern.permute.xlu0 1
    %3750 = vperm.xlu0 %3749, %v3725
    %v3751 = vpop.permute.xlu0 %3750
    %3753 = vset.pattern.permute.xlu0 1
    %3754 = vperm.xlu0 %3753, %v3726
    %v3755 = vpop.permute.xlu0 %3754
    %v3757 = vlaneseq
    %v3758 = vshrl.u32 %v3757, 7
    %v3759 = vsub.s32 0, %v3758
    %v3760 = vrot.slane %v121, %v3759
    %v3761 = vsub.f32 %v3751, %v3760
    %v3762 = vsub.f32 %v3755, %v3760
    %v3763 = vand.u32 2147483647, %v3761
    %v3764 = vand.u32 2147483647, %v3762
    %v3765 = vsub.f32 1.0, %v3763
    %v3766 = vsub.f32 1.0, %v3764
    %v3767 = vmax.f32 %v3765, 0.0
    %v3768 = vmax.f32 %v3766, 0.0
    %v3769 = vmul.f32 %v3747, %v3767
    %v3770 = vmul.f32 %v3748, %v3768
    %v3771 = vmul.f32 %v3769, %v123
    %v3772 = vmul.f32 %v3770, %v124
    %3773 = vmatprep.subr.mxu0 0.0
    %v3774 = vand.u32 %v3724, 4294901760
    %3775 = vmatpush1.xpose.msra.mxu0 %v3774
    %3776 = vmatprep.subr.mxu0 0.0
    %v3777 = vand.u32 %v3723, 4294901760
    %3778 = vmatpush1.xpose.msra.mxu0 %v3777
    %3779 = vmatprep.subr.mxu0 0.0
    %v3780 = vand.u32 %v3722, 4294901760
    %3781 = vmatpush1.xpose.msra.mxu0 %v3780
    %3782 = vmatprep.subr.mxu0 0.0
    %v3783 = vand.u32 %v3721, 4294901760
    %3784 = vmatpush1.xpose.msra.mxu0 %v3783
    %3785 = vmatprep.subr.mxu0 0.0
    %v3786 = vand.u32 %v3720, 4294901760
    %3787 = vmatpush1.xpose.msra.mxu0 %v3786
    %3788 = vmatprep.subr.mxu0 0.0
    %v3789 = vand.u32 %v3719, 4294901760
    %3790 = vmatpush1.xpose.msra.mxu0 %v3789
    %3791 = vmatprep.subr.mxu0 0.0
    %v3792 = vand.u32 %v3718, 4294901760
    %3793 = vmatpush1.xpose.msra.mxu0 %v3792
    %3794 = vmatprep.subr.mxu0 0.0
    %v3795 = vand.u32 %v3717, 4294901760
    %3796 = vmatpush1.xpose.msra.mxu0 %v3795
    %3797 = vmatprep.subr.mxu0 0.0
    %v3798 = vand.u32 %v3716, 4294901760
    %3799 = vmatpush1.xpose.msra.mxu0 %v3798
    %3800 = vmatprep.subr.mxu0 0.0
    %v3801 = vand.u32 %v3715, 4294901760
    %3802 = vmatpush1.xpose.msra.mxu0 %v3801
    %3803 = vmatprep.subr.mxu0 0.0
    %v3804 = vand.u32 %v3714, 4294901760
    %3805 = vmatpush1.xpose.msra.mxu0 %v3804
    %3806 = vmatprep.subr.mxu0 0.0
    %v3807 = vand.u32 %v3713, 4294901760
    %3808 = vmatpush1.xpose.msra.mxu0 %v3807
    %3809 = vmatprep.subr.mxu0 0.0
    %v3810 = vand.u32 %v3712, 4294901760
    %3811 = vmatpush1.xpose.msra.mxu0 %v3810
    %3812 = vmatprep.subr.mxu0 0.0
    %v3813 = vand.u32 %v3711, 4294901760
    %3814 = vmatpush1.xpose.msra.mxu0 %v3813
    %3815 = vmatprep.subr.mxu0 0.0
    %v3816 = vand.u32 %v3710, 4294901760
    %3817 = vmatpush1.xpose.msra.mxu0 %v3816
    %3818 = vmatprep.subr.mxu0 0.0
    %v3819 = vand.u32 %v3709, 4294901760
    %3820 = vmatpush1.xpose.msra.mxu0 %v3819
    %3821 = vmatprep.subr.mxu0 0.0
    %3822 = vmatpush2.xpose.msra.mxu0 0.0
    %3823 = vmatprep.subr.mxu0 0.0
    %3824 = vmatpush2.xpose.msra.mxu0 0.0
    %3825 = vmatprep.subr.mxu0 0.0
    %3826 = vmatpush2.xpose.msra.mxu0 0.0
    %3827 = vmatprep.subr.mxu0 0.0
    %3828 = vmatpush2.xpose.msra.mxu0 0.0
    %3829 = vmatprep.subr.mxu0 0.0
    %3830 = vmatpush2.xpose.msra.mxu0 0.0
    %3831 = vmatprep.subr.mxu0 0.0
    %3832 = vmatpush2.xpose.msra.mxu0 0.0
    %3833 = vmatprep.subr.mxu0 0.0
    %3834 = vmatpush2.xpose.msra.mxu0 0.0
    %3835 = vmatprep.subr.mxu0 0.0
    %3836 = vmatpush2.xpose.msra.mxu0 0.0
    %3837 = vmatprep.subr.mxu0 0.0
    %3838 = vmatpush2.xpose.msra.mxu0 0.0
    %3839 = vmatprep.subr.mxu0 0.0
    %3840 = vmatpush2.xpose.msra.mxu0 0.0
    %3841 = vmatprep.subr.mxu0 0.0
    %3842 = vmatpush2.xpose.msra.mxu0 0.0
    %3843 = vmatprep.subr.mxu0 0.0
    %3844 = vmatpush2.xpose.msra.mxu0 0.0
    %3845 = vmatprep.subr.mxu0 0.0
    %3846 = vmatpush2.xpose.msra.mxu0 0.0
    %3847 = vmatprep.subr.mxu0 0.0
    %3848 = vmatpush2.xpose.msra.mxu0 0.0
    %3849 = vmatprep.subr.mxu0 0.0
    %3850 = vmatpush2.xpose.msra.mxu0 0.0
    %3851 = vmatprep.subr.mxu0 0.0
    %3852 = vmatpush2.xpose.msra.mxu0 0.0
    %3853 = vmatprep.mubr.f32.mxu0 0.0
    %v3854 = vand.u32 %v3771, 4294901760
    %v3855 = vsub.f32 %v3771, %v3854
    %v3856 = vand.u32 %v3855, 4294901760
    %v3857 = vsub.f32 %v3855, %v3856
    %v3858 = vand.u32 %v3857, 4294901760
    %3859 = vmatmul.mubr.f32.gmra.mxu0 %v3858
    %v3860 = vpop.f32.mrf.mxu0
    %v3861 = vadd.f32 0.0, %v3860
    %v3862 = vpop.f32.mrf.mxu0
    %3863 = vmatprep.mubr.f32.mxu0 0.0
    %v3864 = vand.u32 %v3772, 4294901760
    %v3865 = vsub.f32 %v3772, %v3864
    %v3866 = vand.u32 %v3865, 4294901760
    %v3867 = vsub.f32 %v3865, %v3866
    %v3868 = vand.u32 %v3867, 4294901760
    %3869 = vmatmul.mubr.f32.gmra.mxu0 %v3868
    %v3870 = vpop.f32.mrf.mxu0
    %v3871 = vadd.f32 0.0, %v3870
    %v3872 = vpop.f32.mrf.mxu0
    %3873 = vdwg.mxu0
    %3874 = vmatprep.subr.mxu0 0.0
    %v3875 = vand.u32 %v3724, 4294901760
    %v3876 = vsub.f32 %v3724, %v3875
    %v3877 = vand.u32 %v3876, 4294901760
    %v3878 = vsub.f32 %v3876, %v3877
    %v3879 = vand.u32 %v3878, 4294901760
    %3880 = vmatpush1.xpose.msra.mxu0 %v3879
    %3881 = vmatprep.subr.mxu0 0.0
    %v3882 = vand.u32 %v3723, 4294901760
    %v3883 = vsub.f32 %v3723, %v3882
    %v3884 = vand.u32 %v3883, 4294901760
    %v3885 = vsub.f32 %v3883, %v3884
    %v3886 = vand.u32 %v3885, 4294901760
    %3887 = vmatpush1.xpose.msra.mxu0 %v3886
    %3888 = vmatprep.subr.mxu0 0.0
    %v3889 = vand.u32 %v3722, 4294901760
    %v3890 = vsub.f32 %v3722, %v3889
    %v3891 = vand.u32 %v3890, 4294901760
    %v3892 = vsub.f32 %v3890, %v3891
    %v3893 = vand.u32 %v3892, 4294901760
    %3894 = vmatpush1.xpose.msra.mxu0 %v3893
    %3895 = vmatprep.subr.mxu0 0.0
    %v3896 = vand.u32 %v3721, 4294901760
    %v3897 = vsub.f32 %v3721, %v3896
    %v3898 = vand.u32 %v3897, 4294901760
    %v3899 = vsub.f32 %v3897, %v3898
    %v3900 = vand.u32 %v3899, 4294901760
    %3901 = vmatpush1.xpose.msra.mxu0 %v3900
    %3902 = vmatprep.subr.mxu0 0.0
    %v3903 = vand.u32 %v3720, 4294901760
    %v3904 = vsub.f32 %v3720, %v3903
    %v3905 = vand.u32 %v3904, 4294901760
    %v3906 = vsub.f32 %v3904, %v3905
    %v3907 = vand.u32 %v3906, 4294901760
    %3908 = vmatpush1.xpose.msra.mxu0 %v3907
    %3909 = vmatprep.subr.mxu0 0.0
    %v3910 = vand.u32 %v3719, 4294901760
    %v3911 = vsub.f32 %v3719, %v3910
    %v3912 = vand.u32 %v3911, 4294901760
    %v3913 = vsub.f32 %v3911, %v3912
    %v3914 = vand.u32 %v3913, 4294901760
    %3915 = vmatpush1.xpose.msra.mxu0 %v3914
    %3916 = vmatprep.subr.mxu0 0.0
    %v3917 = vand.u32 %v3718, 4294901760
    %v3918 = vsub.f32 %v3718, %v3917
    %v3919 = vand.u32 %v3918, 4294901760
    %v3920 = vsub.f32 %v3918, %v3919
    %v3921 = vand.u32 %v3920, 4294901760
    %3922 = vmatpush1.xpose.msra.mxu0 %v3921
    %3923 = vmatprep.subr.mxu0 0.0
    %v3924 = vand.u32 %v3717, 4294901760
    %v3925 = vsub.f32 %v3717, %v3924
    %v3926 = vand.u32 %v3925, 4294901760
    %v3927 = vsub.f32 %v3925, %v3926
    %v3928 = vand.u32 %v3927, 4294901760
    %3929 = vmatpush1.xpose.msra.mxu0 %v3928
    %3930 = vmatprep.subr.mxu0 0.0
    %v3931 = vand.u32 %v3716, 4294901760
    %v3932 = vsub.f32 %v3716, %v3931
    %v3933 = vand.u32 %v3932, 4294901760
    %v3934 = vsub.f32 %v3932, %v3933
    %v3935 = vand.u32 %v3934, 4294901760
    %3936 = vmatpush1.xpose.msra.mxu0 %v3935
    %3937 = vmatprep.subr.mxu0 0.0
    %v3938 = vand.u32 %v3715, 4294901760
    %v3939 = vsub.f32 %v3715, %v3938
    %v3940 = vand.u32 %v3939, 4294901760
    %v3941 = vsub.f32 %v3939, %v3940
    %v3942 = vand.u32 %v3941, 4294901760
    %3943 = vmatpush1.xpose.msra.mxu0 %v3942
    %3944 = vmatprep.subr.mxu0 0.0
    %v3945 = vand.u32 %v3714, 4294901760
    %v3946 = vsub.f32 %v3714, %v3945
    %v3947 = vand.u32 %v3946, 4294901760
    %v3948 = vsub.f32 %v3946, %v3947
    %v3949 = vand.u32 %v3948, 4294901760
    %3950 = vmatpush1.xpose.msra.mxu0 %v3949
    %3951 = vmatprep.subr.mxu0 0.0
    %v3952 = vand.u32 %v3713, 4294901760
    %v3953 = vsub.f32 %v3713, %v3952
    %v3954 = vand.u32 %v3953, 4294901760
    %v3955 = vsub.f32 %v3953, %v3954
    %v3956 = vand.u32 %v3955, 4294901760
    %3957 = vmatpush1.xpose.msra.mxu0 %v3956
    %3958 = vmatprep.subr.mxu0 0.0
    %v3959 = vand.u32 %v3712, 4294901760
    %v3960 = vsub.f32 %v3712, %v3959
    %v3961 = vand.u32 %v3960, 4294901760
    %v3962 = vsub.f32 %v3960, %v3961
    %v3963 = vand.u32 %v3962, 4294901760
    %3964 = vmatpush1.xpose.msra.mxu0 %v3963
    %3965 = vmatprep.subr.mxu0 0.0
    %v3966 = vand.u32 %v3711, 4294901760
    %v3967 = vsub.f32 %v3711, %v3966
    %v3968 = vand.u32 %v3967, 4294901760
    %v3969 = vsub.f32 %v3967, %v3968
    %v3970 = vand.u32 %v3969, 4294901760
    %3971 = vmatpush1.xpose.msra.mxu0 %v3970
    %3972 = vmatprep.subr.mxu0 0.0
    %v3973 = vand.u32 %v3710, 4294901760
    %v3974 = vsub.f32 %v3710, %v3973
    %v3975 = vand.u32 %v3974, 4294901760
    %v3976 = vsub.f32 %v3974, %v3975
    %v3977 = vand.u32 %v3976, 4294901760
    %3978 = vmatpush1.xpose.msra.mxu0 %v3977
    %3979 = vmatprep.subr.mxu0 0.0
    %v3980 = vand.u32 %v3709, 4294901760
    %v3981 = vsub.f32 %v3709, %v3980
    %v3982 = vand.u32 %v3981, 4294901760
    %v3983 = vsub.f32 %v3981, %v3982
    %v3984 = vand.u32 %v3983, 4294901760
    %3985 = vmatpush1.xpose.msra.mxu0 %v3984
    %3986 = vmatprep.subr.mxu0 0.0
    %3987 = vmatpush2.xpose.msra.mxu0 0.0
    %3988 = vmatprep.subr.mxu0 0.0
    %3989 = vmatpush2.xpose.msra.mxu0 0.0
    %3990 = vmatprep.subr.mxu0 0.0
    %3991 = vmatpush2.xpose.msra.mxu0 0.0
    %3992 = vmatprep.subr.mxu0 0.0
    %3993 = vmatpush2.xpose.msra.mxu0 0.0
    %3994 = vmatprep.subr.mxu0 0.0
    %3995 = vmatpush2.xpose.msra.mxu0 0.0
    %3996 = vmatprep.subr.mxu0 0.0
    %3997 = vmatpush2.xpose.msra.mxu0 0.0
    %3998 = vmatprep.subr.mxu0 0.0
    %3999 = vmatpush2.xpose.msra.mxu0 0.0
    %4000 = vmatprep.subr.mxu0 0.0
    %4001 = vmatpush2.xpose.msra.mxu0 0.0
    %4002 = vmatprep.subr.mxu0 0.0
    %4003 = vmatpush2.xpose.msra.mxu0 0.0
    %4004 = vmatprep.subr.mxu0 0.0
    %4005 = vmatpush2.xpose.msra.mxu0 0.0
    %4006 = vmatprep.subr.mxu0 0.0
    %4007 = vmatpush2.xpose.msra.mxu0 0.0
    %4008 = vmatprep.subr.mxu0 0.0
    %4009 = vmatpush2.xpose.msra.mxu0 0.0
    %4010 = vmatprep.subr.mxu0 0.0
    %4011 = vmatpush2.xpose.msra.mxu0 0.0
    %4012 = vmatprep.subr.mxu0 0.0
    %4013 = vmatpush2.xpose.msra.mxu0 0.0
    %4014 = vmatprep.subr.mxu0 0.0
    %4015 = vmatpush2.xpose.msra.mxu0 0.0
    %4016 = vmatprep.subr.mxu0 0.0
    %4017 = vmatpush2.xpose.msra.mxu0 0.0
    %4018 = vmatprep.mubr.f32.mxu0 0.0
    %v4019 = vand.u32 %v3771, 4294901760
    %4020 = vmatmul.mubr.f32.gmra.mxu0 %v4019
    %v4021 = vpop.f32.mrf.mxu0
    %v4022 = vadd.f32 %v3861, %v4021
    %v4023 = vpop.f32.mrf.mxu0
    %4024 = vmatprep.mubr.f32.mxu0 0.0
    %v4025 = vand.u32 %v3772, 4294901760
    %4026 = vmatmul.mubr.f32.gmra.mxu0 %v4025
    %v4027 = vpop.f32.mrf.mxu0
    %v4028 = vadd.f32 %v3871, %v4027
    %v4029 = vpop.f32.mrf.mxu0
    %4030 = vdwg.mxu0
    %4031 = vmatprep.subr.mxu0 0.0
    %v4032 = vand.u32 %v3724, 4294901760
    %v4033 = vsub.f32 %v3724, %v4032
    %4034 = vmatpush1.xpose.msra.mxu0 %v4033
    %4035 = vmatprep.subr.mxu0 0.0
    %v4036 = vand.u32 %v3723, 4294901760
    %v4037 = vsub.f32 %v3723, %v4036
    %4038 = vmatpush1.xpose.msra.mxu0 %v4037
    %4039 = vmatprep.subr.mxu0 0.0
    %v4040 = vand.u32 %v3722, 4294901760
    %v4041 = vsub.f32 %v3722, %v4040
    %4042 = vmatpush1.xpose.msra.mxu0 %v4041
    %4043 = vmatprep.subr.mxu0 0.0
    %v4044 = vand.u32 %v3721, 4294901760
    %v4045 = vsub.f32 %v3721, %v4044
    %4046 = vmatpush1.xpose.msra.mxu0 %v4045
    %4047 = vmatprep.subr.mxu0 0.0
    %v4048 = vand.u32 %v3720, 4294901760
    %v4049 = vsub.f32 %v3720, %v4048
    %4050 = vmatpush1.xpose.msra.mxu0 %v4049
    %4051 = vmatprep.subr.mxu0 0.0
    %v4052 = vand.u32 %v3719, 4294901760
    %v4053 = vsub.f32 %v3719, %v4052
    %4054 = vmatpush1.xpose.msra.mxu0 %v4053
    %4055 = vmatprep.subr.mxu0 0.0
    %v4056 = vand.u32 %v3718, 4294901760
    %v4057 = vsub.f32 %v3718, %v4056
    %4058 = vmatpush1.xpose.msra.mxu0 %v4057
    %4059 = vmatprep.subr.mxu0 0.0
    %v4060 = vand.u32 %v3717, 4294901760
    %v4061 = vsub.f32 %v3717, %v4060
    %4062 = vmatpush1.xpose.msra.mxu0 %v4061
    %4063 = vmatprep.subr.mxu0 0.0
    %v4064 = vand.u32 %v3716, 4294901760
    %v4065 = vsub.f32 %v3716, %v4064
    %4066 = vmatpush1.xpose.msra.mxu0 %v4065
    %4067 = vmatprep.subr.mxu0 0.0
    %v4068 = vand.u32 %v3715, 4294901760
    %v4069 = vsub.f32 %v3715, %v4068
    %4070 = vmatpush1.xpose.msra.mxu0 %v4069
    %4071 = vmatprep.subr.mxu0 0.0
    %v4072 = vand.u32 %v3714, 4294901760
    %v4073 = vsub.f32 %v3714, %v4072
    %4074 = vmatpush1.xpose.msra.mxu0 %v4073
    %4075 = vmatprep.subr.mxu0 0.0
    %v4076 = vand.u32 %v3713, 4294901760
    %v4077 = vsub.f32 %v3713, %v4076
    %4078 = vmatpush1.xpose.msra.mxu0 %v4077
    %4079 = vmatprep.subr.mxu0 0.0
    %v4080 = vand.u32 %v3712, 4294901760
    %v4081 = vsub.f32 %v3712, %v4080
    %4082 = vmatpush1.xpose.msra.mxu0 %v4081
    %4083 = vmatprep.subr.mxu0 0.0
    %v4084 = vand.u32 %v3711, 4294901760
    %v4085 = vsub.f32 %v3711, %v4084
    %4086 = vmatpush1.xpose.msra.mxu0 %v4085
    %4087 = vmatprep.subr.mxu0 0.0
    %v4088 = vand.u32 %v3710, 4294901760
    %v4089 = vsub.f32 %v3710, %v4088
    %4090 = vmatpush1.xpose.msra.mxu0 %v4089
    %4091 = vmatprep.subr.mxu0 0.0
    %v4092 = vand.u32 %v3709, 4294901760
    %v4093 = vsub.f32 %v3709, %v4092
    %4094 = vmatpush1.xpose.msra.mxu0 %v4093
    %4095 = vmatprep.subr.mxu0 0.0
    %4096 = vmatpush2.xpose.msra.mxu0 0.0
    %4097 = vmatprep.subr.mxu0 0.0
    %4098 = vmatpush2.xpose.msra.mxu0 0.0
    %4099 = vmatprep.subr.mxu0 0.0
    %4100 = vmatpush2.xpose.msra.mxu0 0.0
    %4101 = vmatprep.subr.mxu0 0.0
    %4102 = vmatpush2.xpose.msra.mxu0 0.0
    %4103 = vmatprep.subr.mxu0 0.0
    %4104 = vmatpush2.xpose.msra.mxu0 0.0
    %4105 = vmatprep.subr.mxu0 0.0
    %4106 = vmatpush2.xpose.msra.mxu0 0.0
    %4107 = vmatprep.subr.mxu0 0.0
    %4108 = vmatpush2.xpose.msra.mxu0 0.0
    %4109 = vmatprep.subr.mxu0 0.0
    %4110 = vmatpush2.xpose.msra.mxu0 0.0
    %4111 = vmatprep.subr.mxu0 0.0
    %4112 = vmatpush2.xpose.msra.mxu0 0.0
    %4113 = vmatprep.subr.mxu0 0.0
    %4114 = vmatpush2.xpose.msra.mxu0 0.0
    %4115 = vmatprep.subr.mxu0 0.0
    %4116 = vmatpush2.xpose.msra.mxu0 0.0
    %4117 = vmatprep.subr.mxu0 0.0
    %4118 = vmatpush2.xpose.msra.mxu0 0.0
    %4119 = vmatprep.subr.mxu0 0.0
    %4120 = vmatpush2.xpose.msra.mxu0 0.0
    %4121 = vmatprep.subr.mxu0 0.0
    %4122 = vmatpush2.xpose.msra.mxu0 0.0
    %4123 = vmatprep.subr.mxu0 0.0
    %4124 = vmatpush2.xpose.msra.mxu0 0.0
    %4125 = vmatprep.subr.mxu0 0.0
    %4126 = vmatpush2.xpose.msra.mxu0 0.0
    %4127 = vmatprep.mubr.f32.mxu0 0.0
    %v4128 = vand.u32 %v3771, 4294901760
    %v4129 = vsub.f32 %v3771, %v4128
    %4130 = vmatmul.mubr.f32.gmra.mxu0 %v4129
    %v4131 = vpop.f32.mrf.mxu0
    %v4132 = vadd.f32 %v4022, %v4131
    %v4133 = vpop.f32.mrf.mxu0
    %4134 = vmatprep.mubr.f32.mxu0 0.0
    %v4135 = vand.u32 %v3772, 4294901760
    %v4136 = vsub.f32 %v3772, %v4135
    %4137 = vmatmul.mubr.f32.gmra.mxu0 %v4136
    %v4138 = vpop.f32.mrf.mxu0
    %v4139 = vadd.f32 %v4028, %v4138
    %v4140 = vpop.f32.mrf.mxu0
    %4141 = vdwg.mxu0
    %4142 = vmatprep.subr.mxu0 0.0
    %v4143 = vand.u32 %v3724, 4294901760
    %4144 = vmatpush1.xpose.msra.mxu0 %v4143
    %4145 = vmatprep.subr.mxu0 0.0
    %v4146 = vand.u32 %v3723, 4294901760
    %4147 = vmatpush1.xpose.msra.mxu0 %v4146
    %4148 = vmatprep.subr.mxu0 0.0
    %v4149 = vand.u32 %v3722, 4294901760
    %4150 = vmatpush1.xpose.msra.mxu0 %v4149
    %4151 = vmatprep.subr.mxu0 0.0
    %v4152 = vand.u32 %v3721, 4294901760
    %4153 = vmatpush1.xpose.msra.mxu0 %v4152
    %4154 = vmatprep.subr.mxu0 0.0
    %v4155 = vand.u32 %v3720, 4294901760
    %4156 = vmatpush1.xpose.msra.mxu0 %v4155
    %4157 = vmatprep.subr.mxu0 0.0
    %v4158 = vand.u32 %v3719, 4294901760
    %4159 = vmatpush1.xpose.msra.mxu0 %v4158
    %4160 = vmatprep.subr.mxu0 0.0
    %v4161 = vand.u32 %v3718, 4294901760
    %4162 = vmatpush1.xpose.msra.mxu0 %v4161
    %4163 = vmatprep.subr.mxu0 0.0
    %v4164 = vand.u32 %v3717, 4294901760
    %4165 = vmatpush1.xpose.msra.mxu0 %v4164
    %4166 = vmatprep.subr.mxu0 0.0
    %v4167 = vand.u32 %v3716, 4294901760
    %4168 = vmatpush1.xpose.msra.mxu0 %v4167
    %4169 = vmatprep.subr.mxu0 0.0
    %v4170 = vand.u32 %v3715, 4294901760
    %4171 = vmatpush1.xpose.msra.mxu0 %v4170
    %4172 = vmatprep.subr.mxu0 0.0
    %v4173 = vand.u32 %v3714, 4294901760
    %4174 = vmatpush1.xpose.msra.mxu0 %v4173
    %4175 = vmatprep.subr.mxu0 0.0
    %v4176 = vand.u32 %v3713, 4294901760
    %4177 = vmatpush1.xpose.msra.mxu0 %v4176
    %4178 = vmatprep.subr.mxu0 0.0
    %v4179 = vand.u32 %v3712, 4294901760
    %4180 = vmatpush1.xpose.msra.mxu0 %v4179
    %4181 = vmatprep.subr.mxu0 0.0
    %v4182 = vand.u32 %v3711, 4294901760
    %4183 = vmatpush1.xpose.msra.mxu0 %v4182
    %4184 = vmatprep.subr.mxu0 0.0
    %v4185 = vand.u32 %v3710, 4294901760
    %4186 = vmatpush1.xpose.msra.mxu0 %v4185
    %4187 = vmatprep.subr.mxu0 0.0
    %v4188 = vand.u32 %v3709, 4294901760
    %4189 = vmatpush1.xpose.msra.mxu0 %v4188
    %4190 = vmatprep.subr.mxu0 0.0
    %4191 = vmatpush2.xpose.msra.mxu0 0.0
    %4192 = vmatprep.subr.mxu0 0.0
    %4193 = vmatpush2.xpose.msra.mxu0 0.0
    %4194 = vmatprep.subr.mxu0 0.0
    %4195 = vmatpush2.xpose.msra.mxu0 0.0
    %4196 = vmatprep.subr.mxu0 0.0
    %4197 = vmatpush2.xpose.msra.mxu0 0.0
    %4198 = vmatprep.subr.mxu0 0.0
    %4199 = vmatpush2.xpose.msra.mxu0 0.0
    %4200 = vmatprep.subr.mxu0 0.0
    %4201 = vmatpush2.xpose.msra.mxu0 0.0
    %4202 = vmatprep.subr.mxu0 0.0
    %4203 = vmatpush2.xpose.msra.mxu0 0.0
    %4204 = vmatprep.subr.mxu0 0.0
    %4205 = vmatpush2.xpose.msra.mxu0 0.0
    %4206 = vmatprep.subr.mxu0 0.0
    %4207 = vmatpush2.xpose.msra.mxu0 0.0
    %4208 = vmatprep.subr.mxu0 0.0
    %4209 = vmatpush2.xpose.msra.mxu0 0.0
    %4210 = vmatprep.subr.mxu0 0.0
    %4211 = vmatpush2.xpose.msra.mxu0 0.0
    %4212 = vmatprep.subr.mxu0 0.0
    %4213 = vmatpush2.xpose.msra.mxu0 0.0
    %4214 = vmatprep.subr.mxu0 0.0
    %4215 = vmatpush2.xpose.msra.mxu0 0.0
    %4216 = vmatprep.subr.mxu0 0.0
    %4217 = vmatpush2.xpose.msra.mxu0 0.0
    %4218 = vmatprep.subr.mxu0 0.0
    %4219 = vmatpush2.xpose.msra.mxu0 0.0
    %4220 = vmatprep.subr.mxu0 0.0
    %4221 = vmatpush2.xpose.msra.mxu0 0.0
    %4222 = vmatprep.mubr.f32.mxu0 0.0
    %v4223 = vand.u32 %v3771, 4294901760
    %v4224 = vsub.f32 %v3771, %v4223
    %v4225 = vand.u32 %v4224, 4294901760
    %4226 = vmatmul.mubr.f32.gmra.mxu0 %v4225
    %v4227 = vpop.f32.mrf.mxu0
    %v4228 = vadd.f32 %v4132, %v4227
    %v4229 = vpop.f32.mrf.mxu0
    %4230 = vmatprep.mubr.f32.mxu0 0.0
    %v4231 = vand.u32 %v3772, 4294901760
    %v4232 = vsub.f32 %v3772, %v4231
    %v4233 = vand.u32 %v4232, 4294901760
    %4234 = vmatmul.mubr.f32.gmra.mxu0 %v4233
    %v4235 = vpop.f32.mrf.mxu0
    %v4236 = vadd.f32 %v4139, %v4235
    %v4237 = vpop.f32.mrf.mxu0
    %4238 = vdwg.mxu0
    %4239 = vmatprep.subr.mxu0 0.0
    %v4240 = vand.u32 %v3724, 4294901760
    %v4241 = vsub.f32 %v3724, %v4240
    %v4242 = vand.u32 %v4241, 4294901760
    %4243 = vmatpush1.xpose.msra.mxu0 %v4242
    %4244 = vmatprep.subr.mxu0 0.0
    %v4245 = vand.u32 %v3723, 4294901760
    %v4246 = vsub.f32 %v3723, %v4245
    %v4247 = vand.u32 %v4246, 4294901760
    %4248 = vmatpush1.xpose.msra.mxu0 %v4247
    %4249 = vmatprep.subr.mxu0 0.0
    %v4250 = vand.u32 %v3722, 4294901760
    %v4251 = vsub.f32 %v3722, %v4250
    %v4252 = vand.u32 %v4251, 4294901760
    %4253 = vmatpush1.xpose.msra.mxu0 %v4252
    %4254 = vmatprep.subr.mxu0 0.0
    %v4255 = vand.u32 %v3721, 4294901760
    %v4256 = vsub.f32 %v3721, %v4255
    %v4257 = vand.u32 %v4256, 4294901760
    %4258 = vmatpush1.xpose.msra.mxu0 %v4257
    %4259 = vmatprep.subr.mxu0 0.0
    %v4260 = vand.u32 %v3720, 4294901760
    %v4261 = vsub.f32 %v3720, %v4260
    %v4262 = vand.u32 %v4261, 4294901760
    %4263 = vmatpush1.xpose.msra.mxu0 %v4262
    %4264 = vmatprep.subr.mxu0 0.0
    %v4265 = vand.u32 %v3719, 4294901760
    %v4266 = vsub.f32 %v3719, %v4265
    %v4267 = vand.u32 %v4266, 4294901760
    %4268 = vmatpush1.xpose.msra.mxu0 %v4267
    %4269 = vmatprep.subr.mxu0 0.0
    %v4270 = vand.u32 %v3718, 4294901760
    %v4271 = vsub.f32 %v3718, %v4270
    %v4272 = vand.u32 %v4271, 4294901760
    %4273 = vmatpush1.xpose.msra.mxu0 %v4272
    %4274 = vmatprep.subr.mxu0 0.0
    %v4275 = vand.u32 %v3717, 4294901760
    %v4276 = vsub.f32 %v3717, %v4275
    %v4277 = vand.u32 %v4276, 4294901760
    %4278 = vmatpush1.xpose.msra.mxu0 %v4277
    %4279 = vmatprep.subr.mxu0 0.0
    %v4280 = vand.u32 %v3716, 4294901760
    %v4281 = vsub.f32 %v3716, %v4280
    %v4282 = vand.u32 %v4281, 4294901760
    %4283 = vmatpush1.xpose.msra.mxu0 %v4282
    %4284 = vmatprep.subr.mxu0 0.0
    %v4285 = vand.u32 %v3715, 4294901760
    %v4286 = vsub.f32 %v3715, %v4285
    %v4287 = vand.u32 %v4286, 4294901760
    %4288 = vmatpush1.xpose.msra.mxu0 %v4287
    %4289 = vmatprep.subr.mxu0 0.0
    %v4290 = vand.u32 %v3714, 4294901760
    %v4291 = vsub.f32 %v3714, %v4290
    %v4292 = vand.u32 %v4291, 4294901760
    %4293 = vmatpush1.xpose.msra.mxu0 %v4292
    %4294 = vmatprep.subr.mxu0 0.0
    %v4295 = vand.u32 %v3713, 4294901760
    %v4296 = vsub.f32 %v3713, %v4295
    %v4297 = vand.u32 %v4296, 4294901760
    %4298 = vmatpush1.xpose.msra.mxu0 %v4297
    %4299 = vmatprep.subr.mxu0 0.0
    %v4300 = vand.u32 %v3712, 4294901760
    %v4301 = vsub.f32 %v3712, %v4300
    %v4302 = vand.u32 %v4301, 4294901760
    %4303 = vmatpush1.xpose.msra.mxu0 %v4302
    %4304 = vmatprep.subr.mxu0 0.0
    %v4305 = vand.u32 %v3711, 4294901760
    %v4306 = vsub.f32 %v3711, %v4305
    %v4307 = vand.u32 %v4306, 4294901760
    %4308 = vmatpush1.xpose.msra.mxu0 %v4307
    %4309 = vmatprep.subr.mxu0 0.0
    %v4310 = vand.u32 %v3710, 4294901760
    %v4311 = vsub.f32 %v3710, %v4310
    %v4312 = vand.u32 %v4311, 4294901760
    %4313 = vmatpush1.xpose.msra.mxu0 %v4312
    %4314 = vmatprep.subr.mxu0 0.0
    %v4315 = vand.u32 %v3709, 4294901760
    %v4316 = vsub.f32 %v3709, %v4315
    %v4317 = vand.u32 %v4316, 4294901760
    %4318 = vmatpush1.xpose.msra.mxu0 %v4317
    %4319 = vmatprep.subr.mxu0 0.0
    %4320 = vmatpush2.xpose.msra.mxu0 0.0
    %4321 = vmatprep.subr.mxu0 0.0
    %4322 = vmatpush2.xpose.msra.mxu0 0.0
    %4323 = vmatprep.subr.mxu0 0.0
    %4324 = vmatpush2.xpose.msra.mxu0 0.0
    %4325 = vmatprep.subr.mxu0 0.0
    %4326 = vmatpush2.xpose.msra.mxu0 0.0
    %4327 = vmatprep.subr.mxu0 0.0
    %4328 = vmatpush2.xpose.msra.mxu0 0.0
    %4329 = vmatprep.subr.mxu0 0.0
    %4330 = vmatpush2.xpose.msra.mxu0 0.0
    %4331 = vmatprep.subr.mxu0 0.0
    %4332 = vmatpush2.xpose.msra.mxu0 0.0
    %4333 = vmatprep.subr.mxu0 0.0
    %4334 = vmatpush2.xpose.msra.mxu0 0.0
    %4335 = vmatprep.subr.mxu0 0.0
    %4336 = vmatpush2.xpose.msra.mxu0 0.0
    %4337 = vmatprep.subr.mxu0 0.0
    %4338 = vmatpush2.xpose.msra.mxu0 0.0
    %4339 = vmatprep.subr.mxu0 0.0
    %4340 = vmatpush2.xpose.msra.mxu0 0.0
    %4341 = vmatprep.subr.mxu0 0.0
    %4342 = vmatpush2.xpose.msra.mxu0 0.0
    %4343 = vmatprep.subr.mxu0 0.0
    %4344 = vmatpush2.xpose.msra.mxu0 0.0
    %4345 = vmatprep.subr.mxu0 0.0
    %4346 = vmatpush2.xpose.msra.mxu0 0.0
    %4347 = vmatprep.subr.mxu0 0.0
    %4348 = vmatpush2.xpose.msra.mxu0 0.0
    %4349 = vmatprep.subr.mxu0 0.0
    %4350 = vmatpush2.xpose.msra.mxu0 0.0
    %4351 = vmatprep.mubr.f32.mxu0 0.0
    %v4352 = vand.u32 %v3771, 4294901760
    %4353 = vmatmul.mubr.f32.gmra.mxu0 %v4352
    %v4354 = vpop.f32.mrf.mxu0
    %v4355 = vadd.f32 %v4228, %v4354
    %v4356 = vpop.f32.mrf.mxu0
    %4357 = vmatprep.mubr.f32.mxu0 0.0
    %v4358 = vand.u32 %v3772, 4294901760
    %4359 = vmatmul.mubr.f32.gmra.mxu0 %v4358
    %v4360 = vpop.f32.mrf.mxu0
    %v4361 = vadd.f32 %v4236, %v4360
    %v4362 = vpop.f32.mrf.mxu0
    %4363 = vdwg.mxu0
    %4364 = vmatprep.subr.mxu0 0.0
    %v4365 = vand.u32 %v3724, 4294901760
    %4366 = vmatpush1.xpose.msra.mxu0 %v4365
    %4367 = vmatprep.subr.mxu0 0.0
    %v4368 = vand.u32 %v3723, 4294901760
    %4369 = vmatpush1.xpose.msra.mxu0 %v4368
    %4370 = vmatprep.subr.mxu0 0.0
    %v4371 = vand.u32 %v3722, 4294901760
    %4372 = vmatpush1.xpose.msra.mxu0 %v4371
    %4373 = vmatprep.subr.mxu0 0.0
    %v4374 = vand.u32 %v3721, 4294901760
    %4375 = vmatpush1.xpose.msra.mxu0 %v4374
    %4376 = vmatprep.subr.mxu0 0.0
    %v4377 = vand.u32 %v3720, 4294901760
    %4378 = vmatpush1.xpose.msra.mxu0 %v4377
    %4379 = vmatprep.subr.mxu0 0.0
    %v4380 = vand.u32 %v3719, 4294901760
    %4381 = vmatpush1.xpose.msra.mxu0 %v4380
    %4382 = vmatprep.subr.mxu0 0.0
    %v4383 = vand.u32 %v3718, 4294901760
    %4384 = vmatpush1.xpose.msra.mxu0 %v4383
    %4385 = vmatprep.subr.mxu0 0.0
    %v4386 = vand.u32 %v3717, 4294901760
    %4387 = vmatpush1.xpose.msra.mxu0 %v4386
    %4388 = vmatprep.subr.mxu0 0.0
    %v4389 = vand.u32 %v3716, 4294901760
    %4390 = vmatpush1.xpose.msra.mxu0 %v4389
    %4391 = vmatprep.subr.mxu0 0.0
    %v4392 = vand.u32 %v3715, 4294901760
    %4393 = vmatpush1.xpose.msra.mxu0 %v4392
    %4394 = vmatprep.subr.mxu0 0.0
    %v4395 = vand.u32 %v3714, 4294901760
    %4396 = vmatpush1.xpose.msra.mxu0 %v4395
    %4397 = vmatprep.subr.mxu0 0.0
    %v4398 = vand.u32 %v3713, 4294901760
    %4399 = vmatpush1.xpose.msra.mxu0 %v4398
    %4400 = vmatprep.subr.mxu0 0.0
    %v4401 = vand.u32 %v3712, 4294901760
    %4402 = vmatpush1.xpose.msra.mxu0 %v4401
    %4403 = vmatprep.subr.mxu0 0.0
    %v4404 = vand.u32 %v3711, 4294901760
    %4405 = vmatpush1.xpose.msra.mxu0 %v4404
    %4406 = vmatprep.subr.mxu0 0.0
    %v4407 = vand.u32 %v3710, 4294901760
    %4408 = vmatpush1.xpose.msra.mxu0 %v4407
    %4409 = vmatprep.subr.mxu0 0.0
    %v4410 = vand.u32 %v3709, 4294901760
    %4411 = vmatpush1.xpose.msra.mxu0 %v4410
    %4412 = vmatprep.subr.mxu0 0.0
    %4413 = vmatpush2.xpose.msra.mxu0 0.0
    %4414 = vmatprep.subr.mxu0 0.0
    %4415 = vmatpush2.xpose.msra.mxu0 0.0
    %4416 = vmatprep.subr.mxu0 0.0
    %4417 = vmatpush2.xpose.msra.mxu0 0.0
    %4418 = vmatprep.subr.mxu0 0.0
    %4419 = vmatpush2.xpose.msra.mxu0 0.0
    %4420 = vmatprep.subr.mxu0 0.0
    %4421 = vmatpush2.xpose.msra.mxu0 0.0
    %4422 = vmatprep.subr.mxu0 0.0
    %4423 = vmatpush2.xpose.msra.mxu0 0.0
    %4424 = vmatprep.subr.mxu0 0.0
    %4425 = vmatpush2.xpose.msra.mxu0 0.0
    %4426 = vmatprep.subr.mxu0 0.0
    %4427 = vmatpush2.xpose.msra.mxu0 0.0
    %4428 = vmatprep.subr.mxu0 0.0
    %4429 = vmatpush2.xpose.msra.mxu0 0.0
    %4430 = vmatprep.subr.mxu0 0.0
    %4431 = vmatpush2.xpose.msra.mxu0 0.0
    %4432 = vmatprep.subr.mxu0 0.0
    %4433 = vmatpush2.xpose.msra.mxu0 0.0
    %4434 = vmatprep.subr.mxu0 0.0
    %4435 = vmatpush2.xpose.msra.mxu0 0.0
    %4436 = vmatprep.subr.mxu0 0.0
    %4437 = vmatpush2.xpose.msra.mxu0 0.0
    %4438 = vmatprep.subr.mxu0 0.0
    %4439 = vmatpush2.xpose.msra.mxu0 0.0
    %4440 = vmatprep.subr.mxu0 0.0
    %4441 = vmatpush2.xpose.msra.mxu0 0.0
    %4442 = vmatprep.subr.mxu0 0.0
    %4443 = vmatpush2.xpose.msra.mxu0 0.0
    %4444 = vmatprep.mubr.f32.mxu0 0.0
    %v4445 = vand.u32 %v3771, 4294901760
    %4446 = vmatmul.mubr.f32.gmra.mxu0 %v4445
    %v4447 = vpop.f32.mrf.mxu0
    %v4448 = vadd.f32 %v4355, %v4447
    %v4449 = vpop.f32.mrf.mxu0
    %4450 = vmatprep.mubr.f32.mxu0 0.0
    %v4451 = vand.u32 %v3772, 4294901760
    %4452 = vmatmul.mubr.f32.gmra.mxu0 %v4451
    %v4453 = vpop.f32.mrf.mxu0
    %v4454 = vadd.f32 %v4361, %v4453
    %v4455 = vpop.f32.mrf.mxu0
    %4456 = vdwg.mxu0
    %v4457 = vld [vmem:[%s8] sm:$0xff]
    %v4458 = vld [vmem:[%s8 + $0x8] sm:$0xff]
    %v4459 = vld [vmem:[%s8 + $0x10] sm:$0xff]
    %v4460 = vld [vmem:[%s8 + $0x18] sm:$0x1]
    %v4461 = vld [vmem:[%s3] sm:$0x3]
    %v4462 = vlaneseq
    %v4463 = vshrl.u32 %v4462, 7
    %v4464 = vsub.s32 0, %v4463
    %v4465 = vrot.slane %v4460, %v4464
    %vm4466 = vcmask 195584
    %v4468 = vsel %vm4466, %v4461, 0
    %4470 = vmatprep.subr.mxu0 0.0
    %4471 = vmatpush1.msra.mxu0 0.0
    %4472 = vmatprep.subr.mxu0 0.0
    %4473 = vmatpush1.msra.mxu0 0.0
    %4474 = vmatprep.subr.mxu0 0.0
    %4475 = vmatpush1.msra.mxu0 0.0
    %4476 = vmatprep.subr.mxu0 0.0
    %4477 = vmatpush1.msra.mxu0 0.0
    %4478 = vmatprep.subr.mxu0 0.0
    %4479 = vmatpush1.msra.mxu0 0.0
    %4480 = vmatprep.subr.mxu0 0.0
    %4481 = vmatpush1.msra.mxu0 0.0
    %4482 = vmatprep.subr.mxu0 0.0
    %4483 = vmatpush1.msra.mxu0 0.0
    %4484 = vmatprep.subr.mxu0 0.0
    %4485 = vmatpush1.msra.mxu0 0.0
    %4486 = vmatprep.subr.mxu0 0.0
    %4487 = vmatpush1.msra.mxu0 0.0
    %4488 = vmatprep.subr.mxu0 0.0
    %4489 = vmatpush1.msra.mxu0 0.0
    %4490 = vmatprep.subr.mxu0 0.0
    %4491 = vmatpush1.msra.mxu0 0.0
    %4492 = vmatprep.subr.mxu0 0.0
    %4493 = vmatpush1.msra.mxu0 0.0
    %4494 = vmatprep.subr.mxu0 0.0
    %4495 = vmatpush1.msra.mxu0 0.0
    %4496 = vmatprep.subr.mxu0 0.0
    %v4497 = vand.u32 %v4459, 4294901760
    %4498 = vmatpush1.msra.mxu0 %v4497
    %4499 = vmatprep.subr.mxu0 0.0
    %v4500 = vand.u32 %v4458, 4294901760
    %4501 = vmatpush1.msra.mxu0 %v4500
    %4502 = vmatprep.subr.mxu0 0.0
    %v4503 = vand.u32 %v4457, 4294901760
    %4504 = vmatpush1.msra.mxu0 %v4503
    %4505 = vmatprep.subr.mxu0 0.0
    %4506 = vmatpush2.msra.mxu0 0.0
    %4507 = vmatprep.subr.mxu0 0.0
    %4508 = vmatpush2.msra.mxu0 0.0
    %4509 = vmatprep.subr.mxu0 0.0
    %4510 = vmatpush2.msra.mxu0 0.0
    %4511 = vmatprep.subr.mxu0 0.0
    %4512 = vmatpush2.msra.mxu0 0.0
    %4513 = vmatprep.subr.mxu0 0.0
    %4514 = vmatpush2.msra.mxu0 0.0
    %4515 = vmatprep.subr.mxu0 0.0
    %4516 = vmatpush2.msra.mxu0 0.0
    %4517 = vmatprep.subr.mxu0 0.0
    %4518 = vmatpush2.msra.mxu0 0.0
    %4519 = vmatprep.subr.mxu0 0.0
    %4520 = vmatpush2.msra.mxu0 0.0
    %4521 = vmatprep.subr.mxu0 0.0
    %4522 = vmatpush2.msra.mxu0 0.0
    %4523 = vmatprep.subr.mxu0 0.0
    %4524 = vmatpush2.msra.mxu0 0.0
    %4525 = vmatprep.subr.mxu0 0.0
    %4526 = vmatpush2.msra.mxu0 0.0
    %4527 = vmatprep.subr.mxu0 0.0
    %4528 = vmatpush2.msra.mxu0 0.0
    %4529 = vmatprep.subr.mxu0 0.0
    %4530 = vmatpush2.msra.mxu0 0.0
    %4531 = vmatprep.subr.mxu0 0.0
    %4532 = vmatpush2.msra.mxu0 0.0
    %4533 = vmatprep.subr.mxu0 0.0
    %4534 = vmatpush2.msra.mxu0 0.0
    %4535 = vmatprep.subr.mxu0 0.0
    %4536 = vmatpush2.msra.mxu0 0.0
    %4537 = vmatprep.mubr.f32.mxu0 0.0
    %v4538 = vand.u32 %v4468, 4294901760
    %v4539 = vsub.f32 %v4468, %v4538
    %v4540 = vand.u32 %v4539, 4294901760
    %v4541 = vsub.f32 %v4539, %v4540
    %v4542 = vand.u32 %v4541, 4294901760
    %4543 = vmatmul.mubr.f32.gmra.mxu0 %v4542
    %v4544 = vpop.f32.mrf.mxu0
    %v4545 = vadd.f32 %v4465, %v4544
    %v4546 = vpop.f32.mrf.mxu0
    %4547 = vdwg.mxu0
    %4548 = vmatprep.subr.mxu0 0.0
    %4549 = vmatpush1.msra.mxu0 0.0
    %4550 = vmatprep.subr.mxu0 0.0
    %4551 = vmatpush1.msra.mxu0 0.0
    %4552 = vmatprep.subr.mxu0 0.0
    %4553 = vmatpush1.msra.mxu0 0.0
    %4554 = vmatprep.subr.mxu0 0.0
    %4555 = vmatpush1.msra.mxu0 0.0
    %4556 = vmatprep.subr.mxu0 0.0
    %4557 = vmatpush1.msra.mxu0 0.0
    %4558 = vmatprep.subr.mxu0 0.0
    %4559 = vmatpush1.msra.mxu0 0.0
    %4560 = vmatprep.subr.mxu0 0.0
    %4561 = vmatpush1.msra.mxu0 0.0
    %4562 = vmatprep.subr.mxu0 0.0
    %4563 = vmatpush1.msra.mxu0 0.0
    %4564 = vmatprep.subr.mxu0 0.0
    %4565 = vmatpush1.msra.mxu0 0.0
    %4566 = vmatprep.subr.mxu0 0.0
    %4567 = vmatpush1.msra.mxu0 0.0
    %4568 = vmatprep.subr.mxu0 0.0
    %4569 = vmatpush1.msra.mxu0 0.0
    %4570 = vmatprep.subr.mxu0 0.0
    %4571 = vmatpush1.msra.mxu0 0.0
    %4572 = vmatprep.subr.mxu0 0.0
    %4573 = vmatpush1.msra.mxu0 0.0
    %4574 = vmatprep.subr.mxu0 0.0
    %v4575 = vand.u32 %v4459, 4294901760
    %v4576 = vsub.f32 %v4459, %v4575
    %v4577 = vand.u32 %v4576, 4294901760
    %v4578 = vsub.f32 %v4576, %v4577
    %v4579 = vand.u32 %v4578, 4294901760
    %4580 = vmatpush1.msra.mxu0 %v4579
    %4581 = vmatprep.subr.mxu0 0.0
    %v4582 = vand.u32 %v4458, 4294901760
    %v4583 = vsub.f32 %v4458, %v4582
    %v4584 = vand.u32 %v4583, 4294901760
    %v4585 = vsub.f32 %v4583, %v4584
    %v4586 = vand.u32 %v4585, 4294901760
    %4587 = vmatpush1.msra.mxu0 %v4586
    %4588 = vmatprep.subr.mxu0 0.0
    %v4589 = vand.u32 %v4457, 4294901760
    %v4590 = vsub.f32 %v4457, %v4589
    %v4591 = vand.u32 %v4590, 4294901760
    %v4592 = vsub.f32 %v4590, %v4591
    %v4593 = vand.u32 %v4592, 4294901760
    %4594 = vmatpush1.msra.mxu0 %v4593
    %4595 = vmatprep.subr.mxu0 0.0
    %4596 = vmatpush2.msra.mxu0 0.0
    %4597 = vmatprep.subr.mxu0 0.0
    %4598 = vmatpush2.msra.mxu0 0.0
    %4599 = vmatprep.subr.mxu0 0.0
    %4600 = vmatpush2.msra.mxu0 0.0
    %4601 = vmatprep.subr.mxu0 0.0
    %4602 = vmatpush2.msra.mxu0 0.0
    %4603 = vmatprep.subr.mxu0 0.0
    %4604 = vmatpush2.msra.mxu0 0.0
    %4605 = vmatprep.subr.mxu0 0.0
    %4606 = vmatpush2.msra.mxu0 0.0
    %4607 = vmatprep.subr.mxu0 0.0
    %4608 = vmatpush2.msra.mxu0 0.0
    %4609 = vmatprep.subr.mxu0 0.0
    %4610 = vmatpush2.msra.mxu0 0.0
    %4611 = vmatprep.subr.mxu0 0.0
    %4612 = vmatpush2.msra.mxu0 0.0
    %4613 = vmatprep.subr.mxu0 0.0
    %4614 = vmatpush2.msra.mxu0 0.0
    %4615 = vmatprep.subr.mxu0 0.0
    %4616 = vmatpush2.msra.mxu0 0.0
    %4617 = vmatprep.subr.mxu0 0.0
    %4618 = vmatpush2.msra.mxu0 0.0
    %4619 = vmatprep.subr.mxu0 0.0
    %4620 = vmatpush2.msra.mxu0 0.0
    %4621 = vmatprep.subr.mxu0 0.0
    %4622 = vmatpush2.msra.mxu0 0.0
    %4623 = vmatprep.subr.mxu0 0.0
    %4624 = vmatpush2.msra.mxu0 0.0
    %4625 = vmatprep.subr.mxu0 0.0
    %4626 = vmatpush2.msra.mxu0 0.0
    %4627 = vmatprep.mubr.f32.mxu0 0.0
    %v4628 = vand.u32 %v4468, 4294901760
    %4629 = vmatmul.mubr.f32.gmra.mxu0 %v4628
    %v4630 = vpop.f32.mrf.mxu0
    %v4631 = vadd.f32 %v4545, %v4630
    %v4632 = vpop.f32.mrf.mxu0
    %4633 = vdwg.mxu0
    %4634 = vmatprep.subr.mxu0 0.0
    %4635 = vmatpush1.msra.mxu0 0.0
    %4636 = vmatprep.subr.mxu0 0.0
    %4637 = vmatpush1.msra.mxu0 0.0
    %4638 = vmatprep.subr.mxu0 0.0
    %4639 = vmatpush1.msra.mxu0 0.0
    %4640 = vmatprep.subr.mxu0 0.0
    %4641 = vmatpush1.msra.mxu0 0.0
    %4642 = vmatprep.subr.mxu0 0.0
    %4643 = vmatpush1.msra.mxu0 0.0
    %4644 = vmatprep.subr.mxu0 0.0
    %4645 = vmatpush1.msra.mxu0 0.0
    %4646 = vmatprep.subr.mxu0 0.0
    %4647 = vmatpush1.msra.mxu0 0.0
    %4648 = vmatprep.subr.mxu0 0.0
    %4649 = vmatpush1.msra.mxu0 0.0
    %4650 = vmatprep.subr.mxu0 0.0
    %4651 = vmatpush1.msra.mxu0 0.0
    %4652 = vmatprep.subr.mxu0 0.0
    %4653 = vmatpush1.msra.mxu0 0.0
    %4654 = vmatprep.subr.mxu0 0.0
    %4655 = vmatpush1.msra.mxu0 0.0
    %4656 = vmatprep.subr.mxu0 0.0
    %4657 = vmatpush1.msra.mxu0 0.0
    %4658 = vmatprep.subr.mxu0 0.0
    %4659 = vmatpush1.msra.mxu0 0.0
    %4660 = vmatprep.subr.mxu0 0.0
    %v4661 = vand.u32 %v4459, 4294901760
    %v4662 = vsub.f32 %v4459, %v4661
    %4663 = vmatpush1.msra.mxu0 %v4662
    %4664 = vmatprep.subr.mxu0 0.0
    %v4665 = vand.u32 %v4458, 4294901760
    %v4666 = vsub.f32 %v4458, %v4665
    %4667 = vmatpush1.msra.mxu0 %v4666
    %4668 = vmatprep.subr.mxu0 0.0
    %v4669 = vand.u32 %v4457, 4294901760
    %v4670 = vsub.f32 %v4457, %v4669
    %4671 = vmatpush1.msra.mxu0 %v4670
    %4672 = vmatprep.subr.mxu0 0.0
    %4673 = vmatpush2.msra.mxu0 0.0
    %4674 = vmatprep.subr.mxu0 0.0
    %4675 = vmatpush2.msra.mxu0 0.0
    %4676 = vmatprep.subr.mxu0 0.0
    %4677 = vmatpush2.msra.mxu0 0.0
    %4678 = vmatprep.subr.mxu0 0.0
    %4679 = vmatpush2.msra.mxu0 0.0
    %4680 = vmatprep.subr.mxu0 0.0
    %4681 = vmatpush2.msra.mxu0 0.0
    %4682 = vmatprep.subr.mxu0 0.0
    %4683 = vmatpush2.msra.mxu0 0.0
    %4684 = vmatprep.subr.mxu0 0.0
    %4685 = vmatpush2.msra.mxu0 0.0
    %4686 = vmatprep.subr.mxu0 0.0
    %4687 = vmatpush2.msra.mxu0 0.0
    %4688 = vmatprep.subr.mxu0 0.0
    %4689 = vmatpush2.msra.mxu0 0.0
    %4690 = vmatprep.subr.mxu0 0.0
    %4691 = vmatpush2.msra.mxu0 0.0
    %4692 = vmatprep.subr.mxu0 0.0
    %4693 = vmatpush2.msra.mxu0 0.0
    %4694 = vmatprep.subr.mxu0 0.0
    %4695 = vmatpush2.msra.mxu0 0.0
    %4696 = vmatprep.subr.mxu0 0.0
    %4697 = vmatpush2.msra.mxu0 0.0
    %4698 = vmatprep.subr.mxu0 0.0
    %4699 = vmatpush2.msra.mxu0 0.0
    %4700 = vmatprep.subr.mxu0 0.0
    %4701 = vmatpush2.msra.mxu0 0.0
    %4702 = vmatprep.subr.mxu0 0.0
    %4703 = vmatpush2.msra.mxu0 0.0
    %4704 = vmatprep.mubr.f32.mxu0 0.0
    %v4705 = vand.u32 %v4468, 4294901760
    %v4706 = vsub.f32 %v4468, %v4705
    %4707 = vmatmul.mubr.f32.gmra.mxu0 %v4706
    %v4708 = vpop.f32.mrf.mxu0
    %v4709 = vadd.f32 %v4631, %v4708
    %v4710 = vpop.f32.mrf.mxu0
    %4711 = vdwg.mxu0
    %4712 = vmatprep.subr.mxu0 0.0
    %4713 = vmatpush1.msra.mxu0 0.0
    %4714 = vmatprep.subr.mxu0 0.0
    %4715 = vmatpush1.msra.mxu0 0.0
    %4716 = vmatprep.subr.mxu0 0.0
    %4717 = vmatpush1.msra.mxu0 0.0
    %4718 = vmatprep.subr.mxu0 0.0
    %4719 = vmatpush1.msra.mxu0 0.0
    %4720 = vmatprep.subr.mxu0 0.0
    %4721 = vmatpush1.msra.mxu0 0.0
    %4722 = vmatprep.subr.mxu0 0.0
    %4723 = vmatpush1.msra.mxu0 0.0
    %4724 = vmatprep.subr.mxu0 0.0
    %4725 = vmatpush1.msra.mxu0 0.0
    %4726 = vmatprep.subr.mxu0 0.0
    %4727 = vmatpush1.msra.mxu0 0.0
    %4728 = vmatprep.subr.mxu0 0.0
    %4729 = vmatpush1.msra.mxu0 0.0
    %4730 = vmatprep.subr.mxu0 0.0
    %4731 = vmatpush1.msra.mxu0 0.0
    %4732 = vmatprep.subr.mxu0 0.0
    %4733 = vmatpush1.msra.mxu0 0.0
    %4734 = vmatprep.subr.mxu0 0.0
    %4735 = vmatpush1.msra.mxu0 0.0
    %4736 = vmatprep.subr.mxu0 0.0
    %4737 = vmatpush1.msra.mxu0 0.0
    %4738 = vmatprep.subr.mxu0 0.0
    %v4739 = vand.u32 %v4459, 4294901760
    %4740 = vmatpush1.msra.mxu0 %v4739
    %4741 = vmatprep.subr.mxu0 0.0
    %v4742 = vand.u32 %v4458, 4294901760
    %4743 = vmatpush1.msra.mxu0 %v4742
    %4744 = vmatprep.subr.mxu0 0.0
    %v4745 = vand.u32 %v4457, 4294901760
    %4746 = vmatpush1.msra.mxu0 %v4745
    %4747 = vmatprep.subr.mxu0 0.0
    %4748 = vmatpush2.msra.mxu0 0.0
    %4749 = vmatprep.subr.mxu0 0.0
    %4750 = vmatpush2.msra.mxu0 0.0
    %4751 = vmatprep.subr.mxu0 0.0
    %4752 = vmatpush2.msra.mxu0 0.0
    %4753 = vmatprep.subr.mxu0 0.0
    %4754 = vmatpush2.msra.mxu0 0.0
    %4755 = vmatprep.subr.mxu0 0.0
    %4756 = vmatpush2.msra.mxu0 0.0
    %4757 = vmatprep.subr.mxu0 0.0
    %4758 = vmatpush2.msra.mxu0 0.0
    %4759 = vmatprep.subr.mxu0 0.0
    %4760 = vmatpush2.msra.mxu0 0.0
    %4761 = vmatprep.subr.mxu0 0.0
    %4762 = vmatpush2.msra.mxu0 0.0
    %4763 = vmatprep.subr.mxu0 0.0
    %4764 = vmatpush2.msra.mxu0 0.0
    %4765 = vmatprep.subr.mxu0 0.0
    %4766 = vmatpush2.msra.mxu0 0.0
    %4767 = vmatprep.subr.mxu0 0.0
    %4768 = vmatpush2.msra.mxu0 0.0
    %4769 = vmatprep.subr.mxu0 0.0
    %4770 = vmatpush2.msra.mxu0 0.0
    %4771 = vmatprep.subr.mxu0 0.0
    %4772 = vmatpush2.msra.mxu0 0.0
    %4773 = vmatprep.subr.mxu0 0.0
    %4774 = vmatpush2.msra.mxu0 0.0
    %4775 = vmatprep.subr.mxu0 0.0
    %4776 = vmatpush2.msra.mxu0 0.0
    %4777 = vmatprep.subr.mxu0 0.0
    %4778 = vmatpush2.msra.mxu0 0.0
    %4779 = vmatprep.mubr.f32.mxu0 0.0
    %v4780 = vand.u32 %v4468, 4294901760
    %v4781 = vsub.f32 %v4468, %v4780
    %v4782 = vand.u32 %v4781, 4294901760
    %4783 = vmatmul.mubr.f32.gmra.mxu0 %v4782
    %v4784 = vpop.f32.mrf.mxu0
    %v4785 = vadd.f32 %v4709, %v4784
    %v4786 = vpop.f32.mrf.mxu0
    %4787 = vdwg.mxu0
    %4788 = vmatprep.subr.mxu0 0.0
    %4789 = vmatpush1.msra.mxu0 0.0
    %4790 = vmatprep.subr.mxu0 0.0
    %4791 = vmatpush1.msra.mxu0 0.0
    %4792 = vmatprep.subr.mxu0 0.0
    %4793 = vmatpush1.msra.mxu0 0.0
    %4794 = vmatprep.subr.mxu0 0.0
    %4795 = vmatpush1.msra.mxu0 0.0
    %4796 = vmatprep.subr.mxu0 0.0
    %4797 = vmatpush1.msra.mxu0 0.0
    %4798 = vmatprep.subr.mxu0 0.0
    %4799 = vmatpush1.msra.mxu0 0.0
    %4800 = vmatprep.subr.mxu0 0.0
    %4801 = vmatpush1.msra.mxu0 0.0
    %4802 = vmatprep.subr.mxu0 0.0
    %4803 = vmatpush1.msra.mxu0 0.0
    %4804 = vmatprep.subr.mxu0 0.0
    %4805 = vmatpush1.msra.mxu0 0.0
    %4806 = vmatprep.subr.mxu0 0.0
    %4807 = vmatpush1.msra.mxu0 0.0
    %4808 = vmatprep.subr.mxu0 0.0
    %4809 = vmatpush1.msra.mxu0 0.0
    %4810 = vmatprep.subr.mxu0 0.0
    %4811 = vmatpush1.msra.mxu0 0.0
    %4812 = vmatprep.subr.mxu0 0.0
    %4813 = vmatpush1.msra.mxu0 0.0
    %4814 = vmatprep.subr.mxu0 0.0
    %v4815 = vand.u32 %v4459, 4294901760
    %v4816 = vsub.f32 %v4459, %v4815
    %v4817 = vand.u32 %v4816, 4294901760
    %4818 = vmatpush1.msra.mxu0 %v4817
    %4819 = vmatprep.subr.mxu0 0.0
    %v4820 = vand.u32 %v4458, 4294901760
    %v4821 = vsub.f32 %v4458, %v4820
    %v4822 = vand.u32 %v4821, 4294901760
    %4823 = vmatpush1.msra.mxu0 %v4822
    %4824 = vmatprep.subr.mxu0 0.0
    %v4825 = vand.u32 %v4457, 4294901760
    %v4826 = vsub.f32 %v4457, %v4825
    %v4827 = vand.u32 %v4826, 4294901760
    %4828 = vmatpush1.msra.mxu0 %v4827
    %4829 = vmatprep.subr.mxu0 0.0
    %4830 = vmatpush2.msra.mxu0 0.0
    %4831 = vmatprep.subr.mxu0 0.0
    %4832 = vmatpush2.msra.mxu0 0.0
    %4833 = vmatprep.subr.mxu0 0.0
    %4834 = vmatpush2.msra.mxu0 0.0
    %4835 = vmatprep.subr.mxu0 0.0
    %4836 = vmatpush2.msra.mxu0 0.0
    %4837 = vmatprep.subr.mxu0 0.0
    %4838 = vmatpush2.msra.mxu0 0.0
    %4839 = vmatprep.subr.mxu0 0.0
    %4840 = vmatpush2.msra.mxu0 0.0
    %4841 = vmatprep.subr.mxu0 0.0
    %4842 = vmatpush2.msra.mxu0 0.0
    %4843 = vmatprep.subr.mxu0 0.0
    %4844 = vmatpush2.msra.mxu0 0.0
    %4845 = vmatprep.subr.mxu0 0.0
    %4846 = vmatpush2.msra.mxu0 0.0
    %4847 = vmatprep.subr.mxu0 0.0
    %4848 = vmatpush2.msra.mxu0 0.0
    %4849 = vmatprep.subr.mxu0 0.0
    %4850 = vmatpush2.msra.mxu0 0.0
    %4851 = vmatprep.subr.mxu0 0.0
    %4852 = vmatpush2.msra.mxu0 0.0
    %4853 = vmatprep.subr.mxu0 0.0
    %4854 = vmatpush2.msra.mxu0 0.0
    %4855 = vmatprep.subr.mxu0 0.0
    %4856 = vmatpush2.msra.mxu0 0.0
    %4857 = vmatprep.subr.mxu0 0.0
    %4858 = vmatpush2.msra.mxu0 0.0
    %4859 = vmatprep.subr.mxu0 0.0
    %4860 = vmatpush2.msra.mxu0 0.0
    %4861 = vmatprep.mubr.f32.mxu0 0.0
    %v4862 = vand.u32 %v4468, 4294901760
    %4863 = vmatmul.mubr.f32.gmra.mxu0 %v4862
    %v4864 = vpop.f32.mrf.mxu0
    %v4865 = vadd.f32 %v4785, %v4864
    %v4866 = vpop.f32.mrf.mxu0
    %4867 = vdwg.mxu0
    %4868 = vmatprep.subr.mxu0 0.0
    %4869 = vmatpush1.msra.mxu0 0.0
    %4870 = vmatprep.subr.mxu0 0.0
    %4871 = vmatpush1.msra.mxu0 0.0
    %4872 = vmatprep.subr.mxu0 0.0
    %4873 = vmatpush1.msra.mxu0 0.0
    %4874 = vmatprep.subr.mxu0 0.0
    %4875 = vmatpush1.msra.mxu0 0.0
    %4876 = vmatprep.subr.mxu0 0.0
    %4877 = vmatpush1.msra.mxu0 0.0
    %4878 = vmatprep.subr.mxu0 0.0
    %4879 = vmatpush1.msra.mxu0 0.0
    %4880 = vmatprep.subr.mxu0 0.0
    %4881 = vmatpush1.msra.mxu0 0.0
    %4882 = vmatprep.subr.mxu0 0.0
    %4883 = vmatpush1.msra.mxu0 0.0
    %4884 = vmatprep.subr.mxu0 0.0
    %4885 = vmatpush1.msra.mxu0 0.0
    %4886 = vmatprep.subr.mxu0 0.0
    %4887 = vmatpush1.msra.mxu0 0.0
    %4888 = vmatprep.subr.mxu0 0.0
    %4889 = vmatpush1.msra.mxu0 0.0
    %4890 = vmatprep.subr.mxu0 0.0
    %4891 = vmatpush1.msra.mxu0 0.0
    %4892 = vmatprep.subr.mxu0 0.0
    %4893 = vmatpush1.msra.mxu0 0.0
    %4894 = vmatprep.subr.mxu0 0.0
    %v4895 = vand.u32 %v4459, 4294901760
    %4896 = vmatpush1.msra.mxu0 %v4895
    %4897 = vmatprep.subr.mxu0 0.0
    %v4898 = vand.u32 %v4458, 4294901760
    %4899 = vmatpush1.msra.mxu0 %v4898
    %4900 = vmatprep.subr.mxu0 0.0
    %v4901 = vand.u32 %v4457, 4294901760
    %4902 = vmatpush1.msra.mxu0 %v4901
    %4903 = vmatprep.subr.mxu0 0.0
    %4904 = vmatpush2.msra.mxu0 0.0
    %4905 = vmatprep.subr.mxu0 0.0
    %4906 = vmatpush2.msra.mxu0 0.0
    %4907 = vmatprep.subr.mxu0 0.0
    %4908 = vmatpush2.msra.mxu0 0.0
    %4909 = vmatprep.subr.mxu0 0.0
    %4910 = vmatpush2.msra.mxu0 0.0
    %4911 = vmatprep.subr.mxu0 0.0
    %4912 = vmatpush2.msra.mxu0 0.0
    %4913 = vmatprep.subr.mxu0 0.0
    %4914 = vmatpush2.msra.mxu0 0.0
    %4915 = vmatprep.subr.mxu0 0.0
    %4916 = vmatpush2.msra.mxu0 0.0
    %4917 = vmatprep.subr.mxu0 0.0
    %4918 = vmatpush2.msra.mxu0 0.0
    %4919 = vmatprep.subr.mxu0 0.0
    %4920 = vmatpush2.msra.mxu0 0.0
    %4921 = vmatprep.subr.mxu0 0.0
    %4922 = vmatpush2.msra.mxu0 0.0
    %4923 = vmatprep.subr.mxu0 0.0
    %4924 = vmatpush2.msra.mxu0 0.0
    %4925 = vmatprep.subr.mxu0 0.0
    %4926 = vmatpush2.msra.mxu0 0.0
    %4927 = vmatprep.subr.mxu0 0.0
    %4928 = vmatpush2.msra.mxu0 0.0
    %4929 = vmatprep.subr.mxu0 0.0
    %4930 = vmatpush2.msra.mxu0 0.0
    %4931 = vmatprep.subr.mxu0 0.0
    %4932 = vmatpush2.msra.mxu0 0.0
    %4933 = vmatprep.subr.mxu0 0.0
    %4934 = vmatpush2.msra.mxu0 0.0
    %4935 = vmatprep.mubr.f32.mxu0 0.0
    %v4936 = vand.u32 %v4468, 4294901760
    %4937 = vmatmul.mubr.f32.gmra.mxu0 %v4936
    %v4938 = vpop.f32.mrf.mxu0
    %v4939 = vadd.f32 %v4865, %v4938
    %v4940 = vpop.f32.mrf.mxu0
    %4941 = vdwg.mxu0
    %v4943 = vrot.slane %v4448, 2
    %v4945 = vrot.slane %v4448, 4
    %v4947 = vrot.slane %v4448, 6
    %v4950 = vrot.slane %v4454, 2
    %v4952 = vrot.slane %v4454, 4
    %v4954 = vrot.slane %v4454, 6
    %v4956 = vld [vmem:[#allocation8] sm:$0xff]
    %v4957 = vld [vmem:[#allocation8 + $0x8] sm:$0xff]
    %v4958 = vld [vmem:[#allocation8 + $0x10] sm:$0xff]
    %v4959 = vld [vmem:[#allocation8 + $0x18] sm:$0xff]
    %v4960 = vld [vmem:[#allocation8 + $0x20] sm:$0xff]
    %v4961 = vld [vmem:[#allocation8 + $0x28] sm:$0xff]
    %v4962 = vld [vmem:[#allocation8 + $0x30] sm:$0xff]
    %v4963 = vld [vmem:[#allocation8 + $0x38] sm:$0xff]
    %v4964 = vld [vmem:[#allocation8 + $0x40] sm:$0xff]
    %v4965 = vld [vmem:[#allocation8 + $0x48] sm:$0xff]
    %v4966 = vld [vmem:[#allocation8 + $0x50] sm:$0xff]
    %v4967 = vld [vmem:[#allocation8 + $0x58] sm:$0xff]
    %v4968 = vld [vmem:[#allocation8 + $0x60] sm:$0xff]
    %v4969 = vld [vmem:[#allocation8 + $0x68] sm:$0xff]
    %v4970 = vld [vmem:[#allocation8 + $0x70] sm:$0xff]
    %v4971 = vld [vmem:[#allocation8 + $0x78] sm:$0xff]
    %v4972 = vld [vmem:[#allocation8 + $0x80] sm:$0xff]
    %v4973 = vld [vmem:[#allocation8 + $0x88] sm:$0xff]
    %v4974 = vld [vmem:[#allocation8 + $0x90] sm:$0xff]
    %v4975 = vld [vmem:[#allocation8 + $0x98] sm:$0xff]
    %v4976 = vld [vmem:[#allocation8 + $0xa0] sm:$0xff]
    %v4977 = vld [vmem:[#allocation8 + $0xa8] sm:$0xff]
    %v4978 = vld [vmem:[#allocation8 + $0xb0] sm:$0xff]
    %v4979 = vld [vmem:[#allocation8 + $0xb8] sm:$0xff]
    %v4980 = vld [vmem:[#allocation8 + $0xc0] sm:$0xff]
    %v4981 = vld [vmem:[#allocation8 + $0xc8] sm:$0xff]
    %v4982 = vld [vmem:[#allocation8 + $0xd0] sm:$0xff]
    %v4983 = vld [vmem:[#allocation8 + $0xd8] sm:$0xff]
    %v4984 = vld [vmem:[#allocation8 + $0xe0] sm:$0xff]
    %v4985 = vld [vmem:[#allocation8 + $0xe8] sm:$0xff]
    %v4986 = vld [vmem:[#allocation8 + $0xf0] sm:$0xff]
    %v4987 = vld [vmem:[#allocation8 + $0xf8] sm:$0xff]
    %v4988 = vld [vmem:[#allocation8 + $0x100] sm:$0xff]
    %v4989 = vld [vmem:[#allocation8 + $0x108] sm:$0xff]
    %v4990 = vld [vmem:[#allocation8 + $0x110] sm:$0xff]
    %v4991 = vld [vmem:[#allocation8 + $0x118] sm:$0xff]
    %v4992 = vld [vmem:[#allocation8 + $0x120] sm:$0xff]
    %v4993 = vld [vmem:[#allocation8 + $0x128] sm:$0xff]
    %v4994 = vld [vmem:[#allocation8 + $0x130] sm:$0xff]
    %v4995 = vld [vmem:[#allocation8 + $0x138] sm:$0xff]
    %v4996 = vld [vmem:[#allocation8 + $0x140] sm:$0xff]
    %v4997 = vld [vmem:[#allocation8 + $0x148] sm:$0xff]
    %v4998 = vld [vmem:[#allocation8 + $0x150] sm:$0xff]
    %v4999 = vld [vmem:[#allocation8 + $0x158] sm:$0xff]
    %v5000 = vld [vmem:[#allocation8 + $0x160] sm:$0xff]
    %v5001 = vld [vmem:[#allocation8 + $0x168] sm:$0xff]
    %v5002 = vld [vmem:[#allocation8 + $0x170] sm:$0xff]
    %v5003 = vld [vmem:[#allocation8 + $0x178] sm:$0xff]
    %v5004 = vld [vmem:[#allocation8 + $0x180] sm:$0xff]
    %v5005 = vld [vmem:[#allocation8 + $0x188] sm:$0xff]
    %v5006 = vld [vmem:[#allocation8 + $0x190] sm:$0xff]
    %v5007 = vld [vmem:[#allocation8 + $0x198] sm:$0xff]
    %v5008 = vld [vmem:[#allocation8 + $0x1a0] sm:$0xff]
    %v5009 = vld [vmem:[#allocation8 + $0x1a8] sm:$0xff]
    %v5010 = vld [vmem:[#allocation8 + $0x1b0] sm:$0xff]
    %v5011 = vld [vmem:[#allocation8 + $0x1b8] sm:$0xff]
    %v5012 = vld [vmem:[#allocation8 + $0x1c0] sm:$0xff]
    %v5013 = vld [vmem:[#allocation8 + $0x1c8] sm:$0xff]
    %v5014 = vld [vmem:[#allocation8 + $0x1d0] sm:$0xff]
    %v5015 = vld [vmem:[#allocation8 + $0x1d8] sm:$0xff]
    %v5016 = vld [vmem:[#allocation8 + $0x1e0] sm:$0xff]
    %v5017 = vld [vmem:[#allocation8 + $0x1e8] sm:$0xff]
    %v5018 = vld [vmem:[#allocation8 + $0x1f0] sm:$0xff]
    %v5019 = vld [vmem:[#allocation8 + $0x1f8] sm:$0xff]
    %v5020 = vld [vmem:[#allocation8 + $0x200] sm:$0xff]
    %v5021 = vld [vmem:[#allocation8 + $0x208] sm:$0xff]
    %v5022 = vld [vmem:[#allocation8 + $0x210] sm:$0xff]
    %v5023 = vld [vmem:[#allocation8 + $0x218] sm:$0xff]
    %v5024 = vld [vmem:[#allocation8 + $0x220] sm:$0xff]
    %v5025 = vld [vmem:[#allocation8 + $0x228] sm:$0xff]
    %v5026 = vld [vmem:[#allocation8 + $0x230] sm:$0xff]
    %v5027 = vld [vmem:[#allocation8 + $0x238] sm:$0xff]
    %v5028 = vld [vmem:[#allocation8 + $0x240] sm:$0xff]
    %v5029 = vld [vmem:[#allocation8 + $0x248] sm:$0xff]
    %v5030 = vld [vmem:[#allocation8 + $0x250] sm:$0xff]
    %v5031 = vld [vmem:[#allocation8 + $0x258] sm:$0xff]
    %v5032 = vld [vmem:[#allocation8 + $0x260] sm:$0xff]
    %v5033 = vld [vmem:[#allocation8 + $0x268] sm:$0xff]
    %v5034 = vld [vmem:[#allocation8 + $0x270] sm:$0xff]
    %v5035 = vld [vmem:[#allocation8 + $0x278] sm:$0xff]
    %v5036 = vld [vmem:[#allocation8 + $0x280] sm:$0xff]
    %v5037 = vld [vmem:[#allocation8 + $0x288] sm:$0xff]
    %v5038 = vld [vmem:[#allocation8 + $0x290] sm:$0xff]
    %v5039 = vld [vmem:[#allocation8 + $0x298] sm:$0xff]
    %v5040 = vld [vmem:[#allocation8 + $0x2a0] sm:$0xff]
    %v5041 = vld [vmem:[#allocation8 + $0x2a8] sm:$0xff]
    %v5042 = vld [vmem:[#allocation8 + $0x2b0] sm:$0xff]
    %v5043 = vld [vmem:[#allocation8 + $0x2b8] sm:$0xff]
    %v5044 = vld [vmem:[#allocation8 + $0x2c0] sm:$0xff]
    %v5045 = vld [vmem:[#allocation8 + $0x2c8] sm:$0xff]
    %v5046 = vld [vmem:[#allocation8 + $0x2d0] sm:$0xff]
    %v5047 = vld [vmem:[#allocation8 + $0x2d8] sm:$0xff]
    %v5048 = vld [vmem:[#allocation8 + $0x2e0] sm:$0xff]
    %v5049 = vld [vmem:[#allocation8 + $0x2e8] sm:$0xff]
    %v5050 = vld [vmem:[#allocation8 + $0x2f0] sm:$0xff]
    %v5051 = vld [vmem:[#allocation8 + $0x2f8] sm:$0xff]
    %v5052 = vld [vmem:[#allocation8 + $0x300] sm:$0xff]
    %v5053 = vld [vmem:[#allocation8 + $0x308] sm:$0xff]
    %v5054 = vld [vmem:[#allocation8 + $0x310] sm:$0xff]
    %v5055 = vld [vmem:[#allocation8 + $0x318] sm:$0xff]
    %v5056 = vld [vmem:[#allocation8 + $0x320] sm:$0xff]
    %v5057 = vld [vmem:[#allocation8 + $0x328] sm:$0xff]
    %v5058 = vld [vmem:[#allocation8 + $0x330] sm:$0xff]
    %v5059 = vld [vmem:[#allocation8 + $0x338] sm:$0xff]
    %v5060 = vld [vmem:[#allocation8 + $0x340] sm:$0xff]
    %v5061 = vld [vmem:[#allocation8 + $0x348] sm:$0xff]
    %v5062 = vld [vmem:[#allocation8 + $0x350] sm:$0xff]
    %v5063 = vld [vmem:[#allocation8 + $0x358] sm:$0xff]
    %v5064 = vld [vmem:[#allocation8 + $0x360] sm:$0xff]
    %v5065 = vld [vmem:[#allocation8 + $0x368] sm:$0xff]
    %v5066 = vld [vmem:[#allocation8 + $0x370] sm:$0xff]
    %v5067 = vld [vmem:[#allocation8 + $0x378] sm:$0xff]
    %v5068 = vld [vmem:[#allocation8 + $0x380] sm:$0xff]
    %v5069 = vld [vmem:[#allocation8 + $0x388] sm:$0xff]
    %v5070 = vld [vmem:[#allocation8 + $0x390] sm:$0xff]
    %v5071 = vld [vmem:[#allocation8 + $0x398] sm:$0xff]
    %v5072 = vld [vmem:[#allocation8 + $0x3a0] sm:$0xff]
    %v5073 = vld [vmem:[#allocation8 + $0x3a8] sm:$0xff]
    %v5074 = vld [vmem:[#allocation8 + $0x3b0] sm:$0xff]
    %v5075 = vld [vmem:[#allocation8 + $0x3b8] sm:$0xff]
    %v5076 = vld [vmem:[#allocation8 + $0x3c0] sm:$0xff]
    %v5077 = vld [vmem:[#allocation8 + $0x3c8] sm:$0xff]
    %v5078 = vld [vmem:[#allocation8 + $0x3d0] sm:$0xff]
    %v5079 = vld [vmem:[#allocation8 + $0x3d8] sm:$0xff]
    %v5080 = vld [vmem:[#allocation8 + $0x3e0] sm:$0xff]
    %v5081 = vld [vmem:[#allocation8 + $0x3e8] sm:$0xff]
    %v5082 = vld [vmem:[#allocation8 + $0x3f0] sm:$0xff]
    %v5083 = vld [vmem:[#allocation8 + $0x3f8] sm:$0xff]
    %5084 = vmatprep.subr.mxu0 0.0
    %v5085 = vand.u32 %v4971, 4294901760
    %5086 = vmatpush1.msra.mxu0 %v5085
    %5087 = vmatprep.subr.mxu0 0.0
    %v5088 = vand.u32 %v4970, 4294901760
    %5089 = vmatpush1.msra.mxu0 %v5088
    %5090 = vmatprep.subr.mxu0 0.0
    %v5091 = vand.u32 %v4969, 4294901760
    %5092 = vmatpush1.msra.mxu0 %v5091
    %5093 = vmatprep.subr.mxu0 0.0
    %v5094 = vand.u32 %v4968, 4294901760
    %5095 = vmatpush1.msra.mxu0 %v5094
    %5096 = vmatprep.subr.mxu0 0.0
    %v5097 = vand.u32 %v4967, 4294901760
    %5098 = vmatpush1.msra.mxu0 %v5097
    %5099 = vmatprep.subr.mxu0 0.0
    %v5100 = vand.u32 %v4966, 4294901760
    %5101 = vmatpush1.msra.mxu0 %v5100
    %5102 = vmatprep.subr.mxu0 0.0
    %v5103 = vand.u32 %v4965, 4294901760
    %5104 = vmatpush1.msra.mxu0 %v5103
    %5105 = vmatprep.subr.mxu0 0.0
    %v5106 = vand.u32 %v4964, 4294901760
    %5107 = vmatpush1.msra.mxu0 %v5106
    %5108 = vmatprep.subr.mxu0 0.0
    %v5109 = vand.u32 %v4963, 4294901760
    %5110 = vmatpush1.msra.mxu0 %v5109
    %5111 = vmatprep.subr.mxu0 0.0
    %v5112 = vand.u32 %v4962, 4294901760
    %5113 = vmatpush1.msra.mxu0 %v5112
    %5114 = vmatprep.subr.mxu0 0.0
    %v5115 = vand.u32 %v4961, 4294901760
    %5116 = vmatpush1.msra.mxu0 %v5115
    %5117 = vmatprep.subr.mxu0 0.0
    %v5118 = vand.u32 %v4960, 4294901760
    %5119 = vmatpush1.msra.mxu0 %v5118
    %5120 = vmatprep.subr.mxu0 0.0
    %v5121 = vand.u32 %v4959, 4294901760
    %5122 = vmatpush1.msra.mxu0 %v5121
    %5123 = vmatprep.subr.mxu0 0.0
    %v5124 = vand.u32 %v4958, 4294901760
    %5125 = vmatpush1.msra.mxu0 %v5124
    %5126 = vmatprep.subr.mxu0 0.0
    %v5127 = vand.u32 %v4957, 4294901760
    %5128 = vmatpush1.msra.mxu0 %v5127
    %5129 = vmatprep.subr.mxu0 0.0
    %v5130 = vand.u32 %v4956, 4294901760
    %5131 = vmatpush1.msra.mxu0 %v5130
    %5132 = vmatprep.subr.mxu0 0.0
    %v5133 = vand.u32 %v4987, 4294901760
    %5134 = vmatpush2.msra.mxu0 %v5133
    %5135 = vmatprep.subr.mxu0 0.0
    %v5136 = vand.u32 %v4986, 4294901760
    %5137 = vmatpush2.msra.mxu0 %v5136
    %5138 = vmatprep.subr.mxu0 0.0
    %v5139 = vand.u32 %v4985, 4294901760
    %5140 = vmatpush2.msra.mxu0 %v5139
    %5141 = vmatprep.subr.mxu0 0.0
    %v5142 = vand.u32 %v4984, 4294901760
    %5143 = vmatpush2.msra.mxu0 %v5142
    %5144 = vmatprep.subr.mxu0 0.0
    %v5145 = vand.u32 %v4983, 4294901760
    %5146 = vmatpush2.msra.mxu0 %v5145
    %5147 = vmatprep.subr.mxu0 0.0
    %v5148 = vand.u32 %v4982, 4294901760
    %5149 = vmatpush2.msra.mxu0 %v5148
    %5150 = vmatprep.subr.mxu0 0.0
    %v5151 = vand.u32 %v4981, 4294901760
    %5152 = vmatpush2.msra.mxu0 %v5151
    %5153 = vmatprep.subr.mxu0 0.0
    %v5154 = vand.u32 %v4980, 4294901760
    %5155 = vmatpush2.msra.mxu0 %v5154
    %5156 = vmatprep.subr.mxu0 0.0
    %v5157 = vand.u32 %v4979, 4294901760
    %5158 = vmatpush2.msra.mxu0 %v5157
    %5159 = vmatprep.subr.mxu0 0.0
    %v5160 = vand.u32 %v4978, 4294901760
    %5161 = vmatpush2.msra.mxu0 %v5160
    %5162 = vmatprep.subr.mxu0 0.0
    %v5163 = vand.u32 %v4977, 4294901760
    %5164 = vmatpush2.msra.mxu0 %v5163
    %5165 = vmatprep.subr.mxu0 0.0
    %v5166 = vand.u32 %v4976, 4294901760
    %5167 = vmatpush2.msra.mxu0 %v5166
    %5168 = vmatprep.subr.mxu0 0.0
    %v5169 = vand.u32 %v4975, 4294901760
    %5170 = vmatpush2.msra.mxu0 %v5169
    %5171 = vmatprep.subr.mxu0 0.0
    %v5172 = vand.u32 %v4974, 4294901760
    %5173 = vmatpush2.msra.mxu0 %v5172
    %5174 = vmatprep.subr.mxu0 0.0
    %v5175 = vand.u32 %v4973, 4294901760
    %5176 = vmatpush2.msra.mxu0 %v5175
    %5177 = vmatprep.subr.mxu0 0.0
    %v5178 = vand.u32 %v4972, 4294901760
    %5179 = vmatpush2.msra.mxu0 %v5178
    %v5180 = vand.u32 %v4943, 4294901760
    %v5181 = vsub.f32 %v4943, %v5180
    %v5182 = vand.u32 %v5181, 4294901760
    %v5183 = vsub.f32 %v5181, %v5182
    %v5184 = vand.u32 %v5183, 4294901760
    %5185 = vmatprep.mubr.f32.mxu0 %v5184
    %v5186 = vand.u32 %v4448, 4294901760
    %v5187 = vsub.f32 %v4448, %v5186
    %v5188 = vand.u32 %v5187, 4294901760
    %v5189 = vsub.f32 %v5187, %v5188
    %v5190 = vand.u32 %v5189, 4294901760
    %5191 = vmatmul.mubr.f32.gmra.mxu0 %v5190
    %v5192 = vpop.f32.mrf.mxu0
    %v5193 = vadd.f32 0.0, %v5192
    %v5194 = vpop.f32.mrf.mxu0
    %5195 = vdwg.mxu0
    %5196 = vmatprep.subr.mxu0 0.0
    %v5197 = vand.u32 %v4971, 4294901760
    %v5198 = vsub.f32 %v4971, %v5197
    %v5199 = vand.u32 %v5198, 4294901760
    %v5200 = vsub.f32 %v5198, %v5199
    %v5201 = vand.u32 %v5200, 4294901760
    %5202 = vmatpush1.msra.mxu0 %v5201
    %5203 = vmatprep.subr.mxu0 0.0
    %v5204 = vand.u32 %v4970, 4294901760
    %v5205 = vsub.f32 %v4970, %v5204
    %v5206 = vand.u32 %v5205, 4294901760
    %v5207 = vsub.f32 %v5205, %v5206
    %v5208 = vand.u32 %v5207, 4294901760
    %5209 = vmatpush1.msra.mxu0 %v5208
    %5210 = vmatprep.subr.mxu0 0.0
    %v5211 = vand.u32 %v4969, 4294901760
    %v5212 = vsub.f32 %v4969, %v5211
    %v5213 = vand.u32 %v5212, 4294901760
    %v5214 = vsub.f32 %v5212, %v5213
    %v5215 = vand.u32 %v5214, 4294901760
    %5216 = vmatpush1.msra.mxu0 %v5215
    %5217 = vmatprep.subr.mxu0 0.0
    %v5218 = vand.u32 %v4968, 4294901760
    %v5219 = vsub.f32 %v4968, %v5218
    %v5220 = vand.u32 %v5219, 4294901760
    %v5221 = vsub.f32 %v5219, %v5220
    %v5222 = vand.u32 %v5221, 4294901760
    %5223 = vmatpush1.msra.mxu0 %v5222
    %5224 = vmatprep.subr.mxu0 0.0
    %v5225 = vand.u32 %v4967, 4294901760
    %v5226 = vsub.f32 %v4967, %v5225
    %v5227 = vand.u32 %v5226, 4294901760
    %v5228 = vsub.f32 %v5226, %v5227
    %v5229 = vand.u32 %v5228, 4294901760
    %5230 = vmatpush1.msra.mxu0 %v5229
    %5231 = vmatprep.subr.mxu0 0.0
    %v5232 = vand.u32 %v4966, 4294901760
    %v5233 = vsub.f32 %v4966, %v5232
    %v5234 = vand.u32 %v5233, 4294901760
    %v5235 = vsub.f32 %v5233, %v5234
    %v5236 = vand.u32 %v5235, 4294901760
    %5237 = vmatpush1.msra.mxu0 %v5236
    %5238 = vmatprep.subr.mxu0 0.0
    %v5239 = vand.u32 %v4965, 4294901760
    %v5240 = vsub.f32 %v4965, %v5239
    %v5241 = vand.u32 %v5240, 4294901760
    %v5242 = vsub.f32 %v5240, %v5241
    %v5243 = vand.u32 %v5242, 4294901760
    %5244 = vmatpush1.msra.mxu0 %v5243
    %5245 = vmatprep.subr.mxu0 0.0
    %v5246 = vand.u32 %v4964, 4294901760
    %v5247 = vsub.f32 %v4964, %v5246
    %v5248 = vand.u32 %v5247, 4294901760
    %v5249 = vsub.f32 %v5247, %v5248
    %v5250 = vand.u32 %v5249, 4294901760
    %5251 = vmatpush1.msra.mxu0 %v5250
    %5252 = vmatprep.subr.mxu0 0.0
    %v5253 = vand.u32 %v4963, 4294901760
    %v5254 = vsub.f32 %v4963, %v5253
    %v5255 = vand.u32 %v5254, 4294901760
    %v5256 = vsub.f32 %v5254, %v5255
    %v5257 = vand.u32 %v5256, 4294901760
    %5258 = vmatpush1.msra.mxu0 %v5257
    %5259 = vmatprep.subr.mxu0 0.0
    %v5260 = vand.u32 %v4962, 4294901760
    %v5261 = vsub.f32 %v4962, %v5260
    %v5262 = vand.u32 %v5261, 4294901760
    %v5263 = vsub.f32 %v5261, %v5262
    %v5264 = vand.u32 %v5263, 4294901760
    %5265 = vmatpush1.msra.mxu0 %v5264
    %5266 = vmatprep.subr.mxu0 0.0
    %v5267 = vand.u32 %v4961, 4294901760
    %v5268 = vsub.f32 %v4961, %v5267
    %v5269 = vand.u32 %v5268, 4294901760
    %v5270 = vsub.f32 %v5268, %v5269
    %v5271 = vand.u32 %v5270, 4294901760
    %5272 = vmatpush1.msra.mxu0 %v5271
    %5273 = vmatprep.subr.mxu0 0.0
    %v5274 = vand.u32 %v4960, 4294901760
    %v5275 = vsub.f32 %v4960, %v5274
    %v5276 = vand.u32 %v5275, 4294901760
    %v5277 = vsub.f32 %v5275, %v5276
    %v5278 = vand.u32 %v5277, 4294901760
    %5279 = vmatpush1.msra.mxu0 %v5278
    %5280 = vmatprep.subr.mxu0 0.0
    %v5281 = vand.u32 %v4959, 4294901760
    %v5282 = vsub.f32 %v4959, %v5281
    %v5283 = vand.u32 %v5282, 4294901760
    %v5284 = vsub.f32 %v5282, %v5283
    %v5285 = vand.u32 %v5284, 4294901760
    %5286 = vmatpush1.msra.mxu0 %v5285
    %5287 = vmatprep.subr.mxu0 0.0
    %v5288 = vand.u32 %v4958, 4294901760
    %v5289 = vsub.f32 %v4958, %v5288
    %v5290 = vand.u32 %v5289, 4294901760
    %v5291 = vsub.f32 %v5289, %v5290
    %v5292 = vand.u32 %v5291, 4294901760
    %5293 = vmatpush1.msra.mxu0 %v5292
    %5294 = vmatprep.subr.mxu0 0.0
    %v5295 = vand.u32 %v4957, 4294901760
    %v5296 = vsub.f32 %v4957, %v5295
    %v5297 = vand.u32 %v5296, 4294901760
    %v5298 = vsub.f32 %v5296, %v5297
    %v5299 = vand.u32 %v5298, 4294901760
    %5300 = vmatpush1.msra.mxu0 %v5299
    %5301 = vmatprep.subr.mxu0 0.0
    %v5302 = vand.u32 %v4956, 4294901760
    %v5303 = vsub.f32 %v4956, %v5302
    %v5304 = vand.u32 %v5303, 4294901760
    %v5305 = vsub.f32 %v5303, %v5304
    %v5306 = vand.u32 %v5305, 4294901760
    %5307 = vmatpush1.msra.mxu0 %v5306
    %5308 = vmatprep.subr.mxu0 0.0
    %v5309 = vand.u32 %v4987, 4294901760
    %v5310 = vsub.f32 %v4987, %v5309
    %v5311 = vand.u32 %v5310, 4294901760
    %v5312 = vsub.f32 %v5310, %v5311
    %v5313 = vand.u32 %v5312, 4294901760
    %5314 = vmatpush2.msra.mxu0 %v5313
    %5315 = vmatprep.subr.mxu0 0.0
    %v5316 = vand.u32 %v4986, 4294901760
    %v5317 = vsub.f32 %v4986, %v5316
    %v5318 = vand.u32 %v5317, 4294901760
    %v5319 = vsub.f32 %v5317, %v5318
    %v5320 = vand.u32 %v5319, 4294901760
    %5321 = vmatpush2.msra.mxu0 %v5320
    %5322 = vmatprep.subr.mxu0 0.0
    %v5323 = vand.u32 %v4985, 4294901760
    %v5324 = vsub.f32 %v4985, %v5323
    %v5325 = vand.u32 %v5324, 4294901760
    %v5326 = vsub.f32 %v5324, %v5325
    %v5327 = vand.u32 %v5326, 4294901760
    %5328 = vmatpush2.msra.mxu0 %v5327
    %5329 = vmatprep.subr.mxu0 0.0
    %v5330 = vand.u32 %v4984, 4294901760
    %v5331 = vsub.f32 %v4984, %v5330
    %v5332 = vand.u32 %v5331, 4294901760
    %v5333 = vsub.f32 %v5331, %v5332
    %v5334 = vand.u32 %v5333, 4294901760
    %5335 = vmatpush2.msra.mxu0 %v5334
    %5336 = vmatprep.subr.mxu0 0.0
    %v5337 = vand.u32 %v4983, 4294901760
    %v5338 = vsub.f32 %v4983, %v5337
    %v5339 = vand.u32 %v5338, 4294901760
    %v5340 = vsub.f32 %v5338, %v5339
    %v5341 = vand.u32 %v5340, 4294901760
    %5342 = vmatpush2.msra.mxu0 %v5341
    %5343 = vmatprep.subr.mxu0 0.0
    %v5344 = vand.u32 %v4982, 4294901760
    %v5345 = vsub.f32 %v4982, %v5344
    %v5346 = vand.u32 %v5345, 4294901760
    %v5347 = vsub.f32 %v5345, %v5346
    %v5348 = vand.u32 %v5347, 4294901760
    %5349 = vmatpush2.msra.mxu0 %v5348
    %5350 = vmatprep.subr.mxu0 0.0
    %v5351 = vand.u32 %v4981, 4294901760
    %v5352 = vsub.f32 %v4981, %v5351
    %v5353 = vand.u32 %v5352, 4294901760
    %v5354 = vsub.f32 %v5352, %v5353
    %v5355 = vand.u32 %v5354, 4294901760
    %5356 = vmatpush2.msra.mxu0 %v5355
    %5357 = vmatprep.subr.mxu0 0.0
    %v5358 = vand.u32 %v4980, 4294901760
    %v5359 = vsub.f32 %v4980, %v5358
    %v5360 = vand.u32 %v5359, 4294901760
    %v5361 = vsub.f32 %v5359, %v5360
    %v5362 = vand.u32 %v5361, 4294901760
    %5363 = vmatpush2.msra.mxu0 %v5362
    %5364 = vmatprep.subr.mxu0 0.0
    %v5365 = vand.u32 %v4979, 4294901760
    %v5366 = vsub.f32 %v4979, %v5365
    %v5367 = vand.u32 %v5366, 4294901760
    %v5368 = vsub.f32 %v5366, %v5367
    %v5369 = vand.u32 %v5368, 4294901760
    %5370 = vmatpush2.msra.mxu0 %v5369
    %5371 = vmatprep.subr.mxu0 0.0
    %v5372 = vand.u32 %v4978, 4294901760
    %v5373 = vsub.f32 %v4978, %v5372
    %v5374 = vand.u32 %v5373, 4294901760
    %v5375 = vsub.f32 %v5373, %v5374
    %v5376 = vand.u32 %v5375, 4294901760
    %5377 = vmatpush2.msra.mxu0 %v5376
    %5378 = vmatprep.subr.mxu0 0.0
    %v5379 = vand.u32 %v4977, 4294901760
    %v5380 = vsub.f32 %v4977, %v5379
    %v5381 = vand.u32 %v5380, 4294901760
    %v5382 = vsub.f32 %v5380, %v5381
    %v5383 = vand.u32 %v5382, 4294901760
    %5384 = vmatpush2.msra.mxu0 %v5383
    %5385 = vmatprep.subr.mxu0 0.0
    %v5386 = vand.u32 %v4976, 4294901760
    %v5387 = vsub.f32 %v4976, %v5386
    %v5388 = vand.u32 %v5387, 4294901760
    %v5389 = vsub.f32 %v5387, %v5388
    %v5390 = vand.u32 %v5389, 4294901760
    %5391 = vmatpush2.msra.mxu0 %v5390
    %5392 = vmatprep.subr.mxu0 0.0
    %v5393 = vand.u32 %v4975, 4294901760
    %v5394 = vsub.f32 %v4975, %v5393
    %v5395 = vand.u32 %v5394, 4294901760
    %v5396 = vsub.f32 %v5394, %v5395
    %v5397 = vand.u32 %v5396, 4294901760
    %5398 = vmatpush2.msra.mxu0 %v5397
    %5399 = vmatprep.subr.mxu0 0.0
    %v5400 = vand.u32 %v4974, 4294901760
    %v5401 = vsub.f32 %v4974, %v5400
    %v5402 = vand.u32 %v5401, 4294901760
    %v5403 = vsub.f32 %v5401, %v5402
    %v5404 = vand.u32 %v5403, 4294901760
    %5405 = vmatpush2.msra.mxu0 %v5404
    %5406 = vmatprep.subr.mxu0 0.0
    %v5407 = vand.u32 %v4973, 4294901760
    %v5408 = vsub.f32 %v4973, %v5407
    %v5409 = vand.u32 %v5408, 4294901760
    %v5410 = vsub.f32 %v5408, %v5409
    %v5411 = vand.u32 %v5410, 4294901760
    %5412 = vmatpush2.msra.mxu0 %v5411
    %5413 = vmatprep.subr.mxu0 0.0
    %v5414 = vand.u32 %v4972, 4294901760
    %v5415 = vsub.f32 %v4972, %v5414
    %v5416 = vand.u32 %v5415, 4294901760
    %v5417 = vsub.f32 %v5415, %v5416
    %v5418 = vand.u32 %v5417, 4294901760
    %5419 = vmatpush2.msra.mxu0 %v5418
    %v5420 = vand.u32 %v4943, 4294901760
    %5421 = vmatprep.mubr.f32.mxu0 %v5420
    %v5422 = vand.u32 %v4448, 4294901760
    %5423 = vmatmul.mubr.f32.gmra.mxu0 %v5422
    %v5424 = vpop.f32.mrf.mxu0
    %v5425 = vadd.f32 %v5193, %v5424
    %v5426 = vpop.f32.mrf.mxu0
    %5427 = vdwg.mxu0
    %5428 = vmatprep.subr.mxu0 0.0
    %v5429 = vand.u32 %v4971, 4294901760
    %v5430 = vsub.f32 %v4971, %v5429
    %5431 = vmatpush1.msra.mxu0 %v5430
    %5432 = vmatprep.subr.mxu0 0.0
    %v5433 = vand.u32 %v4970, 4294901760
    %v5434 = vsub.f32 %v4970, %v5433
    %5435 = vmatpush1.msra.mxu0 %v5434
    %5436 = vmatprep.subr.mxu0 0.0
    %v5437 = vand.u32 %v4969, 4294901760
    %v5438 = vsub.f32 %v4969, %v5437
    %5439 = vmatpush1.msra.mxu0 %v5438
    %5440 = vmatprep.subr.mxu0 0.0
    %v5441 = vand.u32 %v4968, 4294901760
    %v5442 = vsub.f32 %v4968, %v5441
    %5443 = vmatpush1.msra.mxu0 %v5442
    %5444 = vmatprep.subr.mxu0 0.0
    %v5445 = vand.u32 %v4967, 4294901760
    %v5446 = vsub.f32 %v4967, %v5445
    %5447 = vmatpush1.msra.mxu0 %v5446
    %5448 = vmatprep.subr.mxu0 0.0
    %v5449 = vand.u32 %v4966, 4294901760
    %v5450 = vsub.f32 %v4966, %v5449
    %5451 = vmatpush1.msra.mxu0 %v5450
    %5452 = vmatprep.subr.mxu0 0.0
    %v5453 = vand.u32 %v4965, 4294901760
    %v5454 = vsub.f32 %v4965, %v5453
    %5455 = vmatpush1.msra.mxu0 %v5454
    %5456 = vmatprep.subr.mxu0 0.0
    %v5457 = vand.u32 %v4964, 4294901760
    %v5458 = vsub.f32 %v4964, %v5457
    %5459 = vmatpush1.msra.mxu0 %v5458
    %5460 = vmatprep.subr.mxu0 0.0
    %v5461 = vand.u32 %v4963, 4294901760
    %v5462 = vsub.f32 %v4963, %v5461
    %5463 = vmatpush1.msra.mxu0 %v5462
    %5464 = vmatprep.subr.mxu0 0.0
    %v5465 = vand.u32 %v4962, 4294901760
    %v5466 = vsub.f32 %v4962, %v5465
    %5467 = vmatpush1.msra.mxu0 %v5466
    %5468 = vmatprep.subr.mxu0 0.0
    %v5469 = vand.u32 %v4961, 4294901760
    %v5470 = vsub.f32 %v4961, %v5469
    %5471 = vmatpush1.msra.mxu0 %v5470
    %5472 = vmatprep.subr.mxu0 0.0
    %v5473 = vand.u32 %v4960, 4294901760
    %v5474 = vsub.f32 %v4960, %v5473
    %5475 = vmatpush1.msra.mxu0 %v5474
    %5476 = vmatprep.subr.mxu0 0.0
    %v5477 = vand.u32 %v4959, 4294901760
    %v5478 = vsub.f32 %v4959, %v5477
    %5479 = vmatpush1.msra.mxu0 %v5478
    %5480 = vmatprep.subr.mxu0 0.0
    %v5481 = vand.u32 %v4958, 4294901760
    %v5482 = vsub.f32 %v4958, %v5481
    %5483 = vmatpush1.msra.mxu0 %v5482
    %5484 = vmatprep.subr.mxu0 0.0
    %v5485 = vand.u32 %v4957, 4294901760
    %v5486 = vsub.f32 %v4957, %v5485
    %5487 = vmatpush1.msra.mxu0 %v5486
    %5488 = vmatprep.subr.mxu0 0.0
    %v5489 = vand.u32 %v4956, 4294901760
    %v5490 = vsub.f32 %v4956, %v5489
    %5491 = vmatpush1.msra.mxu0 %v5490
    %5492 = vmatprep.subr.mxu0 0.0
    %v5493 = vand.u32 %v4987, 4294901760
    %v5494 = vsub.f32 %v4987, %v5493
    %5495 = vmatpush2.msra.mxu0 %v5494
    %5496 = vmatprep.subr.mxu0 0.0
    %v5497 = vand.u32 %v4986, 4294901760
    %v5498 = vsub.f32 %v4986, %v5497
    %5499 = vmatpush2.msra.mxu0 %v5498
    %5500 = vmatprep.subr.mxu0 0.0
    %v5501 = vand.u32 %v4985, 4294901760
    %v5502 = vsub.f32 %v4985, %v5501
    %5503 = vmatpush2.msra.mxu0 %v5502
    %5504 = vmatprep.subr.mxu0 0.0
    %v5505 = vand.u32 %v4984, 4294901760
    %v5506 = vsub.f32 %v4984, %v5505
    %5507 = vmatpush2.msra.mxu0 %v5506
    %5508 = vmatprep.subr.mxu0 0.0
    %v5509 = vand.u32 %v4983, 4294901760
    %v5510 = vsub.f32 %v4983, %v5509
    %5511 = vmatpush2.msra.mxu0 %v5510
    %5512 = vmatprep.subr.mxu0 0.0
    %v5513 = vand.u32 %v4982, 4294901760
    %v5514 = vsub.f32 %v4982, %v5513
    %5515 = vmatpush2.msra.mxu0 %v5514
    %5516 = vmatprep.subr.mxu0 0.0
    %v5517 = vand.u32 %v4981, 4294901760
    %v5518 = vsub.f32 %v4981, %v5517
    %5519 = vmatpush2.msra.mxu0 %v5518
    %5520 = vmatprep.subr.mxu0 0.0
    %v5521 = vand.u32 %v4980, 4294901760
    %v5522 = vsub.f32 %v4980, %v5521
    %5523 = vmatpush2.msra.mxu0 %v5522
    %5524 = vmatprep.subr.mxu0 0.0
    %v5525 = vand.u32 %v4979, 4294901760
    %v5526 = vsub.f32 %v4979, %v5525
    %5527 = vmatpush2.msra.mxu0 %v5526
    %5528 = vmatprep.subr.mxu0 0.0
    %v5529 = vand.u32 %v4978, 4294901760
    %v5530 = vsub.f32 %v4978, %v5529
    %5531 = vmatpush2.msra.mxu0 %v5530
    %5532 = vmatprep.subr.mxu0 0.0
    %v5533 = vand.u32 %v4977, 4294901760
    %v5534 = vsub.f32 %v4977, %v5533
    %5535 = vmatpush2.msra.mxu0 %v5534
    %5536 = vmatprep.subr.mxu0 0.0
    %v5537 = vand.u32 %v4976, 4294901760
    %v5538 = vsub.f32 %v4976, %v5537
    %5539 = vmatpush2.msra.mxu0 %v5538
    %5540 = vmatprep.subr.mxu0 0.0
    %v5541 = vand.u32 %v4975, 4294901760
    %v5542 = vsub.f32 %v4975, %v5541
    %5543 = vmatpush2.msra.mxu0 %v5542
    %5544 = vmatprep.subr.mxu0 0.0
    %v5545 = vand.u32 %v4974, 4294901760
    %v5546 = vsub.f32 %v4974, %v5545
    %5547 = vmatpush2.msra.mxu0 %v5546
    %5548 = vmatprep.subr.mxu0 0.0
    %v5549 = vand.u32 %v4973, 4294901760
    %v5550 = vsub.f32 %v4973, %v5549
    %5551 = vmatpush2.msra.mxu0 %v5550
    %5552 = vmatprep.subr.mxu0 0.0
    %v5553 = vand.u32 %v4972, 4294901760
    %v5554 = vsub.f32 %v4972, %v5553
    %5555 = vmatpush2.msra.mxu0 %v5554
    %v5556 = vand.u32 %v4943, 4294901760
    %v5557 = vsub.f32 %v4943, %v5556
    %5558 = vmatprep.mubr.f32.mxu0 %v5557
    %v5559 = vand.u32 %v4448, 4294901760
    %v5560 = vsub.f32 %v4448, %v5559
    %5561 = vmatmul.mubr.f32.gmra.mxu0 %v5560
    %v5562 = vpop.f32.mrf.mxu0
    %v5563 = vadd.f32 %v5425, %v5562
    %v5564 = vpop.f32.mrf.mxu0
    %5565 = vdwg.mxu0
    %5566 = vmatprep.subr.mxu0 0.0
    %v5567 = vand.u32 %v4971, 4294901760
    %5568 = vmatpush1.msra.mxu0 %v5567
    %5569 = vmatprep.subr.mxu0 0.0
    %v5570 = vand.u32 %v4970, 4294901760
    %5571 = vmatpush1.msra.mxu0 %v5570
    %5572 = vmatprep.subr.mxu0 0.0
    %v5573 = vand.u32 %v4969, 4294901760
    %5574 = vmatpush1.msra.mxu0 %v5573
    %5575 = vmatprep.subr.mxu0 0.0
    %v5576 = vand.u32 %v4968, 4294901760
    %5577 = vmatpush1.msra.mxu0 %v5576
    %5578 = vmatprep.subr.mxu0 0.0
    %v5579 = vand.u32 %v4967, 4294901760
    %5580 = vmatpush1.msra.mxu0 %v5579
    %5581 = vmatprep.subr.mxu0 0.0
    %v5582 = vand.u32 %v4966, 4294901760
    %5583 = vmatpush1.msra.mxu0 %v5582
    %5584 = vmatprep.subr.mxu0 0.0
    %v5585 = vand.u32 %v4965, 4294901760
    %5586 = vmatpush1.msra.mxu0 %v5585
    %5587 = vmatprep.subr.mxu0 0.0
    %v5588 = vand.u32 %v4964, 4294901760
    %5589 = vmatpush1.msra.mxu0 %v5588
    %5590 = vmatprep.subr.mxu0 0.0
    %v5591 = vand.u32 %v4963, 4294901760
    %5592 = vmatpush1.msra.mxu0 %v5591
    %5593 = vmatprep.subr.mxu0 0.0
    %v5594 = vand.u32 %v4962, 4294901760
    %5595 = vmatpush1.msra.mxu0 %v5594
    %5596 = vmatprep.subr.mxu0 0.0
    %v5597 = vand.u32 %v4961, 4294901760
    %5598 = vmatpush1.msra.mxu0 %v5597
    %5599 = vmatprep.subr.mxu0 0.0
    %v5600 = vand.u32 %v4960, 4294901760
    %5601 = vmatpush1.msra.mxu0 %v5600
    %5602 = vmatprep.subr.mxu0 0.0
    %v5603 = vand.u32 %v4959, 4294901760
    %5604 = vmatpush1.msra.mxu0 %v5603
    %5605 = vmatprep.subr.mxu0 0.0
    %v5606 = vand.u32 %v4958, 4294901760
    %5607 = vmatpush1.msra.mxu0 %v5606
    %5608 = vmatprep.subr.mxu0 0.0
    %v5609 = vand.u32 %v4957, 4294901760
    %5610 = vmatpush1.msra.mxu0 %v5609
    %5611 = vmatprep.subr.mxu0 0.0
    %v5612 = vand.u32 %v4956, 4294901760
    %5613 = vmatpush1.msra.mxu0 %v5612
    %5614 = vmatprep.subr.mxu0 0.0
    %v5615 = vand.u32 %v4987, 4294901760
    %5616 = vmatpush2.msra.mxu0 %v5615
    %5617 = vmatprep.subr.mxu0 0.0
    %v5618 = vand.u32 %v4986, 4294901760
    %5619 = vmatpush2.msra.mxu0 %v5618
    %5620 = vmatprep.subr.mxu0 0.0
    %v5621 = vand.u32 %v4985, 4294901760
    %5622 = vmatpush2.msra.mxu0 %v5621
    %5623 = vmatprep.subr.mxu0 0.0
    %v5624 = vand.u32 %v4984, 4294901760
    %5625 = vmatpush2.msra.mxu0 %v5624
    %5626 = vmatprep.subr.mxu0 0.0
    %v5627 = vand.u32 %v4983, 4294901760
    %5628 = vmatpush2.msra.mxu0 %v5627
    %5629 = vmatprep.subr.mxu0 0.0
    %v5630 = vand.u32 %v4982, 4294901760
    %5631 = vmatpush2.msra.mxu0 %v5630
    %5632 = vmatprep.subr.mxu0 0.0
    %v5633 = vand.u32 %v4981, 4294901760
    %5634 = vmatpush2.msra.mxu0 %v5633
    %5635 = vmatprep.subr.mxu0 0.0
    %v5636 = vand.u32 %v4980, 4294901760
    %5637 = vmatpush2.msra.mxu0 %v5636
    %5638 = vmatprep.subr.mxu0 0.0
    %v5639 = vand.u32 %v4979, 4294901760
    %5640 = vmatpush2.msra.mxu0 %v5639
    %5641 = vmatprep.subr.mxu0 0.0
    %v5642 = vand.u32 %v4978, 4294901760
    %5643 = vmatpush2.msra.mxu0 %v5642
    %5644 = vmatprep.subr.mxu0 0.0
    %v5645 = vand.u32 %v4977, 4294901760
    %5646 = vmatpush2.msra.mxu0 %v5645
    %5647 = vmatprep.subr.mxu0 0.0
    %v5648 = vand.u32 %v4976, 4294901760
    %5649 = vmatpush2.msra.mxu0 %v5648
    %5650 = vmatprep.subr.mxu0 0.0
    %v5651 = vand.u32 %v4975, 4294901760
    %5652 = vmatpush2.msra.mxu0 %v5651
    %5653 = vmatprep.subr.mxu0 0.0
    %v5654 = vand.u32 %v4974, 4294901760
    %5655 = vmatpush2.msra.mxu0 %v5654
    %5656 = vmatprep.subr.mxu0 0.0
    %v5657 = vand.u32 %v4973, 4294901760
    %5658 = vmatpush2.msra.mxu0 %v5657
    %5659 = vmatprep.subr.mxu0 0.0
    %v5660 = vand.u32 %v4972, 4294901760
    %5661 = vmatpush2.msra.mxu0 %v5660
    %v5662 = vand.u32 %v4943, 4294901760
    %v5663 = vsub.f32 %v4943, %v5662
    %v5664 = vand.u32 %v5663, 4294901760
    %5665 = vmatprep.mubr.f32.mxu0 %v5664
    %v5666 = vand.u32 %v4448, 4294901760
    %v5667 = vsub.f32 %v4448, %v5666
    %v5668 = vand.u32 %v5667, 4294901760
    %5669 = vmatmul.mubr.f32.gmra.mxu0 %v5668
    %v5670 = vpop.f32.mrf.mxu0
    %v5671 = vadd.f32 %v5563, %v5670
    %v5672 = vpop.f32.mrf.mxu0
    %5673 = vdwg.mxu0
    %5674 = vmatprep.subr.mxu0 0.0
    %v5675 = vand.u32 %v4971, 4294901760
    %v5676 = vsub.f32 %v4971, %v5675
    %v5677 = vand.u32 %v5676, 4294901760
    %5678 = vmatpush1.msra.mxu0 %v5677
    %5679 = vmatprep.subr.mxu0 0.0
    %v5680 = vand.u32 %v4970, 4294901760
    %v5681 = vsub.f32 %v4970, %v5680
    %v5682 = vand.u32 %v5681, 4294901760
    %5683 = vmatpush1.msra.mxu0 %v5682
    %5684 = vmatprep.subr.mxu0 0.0
    %v5685 = vand.u32 %v4969, 4294901760
    %v5686 = vsub.f32 %v4969, %v5685
    %v5687 = vand.u32 %v5686, 4294901760
    %5688 = vmatpush1.msra.mxu0 %v5687
    %5689 = vmatprep.subr.mxu0 0.0
    %v5690 = vand.u32 %v4968, 4294901760
    %v5691 = vsub.f32 %v4968, %v5690
    %v5692 = vand.u32 %v5691, 4294901760
    %5693 = vmatpush1.msra.mxu0 %v5692
    %5694 = vmatprep.subr.mxu0 0.0
    %v5695 = vand.u32 %v4967, 4294901760
    %v5696 = vsub.f32 %v4967, %v5695
    %v5697 = vand.u32 %v5696, 4294901760
    %5698 = vmatpush1.msra.mxu0 %v5697
    %5699 = vmatprep.subr.mxu0 0.0
    %v5700 = vand.u32 %v4966, 4294901760
    %v5701 = vsub.f32 %v4966, %v5700
    %v5702 = vand.u32 %v5701, 4294901760
    %5703 = vmatpush1.msra.mxu0 %v5702
    %5704 = vmatprep.subr.mxu0 0.0
    %v5705 = vand.u32 %v4965, 4294901760
    %v5706 = vsub.f32 %v4965, %v5705
    %v5707 = vand.u32 %v5706, 4294901760
    %5708 = vmatpush1.msra.mxu0 %v5707
    %5709 = vmatprep.subr.mxu0 0.0
    %v5710 = vand.u32 %v4964, 4294901760
    %v5711 = vsub.f32 %v4964, %v5710
    %v5712 = vand.u32 %v5711, 4294901760
    %5713 = vmatpush1.msra.mxu0 %v5712
    %5714 = vmatprep.subr.mxu0 0.0
    %v5715 = vand.u32 %v4963, 4294901760
    %v5716 = vsub.f32 %v4963, %v5715
    %v5717 = vand.u32 %v5716, 4294901760
    %5718 = vmatpush1.msra.mxu0 %v5717
    %5719 = vmatprep.subr.mxu0 0.0
    %v5720 = vand.u32 %v4962, 4294901760
    %v5721 = vsub.f32 %v4962, %v5720
    %v5722 = vand.u32 %v5721, 4294901760
    %5723 = vmatpush1.msra.mxu0 %v5722
    %5724 = vmatprep.subr.mxu0 0.0
    %v5725 = vand.u32 %v4961, 4294901760
    %v5726 = vsub.f32 %v4961, %v5725
    %v5727 = vand.u32 %v5726, 4294901760
    %5728 = vmatpush1.msra.mxu0 %v5727
    %5729 = vmatprep.subr.mxu0 0.0
    %v5730 = vand.u32 %v4960, 4294901760
    %v5731 = vsub.f32 %v4960, %v5730
    %v5732 = vand.u32 %v5731, 4294901760
    %5733 = vmatpush1.msra.mxu0 %v5732
    %5734 = vmatprep.subr.mxu0 0.0
    %v5735 = vand.u32 %v4959, 4294901760
    %v5736 = vsub.f32 %v4959, %v5735
    %v5737 = vand.u32 %v5736, 4294901760
    %5738 = vmatpush1.msra.mxu0 %v5737
    %5739 = vmatprep.subr.mxu0 0.0
    %v5740 = vand.u32 %v4958, 4294901760
    %v5741 = vsub.f32 %v4958, %v5740
    %v5742 = vand.u32 %v5741, 4294901760
    %5743 = vmatpush1.msra.mxu0 %v5742
    %5744 = vmatprep.subr.mxu0 0.0
    %v5745 = vand.u32 %v4957, 4294901760
    %v5746 = vsub.f32 %v4957, %v5745
    %v5747 = vand.u32 %v5746, 4294901760
    %5748 = vmatpush1.msra.mxu0 %v5747
    %5749 = vmatprep.subr.mxu0 0.0
    %v5750 = vand.u32 %v4956, 4294901760
    %v5751 = vsub.f32 %v4956, %v5750
    %v5752 = vand.u32 %v5751, 4294901760
    %5753 = vmatpush1.msra.mxu0 %v5752
    %5754 = vmatprep.subr.mxu0 0.0
    %v5755 = vand.u32 %v4987, 4294901760
    %v5756 = vsub.f32 %v4987, %v5755
    %v5757 = vand.u32 %v5756, 4294901760
    %5758 = vmatpush2.msra.mxu0 %v5757
    %5759 = vmatprep.subr.mxu0 0.0
    %v5760 = vand.u32 %v4986, 4294901760
    %v5761 = vsub.f32 %v4986, %v5760
    %v5762 = vand.u32 %v5761, 4294901760
    %5763 = vmatpush2.msra.mxu0 %v5762
    %5764 = vmatprep.subr.mxu0 0.0
    %v5765 = vand.u32 %v4985, 4294901760
    %v5766 = vsub.f32 %v4985, %v5765
    %v5767 = vand.u32 %v5766, 4294901760
    %5768 = vmatpush2.msra.mxu0 %v5767
    %5769 = vmatprep.subr.mxu0 0.0
    %v5770 = vand.u32 %v4984, 4294901760
    %v5771 = vsub.f32 %v4984, %v5770
    %v5772 = vand.u32 %v5771, 4294901760
    %5773 = vmatpush2.msra.mxu0 %v5772
    %5774 = vmatprep.subr.mxu0 0.0
    %v5775 = vand.u32 %v4983, 4294901760
    %v5776 = vsub.f32 %v4983, %v5775
    %v5777 = vand.u32 %v5776, 4294901760
    %5778 = vmatpush2.msra.mxu0 %v5777
    %5779 = vmatprep.subr.mxu0 0.0
    %v5780 = vand.u32 %v4982, 4294901760
    %v5781 = vsub.f32 %v4982, %v5780
    %v5782 = vand.u32 %v5781, 4294901760
    %5783 = vmatpush2.msra.mxu0 %v5782
    %5784 = vmatprep.subr.mxu0 0.0
    %v5785 = vand.u32 %v4981, 4294901760
    %v5786 = vsub.f32 %v4981, %v5785
    %v5787 = vand.u32 %v5786, 4294901760
    %5788 = vmatpush2.msra.mxu0 %v5787
    %5789 = vmatprep.subr.mxu0 0.0
    %v5790 = vand.u32 %v4980, 4294901760
    %v5791 = vsub.f32 %v4980, %v5790
    %v5792 = vand.u32 %v5791, 4294901760
    %5793 = vmatpush2.msra.mxu0 %v5792
    %5794 = vmatprep.subr.mxu0 0.0
    %v5795 = vand.u32 %v4979, 4294901760
    %v5796 = vsub.f32 %v4979, %v5795
    %v5797 = vand.u32 %v5796, 4294901760
    %5798 = vmatpush2.msra.mxu0 %v5797
    %5799 = vmatprep.subr.mxu0 0.0
    %v5800 = vand.u32 %v4978, 4294901760
    %v5801 = vsub.f32 %v4978, %v5800
    %v5802 = vand.u32 %v5801, 4294901760
    %5803 = vmatpush2.msra.mxu0 %v5802
    %5804 = vmatprep.subr.mxu0 0.0
    %v5805 = vand.u32 %v4977, 4294901760
    %v5806 = vsub.f32 %v4977, %v5805
    %v5807 = vand.u32 %v5806, 4294901760
    %5808 = vmatpush2.msra.mxu0 %v5807
    %5809 = vmatprep.subr.mxu0 0.0
    %v5810 = vand.u32 %v4976, 4294901760
    %v5811 = vsub.f32 %v4976, %v5810
    %v5812 = vand.u32 %v5811, 4294901760
    %5813 = vmatpush2.msra.mxu0 %v5812
    %5814 = vmatprep.subr.mxu0 0.0
    %v5815 = vand.u32 %v4975, 4294901760
    %v5816 = vsub.f32 %v4975, %v5815
    %v5817 = vand.u32 %v5816, 4294901760
    %5818 = vmatpush2.msra.mxu0 %v5817
    %5819 = vmatprep.subr.mxu0 0.0
    %v5820 = vand.u32 %v4974, 4294901760
    %v5821 = vsub.f32 %v4974, %v5820
    %v5822 = vand.u32 %v5821, 4294901760
    %5823 = vmatpush2.msra.mxu0 %v5822
    %5824 = vmatprep.subr.mxu0 0.0
    %v5825 = vand.u32 %v4973, 4294901760
    %v5826 = vsub.f32 %v4973, %v5825
    %v5827 = vand.u32 %v5826, 4294901760
    %5828 = vmatpush2.msra.mxu0 %v5827
    %5829 = vmatprep.subr.mxu0 0.0
    %v5830 = vand.u32 %v4972, 4294901760
    %v5831 = vsub.f32 %v4972, %v5830
    %v5832 = vand.u32 %v5831, 4294901760
    %5833 = vmatpush2.msra.mxu0 %v5832
    %v5834 = vand.u32 %v4943, 4294901760
    %5835 = vmatprep.mubr.f32.mxu0 %v5834
    %v5836 = vand.u32 %v4448, 4294901760
    %5837 = vmatmul.mubr.f32.gmra.mxu0 %v5836
    %v5838 = vpop.f32.mrf.mxu0
    %v5839 = vadd.f32 %v5671, %v5838
    %v5840 = vpop.f32.mrf.mxu0
    %5841 = vdwg.mxu0
    %5842 = vmatprep.subr.mxu0 0.0
    %v5843 = vand.u32 %v4971, 4294901760
    %5844 = vmatpush1.msra.mxu0 %v5843
    %5845 = vmatprep.subr.mxu0 0.0
    %v5846 = vand.u32 %v4970, 4294901760
    %5847 = vmatpush1.msra.mxu0 %v5846
    %5848 = vmatprep.subr.mxu0 0.0
    %v5849 = vand.u32 %v4969, 4294901760
    %5850 = vmatpush1.msra.mxu0 %v5849
    %5851 = vmatprep.subr.mxu0 0.0
    %v5852 = vand.u32 %v4968, 4294901760
    %5853 = vmatpush1.msra.mxu0 %v5852
    %5854 = vmatprep.subr.mxu0 0.0
    %v5855 = vand.u32 %v4967, 4294901760
    %5856 = vmatpush1.msra.mxu0 %v5855
    %5857 = vmatprep.subr.mxu0 0.0
    %v5858 = vand.u32 %v4966, 4294901760
    %5859 = vmatpush1.msra.mxu0 %v5858
    %5860 = vmatprep.subr.mxu0 0.0
    %v5861 = vand.u32 %v4965, 4294901760
    %5862 = vmatpush1.msra.mxu0 %v5861
    %5863 = vmatprep.subr.mxu0 0.0
    %v5864 = vand.u32 %v4964, 4294901760
    %5865 = vmatpush1.msra.mxu0 %v5864
    %5866 = vmatprep.subr.mxu0 0.0
    %v5867 = vand.u32 %v4963, 4294901760
    %5868 = vmatpush1.msra.mxu0 %v5867
    %5869 = vmatprep.subr.mxu0 0.0
    %v5870 = vand.u32 %v4962, 4294901760
    %5871 = vmatpush1.msra.mxu0 %v5870
    %5872 = vmatprep.subr.mxu0 0.0
    %v5873 = vand.u32 %v4961, 4294901760
    %5874 = vmatpush1.msra.mxu0 %v5873
    %5875 = vmatprep.subr.mxu0 0.0
    %v5876 = vand.u32 %v4960, 4294901760
    %5877 = vmatpush1.msra.mxu0 %v5876
    %5878 = vmatprep.subr.mxu0 0.0
    %v5879 = vand.u32 %v4959, 4294901760
    %5880 = vmatpush1.msra.mxu0 %v5879
    %5881 = vmatprep.subr.mxu0 0.0
    %v5882 = vand.u32 %v4958, 4294901760
    %5883 = vmatpush1.msra.mxu0 %v5882
    %5884 = vmatprep.subr.mxu0 0.0
    %v5885 = vand.u32 %v4957, 4294901760
    %5886 = vmatpush1.msra.mxu0 %v5885
    %5887 = vmatprep.subr.mxu0 0.0
    %v5888 = vand.u32 %v4956, 4294901760
    %5889 = vmatpush1.msra.mxu0 %v5888
    %5890 = vmatprep.subr.mxu0 0.0
    %v5891 = vand.u32 %v4987, 4294901760
    %5892 = vmatpush2.msra.mxu0 %v5891
    %5893 = vmatprep.subr.mxu0 0.0
    %v5894 = vand.u32 %v4986, 4294901760
    %5895 = vmatpush2.msra.mxu0 %v5894
    %5896 = vmatprep.subr.mxu0 0.0
    %v5897 = vand.u32 %v4985, 4294901760
    %5898 = vmatpush2.msra.mxu0 %v5897
    %5899 = vmatprep.subr.mxu0 0.0
    %v5900 = vand.u32 %v4984, 4294901760
    %5901 = vmatpush2.msra.mxu0 %v5900
    %5902 = vmatprep.subr.mxu0 0.0
    %v5903 = vand.u32 %v4983, 4294901760
    %5904 = vmatpush2.msra.mxu0 %v5903
    %5905 = vmatprep.subr.mxu0 0.0
    %v5906 = vand.u32 %v4982, 4294901760
    %5907 = vmatpush2.msra.mxu0 %v5906
    %5908 = vmatprep.subr.mxu0 0.0
    %v5909 = vand.u32 %v4981, 4294901760
    %5910 = vmatpush2.msra.mxu0 %v5909
    %5911 = vmatprep.subr.mxu0 0.0
    %v5912 = vand.u32 %v4980, 4294901760
    %5913 = vmatpush2.msra.mxu0 %v5912
    %5914 = vmatprep.subr.mxu0 0.0
    %v5915 = vand.u32 %v4979, 4294901760
    %5916 = vmatpush2.msra.mxu0 %v5915
    %5917 = vmatprep.subr.mxu0 0.0
    %v5918 = vand.u32 %v4978, 4294901760
    %5919 = vmatpush2.msra.mxu0 %v5918
    %5920 = vmatprep.subr.mxu0 0.0
    %v5921 = vand.u32 %v4977, 4294901760
    %5922 = vmatpush2.msra.mxu0 %v5921
    %5923 = vmatprep.subr.mxu0 0.0
    %v5924 = vand.u32 %v4976, 4294901760
    %5925 = vmatpush2.msra.mxu0 %v5924
    %5926 = vmatprep.subr.mxu0 0.0
    %v5927 = vand.u32 %v4975, 4294901760
    %5928 = vmatpush2.msra.mxu0 %v5927
    %5929 = vmatprep.subr.mxu0 0.0
    %v5930 = vand.u32 %v4974, 4294901760
    %5931 = vmatpush2.msra.mxu0 %v5930
    %5932 = vmatprep.subr.mxu0 0.0
    %v5933 = vand.u32 %v4973, 4294901760
    %5934 = vmatpush2.msra.mxu0 %v5933
    %5935 = vmatprep.subr.mxu0 0.0
    %v5936 = vand.u32 %v4972, 4294901760
    %5937 = vmatpush2.msra.mxu0 %v5936
    %v5938 = vand.u32 %v4943, 4294901760
    %5939 = vmatprep.mubr.f32.mxu0 %v5938
    %v5940 = vand.u32 %v4448, 4294901760
    %5941 = vmatmul.mubr.f32.gmra.mxu0 %v5940
    %v5942 = vpop.f32.mrf.mxu0
    %v5943 = vadd.f32 %v5839, %v5942
    %v5944 = vpop.f32.mrf.mxu0
    %5945 = vdwg.mxu0
    %5946 = vmatprep.subr.mxu0 0.0
    %v5947 = vand.u32 %v5003, 4294901760
    %5948 = vmatpush1.msra.mxu0 %v5947
    %5949 = vmatprep.subr.mxu0 0.0
    %v5950 = vand.u32 %v5002, 4294901760
    %5951 = vmatpush1.msra.mxu0 %v5950
    %5952 = vmatprep.subr.mxu0 0.0
    %v5953 = vand.u32 %v5001, 4294901760
    %5954 = vmatpush1.msra.mxu0 %v5953
    %5955 = vmatprep.subr.mxu0 0.0
    %v5956 = vand.u32 %v5000, 4294901760
    %5957 = vmatpush1.msra.mxu0 %v5956
    %5958 = vmatprep.subr.mxu0 0.0
    %v5959 = vand.u32 %v4999, 4294901760
    %5960 = vmatpush1.msra.mxu0 %v5959
    %5961 = vmatprep.subr.mxu0 0.0
    %v5962 = vand.u32 %v4998, 4294901760
    %5963 = vmatpush1.msra.mxu0 %v5962
    %5964 = vmatprep.subr.mxu0 0.0
    %v5965 = vand.u32 %v4997, 4294901760
    %5966 = vmatpush1.msra.mxu0 %v5965
    %5967 = vmatprep.subr.mxu0 0.0
    %v5968 = vand.u32 %v4996, 4294901760
    %5969 = vmatpush1.msra.mxu0 %v5968
    %5970 = vmatprep.subr.mxu0 0.0
    %v5971 = vand.u32 %v4995, 4294901760
    %5972 = vmatpush1.msra.mxu0 %v5971
    %5973 = vmatprep.subr.mxu0 0.0
    %v5974 = vand.u32 %v4994, 4294901760
    %5975 = vmatpush1.msra.mxu0 %v5974
    %5976 = vmatprep.subr.mxu0 0.0
    %v5977 = vand.u32 %v4993, 4294901760
    %5978 = vmatpush1.msra.mxu0 %v5977
    %5979 = vmatprep.subr.mxu0 0.0
    %v5980 = vand.u32 %v4992, 4294901760
    %5981 = vmatpush1.msra.mxu0 %v5980
    %5982 = vmatprep.subr.mxu0 0.0
    %v5983 = vand.u32 %v4991, 4294901760
    %5984 = vmatpush1.msra.mxu0 %v5983
    %5985 = vmatprep.subr.mxu0 0.0
    %v5986 = vand.u32 %v4990, 4294901760
    %5987 = vmatpush1.msra.mxu0 %v5986
    %5988 = vmatprep.subr.mxu0 0.0
    %v5989 = vand.u32 %v4989, 4294901760
    %5990 = vmatpush1.msra.mxu0 %v5989
    %5991 = vmatprep.subr.mxu0 0.0
    %v5992 = vand.u32 %v4988, 4294901760
    %5993 = vmatpush1.msra.mxu0 %v5992
    %5994 = vmatprep.subr.mxu0 0.0
    %v5995 = vand.u32 %v5019, 4294901760
    %5996 = vmatpush2.msra.mxu0 %v5995
    %5997 = vmatprep.subr.mxu0 0.0
    %v5998 = vand.u32 %v5018, 4294901760
    %5999 = vmatpush2.msra.mxu0 %v5998
    %6000 = vmatprep.subr.mxu0 0.0
    %v6001 = vand.u32 %v5017, 4294901760
    %6002 = vmatpush2.msra.mxu0 %v6001
    %6003 = vmatprep.subr.mxu0 0.0
    %v6004 = vand.u32 %v5016, 4294901760
    %6005 = vmatpush2.msra.mxu0 %v6004
    %6006 = vmatprep.subr.mxu0 0.0
    %v6007 = vand.u32 %v5015, 4294901760
    %6008 = vmatpush2.msra.mxu0 %v6007
    %6009 = vmatprep.subr.mxu0 0.0
    %v6010 = vand.u32 %v5014, 4294901760
    %6011 = vmatpush2.msra.mxu0 %v6010
    %6012 = vmatprep.subr.mxu0 0.0
    %v6013 = vand.u32 %v5013, 4294901760
    %6014 = vmatpush2.msra.mxu0 %v6013
    %6015 = vmatprep.subr.mxu0 0.0
    %v6016 = vand.u32 %v5012, 4294901760
    %6017 = vmatpush2.msra.mxu0 %v6016
    %6018 = vmatprep.subr.mxu0 0.0
    %v6019 = vand.u32 %v5011, 4294901760
    %6020 = vmatpush2.msra.mxu0 %v6019
    %6021 = vmatprep.subr.mxu0 0.0
    %v6022 = vand.u32 %v5010, 4294901760
    %6023 = vmatpush2.msra.mxu0 %v6022
    %6024 = vmatprep.subr.mxu0 0.0
    %v6025 = vand.u32 %v5009, 4294901760
    %6026 = vmatpush2.msra.mxu0 %v6025
    %6027 = vmatprep.subr.mxu0 0.0
    %v6028 = vand.u32 %v5008, 4294901760
    %6029 = vmatpush2.msra.mxu0 %v6028
    %6030 = vmatprep.subr.mxu0 0.0
    %v6031 = vand.u32 %v5007, 4294901760
    %6032 = vmatpush2.msra.mxu0 %v6031
    %6033 = vmatprep.subr.mxu0 0.0
    %v6034 = vand.u32 %v5006, 4294901760
    %6035 = vmatpush2.msra.mxu0 %v6034
    %6036 = vmatprep.subr.mxu0 0.0
    %v6037 = vand.u32 %v5005, 4294901760
    %6038 = vmatpush2.msra.mxu0 %v6037
    %6039 = vmatprep.subr.mxu0 0.0
    %v6040 = vand.u32 %v5004, 4294901760
    %6041 = vmatpush2.msra.mxu0 %v6040
    %v6042 = vand.u32 %v4947, 4294901760
    %v6043 = vsub.f32 %v4947, %v6042
    %v6044 = vand.u32 %v6043, 4294901760
    %v6045 = vsub.f32 %v6043, %v6044
    %v6046 = vand.u32 %v6045, 4294901760
    %6047 = vmatprep.mubr.f32.mxu0 %v6046
    %v6048 = vand.u32 %v4945, 4294901760
    %v6049 = vsub.f32 %v4945, %v6048
    %v6050 = vand.u32 %v6049, 4294901760
    %v6051 = vsub.f32 %v6049, %v6050
    %v6052 = vand.u32 %v6051, 4294901760
    %6053 = vmatmul.mubr.f32.gmra.mxu0 %v6052
    %v6054 = vpop.f32.mrf.mxu0
    %v6055 = vadd.f32 %v5943, %v6054
    %v6056 = vpop.f32.mrf.mxu0
    %6057 = vdwg.mxu0
    %6058 = vmatprep.subr.mxu0 0.0
    %v6059 = vand.u32 %v5003, 4294901760
    %v6060 = vsub.f32 %v5003, %v6059
    %v6061 = vand.u32 %v6060, 4294901760
    %v6062 = vsub.f32 %v6060, %v6061
    %v6063 = vand.u32 %v6062, 4294901760
    %6064 = vmatpush1.msra.mxu0 %v6063
    %6065 = vmatprep.subr.mxu0 0.0
    %v6066 = vand.u32 %v5002, 4294901760
    %v6067 = vsub.f32 %v5002, %v6066
    %v6068 = vand.u32 %v6067, 4294901760
    %v6069 = vsub.f32 %v6067, %v6068
    %v6070 = vand.u32 %v6069, 4294901760
    %6071 = vmatpush1.msra.mxu0 %v6070
    %6072 = vmatprep.subr.mxu0 0.0
    %v6073 = vand.u32 %v5001, 4294901760
    %v6074 = vsub.f32 %v5001, %v6073
    %v6075 = vand.u32 %v6074, 4294901760
    %v6076 = vsub.f32 %v6074, %v6075
    %v6077 = vand.u32 %v6076, 4294901760
    %6078 = vmatpush1.msra.mxu0 %v6077
    %6079 = vmatprep.subr.mxu0 0.0
    %v6080 = vand.u32 %v5000, 4294901760
    %v6081 = vsub.f32 %v5000, %v6080
    %v6082 = vand.u32 %v6081, 4294901760
    %v6083 = vsub.f32 %v6081, %v6082
    %v6084 = vand.u32 %v6083, 4294901760
    %6085 = vmatpush1.msra.mxu0 %v6084
    %6086 = vmatprep.subr.mxu0 0.0
    %v6087 = vand.u32 %v4999, 4294901760
    %v6088 = vsub.f32 %v4999, %v6087
    %v6089 = vand.u32 %v6088, 4294901760
    %v6090 = vsub.f32 %v6088, %v6089
    %v6091 = vand.u32 %v6090, 4294901760
    %6092 = vmatpush1.msra.mxu0 %v6091
    %6093 = vmatprep.subr.mxu0 0.0
    %v6094 = vand.u32 %v4998, 4294901760
    %v6095 = vsub.f32 %v4998, %v6094
    %v6096 = vand.u32 %v6095, 4294901760
    %v6097 = vsub.f32 %v6095, %v6096
    %v6098 = vand.u32 %v6097, 4294901760
    %6099 = vmatpush1.msra.mxu0 %v6098
    %6100 = vmatprep.subr.mxu0 0.0
    %v6101 = vand.u32 %v4997, 4294901760
    %v6102 = vsub.f32 %v4997, %v6101
    %v6103 = vand.u32 %v6102, 4294901760
    %v6104 = vsub.f32 %v6102, %v6103
    %v6105 = vand.u32 %v6104, 4294901760
    %6106 = vmatpush1.msra.mxu0 %v6105
    %6107 = vmatprep.subr.mxu0 0.0
    %v6108 = vand.u32 %v4996, 4294901760
    %v6109 = vsub.f32 %v4996, %v6108
    %v6110 = vand.u32 %v6109, 4294901760
    %v6111 = vsub.f32 %v6109, %v6110
    %v6112 = vand.u32 %v6111, 4294901760
    %6113 = vmatpush1.msra.mxu0 %v6112
    %6114 = vmatprep.subr.mxu0 0.0
    %v6115 = vand.u32 %v4995, 4294901760
    %v6116 = vsub.f32 %v4995, %v6115
    %v6117 = vand.u32 %v6116, 4294901760
    %v6118 = vsub.f32 %v6116, %v6117
    %v6119 = vand.u32 %v6118, 4294901760
    %6120 = vmatpush1.msra.mxu0 %v6119
    %6121 = vmatprep.subr.mxu0 0.0
    %v6122 = vand.u32 %v4994, 4294901760
    %v6123 = vsub.f32 %v4994, %v6122
    %v6124 = vand.u32 %v6123, 4294901760
    %v6125 = vsub.f32 %v6123, %v6124
    %v6126 = vand.u32 %v6125, 4294901760
    %6127 = vmatpush1.msra.mxu0 %v6126
    %6128 = vmatprep.subr.mxu0 0.0
    %v6129 = vand.u32 %v4993, 4294901760
    %v6130 = vsub.f32 %v4993, %v6129
    %v6131 = vand.u32 %v6130, 4294901760
    %v6132 = vsub.f32 %v6130, %v6131
    %v6133 = vand.u32 %v6132, 4294901760
    %6134 = vmatpush1.msra.mxu0 %v6133
    %6135 = vmatprep.subr.mxu0 0.0
    %v6136 = vand.u32 %v4992, 4294901760
    %v6137 = vsub.f32 %v4992, %v6136
    %v6138 = vand.u32 %v6137, 4294901760
    %v6139 = vsub.f32 %v6137, %v6138
    %v6140 = vand.u32 %v6139, 4294901760
    %6141 = vmatpush1.msra.mxu0 %v6140
    %6142 = vmatprep.subr.mxu0 0.0
    %v6143 = vand.u32 %v4991, 4294901760
    %v6144 = vsub.f32 %v4991, %v6143
    %v6145 = vand.u32 %v6144, 4294901760
    %v6146 = vsub.f32 %v6144, %v6145
    %v6147 = vand.u32 %v6146, 4294901760
    %6148 = vmatpush1.msra.mxu0 %v6147
    %6149 = vmatprep.subr.mxu0 0.0
    %v6150 = vand.u32 %v4990, 4294901760
    %v6151 = vsub.f32 %v4990, %v6150
    %v6152 = vand.u32 %v6151, 4294901760
    %v6153 = vsub.f32 %v6151, %v6152
    %v6154 = vand.u32 %v6153, 4294901760
    %6155 = vmatpush1.msra.mxu0 %v6154
    %6156 = vmatprep.subr.mxu0 0.0
    %v6157 = vand.u32 %v4989, 4294901760
    %v6158 = vsub.f32 %v4989, %v6157
    %v6159 = vand.u32 %v6158, 4294901760
    %v6160 = vsub.f32 %v6158, %v6159
    %v6161 = vand.u32 %v6160, 4294901760
    %6162 = vmatpush1.msra.mxu0 %v6161
    %6163 = vmatprep.subr.mxu0 0.0
    %v6164 = vand.u32 %v4988, 4294901760
    %v6165 = vsub.f32 %v4988, %v6164
    %v6166 = vand.u32 %v6165, 4294901760
    %v6167 = vsub.f32 %v6165, %v6166
    %v6168 = vand.u32 %v6167, 4294901760
    %6169 = vmatpush1.msra.mxu0 %v6168
    %6170 = vmatprep.subr.mxu0 0.0
    %v6171 = vand.u32 %v5019, 4294901760
    %v6172 = vsub.f32 %v5019, %v6171
    %v6173 = vand.u32 %v6172, 4294901760
    %v6174 = vsub.f32 %v6172, %v6173
    %v6175 = vand.u32 %v6174, 4294901760
    %6176 = vmatpush2.msra.mxu0 %v6175
    %6177 = vmatprep.subr.mxu0 0.0
    %v6178 = vand.u32 %v5018, 4294901760
    %v6179 = vsub.f32 %v5018, %v6178
    %v6180 = vand.u32 %v6179, 4294901760
    %v6181 = vsub.f32 %v6179, %v6180
    %v6182 = vand.u32 %v6181, 4294901760
    %6183 = vmatpush2.msra.mxu0 %v6182
    %6184 = vmatprep.subr.mxu0 0.0
    %v6185 = vand.u32 %v5017, 4294901760
    %v6186 = vsub.f32 %v5017, %v6185
    %v6187 = vand.u32 %v6186, 4294901760
    %v6188 = vsub.f32 %v6186, %v6187
    %v6189 = vand.u32 %v6188, 4294901760
    %6190 = vmatpush2.msra.mxu0 %v6189
    %6191 = vmatprep.subr.mxu0 0.0
    %v6192 = vand.u32 %v5016, 4294901760
    %v6193 = vsub.f32 %v5016, %v6192
    %v6194 = vand.u32 %v6193, 4294901760
    %v6195 = vsub.f32 %v6193, %v6194
    %v6196 = vand.u32 %v6195, 4294901760
    %6197 = vmatpush2.msra.mxu0 %v6196
    %6198 = vmatprep.subr.mxu0 0.0
    %v6199 = vand.u32 %v5015, 4294901760
    %v6200 = vsub.f32 %v5015, %v6199
    %v6201 = vand.u32 %v6200, 4294901760
    %v6202 = vsub.f32 %v6200, %v6201
    %v6203 = vand.u32 %v6202, 4294901760
    %6204 = vmatpush2.msra.mxu0 %v6203
    %6205 = vmatprep.subr.mxu0 0.0
    %v6206 = vand.u32 %v5014, 4294901760
    %v6207 = vsub.f32 %v5014, %v6206
    %v6208 = vand.u32 %v6207, 4294901760
    %v6209 = vsub.f32 %v6207, %v6208
    %v6210 = vand.u32 %v6209, 4294901760
    %6211 = vmatpush2.msra.mxu0 %v6210
    %6212 = vmatprep.subr.mxu0 0.0
    %v6213 = vand.u32 %v5013, 4294901760
    %v6214 = vsub.f32 %v5013, %v6213
    %v6215 = vand.u32 %v6214, 4294901760
    %v6216 = vsub.f32 %v6214, %v6215
    %v6217 = vand.u32 %v6216, 4294901760
    %6218 = vmatpush2.msra.mxu0 %v6217
    %6219 = vmatprep.subr.mxu0 0.0
    %v6220 = vand.u32 %v5012, 4294901760
    %v6221 = vsub.f32 %v5012, %v6220
    %v6222 = vand.u32 %v6221, 4294901760
    %v6223 = vsub.f32 %v6221, %v6222
    %v6224 = vand.u32 %v6223, 4294901760
    %6225 = vmatpush2.msra.mxu0 %v6224
    %6226 = vmatprep.subr.mxu0 0.0
    %v6227 = vand.u32 %v5011, 4294901760
    %v6228 = vsub.f32 %v5011, %v6227
    %v6229 = vand.u32 %v6228, 4294901760
    %v6230 = vsub.f32 %v6228, %v6229
    %v6231 = vand.u32 %v6230, 4294901760
    %6232 = vmatpush2.msra.mxu0 %v6231
    %6233 = vmatprep.subr.mxu0 0.0
    %v6234 = vand.u32 %v5010, 4294901760
    %v6235 = vsub.f32 %v5010, %v6234
    %v6236 = vand.u32 %v6235, 4294901760
    %v6237 = vsub.f32 %v6235, %v6236
    %v6238 = vand.u32 %v6237, 4294901760
    %6239 = vmatpush2.msra.mxu0 %v6238
    %6240 = vmatprep.subr.mxu0 0.0
    %v6241 = vand.u32 %v5009, 4294901760
    %v6242 = vsub.f32 %v5009, %v6241
    %v6243 = vand.u32 %v6242, 4294901760
    %v6244 = vsub.f32 %v6242, %v6243
    %v6245 = vand.u32 %v6244, 4294901760
    %6246 = vmatpush2.msra.mxu0 %v6245
    %6247 = vmatprep.subr.mxu0 0.0
    %v6248 = vand.u32 %v5008, 4294901760
    %v6249 = vsub.f32 %v5008, %v6248
    %v6250 = vand.u32 %v6249, 4294901760
    %v6251 = vsub.f32 %v6249, %v6250
    %v6252 = vand.u32 %v6251, 4294901760
    %6253 = vmatpush2.msra.mxu0 %v6252
    %6254 = vmatprep.subr.mxu0 0.0
    %v6255 = vand.u32 %v5007, 4294901760
    %v6256 = vsub.f32 %v5007, %v6255
    %v6257 = vand.u32 %v6256, 4294901760
    %v6258 = vsub.f32 %v6256, %v6257
    %v6259 = vand.u32 %v6258, 4294901760
    %6260 = vmatpush2.msra.mxu0 %v6259
    %6261 = vmatprep.subr.mxu0 0.0
    %v6262 = vand.u32 %v5006, 4294901760
    %v6263 = vsub.f32 %v5006, %v6262
    %v6264 = vand.u32 %v6263, 4294901760
    %v6265 = vsub.f32 %v6263, %v6264
    %v6266 = vand.u32 %v6265, 4294901760
    %6267 = vmatpush2.msra.mxu0 %v6266
    %6268 = vmatprep.subr.mxu0 0.0
    %v6269 = vand.u32 %v5005, 4294901760
    %v6270 = vsub.f32 %v5005, %v6269
    %v6271 = vand.u32 %v6270, 4294901760
    %v6272 = vsub.f32 %v6270, %v6271
    %v6273 = vand.u32 %v6272, 4294901760
    %6274 = vmatpush2.msra.mxu0 %v6273
    %6275 = vmatprep.subr.mxu0 0.0
    %v6276 = vand.u32 %v5004, 4294901760
    %v6277 = vsub.f32 %v5004, %v6276
    %v6278 = vand.u32 %v6277, 4294901760
    %v6279 = vsub.f32 %v6277, %v6278
    %v6280 = vand.u32 %v6279, 4294901760
    %6281 = vmatpush2.msra.mxu0 %v6280
    %v6282 = vand.u32 %v4947, 4294901760
    %6283 = vmatprep.mubr.f32.mxu0 %v6282
    %v6284 = vand.u32 %v4945, 4294901760
    %6285 = vmatmul.mubr.f32.gmra.mxu0 %v6284
    %v6286 = vpop.f32.mrf.mxu0
    %v6287 = vadd.f32 %v6055, %v6286
    %v6288 = vpop.f32.mrf.mxu0
    %6289 = vdwg.mxu0
    %6290 = vmatprep.subr.mxu0 0.0
    %v6291 = vand.u32 %v5003, 4294901760
    %v6292 = vsub.f32 %v5003, %v6291
    %6293 = vmatpush1.msra.mxu0 %v6292
    %6294 = vmatprep.subr.mxu0 0.0
    %v6295 = vand.u32 %v5002, 4294901760
    %v6296 = vsub.f32 %v5002, %v6295
    %6297 = vmatpush1.msra.mxu0 %v6296
    %6298 = vmatprep.subr.mxu0 0.0
    %v6299 = vand.u32 %v5001, 4294901760
    %v6300 = vsub.f32 %v5001, %v6299
    %6301 = vmatpush1.msra.mxu0 %v6300
    %6302 = vmatprep.subr.mxu0 0.0
    %v6303 = vand.u32 %v5000, 4294901760
    %v6304 = vsub.f32 %v5000, %v6303
    %6305 = vmatpush1.msra.mxu0 %v6304
    %6306 = vmatprep.subr.mxu0 0.0
    %v6307 = vand.u32 %v4999, 4294901760
    %v6308 = vsub.f32 %v4999, %v6307
    %6309 = vmatpush1.msra.mxu0 %v6308
    %6310 = vmatprep.subr.mxu0 0.0
    %v6311 = vand.u32 %v4998, 4294901760
    %v6312 = vsub.f32 %v4998, %v6311
    %6313 = vmatpush1.msra.mxu0 %v6312
    %6314 = vmatprep.subr.mxu0 0.0
    %v6315 = vand.u32 %v4997, 4294901760
    %v6316 = vsub.f32 %v4997, %v6315
    %6317 = vmatpush1.msra.mxu0 %v6316
    %6318 = vmatprep.subr.mxu0 0.0
    %v6319 = vand.u32 %v4996, 4294901760
    %v6320 = vsub.f32 %v4996, %v6319
    %6321 = vmatpush1.msra.mxu0 %v6320
    %6322 = vmatprep.subr.mxu0 0.0
    %v6323 = vand.u32 %v4995, 4294901760
    %v6324 = vsub.f32 %v4995, %v6323
    %6325 = vmatpush1.msra.mxu0 %v6324
    %6326 = vmatprep.subr.mxu0 0.0
    %v6327 = vand.u32 %v4994, 4294901760
    %v6328 = vsub.f32 %v4994, %v6327
    %6329 = vmatpush1.msra.mxu0 %v6328
    %6330 = vmatprep.subr.mxu0 0.0
    %v6331 = vand.u32 %v4993, 4294901760
    %v6332 = vsub.f32 %v4993, %v6331
    %6333 = vmatpush1.msra.mxu0 %v6332
    %6334 = vmatprep.subr.mxu0 0.0
    %v6335 = vand.u32 %v4992, 4294901760
    %v6336 = vsub.f32 %v4992, %v6335
    %6337 = vmatpush1.msra.mxu0 %v6336
    %6338 = vmatprep.subr.mxu0 0.0
    %v6339 = vand.u32 %v4991, 4294901760
    %v6340 = vsub.f32 %v4991, %v6339
    %6341 = vmatpush1.msra.mxu0 %v6340
    %6342 = vmatprep.subr.mxu0 0.0
    %v6343 = vand.u32 %v4990, 4294901760
    %v6344 = vsub.f32 %v4990, %v6343
    %6345 = vmatpush1.msra.mxu0 %v6344
    %6346 = vmatprep.subr.mxu0 0.0
    %v6347 = vand.u32 %v4989, 4294901760
    %v6348 = vsub.f32 %v4989, %v6347
    %6349 = vmatpush1.msra.mxu0 %v6348
    %6350 = vmatprep.subr.mxu0 0.0
    %v6351 = vand.u32 %v4988, 4294901760
    %v6352 = vsub.f32 %v4988, %v6351
    %6353 = vmatpush1.msra.mxu0 %v6352
    %6354 = vmatprep.subr.mxu0 0.0
    %v6355 = vand.u32 %v5019, 4294901760
    %v6356 = vsub.f32 %v5019, %v6355
    %6357 = vmatpush2.msra.mxu0 %v6356
    %6358 = vmatprep.subr.mxu0 0.0
    %v6359 = vand.u32 %v5018, 4294901760
    %v6360 = vsub.f32 %v5018, %v6359
    %6361 = vmatpush2.msra.mxu0 %v6360
    %6362 = vmatprep.subr.mxu0 0.0
    %v6363 = vand.u32 %v5017, 4294901760
    %v6364 = vsub.f32 %v5017, %v6363
    %6365 = vmatpush2.msra.mxu0 %v6364
    %6366 = vmatprep.subr.mxu0 0.0
    %v6367 = vand.u32 %v5016, 4294901760
    %v6368 = vsub.f32 %v5016, %v6367
    %6369 = vmatpush2.msra.mxu0 %v6368
    %6370 = vmatprep.subr.mxu0 0.0
    %v6371 = vand.u32 %v5015, 4294901760
    %v6372 = vsub.f32 %v5015, %v6371
    %6373 = vmatpush2.msra.mxu0 %v6372
    %6374 = vmatprep.subr.mxu0 0.0
    %v6375 = vand.u32 %v5014, 4294901760
    %v6376 = vsub.f32 %v5014, %v6375
    %6377 = vmatpush2.msra.mxu0 %v6376
    %6378 = vmatprep.subr.mxu0 0.0
    %v6379 = vand.u32 %v5013, 4294901760
    %v6380 = vsub.f32 %v5013, %v6379
    %6381 = vmatpush2.msra.mxu0 %v6380
    %6382 = vmatprep.subr.mxu0 0.0
    %v6383 = vand.u32 %v5012, 4294901760
    %v6384 = vsub.f32 %v5012, %v6383
    %6385 = vmatpush2.msra.mxu0 %v6384
    %6386 = vmatprep.subr.mxu0 0.0
    %v6387 = vand.u32 %v5011, 4294901760
    %v6388 = vsub.f32 %v5011, %v6387
    %6389 = vmatpush2.msra.mxu0 %v6388
    %6390 = vmatprep.subr.mxu0 0.0
    %v6391 = vand.u32 %v5010, 4294901760
    %v6392 = vsub.f32 %v5010, %v6391
    %6393 = vmatpush2.msra.mxu0 %v6392
    %6394 = vmatprep.subr.mxu0 0.0
    %v6395 = vand.u32 %v5009, 4294901760
    %v6396 = vsub.f32 %v5009, %v6395
    %6397 = vmatpush2.msra.mxu0 %v6396
    %6398 = vmatprep.subr.mxu0 0.0
    %v6399 = vand.u32 %v5008, 4294901760
    %v6400 = vsub.f32 %v5008, %v6399
    %6401 = vmatpush2.msra.mxu0 %v6400
    %6402 = vmatprep.subr.mxu0 0.0
    %v6403 = vand.u32 %v5007, 4294901760
    %v6404 = vsub.f32 %v5007, %v6403
    %6405 = vmatpush2.msra.mxu0 %v6404
    %6406 = vmatprep.subr.mxu0 0.0
    %v6407 = vand.u32 %v5006, 4294901760
    %v6408 = vsub.f32 %v5006, %v6407
    %6409 = vmatpush2.msra.mxu0 %v6408
    %6410 = vmatprep.subr.mxu0 0.0
    %v6411 = vand.u32 %v5005, 4294901760
    %v6412 = vsub.f32 %v5005, %v6411
    %6413 = vmatpush2.msra.mxu0 %v6412
    %6414 = vmatprep.subr.mxu0 0.0
    %v6415 = vand.u32 %v5004, 4294901760
    %v6416 = vsub.f32 %v5004, %v6415
    %6417 = vmatpush2.msra.mxu0 %v6416
    %v6418 = vand.u32 %v4947, 4294901760
    %v6419 = vsub.f32 %v4947, %v6418
    %6420 = vmatprep.mubr.f32.mxu0 %v6419
    %v6421 = vand.u32 %v4945, 4294901760
    %v6422 = vsub.f32 %v4945, %v6421
    %6423 = vmatmul.mubr.f32.gmra.mxu0 %v6422
    %v6424 = vpop.f32.mrf.mxu0
    %v6425 = vadd.f32 %v6287, %v6424
    %v6426 = vpop.f32.mrf.mxu0
    %6427 = vdwg.mxu0
    %6428 = vmatprep.subr.mxu0 0.0
    %v6429 = vand.u32 %v5003, 4294901760
    %6430 = vmatpush1.msra.mxu0 %v6429
    %6431 = vmatprep.subr.mxu0 0.0
    %v6432 = vand.u32 %v5002, 4294901760
    %6433 = vmatpush1.msra.mxu0 %v6432
    %6434 = vmatprep.subr.mxu0 0.0
    %v6435 = vand.u32 %v5001, 4294901760
    %6436 = vmatpush1.msra.mxu0 %v6435
    %6437 = vmatprep.subr.mxu0 0.0
    %v6438 = vand.u32 %v5000, 4294901760
    %6439 = vmatpush1.msra.mxu0 %v6438
    %6440 = vmatprep.subr.mxu0 0.0
    %v6441 = vand.u32 %v4999, 4294901760
    %6442 = vmatpush1.msra.mxu0 %v6441
    %6443 = vmatprep.subr.mxu0 0.0
    %v6444 = vand.u32 %v4998, 4294901760
    %6445 = vmatpush1.msra.mxu0 %v6444
    %6446 = vmatprep.subr.mxu0 0.0
    %v6447 = vand.u32 %v4997, 4294901760
    %6448 = vmatpush1.msra.mxu0 %v6447
    %6449 = vmatprep.subr.mxu0 0.0
    %v6450 = vand.u32 %v4996, 4294901760
    %6451 = vmatpush1.msra.mxu0 %v6450
    %6452 = vmatprep.subr.mxu0 0.0
    %v6453 = vand.u32 %v4995, 4294901760
    %6454 = vmatpush1.msra.mxu0 %v6453
    %6455 = vmatprep.subr.mxu0 0.0
    %v6456 = vand.u32 %v4994, 4294901760
    %6457 = vmatpush1.msra.mxu0 %v6456
    %6458 = vmatprep.subr.mxu0 0.0
    %v6459 = vand.u32 %v4993, 4294901760
    %6460 = vmatpush1.msra.mxu0 %v6459
    %6461 = vmatprep.subr.mxu0 0.0
    %v6462 = vand.u32 %v4992, 4294901760
    %6463 = vmatpush1.msra.mxu0 %v6462
    %6464 = vmatprep.subr.mxu0 0.0
    %v6465 = vand.u32 %v4991, 4294901760
    %6466 = vmatpush1.msra.mxu0 %v6465
    %6467 = vmatprep.subr.mxu0 0.0
    %v6468 = vand.u32 %v4990, 4294901760
    %6469 = vmatpush1.msra.mxu0 %v6468
    %6470 = vmatprep.subr.mxu0 0.0
    %v6471 = vand.u32 %v4989, 4294901760
    %6472 = vmatpush1.msra.mxu0 %v6471
    %6473 = vmatprep.subr.mxu0 0.0
    %v6474 = vand.u32 %v4988, 4294901760
    %6475 = vmatpush1.msra.mxu0 %v6474
    %6476 = vmatprep.subr.mxu0 0.0
    %v6477 = vand.u32 %v5019, 4294901760
    %6478 = vmatpush2.msra.mxu0 %v6477
    %6479 = vmatprep.subr.mxu0 0.0
    %v6480 = vand.u32 %v5018, 4294901760
    %6481 = vmatpush2.msra.mxu0 %v6480
    %6482 = vmatprep.subr.mxu0 0.0
    %v6483 = vand.u32 %v5017, 4294901760
    %6484 = vmatpush2.msra.mxu0 %v6483
    %6485 = vmatprep.subr.mxu0 0.0
    %v6486 = vand.u32 %v5016, 4294901760
    %6487 = vmatpush2.msra.mxu0 %v6486
    %6488 = vmatprep.subr.mxu0 0.0
    %v6489 = vand.u32 %v5015, 4294901760
    %6490 = vmatpush2.msra.mxu0 %v6489
    %6491 = vmatprep.subr.mxu0 0.0
    %v6492 = vand.u32 %v5014, 4294901760
    %6493 = vmatpush2.msra.mxu0 %v6492
    %6494 = vmatprep.subr.mxu0 0.0
    %v6495 = vand.u32 %v5013, 4294901760
    %6496 = vmatpush2.msra.mxu0 %v6495
    %6497 = vmatprep.subr.mxu0 0.0
    %v6498 = vand.u32 %v5012, 4294901760
    %6499 = vmatpush2.msra.mxu0 %v6498
    %6500 = vmatprep.subr.mxu0 0.0
    %v6501 = vand.u32 %v5011, 4294901760
    %6502 = vmatpush2.msra.mxu0 %v6501
    %6503 = vmatprep.subr.mxu0 0.0
    %v6504 = vand.u32 %v5010, 4294901760
    %6505 = vmatpush2.msra.mxu0 %v6504
    %6506 = vmatprep.subr.mxu0 0.0
    %v6507 = vand.u32 %v5009, 4294901760
    %6508 = vmatpush2.msra.mxu0 %v6507
    %6509 = vmatprep.subr.mxu0 0.0
    %v6510 = vand.u32 %v5008, 4294901760
    %6511 = vmatpush2.msra.mxu0 %v6510
    %6512 = vmatprep.subr.mxu0 0.0
    %v6513 = vand.u32 %v5007, 4294901760
    %6514 = vmatpush2.msra.mxu0 %v6513
    %6515 = vmatprep.subr.mxu0 0.0
    %v6516 = vand.u32 %v5006, 4294901760
    %6517 = vmatpush2.msra.mxu0 %v6516
    %6518 = vmatprep.subr.mxu0 0.0
    %v6519 = vand.u32 %v5005, 4294901760
    %6520 = vmatpush2.msra.mxu0 %v6519
    %6521 = vmatprep.subr.mxu0 0.0
    %v6522 = vand.u32 %v5004, 4294901760
    %6523 = vmatpush2.msra.mxu0 %v6522
    %v6524 = vand.u32 %v4947, 4294901760
    %v6525 = vsub.f32 %v4947, %v6524
    %v6526 = vand.u32 %v6525, 4294901760
    %6527 = vmatprep.mubr.f32.mxu0 %v6526
    %v6528 = vand.u32 %v4945, 4294901760
    %v6529 = vsub.f32 %v4945, %v6528
    %v6530 = vand.u32 %v6529, 4294901760
    %6531 = vmatmul.mubr.f32.gmra.mxu0 %v6530
    %v6532 = vpop.f32.mrf.mxu0
    %v6533 = vadd.f32 %v6425, %v6532
    %v6534 = vpop.f32.mrf.mxu0
    %6535 = vdwg.mxu0
    %6536 = vmatprep.subr.mxu0 0.0
    %v6537 = vand.u32 %v5003, 4294901760
    %v6538 = vsub.f32 %v5003, %v6537
    %v6539 = vand.u32 %v6538, 4294901760
    %6540 = vmatpush1.msra.mxu0 %v6539
    %6541 = vmatprep.subr.mxu0 0.0
    %v6542 = vand.u32 %v5002, 4294901760
    %v6543 = vsub.f32 %v5002, %v6542
    %v6544 = vand.u32 %v6543, 4294901760
    %6545 = vmatpush1.msra.mxu0 %v6544
    %6546 = vmatprep.subr.mxu0 0.0
    %v6547 = vand.u32 %v5001, 4294901760
    %v6548 = vsub.f32 %v5001, %v6547
    %v6549 = vand.u32 %v6548, 4294901760
    %6550 = vmatpush1.msra.mxu0 %v6549
    %6551 = vmatprep.subr.mxu0 0.0
    %v6552 = vand.u32 %v5000, 4294901760
    %v6553 = vsub.f32 %v5000, %v6552
    %v6554 = vand.u32 %v6553, 4294901760
    %6555 = vmatpush1.msra.mxu0 %v6554
    %6556 = vmatprep.subr.mxu0 0.0
    %v6557 = vand.u32 %v4999, 4294901760
    %v6558 = vsub.f32 %v4999, %v6557
    %v6559 = vand.u32 %v6558, 4294901760
    %6560 = vmatpush1.msra.mxu0 %v6559
    %6561 = vmatprep.subr.mxu0 0.0
    %v6562 = vand.u32 %v4998, 4294901760
    %v6563 = vsub.f32 %v4998, %v6562
    %v6564 = vand.u32 %v6563, 4294901760
    %6565 = vmatpush1.msra.mxu0 %v6564
    %6566 = vmatprep.subr.mxu0 0.0
    %v6567 = vand.u32 %v4997, 4294901760
    %v6568 = vsub.f32 %v4997, %v6567
    %v6569 = vand.u32 %v6568, 4294901760
    %6570 = vmatpush1.msra.mxu0 %v6569
    %6571 = vmatprep.subr.mxu0 0.0
    %v6572 = vand.u32 %v4996, 4294901760
    %v6573 = vsub.f32 %v4996, %v6572
    %v6574 = vand.u32 %v6573, 4294901760
    %6575 = vmatpush1.msra.mxu0 %v6574
    %6576 = vmatprep.subr.mxu0 0.0
    %v6577 = vand.u32 %v4995, 4294901760
    %v6578 = vsub.f32 %v4995, %v6577
    %v6579 = vand.u32 %v6578, 4294901760
    %6580 = vmatpush1.msra.mxu0 %v6579
    %6581 = vmatprep.subr.mxu0 0.0
    %v6582 = vand.u32 %v4994, 4294901760
    %v6583 = vsub.f32 %v4994, %v6582
    %v6584 = vand.u32 %v6583, 4294901760
    %6585 = vmatpush1.msra.mxu0 %v6584
    %6586 = vmatprep.subr.mxu0 0.0
    %v6587 = vand.u32 %v4993, 4294901760
    %v6588 = vsub.f32 %v4993, %v6587
    %v6589 = vand.u32 %v6588, 4294901760
    %6590 = vmatpush1.msra.mxu0 %v6589
    %6591 = vmatprep.subr.mxu0 0.0
    %v6592 = vand.u32 %v4992, 4294901760
    %v6593 = vsub.f32 %v4992, %v6592
    %v6594 = vand.u32 %v6593, 4294901760
    %6595 = vmatpush1.msra.mxu0 %v6594
    %6596 = vmatprep.subr.mxu0 0.0
    %v6597 = vand.u32 %v4991, 4294901760
    %v6598 = vsub.f32 %v4991, %v6597
    %v6599 = vand.u32 %v6598, 4294901760
    %6600 = vmatpush1.msra.mxu0 %v6599
    %6601 = vmatprep.subr.mxu0 0.0
    %v6602 = vand.u32 %v4990, 4294901760
    %v6603 = vsub.f32 %v4990, %v6602
    %v6604 = vand.u32 %v6603, 4294901760
    %6605 = vmatpush1.msra.mxu0 %v6604
    %6606 = vmatprep.subr.mxu0 0.0
    %v6607 = vand.u32 %v4989, 4294901760
    %v6608 = vsub.f32 %v4989, %v6607
    %v6609 = vand.u32 %v6608, 4294901760
    %6610 = vmatpush1.msra.mxu0 %v6609
    %6611 = vmatprep.subr.mxu0 0.0
    %v6612 = vand.u32 %v4988, 4294901760
    %v6613 = vsub.f32 %v4988, %v6612
    %v6614 = vand.u32 %v6613, 4294901760
    %6615 = vmatpush1.msra.mxu0 %v6614
    %6616 = vmatprep.subr.mxu0 0.0
    %v6617 = vand.u32 %v5019, 4294901760
    %v6618 = vsub.f32 %v5019, %v6617
    %v6619 = vand.u32 %v6618, 4294901760
    %6620 = vmatpush2.msra.mxu0 %v6619
    %6621 = vmatprep.subr.mxu0 0.0
    %v6622 = vand.u32 %v5018, 4294901760
    %v6623 = vsub.f32 %v5018, %v6622
    %v6624 = vand.u32 %v6623, 4294901760
    %6625 = vmatpush2.msra.mxu0 %v6624
    %6626 = vmatprep.subr.mxu0 0.0
    %v6627 = vand.u32 %v5017, 4294901760
    %v6628 = vsub.f32 %v5017, %v6627
    %v6629 = vand.u32 %v6628, 4294901760
    %6630 = vmatpush2.msra.mxu0 %v6629
    %6631 = vmatprep.subr.mxu0 0.0
    %v6632 = vand.u32 %v5016, 4294901760
    %v6633 = vsub.f32 %v5016, %v6632
    %v6634 = vand.u32 %v6633, 4294901760
    %6635 = vmatpush2.msra.mxu0 %v6634
    %6636 = vmatprep.subr.mxu0 0.0
    %v6637 = vand.u32 %v5015, 4294901760
    %v6638 = vsub.f32 %v5015, %v6637
    %v6639 = vand.u32 %v6638, 4294901760
    %6640 = vmatpush2.msra.mxu0 %v6639
    %6641 = vmatprep.subr.mxu0 0.0
    %v6642 = vand.u32 %v5014, 4294901760
    %v6643 = vsub.f32 %v5014, %v6642
    %v6644 = vand.u32 %v6643, 4294901760
    %6645 = vmatpush2.msra.mxu0 %v6644
    %6646 = vmatprep.subr.mxu0 0.0
    %v6647 = vand.u32 %v5013, 4294901760
    %v6648 = vsub.f32 %v5013, %v6647
    %v6649 = vand.u32 %v6648, 4294901760
    %6650 = vmatpush2.msra.mxu0 %v6649
    %6651 = vmatprep.subr.mxu0 0.0
    %v6652 = vand.u32 %v5012, 4294901760
    %v6653 = vsub.f32 %v5012, %v6652
    %v6654 = vand.u32 %v6653, 4294901760
    %6655 = vmatpush2.msra.mxu0 %v6654
    %6656 = vmatprep.subr.mxu0 0.0
    %v6657 = vand.u32 %v5011, 4294901760
    %v6658 = vsub.f32 %v5011, %v6657
    %v6659 = vand.u32 %v6658, 4294901760
    %6660 = vmatpush2.msra.mxu0 %v6659
    %6661 = vmatprep.subr.mxu0 0.0
    %v6662 = vand.u32 %v5010, 4294901760
    %v6663 = vsub.f32 %v5010, %v6662
    %v6664 = vand.u32 %v6663, 4294901760
    %6665 = vmatpush2.msra.mxu0 %v6664
    %6666 = vmatprep.subr.mxu0 0.0
    %v6667 = vand.u32 %v5009, 4294901760
    %v6668 = vsub.f32 %v5009, %v6667
    %v6669 = vand.u32 %v6668, 4294901760
    %6670 = vmatpush2.msra.mxu0 %v6669
    %6671 = vmatprep.subr.mxu0 0.0
    %v6672 = vand.u32 %v5008, 4294901760
    %v6673 = vsub.f32 %v5008, %v6672
    %v6674 = vand.u32 %v6673, 4294901760
    %6675 = vmatpush2.msra.mxu0 %v6674
    %6676 = vmatprep.subr.mxu0 0.0
    %v6677 = vand.u32 %v5007, 4294901760
    %v6678 = vsub.f32 %v5007, %v6677
    %v6679 = vand.u32 %v6678, 4294901760
    %6680 = vmatpush2.msra.mxu0 %v6679
    %6681 = vmatprep.subr.mxu0 0.0
    %v6682 = vand.u32 %v5006, 4294901760
    %v6683 = vsub.f32 %v5006, %v6682
    %v6684 = vand.u32 %v6683, 4294901760
    %6685 = vmatpush2.msra.mxu0 %v6684
    %6686 = vmatprep.subr.mxu0 0.0
    %v6687 = vand.u32 %v5005, 4294901760
    %v6688 = vsub.f32 %v5005, %v6687
    %v6689 = vand.u32 %v6688, 4294901760
    %6690 = vmatpush2.msra.mxu0 %v6689
    %6691 = vmatprep.subr.mxu0 0.0
    %v6692 = vand.u32 %v5004, 4294901760
    %v6693 = vsub.f32 %v5004, %v6692
    %v6694 = vand.u32 %v6693, 4294901760
    %6695 = vmatpush2.msra.mxu0 %v6694
    %v6696 = vand.u32 %v4947, 4294901760
    %6697 = vmatprep.mubr.f32.mxu0 %v6696
    %v6698 = vand.u32 %v4945, 4294901760
    %6699 = vmatmul.mubr.f32.gmra.mxu0 %v6698
    %v6700 = vpop.f32.mrf.mxu0
    %v6701 = vadd.f32 %v6533, %v6700
    %v6702 = vpop.f32.mrf.mxu0
    %6703 = vdwg.mxu0
    %6704 = vmatprep.subr.mxu0 0.0
    %v6705 = vand.u32 %v5003, 4294901760
    %6706 = vmatpush1.msra.mxu0 %v6705
    %6707 = vmatprep.subr.mxu0 0.0
    %v6708 = vand.u32 %v5002, 4294901760
    %6709 = vmatpush1.msra.mxu0 %v6708
    %6710 = vmatprep.subr.mxu0 0.0
    %v6711 = vand.u32 %v5001, 4294901760
    %6712 = vmatpush1.msra.mxu0 %v6711
    %6713 = vmatprep.subr.mxu0 0.0
    %v6714 = vand.u32 %v5000, 4294901760
    %6715 = vmatpush1.msra.mxu0 %v6714
    %6716 = vmatprep.subr.mxu0 0.0
    %v6717 = vand.u32 %v4999, 4294901760
    %6718 = vmatpush1.msra.mxu0 %v6717
    %6719 = vmatprep.subr.mxu0 0.0
    %v6720 = vand.u32 %v4998, 4294901760
    %6721 = vmatpush1.msra.mxu0 %v6720
    %6722 = vmatprep.subr.mxu0 0.0
    %v6723 = vand.u32 %v4997, 4294901760
    %6724 = vmatpush1.msra.mxu0 %v6723
    %6725 = vmatprep.subr.mxu0 0.0
    %v6726 = vand.u32 %v4996, 4294901760
    %6727 = vmatpush1.msra.mxu0 %v6726
    %6728 = vmatprep.subr.mxu0 0.0
    %v6729 = vand.u32 %v4995, 4294901760
    %6730 = vmatpush1.msra.mxu0 %v6729
    %6731 = vmatprep.subr.mxu0 0.0
    %v6732 = vand.u32 %v4994, 4294901760
    %6733 = vmatpush1.msra.mxu0 %v6732
    %6734 = vmatprep.subr.mxu0 0.0
    %v6735 = vand.u32 %v4993, 4294901760
    %6736 = vmatpush1.msra.mxu0 %v6735
    %6737 = vmatprep.subr.mxu0 0.0
    %v6738 = vand.u32 %v4992, 4294901760
    %6739 = vmatpush1.msra.mxu0 %v6738
    %6740 = vmatprep.subr.mxu0 0.0
    %v6741 = vand.u32 %v4991, 4294901760
    %6742 = vmatpush1.msra.mxu0 %v6741
    %6743 = vmatprep.subr.mxu0 0.0
    %v6744 = vand.u32 %v4990, 4294901760
    %6745 = vmatpush1.msra.mxu0 %v6744
    %6746 = vmatprep.subr.mxu0 0.0
    %v6747 = vand.u32 %v4989, 4294901760
    %6748 = vmatpush1.msra.mxu0 %v6747
    %6749 = vmatprep.subr.mxu0 0.0
    %v6750 = vand.u32 %v4988, 4294901760
    %6751 = vmatpush1.msra.mxu0 %v6750
    %6752 = vmatprep.subr.mxu0 0.0
    %v6753 = vand.u32 %v5019, 4294901760
    %6754 = vmatpush2.msra.mxu0 %v6753
    %6755 = vmatprep.subr.mxu0 0.0
    %v6756 = vand.u32 %v5018, 4294901760
    %6757 = vmatpush2.msra.mxu0 %v6756
    %6758 = vmatprep.subr.mxu0 0.0
    %v6759 = vand.u32 %v5017, 4294901760
    %6760 = vmatpush2.msra.mxu0 %v6759
    %6761 = vmatprep.subr.mxu0 0.0
    %v6762 = vand.u32 %v5016, 4294901760
    %6763 = vmatpush2.msra.mxu0 %v6762
    %6764 = vmatprep.subr.mxu0 0.0
    %v6765 = vand.u32 %v5015, 4294901760
    %6766 = vmatpush2.msra.mxu0 %v6765
    %6767 = vmatprep.subr.mxu0 0.0
    %v6768 = vand.u32 %v5014, 4294901760
    %6769 = vmatpush2.msra.mxu0 %v6768
    %6770 = vmatprep.subr.mxu0 0.0
    %v6771 = vand.u32 %v5013, 4294901760
    %6772 = vmatpush2.msra.mxu0 %v6771
    %6773 = vmatprep.subr.mxu0 0.0
    %v6774 = vand.u32 %v5012, 4294901760
    %6775 = vmatpush2.msra.mxu0 %v6774
    %6776 = vmatprep.subr.mxu0 0.0
    %v6777 = vand.u32 %v5011, 4294901760
    %6778 = vmatpush2.msra.mxu0 %v6777
    %6779 = vmatprep.subr.mxu0 0.0
    %v6780 = vand.u32 %v5010, 4294901760
    %6781 = vmatpush2.msra.mxu0 %v6780
    %6782 = vmatprep.subr.mxu0 0.0
    %v6783 = vand.u32 %v5009, 4294901760
    %6784 = vmatpush2.msra.mxu0 %v6783
    %6785 = vmatprep.subr.mxu0 0.0
    %v6786 = vand.u32 %v5008, 4294901760
    %6787 = vmatpush2.msra.mxu0 %v6786
    %6788 = vmatprep.subr.mxu0 0.0
    %v6789 = vand.u32 %v5007, 4294901760
    %6790 = vmatpush2.msra.mxu0 %v6789
    %6791 = vmatprep.subr.mxu0 0.0
    %v6792 = vand.u32 %v5006, 4294901760
    %6793 = vmatpush2.msra.mxu0 %v6792
    %6794 = vmatprep.subr.mxu0 0.0
    %v6795 = vand.u32 %v5005, 4294901760
    %6796 = vmatpush2.msra.mxu0 %v6795
    %6797 = vmatprep.subr.mxu0 0.0
    %v6798 = vand.u32 %v5004, 4294901760
    %6799 = vmatpush2.msra.mxu0 %v6798
    %v6800 = vand.u32 %v4947, 4294901760
    %6801 = vmatprep.mubr.f32.mxu0 %v6800
    %v6802 = vand.u32 %v4945, 4294901760
    %6803 = vmatmul.mubr.f32.gmra.mxu0 %v6802
    %v6804 = vpop.f32.mrf.mxu0
    %v6805 = vadd.f32 %v6701, %v6804
    %v6806 = vpop.f32.mrf.mxu0
    %6807 = vdwg.mxu0
    %6808 = vmatprep.subr.mxu0 0.0
    %v6809 = vand.u32 %v5035, 4294901760
    %6810 = vmatpush1.msra.mxu0 %v6809
    %6811 = vmatprep.subr.mxu0 0.0
    %v6812 = vand.u32 %v5034, 4294901760
    %6813 = vmatpush1.msra.mxu0 %v6812
    %6814 = vmatprep.subr.mxu0 0.0
    %v6815 = vand.u32 %v5033, 4294901760
    %6816 = vmatpush1.msra.mxu0 %v6815
    %6817 = vmatprep.subr.mxu0 0.0
    %v6818 = vand.u32 %v5032, 4294901760
    %6819 = vmatpush1.msra.mxu0 %v6818
    %6820 = vmatprep.subr.mxu0 0.0
    %v6821 = vand.u32 %v5031, 4294901760
    %6822 = vmatpush1.msra.mxu0 %v6821
    %6823 = vmatprep.subr.mxu0 0.0
    %v6824 = vand.u32 %v5030, 4294901760
    %6825 = vmatpush1.msra.mxu0 %v6824
    %6826 = vmatprep.subr.mxu0 0.0
    %v6827 = vand.u32 %v5029, 4294901760
    %6828 = vmatpush1.msra.mxu0 %v6827
    %6829 = vmatprep.subr.mxu0 0.0
    %v6830 = vand.u32 %v5028, 4294901760
    %6831 = vmatpush1.msra.mxu0 %v6830
    %6832 = vmatprep.subr.mxu0 0.0
    %v6833 = vand.u32 %v5027, 4294901760
    %6834 = vmatpush1.msra.mxu0 %v6833
    %6835 = vmatprep.subr.mxu0 0.0
    %v6836 = vand.u32 %v5026, 4294901760
    %6837 = vmatpush1.msra.mxu0 %v6836
    %6838 = vmatprep.subr.mxu0 0.0
    %v6839 = vand.u32 %v5025, 4294901760
    %6840 = vmatpush1.msra.mxu0 %v6839
    %6841 = vmatprep.subr.mxu0 0.0
    %v6842 = vand.u32 %v5024, 4294901760
    %6843 = vmatpush1.msra.mxu0 %v6842
    %6844 = vmatprep.subr.mxu0 0.0
    %v6845 = vand.u32 %v5023, 4294901760
    %6846 = vmatpush1.msra.mxu0 %v6845
    %6847 = vmatprep.subr.mxu0 0.0
    %v6848 = vand.u32 %v5022, 4294901760
    %6849 = vmatpush1.msra.mxu0 %v6848
    %6850 = vmatprep.subr.mxu0 0.0
    %v6851 = vand.u32 %v5021, 4294901760
    %6852 = vmatpush1.msra.mxu0 %v6851
    %6853 = vmatprep.subr.mxu0 0.0
    %v6854 = vand.u32 %v5020, 4294901760
    %6855 = vmatpush1.msra.mxu0 %v6854
    %6856 = vmatprep.subr.mxu0 0.0
    %v6857 = vand.u32 %v5051, 4294901760
    %6858 = vmatpush2.msra.mxu0 %v6857
    %6859 = vmatprep.subr.mxu0 0.0
    %v6860 = vand.u32 %v5050, 4294901760
    %6861 = vmatpush2.msra.mxu0 %v6860
    %6862 = vmatprep.subr.mxu0 0.0
    %v6863 = vand.u32 %v5049, 4294901760
    %6864 = vmatpush2.msra.mxu0 %v6863
    %6865 = vmatprep.subr.mxu0 0.0
    %v6866 = vand.u32 %v5048, 4294901760
    %6867 = vmatpush2.msra.mxu0 %v6866
    %6868 = vmatprep.subr.mxu0 0.0
    %v6869 = vand.u32 %v5047, 4294901760
    %6870 = vmatpush2.msra.mxu0 %v6869
    %6871 = vmatprep.subr.mxu0 0.0
    %v6872 = vand.u32 %v5046, 4294901760
    %6873 = vmatpush2.msra.mxu0 %v6872
    %6874 = vmatprep.subr.mxu0 0.0
    %v6875 = vand.u32 %v5045, 4294901760
    %6876 = vmatpush2.msra.mxu0 %v6875
    %6877 = vmatprep.subr.mxu0 0.0
    %v6878 = vand.u32 %v5044, 4294901760
    %6879 = vmatpush2.msra.mxu0 %v6878
    %6880 = vmatprep.subr.mxu0 0.0
    %v6881 = vand.u32 %v5043, 4294901760
    %6882 = vmatpush2.msra.mxu0 %v6881
    %6883 = vmatprep.subr.mxu0 0.0
    %v6884 = vand.u32 %v5042, 4294901760
    %6885 = vmatpush2.msra.mxu0 %v6884
    %6886 = vmatprep.subr.mxu0 0.0
    %v6887 = vand.u32 %v5041, 4294901760
    %6888 = vmatpush2.msra.mxu0 %v6887
    %6889 = vmatprep.subr.mxu0 0.0
    %v6890 = vand.u32 %v5040, 4294901760
    %6891 = vmatpush2.msra.mxu0 %v6890
    %6892 = vmatprep.subr.mxu0 0.0
    %v6893 = vand.u32 %v5039, 4294901760
    %6894 = vmatpush2.msra.mxu0 %v6893
    %6895 = vmatprep.subr.mxu0 0.0
    %v6896 = vand.u32 %v5038, 4294901760
    %6897 = vmatpush2.msra.mxu0 %v6896
    %6898 = vmatprep.subr.mxu0 0.0
    %v6899 = vand.u32 %v5037, 4294901760
    %6900 = vmatpush2.msra.mxu0 %v6899
    %6901 = vmatprep.subr.mxu0 0.0
    %v6902 = vand.u32 %v5036, 4294901760
    %6903 = vmatpush2.msra.mxu0 %v6902
    %v6904 = vand.u32 %v4950, 4294901760
    %v6905 = vsub.f32 %v4950, %v6904
    %v6906 = vand.u32 %v6905, 4294901760
    %v6907 = vsub.f32 %v6905, %v6906
    %v6908 = vand.u32 %v6907, 4294901760
    %6909 = vmatprep.mubr.f32.mxu0 %v6908
    %v6910 = vand.u32 %v4454, 4294901760
    %v6911 = vsub.f32 %v4454, %v6910
    %v6912 = vand.u32 %v6911, 4294901760
    %v6913 = vsub.f32 %v6911, %v6912
    %v6914 = vand.u32 %v6913, 4294901760
    %6915 = vmatmul.mubr.f32.gmra.mxu0 %v6914
    %v6916 = vpop.f32.mrf.mxu0
    %v6917 = vadd.f32 %v6805, %v6916
    %v6918 = vpop.f32.mrf.mxu0
    %6919 = vdwg.mxu0
    %6920 = vmatprep.subr.mxu0 0.0
    %v6921 = vand.u32 %v5035, 4294901760
    %v6922 = vsub.f32 %v5035, %v6921
    %v6923 = vand.u32 %v6922, 4294901760
    %v6924 = vsub.f32 %v6922, %v6923
    %v6925 = vand.u32 %v6924, 4294901760
    %6926 = vmatpush1.msra.mxu0 %v6925
    %6927 = vmatprep.subr.mxu0 0.0
    %v6928 = vand.u32 %v5034, 4294901760
    %v6929 = vsub.f32 %v5034, %v6928
    %v6930 = vand.u32 %v6929, 4294901760
    %v6931 = vsub.f32 %v6929, %v6930
    %v6932 = vand.u32 %v6931, 4294901760
    %6933 = vmatpush1.msra.mxu0 %v6932
    %6934 = vmatprep.subr.mxu0 0.0
    %v6935 = vand.u32 %v5033, 4294901760
    %v6936 = vsub.f32 %v5033, %v6935
    %v6937 = vand.u32 %v6936, 4294901760
    %v6938 = vsub.f32 %v6936, %v6937
    %v6939 = vand.u32 %v6938, 4294901760
    %6940 = vmatpush1.msra.mxu0 %v6939
    %6941 = vmatprep.subr.mxu0 0.0
    %v6942 = vand.u32 %v5032, 4294901760
    %v6943 = vsub.f32 %v5032, %v6942
    %v6944 = vand.u32 %v6943, 4294901760
    %v6945 = vsub.f32 %v6943, %v6944
    %v6946 = vand.u32 %v6945, 4294901760
    %6947 = vmatpush1.msra.mxu0 %v6946
    %6948 = vmatprep.subr.mxu0 0.0
    %v6949 = vand.u32 %v5031, 4294901760
    %v6950 = vsub.f32 %v5031, %v6949
    %v6951 = vand.u32 %v6950, 4294901760
    %v6952 = vsub.f32 %v6950, %v6951
    %v6953 = vand.u32 %v6952, 4294901760
    %6954 = vmatpush1.msra.mxu0 %v6953
    %6955 = vmatprep.subr.mxu0 0.0
    %v6956 = vand.u32 %v5030, 4294901760
    %v6957 = vsub.f32 %v5030, %v6956
    %v6958 = vand.u32 %v6957, 4294901760
    %v6959 = vsub.f32 %v6957, %v6958
    %v6960 = vand.u32 %v6959, 4294901760
    %6961 = vmatpush1.msra.mxu0 %v6960
    %6962 = vmatprep.subr.mxu0 0.0
    %v6963 = vand.u32 %v5029, 4294901760
    %v6964 = vsub.f32 %v5029, %v6963
    %v6965 = vand.u32 %v6964, 4294901760
    %v6966 = vsub.f32 %v6964, %v6965
    %v6967 = vand.u32 %v6966, 4294901760
    %6968 = vmatpush1.msra.mxu0 %v6967
    %6969 = vmatprep.subr.mxu0 0.0
    %v6970 = vand.u32 %v5028, 4294901760
    %v6971 = vsub.f32 %v5028, %v6970
    %v6972 = vand.u32 %v6971, 4294901760
    %v6973 = vsub.f32 %v6971, %v6972
    %v6974 = vand.u32 %v6973, 4294901760
    %6975 = vmatpush1.msra.mxu0 %v6974
    %6976 = vmatprep.subr.mxu0 0.0
    %v6977 = vand.u32 %v5027, 4294901760
    %v6978 = vsub.f32 %v5027, %v6977
    %v6979 = vand.u32 %v6978, 4294901760
    %v6980 = vsub.f32 %v6978, %v6979
    %v6981 = vand.u32 %v6980, 4294901760
    %6982 = vmatpush1.msra.mxu0 %v6981
    %6983 = vmatprep.subr.mxu0 0.0
    %v6984 = vand.u32 %v5026, 4294901760
    %v6985 = vsub.f32 %v5026, %v6984
    %v6986 = vand.u32 %v6985, 4294901760
    %v6987 = vsub.f32 %v6985, %v6986
    %v6988 = vand.u32 %v6987, 4294901760
    %6989 = vmatpush1.msra.mxu0 %v6988
    %6990 = vmatprep.subr.mxu0 0.0
    %v6991 = vand.u32 %v5025, 4294901760
    %v6992 = vsub.f32 %v5025, %v6991
    %v6993 = vand.u32 %v6992, 4294901760
    %v6994 = vsub.f32 %v6992, %v6993
    %v6995 = vand.u32 %v6994, 4294901760
    %6996 = vmatpush1.msra.mxu0 %v6995
    %6997 = vmatprep.subr.mxu0 0.0
    %v6998 = vand.u32 %v5024, 4294901760
    %v6999 = vsub.f32 %v5024, %v6998
    %v7000 = vand.u32 %v6999, 4294901760
    %v7001 = vsub.f32 %v6999, %v7000
    %v7002 = vand.u32 %v7001, 4294901760
    %7003 = vmatpush1.msra.mxu0 %v7002
    %7004 = vmatprep.subr.mxu0 0.0
    %v7005 = vand.u32 %v5023, 4294901760
    %v7006 = vsub.f32 %v5023, %v7005
    %v7007 = vand.u32 %v7006, 4294901760
    %v7008 = vsub.f32 %v7006, %v7007
    %v7009 = vand.u32 %v7008, 4294901760
    %7010 = vmatpush1.msra.mxu0 %v7009
    %7011 = vmatprep.subr.mxu0 0.0
    %v7012 = vand.u32 %v5022, 4294901760
    %v7013 = vsub.f32 %v5022, %v7012
    %v7014 = vand.u32 %v7013, 4294901760
    %v7015 = vsub.f32 %v7013, %v7014
    %v7016 = vand.u32 %v7015, 4294901760
    %7017 = vmatpush1.msra.mxu0 %v7016
    %7018 = vmatprep.subr.mxu0 0.0
    %v7019 = vand.u32 %v5021, 4294901760
    %v7020 = vsub.f32 %v5021, %v7019
    %v7021 = vand.u32 %v7020, 4294901760
    %v7022 = vsub.f32 %v7020, %v7021
    %v7023 = vand.u32 %v7022, 4294901760
    %7024 = vmatpush1.msra.mxu0 %v7023
    %7025 = vmatprep.subr.mxu0 0.0
    %v7026 = vand.u32 %v5020, 4294901760
    %v7027 = vsub.f32 %v5020, %v7026
    %v7028 = vand.u32 %v7027, 4294901760
    %v7029 = vsub.f32 %v7027, %v7028
    %v7030 = vand.u32 %v7029, 4294901760
    %7031 = vmatpush1.msra.mxu0 %v7030
    %7032 = vmatprep.subr.mxu0 0.0
    %v7033 = vand.u32 %v5051, 4294901760
    %v7034 = vsub.f32 %v5051, %v7033
    %v7035 = vand.u32 %v7034, 4294901760
    %v7036 = vsub.f32 %v7034, %v7035
    %v7037 = vand.u32 %v7036, 4294901760
    %7038 = vmatpush2.msra.mxu0 %v7037
    %7039 = vmatprep.subr.mxu0 0.0
    %v7040 = vand.u32 %v5050, 4294901760
    %v7041 = vsub.f32 %v5050, %v7040
    %v7042 = vand.u32 %v7041, 4294901760
    %v7043 = vsub.f32 %v7041, %v7042
    %v7044 = vand.u32 %v7043, 4294901760
    %7045 = vmatpush2.msra.mxu0 %v7044
    %7046 = vmatprep.subr.mxu0 0.0
    %v7047 = vand.u32 %v5049, 4294901760
    %v7048 = vsub.f32 %v5049, %v7047
    %v7049 = vand.u32 %v7048, 4294901760
    %v7050 = vsub.f32 %v7048, %v7049
    %v7051 = vand.u32 %v7050, 4294901760
    %7052 = vmatpush2.msra.mxu0 %v7051
    %7053 = vmatprep.subr.mxu0 0.0
    %v7054 = vand.u32 %v5048, 4294901760
    %v7055 = vsub.f32 %v5048, %v7054
    %v7056 = vand.u32 %v7055, 4294901760
    %v7057 = vsub.f32 %v7055, %v7056
    %v7058 = vand.u32 %v7057, 4294901760
    %7059 = vmatpush2.msra.mxu0 %v7058
    %7060 = vmatprep.subr.mxu0 0.0
    %v7061 = vand.u32 %v5047, 4294901760
    %v7062 = vsub.f32 %v5047, %v7061
    %v7063 = vand.u32 %v7062, 4294901760
    %v7064 = vsub.f32 %v7062, %v7063
    %v7065 = vand.u32 %v7064, 4294901760
    %7066 = vmatpush2.msra.mxu0 %v7065
    %7067 = vmatprep.subr.mxu0 0.0
    %v7068 = vand.u32 %v5046, 4294901760
    %v7069 = vsub.f32 %v5046, %v7068
    %v7070 = vand.u32 %v7069, 4294901760
    %v7071 = vsub.f32 %v7069, %v7070
    %v7072 = vand.u32 %v7071, 4294901760
    %7073 = vmatpush2.msra.mxu0 %v7072
    %7074 = vmatprep.subr.mxu0 0.0
    %v7075 = vand.u32 %v5045, 4294901760
    %v7076 = vsub.f32 %v5045, %v7075
    %v7077 = vand.u32 %v7076, 4294901760
    %v7078 = vsub.f32 %v7076, %v7077
    %v7079 = vand.u32 %v7078, 4294901760
    %7080 = vmatpush2.msra.mxu0 %v7079
    %7081 = vmatprep.subr.mxu0 0.0
    %v7082 = vand.u32 %v5044, 4294901760
    %v7083 = vsub.f32 %v5044, %v7082
    %v7084 = vand.u32 %v7083, 4294901760
    %v7085 = vsub.f32 %v7083, %v7084
    %v7086 = vand.u32 %v7085, 4294901760
    %7087 = vmatpush2.msra.mxu0 %v7086
    %7088 = vmatprep.subr.mxu0 0.0
    %v7089 = vand.u32 %v5043, 4294901760
    %v7090 = vsub.f32 %v5043, %v7089
    %v7091 = vand.u32 %v7090, 4294901760
    %v7092 = vsub.f32 %v7090, %v7091
    %v7093 = vand.u32 %v7092, 4294901760
    %7094 = vmatpush2.msra.mxu0 %v7093
    %7095 = vmatprep.subr.mxu0 0.0
    %v7096 = vand.u32 %v5042, 4294901760
    %v7097 = vsub.f32 %v5042, %v7096
    %v7098 = vand.u32 %v7097, 4294901760
    %v7099 = vsub.f32 %v7097, %v7098
    %v7100 = vand.u32 %v7099, 4294901760
    %7101 = vmatpush2.msra.mxu0 %v7100
    %7102 = vmatprep.subr.mxu0 0.0
    %v7103 = vand.u32 %v5041, 4294901760
    %v7104 = vsub.f32 %v5041, %v7103
    %v7105 = vand.u32 %v7104, 4294901760
    %v7106 = vsub.f32 %v7104, %v7105
    %v7107 = vand.u32 %v7106, 4294901760
    %7108 = vmatpush2.msra.mxu0 %v7107
    %7109 = vmatprep.subr.mxu0 0.0
    %v7110 = vand.u32 %v5040, 4294901760
    %v7111 = vsub.f32 %v5040, %v7110
    %v7112 = vand.u32 %v7111, 4294901760
    %v7113 = vsub.f32 %v7111, %v7112
    %v7114 = vand.u32 %v7113, 4294901760
    %7115 = vmatpush2.msra.mxu0 %v7114
    %7116 = vmatprep.subr.mxu0 0.0
    %v7117 = vand.u32 %v5039, 4294901760
    %v7118 = vsub.f32 %v5039, %v7117
    %v7119 = vand.u32 %v7118, 4294901760
    %v7120 = vsub.f32 %v7118, %v7119
    %v7121 = vand.u32 %v7120, 4294901760
    %7122 = vmatpush2.msra.mxu0 %v7121
    %7123 = vmatprep.subr.mxu0 0.0
    %v7124 = vand.u32 %v5038, 4294901760
    %v7125 = vsub.f32 %v5038, %v7124
    %v7126 = vand.u32 %v7125, 4294901760
    %v7127 = vsub.f32 %v7125, %v7126
    %v7128 = vand.u32 %v7127, 4294901760
    %7129 = vmatpush2.msra.mxu0 %v7128
    %7130 = vmatprep.subr.mxu0 0.0
    %v7131 = vand.u32 %v5037, 4294901760
    %v7132 = vsub.f32 %v5037, %v7131
    %v7133 = vand.u32 %v7132, 4294901760
    %v7134 = vsub.f32 %v7132, %v7133
    %v7135 = vand.u32 %v7134, 4294901760
    %7136 = vmatpush2.msra.mxu0 %v7135
    %7137 = vmatprep.subr.mxu0 0.0
    %v7138 = vand.u32 %v5036, 4294901760
    %v7139 = vsub.f32 %v5036, %v7138
    %v7140 = vand.u32 %v7139, 4294901760
    %v7141 = vsub.f32 %v7139, %v7140
    %v7142 = vand.u32 %v7141, 4294901760
    %7143 = vmatpush2.msra.mxu0 %v7142
    %v7144 = vand.u32 %v4950, 4294901760
    %7145 = vmatprep.mubr.f32.mxu0 %v7144
    %v7146 = vand.u32 %v4454, 4294901760
    %7147 = vmatmul.mubr.f32.gmra.mxu0 %v7146
    %v7148 = vpop.f32.mrf.mxu0
    %v7149 = vadd.f32 %v6917, %v7148
    %v7150 = vpop.f32.mrf.mxu0
    %7151 = vdwg.mxu0
    %7152 = vmatprep.subr.mxu0 0.0
    %v7153 = vand.u32 %v5035, 4294901760
    %v7154 = vsub.f32 %v5035, %v7153
    %7155 = vmatpush1.msra.mxu0 %v7154
    %7156 = vmatprep.subr.mxu0 0.0
    %v7157 = vand.u32 %v5034, 4294901760
    %v7158 = vsub.f32 %v5034, %v7157
    %7159 = vmatpush1.msra.mxu0 %v7158
    %7160 = vmatprep.subr.mxu0 0.0
    %v7161 = vand.u32 %v5033, 4294901760
    %v7162 = vsub.f32 %v5033, %v7161
    %7163 = vmatpush1.msra.mxu0 %v7162
    %7164 = vmatprep.subr.mxu0 0.0
    %v7165 = vand.u32 %v5032, 4294901760
    %v7166 = vsub.f32 %v5032, %v7165
    %7167 = vmatpush1.msra.mxu0 %v7166
    %7168 = vmatprep.subr.mxu0 0.0
    %v7169 = vand.u32 %v5031, 4294901760
    %v7170 = vsub.f32 %v5031, %v7169
    %7171 = vmatpush1.msra.mxu0 %v7170
    %7172 = vmatprep.subr.mxu0 0.0
    %v7173 = vand.u32 %v5030, 4294901760
    %v7174 = vsub.f32 %v5030, %v7173
    %7175 = vmatpush1.msra.mxu0 %v7174
    %7176 = vmatprep.subr.mxu0 0.0
    %v7177 = vand.u32 %v5029, 4294901760
    %v7178 = vsub.f32 %v5029, %v7177
    %7179 = vmatpush1.msra.mxu0 %v7178
    %7180 = vmatprep.subr.mxu0 0.0
    %v7181 = vand.u32 %v5028, 4294901760
    %v7182 = vsub.f32 %v5028, %v7181
    %7183 = vmatpush1.msra.mxu0 %v7182
    %7184 = vmatprep.subr.mxu0 0.0
    %v7185 = vand.u32 %v5027, 4294901760
    %v7186 = vsub.f32 %v5027, %v7185
    %7187 = vmatpush1.msra.mxu0 %v7186
    %7188 = vmatprep.subr.mxu0 0.0
    %v7189 = vand.u32 %v5026, 4294901760
    %v7190 = vsub.f32 %v5026, %v7189
    %7191 = vmatpush1.msra.mxu0 %v7190
    %7192 = vmatprep.subr.mxu0 0.0
    %v7193 = vand.u32 %v5025, 4294901760
    %v7194 = vsub.f32 %v5025, %v7193
    %7195 = vmatpush1.msra.mxu0 %v7194
    %7196 = vmatprep.subr.mxu0 0.0
    %v7197 = vand.u32 %v5024, 4294901760
    %v7198 = vsub.f32 %v5024, %v7197
    %7199 = vmatpush1.msra.mxu0 %v7198
    %7200 = vmatprep.subr.mxu0 0.0
    %v7201 = vand.u32 %v5023, 4294901760
    %v7202 = vsub.f32 %v5023, %v7201
    %7203 = vmatpush1.msra.mxu0 %v7202
    %7204 = vmatprep.subr.mxu0 0.0
    %v7205 = vand.u32 %v5022, 4294901760
    %v7206 = vsub.f32 %v5022, %v7205
    %7207 = vmatpush1.msra.mxu0 %v7206
    %7208 = vmatprep.subr.mxu0 0.0
    %v7209 = vand.u32 %v5021, 4294901760
    %v7210 = vsub.f32 %v5021, %v7209
    %7211 = vmatpush1.msra.mxu0 %v7210
    %7212 = vmatprep.subr.mxu0 0.0
    %v7213 = vand.u32 %v5020, 4294901760
    %v7214 = vsub.f32 %v5020, %v7213
    %7215 = vmatpush1.msra.mxu0 %v7214
    %7216 = vmatprep.subr.mxu0 0.0
    %v7217 = vand.u32 %v5051, 4294901760
    %v7218 = vsub.f32 %v5051, %v7217
    %7219 = vmatpush2.msra.mxu0 %v7218
    %7220 = vmatprep.subr.mxu0 0.0
    %v7221 = vand.u32 %v5050, 4294901760
    %v7222 = vsub.f32 %v5050, %v7221
    %7223 = vmatpush2.msra.mxu0 %v7222
    %7224 = vmatprep.subr.mxu0 0.0
    %v7225 = vand.u32 %v5049, 4294901760
    %v7226 = vsub.f32 %v5049, %v7225
    %7227 = vmatpush2.msra.mxu0 %v7226
    %7228 = vmatprep.subr.mxu0 0.0
    %v7229 = vand.u32 %v5048, 4294901760
    %v7230 = vsub.f32 %v5048, %v7229
    %7231 = vmatpush2.msra.mxu0 %v7230
    %7232 = vmatprep.subr.mxu0 0.0
    %v7233 = vand.u32 %v5047, 4294901760
    %v7234 = vsub.f32 %v5047, %v7233
    %7235 = vmatpush2.msra.mxu0 %v7234
    %7236 = vmatprep.subr.mxu0 0.0
    %v7237 = vand.u32 %v5046, 4294901760
    %v7238 = vsub.f32 %v5046, %v7237
    %7239 = vmatpush2.msra.mxu0 %v7238
    %7240 = vmatprep.subr.mxu0 0.0
    %v7241 = vand.u32 %v5045, 4294901760
    %v7242 = vsub.f32 %v5045, %v7241
    %7243 = vmatpush2.msra.mxu0 %v7242
    %7244 = vmatprep.subr.mxu0 0.0
    %v7245 = vand.u32 %v5044, 4294901760
    %v7246 = vsub.f32 %v5044, %v7245
    %7247 = vmatpush2.msra.mxu0 %v7246
    %7248 = vmatprep.subr.mxu0 0.0
    %v7249 = vand.u32 %v5043, 4294901760
    %v7250 = vsub.f32 %v5043, %v7249
    %7251 = vmatpush2.msra.mxu0 %v7250
    %7252 = vmatprep.subr.mxu0 0.0
    %v7253 = vand.u32 %v5042, 4294901760
    %v7254 = vsub.f32 %v5042, %v7253
    %7255 = vmatpush2.msra.mxu0 %v7254
    %7256 = vmatprep.subr.mxu0 0.0
    %v7257 = vand.u32 %v5041, 4294901760
    %v7258 = vsub.f32 %v5041, %v7257
    %7259 = vmatpush2.msra.mxu0 %v7258
    %7260 = vmatprep.subr.mxu0 0.0
    %v7261 = vand.u32 %v5040, 4294901760
    %v7262 = vsub.f32 %v5040, %v7261
    %7263 = vmatpush2.msra.mxu0 %v7262
    %7264 = vmatprep.subr.mxu0 0.0
    %v7265 = vand.u32 %v5039, 4294901760
    %v7266 = vsub.f32 %v5039, %v7265
    %7267 = vmatpush2.msra.mxu0 %v7266
    %7268 = vmatprep.subr.mxu0 0.0
    %v7269 = vand.u32 %v5038, 4294901760
    %v7270 = vsub.f32 %v5038, %v7269
    %7271 = vmatpush2.msra.mxu0 %v7270
    %7272 = vmatprep.subr.mxu0 0.0
    %v7273 = vand.u32 %v5037, 4294901760
    %v7274 = vsub.f32 %v5037, %v7273
    %7275 = vmatpush2.msra.mxu0 %v7274
    %7276 = vmatprep.subr.mxu0 0.0
    %v7277 = vand.u32 %v5036, 4294901760
    %v7278 = vsub.f32 %v5036, %v7277
    %7279 = vmatpush2.msra.mxu0 %v7278
    %v7280 = vand.u32 %v4950, 4294901760
    %v7281 = vsub.f32 %v4950, %v7280
    %7282 = vmatprep.mubr.f32.mxu0 %v7281
    %v7283 = vand.u32 %v4454, 4294901760
    %v7284 = vsub.f32 %v4454, %v7283
    %7285 = vmatmul.mubr.f32.gmra.mxu0 %v7284
    %v7286 = vpop.f32.mrf.mxu0
    %v7287 = vadd.f32 %v7149, %v7286
    %v7288 = vpop.f32.mrf.mxu0
    %7289 = vdwg.mxu0
    %7290 = vmatprep.subr.mxu0 0.0
    %v7291 = vand.u32 %v5035, 4294901760
    %7292 = vmatpush1.msra.mxu0 %v7291
    %7293 = vmatprep.subr.mxu0 0.0
    %v7294 = vand.u32 %v5034, 4294901760
    %7295 = vmatpush1.msra.mxu0 %v7294
    %7296 = vmatprep.subr.mxu0 0.0
    %v7297 = vand.u32 %v5033, 4294901760
    %7298 = vmatpush1.msra.mxu0 %v7297
    %7299 = vmatprep.subr.mxu0 0.0
    %v7300 = vand.u32 %v5032, 4294901760
    %7301 = vmatpush1.msra.mxu0 %v7300
    %7302 = vmatprep.subr.mxu0 0.0
    %v7303 = vand.u32 %v5031, 4294901760
    %7304 = vmatpush1.msra.mxu0 %v7303
    %7305 = vmatprep.subr.mxu0 0.0
    %v7306 = vand.u32 %v5030, 4294901760
    %7307 = vmatpush1.msra.mxu0 %v7306
    %7308 = vmatprep.subr.mxu0 0.0
    %v7309 = vand.u32 %v5029, 4294901760
    %7310 = vmatpush1.msra.mxu0 %v7309
    %7311 = vmatprep.subr.mxu0 0.0
    %v7312 = vand.u32 %v5028, 4294901760
    %7313 = vmatpush1.msra.mxu0 %v7312
    %7314 = vmatprep.subr.mxu0 0.0
    %v7315 = vand.u32 %v5027, 4294901760
    %7316 = vmatpush1.msra.mxu0 %v7315
    %7317 = vmatprep.subr.mxu0 0.0
    %v7318 = vand.u32 %v5026, 4294901760
    %7319 = vmatpush1.msra.mxu0 %v7318
    %7320 = vmatprep.subr.mxu0 0.0
    %v7321 = vand.u32 %v5025, 4294901760
    %7322 = vmatpush1.msra.mxu0 %v7321
    %7323 = vmatprep.subr.mxu0 0.0
    %v7324 = vand.u32 %v5024, 4294901760
    %7325 = vmatpush1.msra.mxu0 %v7324
    %7326 = vmatprep.subr.mxu0 0.0
    %v7327 = vand.u32 %v5023, 4294901760
    %7328 = vmatpush1.msra.mxu0 %v7327
    %7329 = vmatprep.subr.mxu0 0.0
    %v7330 = vand.u32 %v5022, 4294901760
    %7331 = vmatpush1.msra.mxu0 %v7330
    %7332 = vmatprep.subr.mxu0 0.0
    %v7333 = vand.u32 %v5021, 4294901760
    %7334 = vmatpush1.msra.mxu0 %v7333
    %7335 = vmatprep.subr.mxu0 0.0
    %v7336 = vand.u32 %v5020, 4294901760
    %7337 = vmatpush1.msra.mxu0 %v7336
    %7338 = vmatprep.subr.mxu0 0.0
    %v7339 = vand.u32 %v5051, 4294901760
    %7340 = vmatpush2.msra.mxu0 %v7339
    %7341 = vmatprep.subr.mxu0 0.0
    %v7342 = vand.u32 %v5050, 4294901760
    %7343 = vmatpush2.msra.mxu0 %v7342
    %7344 = vmatprep.subr.mxu0 0.0
    %v7345 = vand.u32 %v5049, 4294901760
    %7346 = vmatpush2.msra.mxu0 %v7345
    %7347 = vmatprep.subr.mxu0 0.0
    %v7348 = vand.u32 %v5048, 4294901760
    %7349 = vmatpush2.msra.mxu0 %v7348
    %7350 = vmatprep.subr.mxu0 0.0
    %v7351 = vand.u32 %v5047, 4294901760
    %7352 = vmatpush2.msra.mxu0 %v7351
    %7353 = vmatprep.subr.mxu0 0.0
    %v7354 = vand.u32 %v5046, 4294901760
    %7355 = vmatpush2.msra.mxu0 %v7354
    %7356 = vmatprep.subr.mxu0 0.0
    %v7357 = vand.u32 %v5045, 4294901760
    %7358 = vmatpush2.msra.mxu0 %v7357
    %7359 = vmatprep.subr.mxu0 0.0
    %v7360 = vand.u32 %v5044, 4294901760
    %7361 = vmatpush2.msra.mxu0 %v7360
    %7362 = vmatprep.subr.mxu0 0.0
    %v7363 = vand.u32 %v5043, 4294901760
    %7364 = vmatpush2.msra.mxu0 %v7363
    %7365 = vmatprep.subr.mxu0 0.0
    %v7366 = vand.u32 %v5042, 4294901760
    %7367 = vmatpush2.msra.mxu0 %v7366
    %7368 = vmatprep.subr.mxu0 0.0
    %v7369 = vand.u32 %v5041, 4294901760
    %7370 = vmatpush2.msra.mxu0 %v7369
    %7371 = vmatprep.subr.mxu0 0.0
    %v7372 = vand.u32 %v5040, 4294901760
    %7373 = vmatpush2.msra.mxu0 %v7372
    %7374 = vmatprep.subr.mxu0 0.0
    %v7375 = vand.u32 %v5039, 4294901760
    %7376 = vmatpush2.msra.mxu0 %v7375
    %7377 = vmatprep.subr.mxu0 0.0
    %v7378 = vand.u32 %v5038, 4294901760
    %7379 = vmatpush2.msra.mxu0 %v7378
    %7380 = vmatprep.subr.mxu0 0.0
    %v7381 = vand.u32 %v5037, 4294901760
    %7382 = vmatpush2.msra.mxu0 %v7381
    %7383 = vmatprep.subr.mxu0 0.0
    %v7384 = vand.u32 %v5036, 4294901760
    %7385 = vmatpush2.msra.mxu0 %v7384
    %v7386 = vand.u32 %v4950, 4294901760
    %v7387 = vsub.f32 %v4950, %v7386
    %v7388 = vand.u32 %v7387, 4294901760
    %7389 = vmatprep.mubr.f32.mxu0 %v7388
    %v7390 = vand.u32 %v4454, 4294901760
    %v7391 = vsub.f32 %v4454, %v7390
    %v7392 = vand.u32 %v7391, 4294901760
    %7393 = vmatmul.mubr.f32.gmra.mxu0 %v7392
    %v7394 = vpop.f32.mrf.mxu0
    %v7395 = vadd.f32 %v7287, %v7394
    %v7396 = vpop.f32.mrf.mxu0
    %7397 = vdwg.mxu0
    %7398 = vmatprep.subr.mxu0 0.0
    %v7399 = vand.u32 %v5035, 4294901760
    %v7400 = vsub.f32 %v5035, %v7399
    %v7401 = vand.u32 %v7400, 4294901760
    %7402 = vmatpush1.msra.mxu0 %v7401
    %7403 = vmatprep.subr.mxu0 0.0
    %v7404 = vand.u32 %v5034, 4294901760
    %v7405 = vsub.f32 %v5034, %v7404
    %v7406 = vand.u32 %v7405, 4294901760
    %7407 = vmatpush1.msra.mxu0 %v7406
    %7408 = vmatprep.subr.mxu0 0.0
    %v7409 = vand.u32 %v5033, 4294901760
    %v7410 = vsub.f32 %v5033, %v7409
    %v7411 = vand.u32 %v7410, 4294901760
    %7412 = vmatpush1.msra.mxu0 %v7411
    %7413 = vmatprep.subr.mxu0 0.0
    %v7414 = vand.u32 %v5032, 4294901760
    %v7415 = vsub.f32 %v5032, %v7414
    %v7416 = vand.u32 %v7415, 4294901760
    %7417 = vmatpush1.msra.mxu0 %v7416
    %7418 = vmatprep.subr.mxu0 0.0
    %v7419 = vand.u32 %v5031, 4294901760
    %v7420 = vsub.f32 %v5031, %v7419
    %v7421 = vand.u32 %v7420, 4294901760
    %7422 = vmatpush1.msra.mxu0 %v7421
    %7423 = vmatprep.subr.mxu0 0.0
    %v7424 = vand.u32 %v5030, 4294901760
    %v7425 = vsub.f32 %v5030, %v7424
    %v7426 = vand.u32 %v7425, 4294901760
    %7427 = vmatpush1.msra.mxu0 %v7426
    %7428 = vmatprep.subr.mxu0 0.0
    %v7429 = vand.u32 %v5029, 4294901760
    %v7430 = vsub.f32 %v5029, %v7429
    %v7431 = vand.u32 %v7430, 4294901760
    %7432 = vmatpush1.msra.mxu0 %v7431
    %7433 = vmatprep.subr.mxu0 0.0
    %v7434 = vand.u32 %v5028, 4294901760
    %v7435 = vsub.f32 %v5028, %v7434
    %v7436 = vand.u32 %v7435, 4294901760
    %7437 = vmatpush1.msra.mxu0 %v7436
    %7438 = vmatprep.subr.mxu0 0.0
    %v7439 = vand.u32 %v5027, 4294901760
    %v7440 = vsub.f32 %v5027, %v7439
    %v7441 = vand.u32 %v7440, 4294901760
    %7442 = vmatpush1.msra.mxu0 %v7441
    %7443 = vmatprep.subr.mxu0 0.0
    %v7444 = vand.u32 %v5026, 4294901760
    %v7445 = vsub.f32 %v5026, %v7444
    %v7446 = vand.u32 %v7445, 4294901760
    %7447 = vmatpush1.msra.mxu0 %v7446
    %7448 = vmatprep.subr.mxu0 0.0
    %v7449 = vand.u32 %v5025, 4294901760
    %v7450 = vsub.f32 %v5025, %v7449
    %v7451 = vand.u32 %v7450, 4294901760
    %7452 = vmatpush1.msra.mxu0 %v7451
    %7453 = vmatprep.subr.mxu0 0.0
    %v7454 = vand.u32 %v5024, 4294901760
    %v7455 = vsub.f32 %v5024, %v7454
    %v7456 = vand.u32 %v7455, 4294901760
    %7457 = vmatpush1.msra.mxu0 %v7456
    %7458 = vmatprep.subr.mxu0 0.0
    %v7459 = vand.u32 %v5023, 4294901760
    %v7460 = vsub.f32 %v5023, %v7459
    %v7461 = vand.u32 %v7460, 4294901760
    %7462 = vmatpush1.msra.mxu0 %v7461
    %7463 = vmatprep.subr.mxu0 0.0
    %v7464 = vand.u32 %v5022, 4294901760
    %v7465 = vsub.f32 %v5022, %v7464
    %v7466 = vand.u32 %v7465, 4294901760
    %7467 = vmatpush1.msra.mxu0 %v7466
    %7468 = vmatprep.subr.mxu0 0.0
    %v7469 = vand.u32 %v5021, 4294901760
    %v7470 = vsub.f32 %v5021, %v7469
    %v7471 = vand.u32 %v7470, 4294901760
    %7472 = vmatpush1.msra.mxu0 %v7471
    %7473 = vmatprep.subr.mxu0 0.0
    %v7474 = vand.u32 %v5020, 4294901760
    %v7475 = vsub.f32 %v5020, %v7474
    %v7476 = vand.u32 %v7475, 4294901760
    %7477 = vmatpush1.msra.mxu0 %v7476
    %7478 = vmatprep.subr.mxu0 0.0
    %v7479 = vand.u32 %v5051, 4294901760
    %v7480 = vsub.f32 %v5051, %v7479
    %v7481 = vand.u32 %v7480, 4294901760
    %7482 = vmatpush2.msra.mxu0 %v7481
    %7483 = vmatprep.subr.mxu0 0.0
    %v7484 = vand.u32 %v5050, 4294901760
    %v7485 = vsub.f32 %v5050, %v7484
    %v7486 = vand.u32 %v7485, 4294901760
    %7487 = vmatpush2.msra.mxu0 %v7486
    %7488 = vmatprep.subr.mxu0 0.0
    %v7489 = vand.u32 %v5049, 4294901760
    %v7490 = vsub.f32 %v5049, %v7489
    %v7491 = vand.u32 %v7490, 4294901760
    %7492 = vmatpush2.msra.mxu0 %v7491
    %7493 = vmatprep.subr.mxu0 0.0
    %v7494 = vand.u32 %v5048, 4294901760
    %v7495 = vsub.f32 %v5048, %v7494
    %v7496 = vand.u32 %v7495, 4294901760
    %7497 = vmatpush2.msra.mxu0 %v7496
    %7498 = vmatprep.subr.mxu0 0.0
    %v7499 = vand.u32 %v5047, 4294901760
    %v7500 = vsub.f32 %v5047, %v7499
    %v7501 = vand.u32 %v7500, 4294901760
    %7502 = vmatpush2.msra.mxu0 %v7501
    %7503 = vmatprep.subr.mxu0 0.0
    %v7504 = vand.u32 %v5046, 4294901760
    %v7505 = vsub.f32 %v5046, %v7504
    %v7506 = vand.u32 %v7505, 4294901760
    %7507 = vmatpush2.msra.mxu0 %v7506
    %7508 = vmatprep.subr.mxu0 0.0
    %v7509 = vand.u32 %v5045, 4294901760
    %v7510 = vsub.f32 %v5045, %v7509
    %v7511 = vand.u32 %v7510, 4294901760
    %7512 = vmatpush2.msra.mxu0 %v7511
    %7513 = vmatprep.subr.mxu0 0.0
    %v7514 = vand.u32 %v5044, 4294901760
    %v7515 = vsub.f32 %v5044, %v7514
    %v7516 = vand.u32 %v7515, 4294901760
    %7517 = vmatpush2.msra.mxu0 %v7516
    %7518 = vmatprep.subr.mxu0 0.0
    %v7519 = vand.u32 %v5043, 4294901760
    %v7520 = vsub.f32 %v5043, %v7519
    %v7521 = vand.u32 %v7520, 4294901760
    %7522 = vmatpush2.msra.mxu0 %v7521
    %7523 = vmatprep.subr.mxu0 0.0
    %v7524 = vand.u32 %v5042, 4294901760
    %v7525 = vsub.f32 %v5042, %v7524
    %v7526 = vand.u32 %v7525, 4294901760
    %7527 = vmatpush2.msra.mxu0 %v7526
    %7528 = vmatprep.subr.mxu0 0.0
    %v7529 = vand.u32 %v5041, 4294901760
    %v7530 = vsub.f32 %v5041, %v7529
    %v7531 = vand.u32 %v7530, 4294901760
    %7532 = vmatpush2.msra.mxu0 %v7531
    %7533 = vmatprep.subr.mxu0 0.0
    %v7534 = vand.u32 %v5040, 4294901760
    %v7535 = vsub.f32 %v5040, %v7534
    %v7536 = vand.u32 %v7535, 4294901760
    %7537 = vmatpush2.msra.mxu0 %v7536
    %7538 = vmatprep.subr.mxu0 0.0
    %v7539 = vand.u32 %v5039, 4294901760
    %v7540 = vsub.f32 %v5039, %v7539
    %v7541 = vand.u32 %v7540, 4294901760
    %7542 = vmatpush2.msra.mxu0 %v7541
    %7543 = vmatprep.subr.mxu0 0.0
    %v7544 = vand.u32 %v5038, 4294901760
    %v7545 = vsub.f32 %v5038, %v7544
    %v7546 = vand.u32 %v7545, 4294901760
    %7547 = vmatpush2.msra.mxu0 %v7546
    %7548 = vmatprep.subr.mxu0 0.0
    %v7549 = vand.u32 %v5037, 4294901760
    %v7550 = vsub.f32 %v5037, %v7549
    %v7551 = vand.u32 %v7550, 4294901760
    %7552 = vmatpush2.msra.mxu0 %v7551
    %7553 = vmatprep.subr.mxu0 0.0
    %v7554 = vand.u32 %v5036, 4294901760
    %v7555 = vsub.f32 %v5036, %v7554
    %v7556 = vand.u32 %v7555, 4294901760
    %7557 = vmatpush2.msra.mxu0 %v7556
    %v7558 = vand.u32 %v4950, 4294901760
    %7559 = vmatprep.mubr.f32.mxu0 %v7558
    %v7560 = vand.u32 %v4454, 4294901760
    %7561 = vmatmul.mubr.f32.gmra.mxu0 %v7560
    %v7562 = vpop.f32.mrf.mxu0
    %v7563 = vadd.f32 %v7395, %v7562
    %v7564 = vpop.f32.mrf.mxu0
    %7565 = vdwg.mxu0
    %7566 = vmatprep.subr.mxu0 0.0
    %v7567 = vand.u32 %v5035, 4294901760
    %7568 = vmatpush1.msra.mxu0 %v7567
    %7569 = vmatprep.subr.mxu0 0.0
    %v7570 = vand.u32 %v5034, 4294901760
    %7571 = vmatpush1.msra.mxu0 %v7570
    %7572 = vmatprep.subr.mxu0 0.0
    %v7573 = vand.u32 %v5033, 4294901760
    %7574 = vmatpush1.msra.mxu0 %v7573
    %7575 = vmatprep.subr.mxu0 0.0
    %v7576 = vand.u32 %v5032, 4294901760
    %7577 = vmatpush1.msra.mxu0 %v7576
    %7578 = vmatprep.subr.mxu0 0.0
    %v7579 = vand.u32 %v5031, 4294901760
    %7580 = vmatpush1.msra.mxu0 %v7579
    %7581 = vmatprep.subr.mxu0 0.0
    %v7582 = vand.u32 %v5030, 4294901760
    %7583 = vmatpush1.msra.mxu0 %v7582
    %7584 = vmatprep.subr.mxu0 0.0
    %v7585 = vand.u32 %v5029, 4294901760
    %7586 = vmatpush1.msra.mxu0 %v7585
    %7587 = vmatprep.subr.mxu0 0.0
    %v7588 = vand.u32 %v5028, 4294901760
    %7589 = vmatpush1.msra.mxu0 %v7588
    %7590 = vmatprep.subr.mxu0 0.0
    %v7591 = vand.u32 %v5027, 4294901760
    %7592 = vmatpush1.msra.mxu0 %v7591
    %7593 = vmatprep.subr.mxu0 0.0
    %v7594 = vand.u32 %v5026, 4294901760
    %7595 = vmatpush1.msra.mxu0 %v7594
    %7596 = vmatprep.subr.mxu0 0.0
    %v7597 = vand.u32 %v5025, 4294901760
    %7598 = vmatpush1.msra.mxu0 %v7597
    %7599 = vmatprep.subr.mxu0 0.0
    %v7600 = vand.u32 %v5024, 4294901760
    %7601 = vmatpush1.msra.mxu0 %v7600
    %7602 = vmatprep.subr.mxu0 0.0
    %v7603 = vand.u32 %v5023, 4294901760
    %7604 = vmatpush1.msra.mxu0 %v7603
    %7605 = vmatprep.subr.mxu0 0.0
    %v7606 = vand.u32 %v5022, 4294901760
    %7607 = vmatpush1.msra.mxu0 %v7606
    %7608 = vmatprep.subr.mxu0 0.0
    %v7609 = vand.u32 %v5021, 4294901760
    %7610 = vmatpush1.msra.mxu0 %v7609
    %7611 = vmatprep.subr.mxu0 0.0
    %v7612 = vand.u32 %v5020, 4294901760
    %7613 = vmatpush1.msra.mxu0 %v7612
    %7614 = vmatprep.subr.mxu0 0.0
    %v7615 = vand.u32 %v5051, 4294901760
    %7616 = vmatpush2.msra.mxu0 %v7615
    %7617 = vmatprep.subr.mxu0 0.0
    %v7618 = vand.u32 %v5050, 4294901760
    %7619 = vmatpush2.msra.mxu0 %v7618
    %7620 = vmatprep.subr.mxu0 0.0
    %v7621 = vand.u32 %v5049, 4294901760
    %7622 = vmatpush2.msra.mxu0 %v7621
    %7623 = vmatprep.subr.mxu0 0.0
    %v7624 = vand.u32 %v5048, 4294901760
    %7625 = vmatpush2.msra.mxu0 %v7624
    %7626 = vmatprep.subr.mxu0 0.0
    %v7627 = vand.u32 %v5047, 4294901760
    %7628 = vmatpush2.msra.mxu0 %v7627
    %7629 = vmatprep.subr.mxu0 0.0
    %v7630 = vand.u32 %v5046, 4294901760
    %7631 = vmatpush2.msra.mxu0 %v7630
    %7632 = vmatprep.subr.mxu0 0.0
    %v7633 = vand.u32 %v5045, 4294901760
    %7634 = vmatpush2.msra.mxu0 %v7633
    %7635 = vmatprep.subr.mxu0 0.0
    %v7636 = vand.u32 %v5044, 4294901760
    %7637 = vmatpush2.msra.mxu0 %v7636
    %7638 = vmatprep.subr.mxu0 0.0
    %v7639 = vand.u32 %v5043, 4294901760
    %7640 = vmatpush2.msra.mxu0 %v7639
    %7641 = vmatprep.subr.mxu0 0.0
    %v7642 = vand.u32 %v5042, 4294901760
    %7643 = vmatpush2.msra.mxu0 %v7642
    %7644 = vmatprep.subr.mxu0 0.0
    %v7645 = vand.u32 %v5041, 4294901760
    %7646 = vmatpush2.msra.mxu0 %v7645
    %7647 = vmatprep.subr.mxu0 0.0
    %v7648 = vand.u32 %v5040, 4294901760
    %7649 = vmatpush2.msra.mxu0 %v7648
    %7650 = vmatprep.subr.mxu0 0.0
    %v7651 = vand.u32 %v5039, 4294901760
    %7652 = vmatpush2.msra.mxu0 %v7651
    %7653 = vmatprep.subr.mxu0 0.0
    %v7654 = vand.u32 %v5038, 4294901760
    %7655 = vmatpush2.msra.mxu0 %v7654
    %7656 = vmatprep.subr.mxu0 0.0
    %v7657 = vand.u32 %v5037, 4294901760
    %7658 = vmatpush2.msra.mxu0 %v7657
    %7659 = vmatprep.subr.mxu0 0.0
    %v7660 = vand.u32 %v5036, 4294901760
    %7661 = vmatpush2.msra.mxu0 %v7660
    %v7662 = vand.u32 %v4950, 4294901760
    %7663 = vmatprep.mubr.f32.mxu0 %v7662
    %v7664 = vand.u32 %v4454, 4294901760
    %7665 = vmatmul.mubr.f32.gmra.mxu0 %v7664
    %v7666 = vpop.f32.mrf.mxu0
    %v7667 = vadd.f32 %v7563, %v7666
    %v7668 = vpop.f32.mrf.mxu0
    %7669 = vdwg.mxu0
    %7670 = vmatprep.subr.mxu0 0.0
    %v7671 = vand.u32 %v5067, 4294901760
    %7672 = vmatpush1.msra.mxu0 %v7671
    %7673 = vmatprep.subr.mxu0 0.0
    %v7674 = vand.u32 %v5066, 4294901760
    %7675 = vmatpush1.msra.mxu0 %v7674
    %7676 = vmatprep.subr.mxu0 0.0
    %v7677 = vand.u32 %v5065, 4294901760
    %7678 = vmatpush1.msra.mxu0 %v7677
    %7679 = vmatprep.subr.mxu0 0.0
    %v7680 = vand.u32 %v5064, 4294901760
    %7681 = vmatpush1.msra.mxu0 %v7680
    %7682 = vmatprep.subr.mxu0 0.0
    %v7683 = vand.u32 %v5063, 4294901760
    %7684 = vmatpush1.msra.mxu0 %v7683
    %7685 = vmatprep.subr.mxu0 0.0
    %v7686 = vand.u32 %v5062, 4294901760
    %7687 = vmatpush1.msra.mxu0 %v7686
    %7688 = vmatprep.subr.mxu0 0.0
    %v7689 = vand.u32 %v5061, 4294901760
    %7690 = vmatpush1.msra.mxu0 %v7689
    %7691 = vmatprep.subr.mxu0 0.0
    %v7692 = vand.u32 %v5060, 4294901760
    %7693 = vmatpush1.msra.mxu0 %v7692
    %7694 = vmatprep.subr.mxu0 0.0
    %v7695 = vand.u32 %v5059, 4294901760
    %7696 = vmatpush1.msra.mxu0 %v7695
    %7697 = vmatprep.subr.mxu0 0.0
    %v7698 = vand.u32 %v5058, 4294901760
    %7699 = vmatpush1.msra.mxu0 %v7698
    %7700 = vmatprep.subr.mxu0 0.0
    %v7701 = vand.u32 %v5057, 4294901760
    %7702 = vmatpush1.msra.mxu0 %v7701
    %7703 = vmatprep.subr.mxu0 0.0
    %v7704 = vand.u32 %v5056, 4294901760
    %7705 = vmatpush1.msra.mxu0 %v7704
    %7706 = vmatprep.subr.mxu0 0.0
    %v7707 = vand.u32 %v5055, 4294901760
    %7708 = vmatpush1.msra.mxu0 %v7707
    %7709 = vmatprep.subr.mxu0 0.0
    %v7710 = vand.u32 %v5054, 4294901760
    %7711 = vmatpush1.msra.mxu0 %v7710
    %7712 = vmatprep.subr.mxu0 0.0
    %v7713 = vand.u32 %v5053, 4294901760
    %7714 = vmatpush1.msra.mxu0 %v7713
    %7715 = vmatprep.subr.mxu0 0.0
    %v7716 = vand.u32 %v5052, 4294901760
    %7717 = vmatpush1.msra.mxu0 %v7716
    %7718 = vmatprep.subr.mxu0 0.0
    %v7719 = vand.u32 %v5083, 4294901760
    %7720 = vmatpush2.msra.mxu0 %v7719
    %7721 = vmatprep.subr.mxu0 0.0
    %v7722 = vand.u32 %v5082, 4294901760
    %7723 = vmatpush2.msra.mxu0 %v7722
    %7724 = vmatprep.subr.mxu0 0.0
    %v7725 = vand.u32 %v5081, 4294901760
    %7726 = vmatpush2.msra.mxu0 %v7725
    %7727 = vmatprep.subr.mxu0 0.0
    %v7728 = vand.u32 %v5080, 4294901760
    %7729 = vmatpush2.msra.mxu0 %v7728
    %7730 = vmatprep.subr.mxu0 0.0
    %v7731 = vand.u32 %v5079, 4294901760
    %7732 = vmatpush2.msra.mxu0 %v7731
    %7733 = vmatprep.subr.mxu0 0.0
    %v7734 = vand.u32 %v5078, 4294901760
    %7735 = vmatpush2.msra.mxu0 %v7734
    %7736 = vmatprep.subr.mxu0 0.0
    %v7737 = vand.u32 %v5077, 4294901760
    %7738 = vmatpush2.msra.mxu0 %v7737
    %7739 = vmatprep.subr.mxu0 0.0
    %v7740 = vand.u32 %v5076, 4294901760
    %7741 = vmatpush2.msra.mxu0 %v7740
    %7742 = vmatprep.subr.mxu0 0.0
    %v7743 = vand.u32 %v5075, 4294901760
    %7744 = vmatpush2.msra.mxu0 %v7743
    %7745 = vmatprep.subr.mxu0 0.0
    %v7746 = vand.u32 %v5074, 4294901760
    %7747 = vmatpush2.msra.mxu0 %v7746
    %7748 = vmatprep.subr.mxu0 0.0
    %v7749 = vand.u32 %v5073, 4294901760
    %7750 = vmatpush2.msra.mxu0 %v7749
    %7751 = vmatprep.subr.mxu0 0.0
    %v7752 = vand.u32 %v5072, 4294901760
    %7753 = vmatpush2.msra.mxu0 %v7752
    %7754 = vmatprep.subr.mxu0 0.0
    %v7755 = vand.u32 %v5071, 4294901760
    %7756 = vmatpush2.msra.mxu0 %v7755
    %7757 = vmatprep.subr.mxu0 0.0
    %v7758 = vand.u32 %v5070, 4294901760
    %7759 = vmatpush2.msra.mxu0 %v7758
    %7760 = vmatprep.subr.mxu0 0.0
    %v7761 = vand.u32 %v5069, 4294901760
    %7762 = vmatpush2.msra.mxu0 %v7761
    %7763 = vmatprep.subr.mxu0 0.0
    %v7764 = vand.u32 %v5068, 4294901760
    %7765 = vmatpush2.msra.mxu0 %v7764
    %v7766 = vand.u32 %v4954, 4294901760
    %v7767 = vsub.f32 %v4954, %v7766
    %v7768 = vand.u32 %v7767, 4294901760
    %v7769 = vsub.f32 %v7767, %v7768
    %v7770 = vand.u32 %v7769, 4294901760
    %7771 = vmatprep.mubr.f32.mxu0 %v7770
    %v7772 = vand.u32 %v4952, 4294901760
    %v7773 = vsub.f32 %v4952, %v7772
    %v7774 = vand.u32 %v7773, 4294901760
    %v7775 = vsub.f32 %v7773, %v7774
    %v7776 = vand.u32 %v7775, 4294901760
    %7777 = vmatmul.mubr.f32.gmra.mxu0 %v7776
    %v7778 = vpop.f32.mrf.mxu0
    %v7779 = vadd.f32 %v7667, %v7778
    %v7780 = vpop.f32.mrf.mxu0
    %7781 = vdwg.mxu0
    %7782 = vmatprep.subr.mxu0 0.0
    %v7783 = vand.u32 %v5067, 4294901760
    %v7784 = vsub.f32 %v5067, %v7783
    %v7785 = vand.u32 %v7784, 4294901760
    %v7786 = vsub.f32 %v7784, %v7785
    %v7787 = vand.u32 %v7786, 4294901760
    %7788 = vmatpush1.msra.mxu0 %v7787
    %7789 = vmatprep.subr.mxu0 0.0
    %v7790 = vand.u32 %v5066, 4294901760
    %v7791 = vsub.f32 %v5066, %v7790
    %v7792 = vand.u32 %v7791, 4294901760
    %v7793 = vsub.f32 %v7791, %v7792
    %v7794 = vand.u32 %v7793, 4294901760
    %7795 = vmatpush1.msra.mxu0 %v7794
    %7796 = vmatprep.subr.mxu0 0.0
    %v7797 = vand.u32 %v5065, 4294901760
    %v7798 = vsub.f32 %v5065, %v7797
    %v7799 = vand.u32 %v7798, 4294901760
    %v7800 = vsub.f32 %v7798, %v7799
    %v7801 = vand.u32 %v7800, 4294901760
    %7802 = vmatpush1.msra.mxu0 %v7801
    %7803 = vmatprep.subr.mxu0 0.0
    %v7804 = vand.u32 %v5064, 4294901760
    %v7805 = vsub.f32 %v5064, %v7804
    %v7806 = vand.u32 %v7805, 4294901760
    %v7807 = vsub.f32 %v7805, %v7806
    %v7808 = vand.u32 %v7807, 4294901760
    %7809 = vmatpush1.msra.mxu0 %v7808
    %7810 = vmatprep.subr.mxu0 0.0
    %v7811 = vand.u32 %v5063, 4294901760
    %v7812 = vsub.f32 %v5063, %v7811
    %v7813 = vand.u32 %v7812, 4294901760
    %v7814 = vsub.f32 %v7812, %v7813
    %v7815 = vand.u32 %v7814, 4294901760
    %7816 = vmatpush1.msra.mxu0 %v7815
    %7817 = vmatprep.subr.mxu0 0.0
    %v7818 = vand.u32 %v5062, 4294901760
    %v7819 = vsub.f32 %v5062, %v7818
    %v7820 = vand.u32 %v7819, 4294901760
    %v7821 = vsub.f32 %v7819, %v7820
    %v7822 = vand.u32 %v7821, 4294901760
    %7823 = vmatpush1.msra.mxu0 %v7822
    %7824 = vmatprep.subr.mxu0 0.0
    %v7825 = vand.u32 %v5061, 4294901760
    %v7826 = vsub.f32 %v5061, %v7825
    %v7827 = vand.u32 %v7826, 4294901760
    %v7828 = vsub.f32 %v7826, %v7827
    %v7829 = vand.u32 %v7828, 4294901760
    %7830 = vmatpush1.msra.mxu0 %v7829
    %7831 = vmatprep.subr.mxu0 0.0
    %v7832 = vand.u32 %v5060, 4294901760
    %v7833 = vsub.f32 %v5060, %v7832
    %v7834 = vand.u32 %v7833, 4294901760
    %v7835 = vsub.f32 %v7833, %v7834
    %v7836 = vand.u32 %v7835, 4294901760
    %7837 = vmatpush1.msra.mxu0 %v7836
    %7838 = vmatprep.subr.mxu0 0.0
    %v7839 = vand.u32 %v5059, 4294901760
    %v7840 = vsub.f32 %v5059, %v7839
    %v7841 = vand.u32 %v7840, 4294901760
    %v7842 = vsub.f32 %v7840, %v7841
    %v7843 = vand.u32 %v7842, 4294901760
    %7844 = vmatpush1.msra.mxu0 %v7843
    %7845 = vmatprep.subr.mxu0 0.0
    %v7846 = vand.u32 %v5058, 4294901760
    %v7847 = vsub.f32 %v5058, %v7846
    %v7848 = vand.u32 %v7847, 4294901760
    %v7849 = vsub.f32 %v7847, %v7848
    %v7850 = vand.u32 %v7849, 4294901760
    %7851 = vmatpush1.msra.mxu0 %v7850
    %7852 = vmatprep.subr.mxu0 0.0
    %v7853 = vand.u32 %v5057, 4294901760
    %v7854 = vsub.f32 %v5057, %v7853
    %v7855 = vand.u32 %v7854, 4294901760
    %v7856 = vsub.f32 %v7854, %v7855
    %v7857 = vand.u32 %v7856, 4294901760
    %7858 = vmatpush1.msra.mxu0 %v7857
    %7859 = vmatprep.subr.mxu0 0.0
    %v7860 = vand.u32 %v5056, 4294901760
    %v7861 = vsub.f32 %v5056, %v7860
    %v7862 = vand.u32 %v7861, 4294901760
    %v7863 = vsub.f32 %v7861, %v7862
    %v7864 = vand.u32 %v7863, 4294901760
    %7865 = vmatpush1.msra.mxu0 %v7864
    %7866 = vmatprep.subr.mxu0 0.0
    %v7867 = vand.u32 %v5055, 4294901760
    %v7868 = vsub.f32 %v5055, %v7867
    %v7869 = vand.u32 %v7868, 4294901760
    %v7870 = vsub.f32 %v7868, %v7869
    %v7871 = vand.u32 %v7870, 4294901760
    %7872 = vmatpush1.msra.mxu0 %v7871
    %7873 = vmatprep.subr.mxu0 0.0
    %v7874 = vand.u32 %v5054, 4294901760
    %v7875 = vsub.f32 %v5054, %v7874
    %v7876 = vand.u32 %v7875, 4294901760
    %v7877 = vsub.f32 %v7875, %v7876
    %v7878 = vand.u32 %v7877, 4294901760
    %7879 = vmatpush1.msra.mxu0 %v7878
    %7880 = vmatprep.subr.mxu0 0.0
    %v7881 = vand.u32 %v5053, 4294901760
    %v7882 = vsub.f32 %v5053, %v7881
    %v7883 = vand.u32 %v7882, 4294901760
    %v7884 = vsub.f32 %v7882, %v7883
    %v7885 = vand.u32 %v7884, 4294901760
    %7886 = vmatpush1.msra.mxu0 %v7885
    %7887 = vmatprep.subr.mxu0 0.0
    %v7888 = vand.u32 %v5052, 4294901760
    %v7889 = vsub.f32 %v5052, %v7888
    %v7890 = vand.u32 %v7889, 4294901760
    %v7891 = vsub.f32 %v7889, %v7890
    %v7892 = vand.u32 %v7891, 4294901760
    %7893 = vmatpush1.msra.mxu0 %v7892
    %7894 = vmatprep.subr.mxu0 0.0
    %v7895 = vand.u32 %v5083, 4294901760
    %v7896 = vsub.f32 %v5083, %v7895
    %v7897 = vand.u32 %v7896, 4294901760
    %v7898 = vsub.f32 %v7896, %v7897
    %v7899 = vand.u32 %v7898, 4294901760
    %7900 = vmatpush2.msra.mxu0 %v7899
    %7901 = vmatprep.subr.mxu0 0.0
    %v7902 = vand.u32 %v5082, 4294901760
    %v7903 = vsub.f32 %v5082, %v7902
    %v7904 = vand.u32 %v7903, 4294901760
    %v7905 = vsub.f32 %v7903, %v7904
    %v7906 = vand.u32 %v7905, 4294901760
    %7907 = vmatpush2.msra.mxu0 %v7906
    %7908 = vmatprep.subr.mxu0 0.0
    %v7909 = vand.u32 %v5081, 4294901760
    %v7910 = vsub.f32 %v5081, %v7909
    %v7911 = vand.u32 %v7910, 4294901760
    %v7912 = vsub.f32 %v7910, %v7911
    %v7913 = vand.u32 %v7912, 4294901760
    %7914 = vmatpush2.msra.mxu0 %v7913
    %7915 = vmatprep.subr.mxu0 0.0
    %v7916 = vand.u32 %v5080, 4294901760
    %v7917 = vsub.f32 %v5080, %v7916
    %v7918 = vand.u32 %v7917, 4294901760
    %v7919 = vsub.f32 %v7917, %v7918
    %v7920 = vand.u32 %v7919, 4294901760
    %7921 = vmatpush2.msra.mxu0 %v7920
    %7922 = vmatprep.subr.mxu0 0.0
    %v7923 = vand.u32 %v5079, 4294901760
    %v7924 = vsub.f32 %v5079, %v7923
    %v7925 = vand.u32 %v7924, 4294901760
    %v7926 = vsub.f32 %v7924, %v7925
    %v7927 = vand.u32 %v7926, 4294901760
    %7928 = vmatpush2.msra.mxu0 %v7927
    %7929 = vmatprep.subr.mxu0 0.0
    %v7930 = vand.u32 %v5078, 4294901760
    %v7931 = vsub.f32 %v5078, %v7930
    %v7932 = vand.u32 %v7931, 4294901760
    %v7933 = vsub.f32 %v7931, %v7932
    %v7934 = vand.u32 %v7933, 4294901760
    %7935 = vmatpush2.msra.mxu0 %v7934
    %7936 = vmatprep.subr.mxu0 0.0
    %v7937 = vand.u32 %v5077, 4294901760
    %v7938 = vsub.f32 %v5077, %v7937
    %v7939 = vand.u32 %v7938, 4294901760
    %v7940 = vsub.f32 %v7938, %v7939
    %v7941 = vand.u32 %v7940, 4294901760
    %7942 = vmatpush2.msra.mxu0 %v7941
    %7943 = vmatprep.subr.mxu0 0.0
    %v7944 = vand.u32 %v5076, 4294901760
    %v7945 = vsub.f32 %v5076, %v7944
    %v7946 = vand.u32 %v7945, 4294901760
    %v7947 = vsub.f32 %v7945, %v7946
    %v7948 = vand.u32 %v7947, 4294901760
    %7949 = vmatpush2.msra.mxu0 %v7948
    %7950 = vmatprep.subr.mxu0 0.0
    %v7951 = vand.u32 %v5075, 4294901760
    %v7952 = vsub.f32 %v5075, %v7951
    %v7953 = vand.u32 %v7952, 4294901760
    %v7954 = vsub.f32 %v7952, %v7953
    %v7955 = vand.u32 %v7954, 4294901760
    %7956 = vmatpush2.msra.mxu0 %v7955
    %7957 = vmatprep.subr.mxu0 0.0
    %v7958 = vand.u32 %v5074, 4294901760
    %v7959 = vsub.f32 %v5074, %v7958
    %v7960 = vand.u32 %v7959, 4294901760
    %v7961 = vsub.f32 %v7959, %v7960
    %v7962 = vand.u32 %v7961, 4294901760
    %7963 = vmatpush2.msra.mxu0 %v7962
    %7964 = vmatprep.subr.mxu0 0.0
    %v7965 = vand.u32 %v5073, 4294901760
    %v7966 = vsub.f32 %v5073, %v7965
    %v7967 = vand.u32 %v7966, 4294901760
    %v7968 = vsub.f32 %v7966, %v7967
    %v7969 = vand.u32 %v7968, 4294901760
    %7970 = vmatpush2.msra.mxu0 %v7969
    %7971 = vmatprep.subr.mxu0 0.0
    %v7972 = vand.u32 %v5072, 4294901760
    %v7973 = vsub.f32 %v5072, %v7972
    %v7974 = vand.u32 %v7973, 4294901760
    %v7975 = vsub.f32 %v7973, %v7974
    %v7976 = vand.u32 %v7975, 4294901760
    %7977 = vmatpush2.msra.mxu0 %v7976
    %7978 = vmatprep.subr.mxu0 0.0
    %v7979 = vand.u32 %v5071, 4294901760
    %v7980 = vsub.f32 %v5071, %v7979
    %v7981 = vand.u32 %v7980, 4294901760
    %v7982 = vsub.f32 %v7980, %v7981
    %v7983 = vand.u32 %v7982, 4294901760
    %7984 = vmatpush2.msra.mxu0 %v7983
    %7985 = vmatprep.subr.mxu0 0.0
    %v7986 = vand.u32 %v5070, 4294901760
    %v7987 = vsub.f32 %v5070, %v7986
    %v7988 = vand.u32 %v7987, 4294901760
    %v7989 = vsub.f32 %v7987, %v7988
    %v7990 = vand.u32 %v7989, 4294901760
    %7991 = vmatpush2.msra.mxu0 %v7990
    %7992 = vmatprep.subr.mxu0 0.0
    %v7993 = vand.u32 %v5069, 4294901760
    %v7994 = vsub.f32 %v5069, %v7993
    %v7995 = vand.u32 %v7994, 4294901760
    %v7996 = vsub.f32 %v7994, %v7995
    %v7997 = vand.u32 %v7996, 4294901760
    %7998 = vmatpush2.msra.mxu0 %v7997
    %7999 = vmatprep.subr.mxu0 0.0
    %v8000 = vand.u32 %v5068, 4294901760
    %v8001 = vsub.f32 %v5068, %v8000
    %v8002 = vand.u32 %v8001, 4294901760
    %v8003 = vsub.f32 %v8001, %v8002
    %v8004 = vand.u32 %v8003, 4294901760
    %8005 = vmatpush2.msra.mxu0 %v8004
    %v8006 = vand.u32 %v4954, 4294901760
    %8007 = vmatprep.mubr.f32.mxu0 %v8006
    %v8008 = vand.u32 %v4952, 4294901760
    %8009 = vmatmul.mubr.f32.gmra.mxu0 %v8008
    %v8010 = vpop.f32.mrf.mxu0
    %v8011 = vadd.f32 %v7779, %v8010
    %v8012 = vpop.f32.mrf.mxu0
    %8013 = vdwg.mxu0
    %8014 = vmatprep.subr.mxu0 0.0
    %v8015 = vand.u32 %v5067, 4294901760
    %v8016 = vsub.f32 %v5067, %v8015
    %8017 = vmatpush1.msra.mxu0 %v8016
    %8018 = vmatprep.subr.mxu0 0.0
    %v8019 = vand.u32 %v5066, 4294901760
    %v8020 = vsub.f32 %v5066, %v8019
    %8021 = vmatpush1.msra.mxu0 %v8020
    %8022 = vmatprep.subr.mxu0 0.0
    %v8023 = vand.u32 %v5065, 4294901760
    %v8024 = vsub.f32 %v5065, %v8023
    %8025 = vmatpush1.msra.mxu0 %v8024
    %8026 = vmatprep.subr.mxu0 0.0
    %v8027 = vand.u32 %v5064, 4294901760
    %v8028 = vsub.f32 %v5064, %v8027
    %8029 = vmatpush1.msra.mxu0 %v8028
    %8030 = vmatprep.subr.mxu0 0.0
    %v8031 = vand.u32 %v5063, 4294901760
    %v8032 = vsub.f32 %v5063, %v8031
    %8033 = vmatpush1.msra.mxu0 %v8032
    %8034 = vmatprep.subr.mxu0 0.0
    %v8035 = vand.u32 %v5062, 4294901760
    %v8036 = vsub.f32 %v5062, %v8035
    %8037 = vmatpush1.msra.mxu0 %v8036
    %8038 = vmatprep.subr.mxu0 0.0
    %v8039 = vand.u32 %v5061, 4294901760
    %v8040 = vsub.f32 %v5061, %v8039
    %8041 = vmatpush1.msra.mxu0 %v8040
    %8042 = vmatprep.subr.mxu0 0.0
    %v8043 = vand.u32 %v5060, 4294901760
    %v8044 = vsub.f32 %v5060, %v8043
    %8045 = vmatpush1.msra.mxu0 %v8044
    %8046 = vmatprep.subr.mxu0 0.0
    %v8047 = vand.u32 %v5059, 4294901760
    %v8048 = vsub.f32 %v5059, %v8047
    %8049 = vmatpush1.msra.mxu0 %v8048
    %8050 = vmatprep.subr.mxu0 0.0
    %v8051 = vand.u32 %v5058, 4294901760
    %v8052 = vsub.f32 %v5058, %v8051
    %8053 = vmatpush1.msra.mxu0 %v8052
    %8054 = vmatprep.subr.mxu0 0.0
    %v8055 = vand.u32 %v5057, 4294901760
    %v8056 = vsub.f32 %v5057, %v8055
    %8057 = vmatpush1.msra.mxu0 %v8056
    %8058 = vmatprep.subr.mxu0 0.0
    %v8059 = vand.u32 %v5056, 4294901760
    %v8060 = vsub.f32 %v5056, %v8059
    %8061 = vmatpush1.msra.mxu0 %v8060
    %8062 = vmatprep.subr.mxu0 0.0
    %v8063 = vand.u32 %v5055, 4294901760
    %v8064 = vsub.f32 %v5055, %v8063
    %8065 = vmatpush1.msra.mxu0 %v8064
    %8066 = vmatprep.subr.mxu0 0.0
    %v8067 = vand.u32 %v5054, 4294901760
    %v8068 = vsub.f32 %v5054, %v8067
    %8069 = vmatpush1.msra.mxu0 %v8068
    %8070 = vmatprep.subr.mxu0 0.0
    %v8071 = vand.u32 %v5053, 4294901760
    %v8072 = vsub.f32 %v5053, %v8071
    %8073 = vmatpush1.msra.mxu0 %v8072
    %8074 = vmatprep.subr.mxu0 0.0
    %v8075 = vand.u32 %v5052, 4294901760
    %v8076 = vsub.f32 %v5052, %v8075
    %8077 = vmatpush1.msra.mxu0 %v8076
    %8078 = vmatprep.subr.mxu0 0.0
    %v8079 = vand.u32 %v5083, 4294901760
    %v8080 = vsub.f32 %v5083, %v8079
    %8081 = vmatpush2.msra.mxu0 %v8080
    %8082 = vmatprep.subr.mxu0 0.0
    %v8083 = vand.u32 %v5082, 4294901760
    %v8084 = vsub.f32 %v5082, %v8083
    %8085 = vmatpush2.msra.mxu0 %v8084
    %8086 = vmatprep.subr.mxu0 0.0
    %v8087 = vand.u32 %v5081, 4294901760
    %v8088 = vsub.f32 %v5081, %v8087
    %8089 = vmatpush2.msra.mxu0 %v8088
    %8090 = vmatprep.subr.mxu0 0.0
    %v8091 = vand.u32 %v5080, 4294901760
    %v8092 = vsub.f32 %v5080, %v8091
    %8093 = vmatpush2.msra.mxu0 %v8092
    %8094 = vmatprep.subr.mxu0 0.0
    %v8095 = vand.u32 %v5079, 4294901760
    %v8096 = vsub.f32 %v5079, %v8095
    %8097 = vmatpush2.msra.mxu0 %v8096
    %8098 = vmatprep.subr.mxu0 0.0
    %v8099 = vand.u32 %v5078, 4294901760
    %v8100 = vsub.f32 %v5078, %v8099
    %8101 = vmatpush2.msra.mxu0 %v8100
    %8102 = vmatprep.subr.mxu0 0.0
    %v8103 = vand.u32 %v5077, 4294901760
    %v8104 = vsub.f32 %v5077, %v8103
    %8105 = vmatpush2.msra.mxu0 %v8104
    %8106 = vmatprep.subr.mxu0 0.0
    %v8107 = vand.u32 %v5076, 4294901760
    %v8108 = vsub.f32 %v5076, %v8107
    %8109 = vmatpush2.msra.mxu0 %v8108
    %8110 = vmatprep.subr.mxu0 0.0
    %v8111 = vand.u32 %v5075, 4294901760
    %v8112 = vsub.f32 %v5075, %v8111
    %8113 = vmatpush2.msra.mxu0 %v8112
    %8114 = vmatprep.subr.mxu0 0.0
    %v8115 = vand.u32 %v5074, 4294901760
    %v8116 = vsub.f32 %v5074, %v8115
    %8117 = vmatpush2.msra.mxu0 %v8116
    %8118 = vmatprep.subr.mxu0 0.0
    %v8119 = vand.u32 %v5073, 4294901760
    %v8120 = vsub.f32 %v5073, %v8119
    %8121 = vmatpush2.msra.mxu0 %v8120
    %8122 = vmatprep.subr.mxu0 0.0
    %v8123 = vand.u32 %v5072, 4294901760
    %v8124 = vsub.f32 %v5072, %v8123
    %8125 = vmatpush2.msra.mxu0 %v8124
    %8126 = vmatprep.subr.mxu0 0.0
    %v8127 = vand.u32 %v5071, 4294901760
    %v8128 = vsub.f32 %v5071, %v8127
    %8129 = vmatpush2.msra.mxu0 %v8128
    %8130 = vmatprep.subr.mxu0 0.0
    %v8131 = vand.u32 %v5070, 4294901760
    %v8132 = vsub.f32 %v5070, %v8131
    %8133 = vmatpush2.msra.mxu0 %v8132
    %8134 = vmatprep.subr.mxu0 0.0
    %v8135 = vand.u32 %v5069, 4294901760
    %v8136 = vsub.f32 %v5069, %v8135
    %8137 = vmatpush2.msra.mxu0 %v8136
    %8138 = vmatprep.subr.mxu0 0.0
    %v8139 = vand.u32 %v5068, 4294901760
    %v8140 = vsub.f32 %v5068, %v8139
    %8141 = vmatpush2.msra.mxu0 %v8140
    %v8142 = vand.u32 %v4954, 4294901760
    %v8143 = vsub.f32 %v4954, %v8142
    %8144 = vmatprep.mubr.f32.mxu0 %v8143
    %v8145 = vand.u32 %v4952, 4294901760
    %v8146 = vsub.f32 %v4952, %v8145
    %8147 = vmatmul.mubr.f32.gmra.mxu0 %v8146
    %v8148 = vpop.f32.mrf.mxu0
    %v8149 = vadd.f32 %v8011, %v8148
    %v8150 = vpop.f32.mrf.mxu0
    %8151 = vdwg.mxu0
    %8152 = vmatprep.subr.mxu0 0.0
    %v8153 = vand.u32 %v5067, 4294901760
    %8154 = vmatpush1.msra.mxu0 %v8153
    %8155 = vmatprep.subr.mxu0 0.0
    %v8156 = vand.u32 %v5066, 4294901760
    %8157 = vmatpush1.msra.mxu0 %v8156
    %8158 = vmatprep.subr.mxu0 0.0
    %v8159 = vand.u32 %v5065, 4294901760
    %8160 = vmatpush1.msra.mxu0 %v8159
    %8161 = vmatprep.subr.mxu0 0.0
    %v8162 = vand.u32 %v5064, 4294901760
    %8163 = vmatpush1.msra.mxu0 %v8162
    %8164 = vmatprep.subr.mxu0 0.0
    %v8165 = vand.u32 %v5063, 4294901760
    %8166 = vmatpush1.msra.mxu0 %v8165
    %8167 = vmatprep.subr.mxu0 0.0
    %v8168 = vand.u32 %v5062, 4294901760
    %8169 = vmatpush1.msra.mxu0 %v8168
    %8170 = vmatprep.subr.mxu0 0.0
    %v8171 = vand.u32 %v5061, 4294901760
    %8172 = vmatpush1.msra.mxu0 %v8171
    %8173 = vmatprep.subr.mxu0 0.0
    %v8174 = vand.u32 %v5060, 4294901760
    %8175 = vmatpush1.msra.mxu0 %v8174
    %8176 = vmatprep.subr.mxu0 0.0
    %v8177 = vand.u32 %v5059, 4294901760
    %8178 = vmatpush1.msra.mxu0 %v8177
    %8179 = vmatprep.subr.mxu0 0.0
    %v8180 = vand.u32 %v5058, 4294901760
    %8181 = vmatpush1.msra.mxu0 %v8180
    %8182 = vmatprep.subr.mxu0 0.0
    %v8183 = vand.u32 %v5057, 4294901760
    %8184 = vmatpush1.msra.mxu0 %v8183
    %8185 = vmatprep.subr.mxu0 0.0
    %v8186 = vand.u32 %v5056, 4294901760
    %8187 = vmatpush1.msra.mxu0 %v8186
    %8188 = vmatprep.subr.mxu0 0.0
    %v8189 = vand.u32 %v5055, 4294901760
    %8190 = vmatpush1.msra.mxu0 %v8189
    %8191 = vmatprep.subr.mxu0 0.0
    %v8192 = vand.u32 %v5054, 4294901760
    %8193 = vmatpush1.msra.mxu0 %v8192
    %8194 = vmatprep.subr.mxu0 0.0
    %v8195 = vand.u32 %v5053, 4294901760
    %8196 = vmatpush1.msra.mxu0 %v8195
    %8197 = vmatprep.subr.mxu0 0.0
    %v8198 = vand.u32 %v5052, 4294901760
    %8199 = vmatpush1.msra.mxu0 %v8198
    %8200 = vmatprep.subr.mxu0 0.0
    %v8201 = vand.u32 %v5083, 4294901760
    %8202 = vmatpush2.msra.mxu0 %v8201
    %8203 = vmatprep.subr.mxu0 0.0
    %v8204 = vand.u32 %v5082, 4294901760
    %8205 = vmatpush2.msra.mxu0 %v8204
    %8206 = vmatprep.subr.mxu0 0.0
    %v8207 = vand.u32 %v5081, 4294901760
    %8208 = vmatpush2.msra.mxu0 %v8207
    %8209 = vmatprep.subr.mxu0 0.0
    %v8210 = vand.u32 %v5080, 4294901760
    %8211 = vmatpush2.msra.mxu0 %v8210
    %8212 = vmatprep.subr.mxu0 0.0
    %v8213 = vand.u32 %v5079, 4294901760
    %8214 = vmatpush2.msra.mxu0 %v8213
    %8215 = vmatprep.subr.mxu0 0.0
    %v8216 = vand.u32 %v5078, 4294901760
    %8217 = vmatpush2.msra.mxu0 %v8216
    %8218 = vmatprep.subr.mxu0 0.0
    %v8219 = vand.u32 %v5077, 4294901760
    %8220 = vmatpush2.msra.mxu0 %v8219
    %8221 = vmatprep.subr.mxu0 0.0
    %v8222 = vand.u32 %v5076, 4294901760
    %8223 = vmatpush2.msra.mxu0 %v8222
    %8224 = vmatprep.subr.mxu0 0.0
    %v8225 = vand.u32 %v5075, 4294901760
    %8226 = vmatpush2.msra.mxu0 %v8225
    %8227 = vmatprep.subr.mxu0 0.0
    %v8228 = vand.u32 %v5074, 4294901760
    %8229 = vmatpush2.msra.mxu0 %v8228
    %8230 = vmatprep.subr.mxu0 0.0
    %v8231 = vand.u32 %v5073, 4294901760
    %8232 = vmatpush2.msra.mxu0 %v8231
    %8233 = vmatprep.subr.mxu0 0.0
    %v8234 = vand.u32 %v5072, 4294901760
    %8235 = vmatpush2.msra.mxu0 %v8234
    %8236 = vmatprep.subr.mxu0 0.0
    %v8237 = vand.u32 %v5071, 4294901760
    %8238 = vmatpush2.msra.mxu0 %v8237
    %8239 = vmatprep.subr.mxu0 0.0
    %v8240 = vand.u32 %v5070, 4294901760
    %8241 = vmatpush2.msra.mxu0 %v8240
    %8242 = vmatprep.subr.mxu0 0.0
    %v8243 = vand.u32 %v5069, 4294901760
    %8244 = vmatpush2.msra.mxu0 %v8243
    %8245 = vmatprep.subr.mxu0 0.0
    %v8246 = vand.u32 %v5068, 4294901760
    %8247 = vmatpush2.msra.mxu0 %v8246
    %v8248 = vand.u32 %v4954, 4294901760
    %v8249 = vsub.f32 %v4954, %v8248
    %v8250 = vand.u32 %v8249, 4294901760
    %8251 = vmatprep.mubr.f32.mxu0 %v8250
    %v8252 = vand.u32 %v4952, 4294901760
    %v8253 = vsub.f32 %v4952, %v8252
    %v8254 = vand.u32 %v8253, 4294901760
    %8255 = vmatmul.mubr.f32.gmra.mxu0 %v8254
    %v8256 = vpop.f32.mrf.mxu0
    %v8257 = vadd.f32 %v8149, %v8256
    %v8258 = vpop.f32.mrf.mxu0
    %8259 = vdwg.mxu0
    %8260 = vmatprep.subr.mxu0 0.0
    %v8261 = vand.u32 %v5067, 4294901760
    %v8262 = vsub.f32 %v5067, %v8261
    %v8263 = vand.u32 %v8262, 4294901760
    %8264 = vmatpush1.msra.mxu0 %v8263
    %8265 = vmatprep.subr.mxu0 0.0
    %v8266 = vand.u32 %v5066, 4294901760
    %v8267 = vsub.f32 %v5066, %v8266
    %v8268 = vand.u32 %v8267, 4294901760
    %8269 = vmatpush1.msra.mxu0 %v8268
    %8270 = vmatprep.subr.mxu0 0.0
    %v8271 = vand.u32 %v5065, 4294901760
    %v8272 = vsub.f32 %v5065, %v8271
    %v8273 = vand.u32 %v8272, 4294901760
    %8274 = vmatpush1.msra.mxu0 %v8273
    %8275 = vmatprep.subr.mxu0 0.0
    %v8276 = vand.u32 %v5064, 4294901760
    %v8277 = vsub.f32 %v5064, %v8276
    %v8278 = vand.u32 %v8277, 4294901760
    %8279 = vmatpush1.msra.mxu0 %v8278
    %8280 = vmatprep.subr.mxu0 0.0
    %v8281 = vand.u32 %v5063, 4294901760
    %v8282 = vsub.f32 %v5063, %v8281
    %v8283 = vand.u32 %v8282, 4294901760
    %8284 = vmatpush1.msra.mxu0 %v8283
    %8285 = vmatprep.subr.mxu0 0.0
    %v8286 = vand.u32 %v5062, 4294901760
    %v8287 = vsub.f32 %v5062, %v8286
    %v8288 = vand.u32 %v8287, 4294901760
    %8289 = vmatpush1.msra.mxu0 %v8288
    %8290 = vmatprep.subr.mxu0 0.0
    %v8291 = vand.u32 %v5061, 4294901760
    %v8292 = vsub.f32 %v5061, %v8291
    %v8293 = vand.u32 %v8292, 4294901760
    %8294 = vmatpush1.msra.mxu0 %v8293
    %8295 = vmatprep.subr.mxu0 0.0
    %v8296 = vand.u32 %v5060, 4294901760
    %v8297 = vsub.f32 %v5060, %v8296
    %v8298 = vand.u32 %v8297, 4294901760
    %8299 = vmatpush1.msra.mxu0 %v8298
    %8300 = vmatprep.subr.mxu0 0.0
    %v8301 = vand.u32 %v5059, 4294901760
    %v8302 = vsub.f32 %v5059, %v8301
    %v8303 = vand.u32 %v8302, 4294901760
    %8304 = vmatpush1.msra.mxu0 %v8303
    %8305 = vmatprep.subr.mxu0 0.0
    %v8306 = vand.u32 %v5058, 4294901760
    %v8307 = vsub.f32 %v5058, %v8306
    %v8308 = vand.u32 %v8307, 4294901760
    %8309 = vmatpush1.msra.mxu0 %v8308
    %8310 = vmatprep.subr.mxu0 0.0
    %v8311 = vand.u32 %v5057, 4294901760
    %v8312 = vsub.f32 %v5057, %v8311
    %v8313 = vand.u32 %v8312, 4294901760
    %8314 = vmatpush1.msra.mxu0 %v8313
    %8315 = vmatprep.subr.mxu0 0.0
    %v8316 = vand.u32 %v5056, 4294901760
    %v8317 = vsub.f32 %v5056, %v8316
    %v8318 = vand.u32 %v8317, 4294901760
    %8319 = vmatpush1.msra.mxu0 %v8318
    %8320 = vmatprep.subr.mxu0 0.0
    %v8321 = vand.u32 %v5055, 4294901760
    %v8322 = vsub.f32 %v5055, %v8321
    %v8323 = vand.u32 %v8322, 4294901760
    %8324 = vmatpush1.msra.mxu0 %v8323
    %8325 = vmatprep.subr.mxu0 0.0
    %v8326 = vand.u32 %v5054, 4294901760
    %v8327 = vsub.f32 %v5054, %v8326
    %v8328 = vand.u32 %v8327, 4294901760
    %8329 = vmatpush1.msra.mxu0 %v8328
    %8330 = vmatprep.subr.mxu0 0.0
    %v8331 = vand.u32 %v5053, 4294901760
    %v8332 = vsub.f32 %v5053, %v8331
    %v8333 = vand.u32 %v8332, 4294901760
    %8334 = vmatpush1.msra.mxu0 %v8333
    %8335 = vmatprep.subr.mxu0 0.0
    %v8336 = vand.u32 %v5052, 4294901760
    %v8337 = vsub.f32 %v5052, %v8336
    %v8338 = vand.u32 %v8337, 4294901760
    %8339 = vmatpush1.msra.mxu0 %v8338
    %8340 = vmatprep.subr.mxu0 0.0
    %v8341 = vand.u32 %v5083, 4294901760
    %v8342 = vsub.f32 %v5083, %v8341
    %v8343 = vand.u32 %v8342, 4294901760
    %8344 = vmatpush2.msra.mxu0 %v8343
    %8345 = vmatprep.subr.mxu0 0.0
    %v8346 = vand.u32 %v5082, 4294901760
    %v8347 = vsub.f32 %v5082, %v8346
    %v8348 = vand.u32 %v8347, 4294901760
    %8349 = vmatpush2.msra.mxu0 %v8348
    %8350 = vmatprep.subr.mxu0 0.0
    %v8351 = vand.u32 %v5081, 4294901760
    %v8352 = vsub.f32 %v5081, %v8351
    %v8353 = vand.u32 %v8352, 4294901760
    %8354 = vmatpush2.msra.mxu0 %v8353
    %8355 = vmatprep.subr.mxu0 0.0
    %v8356 = vand.u32 %v5080, 4294901760
    %v8357 = vsub.f32 %v5080, %v8356
    %v8358 = vand.u32 %v8357, 4294901760
    %8359 = vmatpush2.msra.mxu0 %v8358
    %8360 = vmatprep.subr.mxu0 0.0
    %v8361 = vand.u32 %v5079, 4294901760
    %v8362 = vsub.f32 %v5079, %v8361
    %v8363 = vand.u32 %v8362, 4294901760
    %8364 = vmatpush2.msra.mxu0 %v8363
    %8365 = vmatprep.subr.mxu0 0.0
    %v8366 = vand.u32 %v5078, 4294901760
    %v8367 = vsub.f32 %v5078, %v8366
    %v8368 = vand.u32 %v8367, 4294901760
    %8369 = vmatpush2.msra.mxu0 %v8368
    %8370 = vmatprep.subr.mxu0 0.0
    %v8371 = vand.u32 %v5077, 4294901760
    %v8372 = vsub.f32 %v5077, %v8371
    %v8373 = vand.u32 %v8372, 4294901760
    %8374 = vmatpush2.msra.mxu0 %v8373
    %8375 = vmatprep.subr.mxu0 0.0
    %v8376 = vand.u32 %v5076, 4294901760
    %v8377 = vsub.f32 %v5076, %v8376
    %v8378 = vand.u32 %v8377, 4294901760
    %8379 = vmatpush2.msra.mxu0 %v8378
    %8380 = vmatprep.subr.mxu0 0.0
    %v8381 = vand.u32 %v5075, 4294901760
    %v8382 = vsub.f32 %v5075, %v8381
    %v8383 = vand.u32 %v8382, 4294901760
    %8384 = vmatpush2.msra.mxu0 %v8383
    %8385 = vmatprep.subr.mxu0 0.0
    %v8386 = vand.u32 %v5074, 4294901760
    %v8387 = vsub.f32 %v5074, %v8386
    %v8388 = vand.u32 %v8387, 4294901760
    %8389 = vmatpush2.msra.mxu0 %v8388
    %8390 = vmatprep.subr.mxu0 0.0
    %v8391 = vand.u32 %v5073, 4294901760
    %v8392 = vsub.f32 %v5073, %v8391
    %v8393 = vand.u32 %v8392, 4294901760
    %8394 = vmatpush2.msra.mxu0 %v8393
    %8395 = vmatprep.subr.mxu0 0.0
    %v8396 = vand.u32 %v5072, 4294901760
    %v8397 = vsub.f32 %v5072, %v8396
    %v8398 = vand.u32 %v8397, 4294901760
    %8399 = vmatpush2.msra.mxu0 %v8398
    %8400 = vmatprep.subr.mxu0 0.0
    %v8401 = vand.u32 %v5071, 4294901760
    %v8402 = vsub.f32 %v5071, %v8401
    %v8403 = vand.u32 %v8402, 4294901760
    %8404 = vmatpush2.msra.mxu0 %v8403
    %8405 = vmatprep.subr.mxu0 0.0
    %v8406 = vand.u32 %v5070, 4294901760
    %v8407 = vsub.f32 %v5070, %v8406
    %v8408 = vand.u32 %v8407, 4294901760
    %8409 = vmatpush2.msra.mxu0 %v8408
    %8410 = vmatprep.subr.mxu0 0.0
    %v8411 = vand.u32 %v5069, 4294901760
    %v8412 = vsub.f32 %v5069, %v8411
    %v8413 = vand.u32 %v8412, 4294901760
    %8414 = vmatpush2.msra.mxu0 %v8413
    %8415 = vmatprep.subr.mxu0 0.0
    %v8416 = vand.u32 %v5068, 4294901760
    %v8417 = vsub.f32 %v5068, %v8416
    %v8418 = vand.u32 %v8417, 4294901760
    %8419 = vmatpush2.msra.mxu0 %v8418
    %v8420 = vand.u32 %v4954, 4294901760
    %8421 = vmatprep.mubr.f32.mxu0 %v8420
    %v8422 = vand.u32 %v4952, 4294901760
    %8423 = vmatmul.mubr.f32.gmra.mxu0 %v8422
    %v8424 = vpop.f32.mrf.mxu0
    %v8425 = vadd.f32 %v8257, %v8424
    %v8426 = vpop.f32.mrf.mxu0
    %8427 = vdwg.mxu0
    %8428 = vmatprep.subr.mxu0 0.0
    %v8429 = vand.u32 %v5067, 4294901760
    %8430 = vmatpush1.msra.mxu0 %v8429
    %8431 = vmatprep.subr.mxu0 0.0
    %v8432 = vand.u32 %v5066, 4294901760
    %8433 = vmatpush1.msra.mxu0 %v8432
    %8434 = vmatprep.subr.mxu0 0.0
    %v8435 = vand.u32 %v5065, 4294901760
    %8436 = vmatpush1.msra.mxu0 %v8435
    %8437 = vmatprep.subr.mxu0 0.0
    %v8438 = vand.u32 %v5064, 4294901760
    %8439 = vmatpush1.msra.mxu0 %v8438
    %8440 = vmatprep.subr.mxu0 0.0
    %v8441 = vand.u32 %v5063, 4294901760
    %8442 = vmatpush1.msra.mxu0 %v8441
    %8443 = vmatprep.subr.mxu0 0.0
    %v8444 = vand.u32 %v5062, 4294901760
    %8445 = vmatpush1.msra.mxu0 %v8444
    %8446 = vmatprep.subr.mxu0 0.0
    %v8447 = vand.u32 %v5061, 4294901760
    %8448 = vmatpush1.msra.mxu0 %v8447
    %8449 = vmatprep.subr.mxu0 0.0
    %v8450 = vand.u32 %v5060, 4294901760
    %8451 = vmatpush1.msra.mxu0 %v8450
    %8452 = vmatprep.subr.mxu0 0.0
    %v8453 = vand.u32 %v5059, 4294901760
    %8454 = vmatpush1.msra.mxu0 %v8453
    %8455 = vmatprep.subr.mxu0 0.0
    %v8456 = vand.u32 %v5058, 4294901760
    %8457 = vmatpush1.msra.mxu0 %v8456
    %8458 = vmatprep.subr.mxu0 0.0
    %v8459 = vand.u32 %v5057, 4294901760
    %8460 = vmatpush1.msra.mxu0 %v8459
    %8461 = vmatprep.subr.mxu0 0.0
    %v8462 = vand.u32 %v5056, 4294901760
    %8463 = vmatpush1.msra.mxu0 %v8462
    %8464 = vmatprep.subr.mxu0 0.0
    %v8465 = vand.u32 %v5055, 4294901760
    %8466 = vmatpush1.msra.mxu0 %v8465
    %8467 = vmatprep.subr.mxu0 0.0
    %v8468 = vand.u32 %v5054, 4294901760
    %8469 = vmatpush1.msra.mxu0 %v8468
    %8470 = vmatprep.subr.mxu0 0.0
    %v8471 = vand.u32 %v5053, 4294901760
    %8472 = vmatpush1.msra.mxu0 %v8471
    %8473 = vmatprep.subr.mxu0 0.0
    %v8474 = vand.u32 %v5052, 4294901760
    %8475 = vmatpush1.msra.mxu0 %v8474
    %8476 = vmatprep.subr.mxu0 0.0
    %v8477 = vand.u32 %v5083, 4294901760
    %8478 = vmatpush2.msra.mxu0 %v8477
    %8479 = vmatprep.subr.mxu0 0.0
    %v8480 = vand.u32 %v5082, 4294901760
    %8481 = vmatpush2.msra.mxu0 %v8480
    %8482 = vmatprep.subr.mxu0 0.0
    %v8483 = vand.u32 %v5081, 4294901760
    %8484 = vmatpush2.msra.mxu0 %v8483
    %8485 = vmatprep.subr.mxu0 0.0
    %v8486 = vand.u32 %v5080, 4294901760
    %8487 = vmatpush2.msra.mxu0 %v8486
    %8488 = vmatprep.subr.mxu0 0.0
    %v8489 = vand.u32 %v5079, 4294901760
    %8490 = vmatpush2.msra.mxu0 %v8489
    %8491 = vmatprep.subr.mxu0 0.0
    %v8492 = vand.u32 %v5078, 4294901760
    %8493 = vmatpush2.msra.mxu0 %v8492
    %8494 = vmatprep.subr.mxu0 0.0
    %v8495 = vand.u32 %v5077, 4294901760
    %8496 = vmatpush2.msra.mxu0 %v8495
    %8497 = vmatprep.subr.mxu0 0.0
    %v8498 = vand.u32 %v5076, 4294901760
    %8499 = vmatpush2.msra.mxu0 %v8498
    %8500 = vmatprep.subr.mxu0 0.0
    %v8501 = vand.u32 %v5075, 4294901760
    %8502 = vmatpush2.msra.mxu0 %v8501
    %8503 = vmatprep.subr.mxu0 0.0
    %v8504 = vand.u32 %v5074, 4294901760
    %8505 = vmatpush2.msra.mxu0 %v8504
    %8506 = vmatprep.subr.mxu0 0.0
    %v8507 = vand.u32 %v5073, 4294901760
    %8508 = vmatpush2.msra.mxu0 %v8507
    %8509 = vmatprep.subr.mxu0 0.0
    %v8510 = vand.u32 %v5072, 4294901760
    %8511 = vmatpush2.msra.mxu0 %v8510
    %8512 = vmatprep.subr.mxu0 0.0
    %v8513 = vand.u32 %v5071, 4294901760
    %8514 = vmatpush2.msra.mxu0 %v8513
    %8515 = vmatprep.subr.mxu0 0.0
    %v8516 = vand.u32 %v5070, 4294901760
    %8517 = vmatpush2.msra.mxu0 %v8516
    %8518 = vmatprep.subr.mxu0 0.0
    %v8519 = vand.u32 %v5069, 4294901760
    %8520 = vmatpush2.msra.mxu0 %v8519
    %8521 = vmatprep.subr.mxu0 0.0
    %v8522 = vand.u32 %v5068, 4294901760
    %8523 = vmatpush2.msra.mxu0 %v8522
    %v8524 = vand.u32 %v4954, 4294901760
    %8525 = vmatprep.mubr.f32.mxu0 %v8524
    %v8526 = vand.u32 %v4952, 4294901760
    %8527 = vmatmul.mubr.f32.gmra.mxu0 %v8526
    %v8528 = vpop.f32.mrf.mxu0
    %v8529 = vadd.f32 %v8425, %v8528
    %v8530 = vpop.f32.mrf.mxu0
    %8531 = vdwg.mxu0
    %v8532 = vadd.f32 %v4939, %v8529
    %v8535 = vcombine.low %v1876, %v8532
    %v8537 = vunpack.c.l.s4 1983009808
    %v8538 = vunpack.c.0.s8 %v8537
    %v8539 = vlaneseq
    %v8540 = vshrl.u32 %v8539, 7
    %v8541 = vsub.s32 %v8538, %v8540
    %v8542 = vrot.slane %v8535, %v8541
    %8544 = vst [vmem:[#allocation10] sm:$0xf] %v8542
    // Predicated region
    $region54: #{tpu_custom_call.1} parent=1 // pred_check
      _
    $region55: #{tpu_custom_call.1} parent=1 // pred_check_branch
      %8546 = sbr.rel (0) target = $region57
    $region56: #{tpu_custom_call.1} parent=1 // pred_region
      %s8548 = ssub.s32 64, 64
      %8549 = vsyncadd [#allocation4], %s8548
      %s8551 = sshll.u32 [#allocation10], 4
      %s8552 = int_to_ptr.vmem [resolvable:$true] %s8551
      %8554 = dma.vmem_to_hbm [thread:$0]  %s8552, 64, %s9, [#allocation4]
    $region57: #{tpu_custom_call.1} parent=1 // pred_fallthru
      _
    // Predicated region
    $region58: #{tpu_custom_call.1} parent=1 // pred_check
      _
    $region59: #{tpu_custom_call.1} parent=1 // pred_check_branch
      %8556 = sbr.rel (0) target = $region61
    $region60: #{tpu_custom_call.1} parent=1 // pred_region
      %8557 = dma.done [#allocation4], 64
    $region61: #{tpu_custom_call.1} parent=1 // pred_fallthru
      _
    %8558 = vsyncpa [#allocation3], 1
    %8559 = vsyncpa [#allocation6], 1
    %8560 = vsyncpa [#allocation9], 1
    %8561 = vsyncpa [#allocation4], 1

</llo_original>
